<compile_context>
chip_gen: v7x
topology: tpu7x:2x2x1
jax: 0.10.0
libtpu: 0.0.40
codegen_flags: <defaults>
</compile_context>

<pallas_src>
import functools

import jax
import jax.numpy as jnp
import numpy as np
from jax.experimental import pallas as pl
from jax.experimental.pallas import tpu as pltpu

DILATION_RATES = (3, 6, 9)


# -------------------------- fused Pallas kernel --------------------------

def _multi_atrous_fused_kernel(xpad_ref, wd_ref, bd_ref, gap_ref, o_ref,
                               *, dilations, pad, h, w):
    # xpad_ref: (1, H+2R, W+2R, Cin)   input padded ONCE to R = max(dilations), compute dtype
    # wd_ref:   (nb, 9, Cin, C4)       dilated-conv weights, tap index = ky*3 + kx, compute dtype
    # bd_ref:   (nb, 1, C4)            f32 biases
    # gap_ref:  (1, 1, C4)             f32, already mean->1x1 conv->ReLU (hoisted to wrapper)
    # o_ref:    (1, H*W, (nb+1)*C4)    channel-concatenated output slab
    H, W = h, w
    Cin = xpad_ref.shape[-1]
    nb = len(dilations)
    Ctot = o_ref.shape[-1]
    C4 = Ctot // (nb + 1)
    R = pad

    # Dilated 3x3 branches: 9 per-tap matmuls (K = Cin) accumulated in f32 — no im2col buffer,
    # no concatenates; each branch result is stored straight into its output channel slice.
    for bi, r in enumerate(dilations):
        acc = jnp.zeros((H * W, C4), jnp.float32)
        for ky in range(3):
            for kx in range(3):
                r0 = R + (ky - 1) * r
                c0 = R + (kx - 1) * r
                patch = xpad_ref[0, r0:r0 + H, c0:c0 + W, :].reshape(H * W, Cin)
                acc = acc + jnp.dot(patch, wd_ref[bi, ky * 3 + kx],
                                    preferred_element_type=jnp.float32)
        acc = acc + bd_ref[bi]                                        # bias in f32
        o_ref[0, :, bi * C4:(bi + 1) * C4] = acc.astype(o_ref.dtype)

    # GAP branch: constant broadcast-store (== exact bilinear upsample of a 1x1 map).
    o_ref[0, :, nb * C4:(nb + 1) * C4] = jnp.broadcast_to(
        gap_ref[0], (H * W, C4)).astype(o_ref.dtype)


# -------------------------- pallas_call wrapper --------------------------

def multi_atrous_nhwc(params, x_nhwc, *, compute_dtype=None):
    """NHWC-native fused MultiAtrous.  x_nhwc: (N, H, W, Cin) -> (N, H, W, 4*C4)."""
    if compute_dtype is None:
        compute_dtype = x_nhwc.dtype
    N, H, W, Cin = x_nhwc.shape
    C4 = params["gap_w"].shape[-1]
    nb = len(DILATION_RATES)
    Ctot = (nb + 1) * C4
    R = max(DILATION_RATES)

    # GAP branch hoisted out of the kernel (O(HW*Cin) XLA work, exact f32).
    mean = jnp.mean(x_nhwc.astype(jnp.float32), axis=(1, 2))                 # (N, Cin)
    gap = jnp.maximum(mean @ params["gap_w"].astype(jnp.float32)
                      + params["gap_b"].astype(jnp.float32), 0.0)            # (N, C4)
    gap = gap.reshape(N, 1, C4)

    # Early cast (bf16 on v6e/v7x halves input DMA + all in-VMEM slice traffic), then pad ONCE
    # to the max dilation; every branch reads its taps at offset R + (k-1)*r.
    xc = x_nhwc.astype(compute_dtype)
    xpad = jnp.pad(xc, ((0, 0), (R, R), (R, R), (0, 0)))
    Hp, Wp = H + 2 * R, W + 2 * R

    # Weights packed as (branch, tap, Cin, C4); taps in ky*3+kx order. Pre-cast to compute dtype.
    wd = jnp.stack([params[f"dconv{i}_w"].reshape(9, Cin, C4)
                    for i in range(nb)]).astype(compute_dtype)               # (nb, 9, Cin, C4)
    bd = jnp.stack([params[f"dconv{i}_b"].reshape(1, C4)
                    for i in range(nb)]).astype(jnp.float32)                 # (nb, 1, C4)

    kern = functools.partial(_multi_atrous_fused_kernel,
                             dilations=DILATION_RATES, pad=R, h=H, w=W)

    # Generation-aware scoped-VMEM sizing: double-buffered blocks + live in-kernel temporaries
    # (a few tap patches + the f32 accumulator), capped at ~90% of physical VMEM.
    in_item = jnp.dtype(compute_dtype).itemsize
    out_item = jnp.dtype(x_nhwc.dtype).itemsize
    in_block = Hp * Wp * Cin * in_item
    out_block = H * W * Ctot * out_item
    const_block = wd.size * in_item + bd.size * 4 + C4 * 4
    temps = 4 * H * W * Cin * in_item + H * W * C4 * 4 + H * W * Ctot * 4
    need = 2 * (in_block + out_block + const_block) + temps + (2 << 20)
    try:
        cap = int(getattr(pltpu.get_tpu_info(), "vmem_capacity_bytes", 64 << 20))
    except Exception:
        cap = 64 << 20
    vmem_limit = int(min(max(need, 32 << 20), int(0.9 * cap)))

    # TODO(synk): for large H*Cin (v7x 64 MiB VMEM) add an H-tile grid axis with a 2R-row halo
    # (manual DMA or pl.Element-offset blocks) so per-tile blocks fit and the grid has >= ~8
    # steps for pipelining / megacore; the GAP reduction is already hoisted so tiling is legal.
    out_flat = pl.pallas_call(
        kern,
        out_shape=jax.ShapeDtypeStruct((N, H * W, Ctot), x_nhwc.dtype),
        grid_spec=pltpu.PrefetchScalarGridSpec(
            num_scalar_prefetch=0,
            grid=(N,),
            in_specs=[
                pl.BlockSpec((1, Hp, Wp, Cin), lambda n: (n, 0, 0, 0)),
                pl.BlockSpec((nb, 9, Cin, C4), lambda n: (0, 0, 0, 0)),
                pl.BlockSpec((nb, 1, C4), lambda n: (0, 0, 0)),
                pl.BlockSpec((1, 1, C4), lambda n: (n, 0, 0)),
            ],
            out_specs=pl.BlockSpec((1, H * W, Ctot), lambda n: (n, 0, 0)),
        ),
        compiler_params=pltpu.CompilerParams(
            dimension_semantics=("parallel",),
            vmem_limit_bytes=vmem_limit,
        ),
    )(xpad, wd, bd, gap)
    return out_flat.reshape(N, H, W, Ctot)


def multi_atrous_forward(params, x_nchw, *, compute_dtype=None):
    """PyTorch-interface wrapper: (N, Cin, H, W) -> (N, 4*(out_channel//4), H, W).

    Callers that can stay NHWC end-to-end should use multi_atrous_nhwc directly and skip
    these two boundary transposes (under jit, the entry transpose fuses with the pad).
    """
    x_nhwc = jnp.transpose(x_nchw, (0, 2, 3, 1))
    out_nhwc = multi_atrous_nhwc(params, x_nhwc, compute_dtype=compute_dtype)
    return jnp.transpose(out_nhwc, (0, 3, 1, 2))


# -------------------------- params --------------------------

def init_multi_atrous_params(key, in_channel, out_channel):
    c4 = out_channel // 4
    params = {}
    keys = jax.random.split(key, 2 * (len(DILATION_RATES) + 1))
    for i, _ in enumerate(DILATION_RATES):
        fan_in = in_channel * 9
        bound = 1.0 / np.sqrt(fan_in)
        params[f"dconv{i}_w"] = jax.random.uniform(
            keys[2 * i], (3, 3, in_channel, c4), jnp.float32, -bound, bound)   # HWIO
        params[f"dconv{i}_b"] = jax.random.uniform(
            keys[2 * i + 1], (c4,), jnp.float32, -bound, bound)
    bound = 1.0 / np.sqrt(in_channel)
    params["gap_w"] = jax.random.uniform(
        keys[-2], (in_channel, c4), jnp.float32, -bound, bound)
    params["gap_b"] = jax.random.uniform(
        keys[-1], (c4,), jnp.float32, -bound, bound)
    return params


# -------------------------- reference (plain JAX) for verification --------------------------

def multi_atrous_reference(params, x_nchw):
    feats = []
    for i, r in enumerate(DILATION_RATES):
        w = jnp.transpose(params[f"dconv{i}_w"], (3, 2, 0, 1))   # HWIO -> OIHW
        y = jax.lax.conv_general_dilated(
            x_nchw, w, window_strides=(1, 1), padding=[(r, r), (r, r)],
            rhs_dilation=(r, r), dimension_numbers=("NCHW", "OIHW", "NCHW"))
        feats.append(y + params[f"dconv{i}_b"].reshape(1, -1, 1, 1))
    mean = jnp.mean(x_nchw, axis=(2, 3))                              # (N, Cin)
    v = jnp.maximum(mean @ params["gap_w"] + params["gap_b"], 0.0)    # (N, C4)
    H, W = x_nchw.shape[2], x_nchw.shape[3]
    feats.append(jnp.broadcast_to(v[:, :, None, None], (x_nchw.shape[0], v.shape[1], H, W)))
    return jnp.concatenate(feats, axis=1)


# -------------------------- main --------------------------

if __name__ == "__main__":
    N, Cin, H, W = 2, 4, 16, 16          # size=16 (gap branch upsamples to (16,16))
    out_channel = 8                       # each branch emits out_channel//4 = 2 channels

    key = jax.random.PRNGKey(0)
    kx, kp = jax.random.split(key)
    x = jax.random.normal(kx, (N, Cin, H, W), jnp.float32)
    params = init_multi_atrous_params(kp, Cin, out_channel)

    @jax.jit
    def run(p, xx):
        # f32 MXU operands here to hold the 1e-4 check; pass compute_dtype=jnp.bfloat16
        # on v6e/v7x for 2x MXU throughput and halved slice/DMA traffic in production.
        return multi_atrous_forward(p, xx)

    out = jax.block_until_ready(run(params, x))

    ref = jax.block_until_ready(multi_atrous_reference(params, x))
    np.testing.assert_allclose(np.asarray(out), np.asarray(ref), rtol=1e-4, atol=1e-4)
    assert out.shape == (N, out_channel, H, W)

    print("KERNEL_OK")
</pallas_src>

<mosaic_0001>
module attributes {stable_mosaic.version = 11 : i64} {
  func.func @_multi_atrous_fused_kernel(%arg0: i32, %arg1: memref<1x34x34x4xf32, #tpu.memory_space<vmem>>, %arg2: memref<3x9x4x2xf32, #tpu.memory_space<vmem>>, %arg3: memref<3x1x2xf32, #tpu.memory_space<vmem>>, %arg4: memref<1x1x2xf32, #tpu.memory_space<vmem>>, %arg5: memref<1x256x8xf32, #tpu.memory_space<vmem>>) attributes {dimension_semantics = [#tpu.dimension_semantics<parallel>], iteration_bounds = array<i64: 2>, scalar_prefetch = 0 : i64, scratch_operands = 0 : i64, tpu.core_type = #tpu.core_type<tc>, window_params = [{transform_indices = @transform_0, window_bounds = array<i64: 1, 34, 34, 4>}, {pipeline_mode = #tpu.pipeline_mode<synchronous>, transform_indices = @transform_1, window_bounds = array<i64: 3, 9, 4, 2>}, {pipeline_mode = #tpu.pipeline_mode<synchronous>, transform_indices = @transform_2, window_bounds = array<i64: 3, 1, 2>}, {transform_indices = @transform_3, window_bounds = array<i64: 1, 1, 2>}, {transform_indices = @transform_4, window_bounds = array<i64: 1, 256, 8>}]} {
    %cst = arith.constant 0.000000e+00 : f32
    %0 = vector.broadcast %cst : f32 to vector<256x2xf32>
    %c0 = arith.constant 0 : index
    %c6 = arith.constant 6 : index
    %c6_0 = arith.constant 6 : index
    %c0_1 = arith.constant 0 : index
    %1 = vector.load %arg1[%c0, %c6, %c6_0, %c0_1] : memref<1x34x34x4xf32, #tpu.memory_space<vmem>>, vector<1x16x16x4xf32>
    %2 = vector.shape_cast %1 : vector<1x16x16x4xf32> to vector<16x16x4xf32>
    %3 = vector.shape_cast %2 : vector<16x16x4xf32> to vector<256x4xf32>
    %c0_2 = arith.constant 0 : index
    %c0_3 = arith.constant 0 : index
    %c0_4 = arith.constant 0 : index
    %c0_5 = arith.constant 0 : index
    %4 = vector.load %arg2[%c0_2, %c0_3, %c0_4, %c0_5] : memref<3x9x4x2xf32, #tpu.memory_space<vmem>>, vector<1x1x4x2xf32>
    %5 = vector.shape_cast %4 : vector<1x1x4x2xf32> to vector<4x2xf32>
    %cst_6 = arith.constant dense<0.000000e+00> : vector<256x2xf32>
    %6 = tpu.matmul %3, %5, %cst_6 {dimension_numbers = #tpu.dot_dimension_numbers<[1], [0], [0], [1], [0, 0, 1, 1], [], []>} : vector<256x4xf32>, vector<4x2xf32>, vector<256x2xf32> -> vector<256x2xf32>
    %7 = arith.addf %0, %6 : vector<256x2xf32>
    %c0_7 = arith.constant 0 : index
    %c6_8 = arith.constant 6 : index
    %c9 = arith.constant 9 : index
    %c0_9 = arith.constant 0 : index
    %8 = vector.load %arg1[%c0_7, %c6_8, %c9, %c0_9] : memref<1x34x34x4xf32, #tpu.memory_space<vmem>>, vector<1x16x16x4xf32>
    %9 = vector.shape_cast %8 : vector<1x16x16x4xf32> to vector<16x16x4xf32>
    %10 = vector.shape_cast %9 : vector<16x16x4xf32> to vector<256x4xf32>
    %c0_10 = arith.constant 0 : index
    %c1 = arith.constant 1 : index
    %c0_11 = arith.constant 0 : index
    %c0_12 = arith.constant 0 : index
    %11 = vector.load %arg2[%c0_10, %c1, %c0_11, %c0_12] : memref<3x9x4x2xf32, #tpu.memory_space<vmem>>, vector<1x1x4x2xf32>
    %12 = vector.shape_cast %11 : vector<1x1x4x2xf32> to vector<4x2xf32>
    %cst_13 = arith.constant dense<0.000000e+00> : vector<256x2xf32>
    %13 = tpu.matmul %10, %12, %cst_13 {dimension_numbers = #tpu.dot_dimension_numbers<[1], [0], [0], [1], [0, 0, 1, 1], [], []>} : vector<256x4xf32>, vector<4x2xf32>, vector<256x2xf32> -> vector<256x2xf32>
    %14 = arith.addf %7, %13 : vector<256x2xf32>
    %c0_14 = arith.constant 0 : index
    %c6_15 = arith.constant 6 : index
    %c12 = arith.constant 12 : index
    %c0_16 = arith.constant 0 : index
    %15 = vector.load %arg1[%c0_14, %c6_15, %c12, %c0_16] : memref<1x34x34x4xf32, #tpu.memory_space<vmem>>, vector<1x16x16x4xf32>
    %16 = vector.shape_cast %15 : vector<1x16x16x4xf32> to vector<16x16x4xf32>
    %17 = vector.shape_cast %16 : vector<16x16x4xf32> to vector<256x4xf32>
    %c0_17 = arith.constant 0 : index
    %c2 = arith.constant 2 : index
    %c0_18 = arith.constant 0 : index
    %c0_19 = arith.constant 0 : index
    %18 = vector.load %arg2[%c0_17, %c2, %c0_18, %c0_19] : memref<3x9x4x2xf32, #tpu.memory_space<vmem>>, vector<1x1x4x2xf32>
    %19 = vector.shape_cast %18 : vector<1x1x4x2xf32> to vector<4x2xf32>
    %cst_20 = arith.constant dense<0.000000e+00> : vector<256x2xf32>
    %20 = tpu.matmul %17, %19, %cst_20 {dimension_numbers = #tpu.dot_dimension_numbers<[1], [0], [0], [1], [0, 0, 1, 1], [], []>} : vector<256x4xf32>, vector<4x2xf32>, vector<256x2xf32> -> vector<256x2xf32>
    %21 = arith.addf %14, %20 : vector<256x2xf32>
    %c0_21 = arith.constant 0 : index
    %c9_22 = arith.constant 9 : index
    %c6_23 = arith.constant 6 : index
    %c0_24 = arith.constant 0 : index
    %22 = vector.load %arg1[%c0_21, %c9_22, %c6_23, %c0_24] : memref<1x34x34x4xf32, #tpu.memory_space<vmem>>, vector<1x16x16x4xf32>
    %23 = vector.shape_cast %22 : vector<1x16x16x4xf32> to vector<16x16x4xf32>
    %24 = vector.shape_cast %23 : vector<16x16x4xf32> to vector<256x4xf32>
    %c0_25 = arith.constant 0 : index
    %c3 = arith.constant 3 : index
    %c0_26 = arith.constant 0 : index
    %c0_27 = arith.constant 0 : index
    %25 = vector.load %arg2[%c0_25, %c3, %c0_26, %c0_27] : memref<3x9x4x2xf32, #tpu.memory_space<vmem>>, vector<1x1x4x2xf32>
    %26 = vector.shape_cast %25 : vector<1x1x4x2xf32> to vector<4x2xf32>
    %cst_28 = arith.constant dense<0.000000e+00> : vector<256x2xf32>
    %27 = tpu.matmul %24, %26, %cst_28 {dimension_numbers = #tpu.dot_dimension_numbers<[1], [0], [0], [1], [0, 0, 1, 1], [], []>} : vector<256x4xf32>, vector<4x2xf32>, vector<256x2xf32> -> vector<256x2xf32>
    %28 = arith.addf %21, %27 : vector<256x2xf32>
    %c0_29 = arith.constant 0 : index
    %c9_30 = arith.constant 9 : index
    %c9_31 = arith.constant 9 : index
    %c0_32 = arith.constant 0 : index
    %29 = vector.load %arg1[%c0_29, %c9_30, %c9_31, %c0_32] : memref<1x34x34x4xf32, #tpu.memory_space<vmem>>, vector<1x16x16x4xf32>
    %30 = vector.shape_cast %29 : vector<1x16x16x4xf32> to vector<16x16x4xf32>
    %31 = vector.shape_cast %30 : vector<16x16x4xf32> to vector<256x4xf32>
    %c0_33 = arith.constant 0 : index
    %c4 = arith.constant 4 : index
    %c0_34 = arith.constant 0 : index
    %c0_35 = arith.constant 0 : index
    %32 = vector.load %arg2[%c0_33, %c4, %c0_34, %c0_35] : memref<3x9x4x2xf32, #tpu.memory_space<vmem>>, vector<1x1x4x2xf32>
    %33 = vector.shape_cast %32 : vector<1x1x4x2xf32> to vector<4x2xf32>
    %cst_36 = arith.constant dense<0.000000e+00> : vector<256x2xf32>
    %34 = tpu.matmul %31, %33, %cst_36 {dimension_numbers = #tpu.dot_dimension_numbers<[1], [0], [0], [1], [0, 0, 1, 1], [], []>} : vector<256x4xf32>, vector<4x2xf32>, vector<256x2xf32> -> vector<256x2xf32>
    %35 = arith.addf %28, %34 : vector<256x2xf32>
    %c0_37 = arith.constant 0 : index
    %c9_38 = arith.constant 9 : index
    %c12_39 = arith.constant 12 : index
    %c0_40 = arith.constant 0 : index
    %36 = vector.load %arg1[%c0_37, %c9_38, %c12_39, %c0_40] : memref<1x34x34x4xf32, #tpu.memory_space<vmem>>, vector<1x16x16x4xf32>
    %37 = vector.shape_cast %36 : vector<1x16x16x4xf32> to vector<16x16x4xf32>
    %38 = vector.shape_cast %37 : vector<16x16x4xf32> to vector<256x4xf32>
    %c0_41 = arith.constant 0 : index
    %c5 = arith.constant 5 : index
    %c0_42 = arith.constant 0 : index
    %c0_43 = arith.constant 0 : index
    %39 = vector.load %arg2[%c0_41, %c5, %c0_42, %c0_43] : memref<3x9x4x2xf32, #tpu.memory_space<vmem>>, vector<1x1x4x2xf32>
    %40 = vector.shape_cast %39 : vector<1x1x4x2xf32> to vector<4x2xf32>
    %cst_44 = arith.constant dense<0.000000e+00> : vector<256x2xf32>
    %41 = tpu.matmul %38, %40, %cst_44 {dimension_numbers = #tpu.dot_dimension_numbers<[1], [0], [0], [1], [0, 0, 1, 1], [], []>} : vector<256x4xf32>, vector<4x2xf32>, vector<256x2xf32> -> vector<256x2xf32>
    %42 = arith.addf %35, %41 : vector<256x2xf32>
    %c0_45 = arith.constant 0 : index
    %c12_46 = arith.constant 12 : index
    %c6_47 = arith.constant 6 : index
    %c0_48 = arith.constant 0 : index
    %43 = vector.load %arg1[%c0_45, %c12_46, %c6_47, %c0_48] : memref<1x34x34x4xf32, #tpu.memory_space<vmem>>, vector<1x16x16x4xf32>
    %44 = vector.shape_cast %43 : vector<1x16x16x4xf32> to vector<16x16x4xf32>
    %45 = vector.shape_cast %44 : vector<16x16x4xf32> to vector<256x4xf32>
    %c0_49 = arith.constant 0 : index
    %c6_50 = arith.constant 6 : index
    %c0_51 = arith.constant 0 : index
    %c0_52 = arith.constant 0 : index
    %46 = vector.load %arg2[%c0_49, %c6_50, %c0_51, %c0_52] : memref<3x9x4x2xf32, #tpu.memory_space<vmem>>, vector<1x1x4x2xf32>
    %47 = vector.shape_cast %46 : vector<1x1x4x2xf32> to vector<4x2xf32>
    %cst_53 = arith.constant dense<0.000000e+00> : vector<256x2xf32>
    %48 = tpu.matmul %45, %47, %cst_53 {dimension_numbers = #tpu.dot_dimension_numbers<[1], [0], [0], [1], [0, 0, 1, 1], [], []>} : vector<256x4xf32>, vector<4x2xf32>, vector<256x2xf32> -> vector<256x2xf32>
    %49 = arith.addf %42, %48 : vector<256x2xf32>
    %c0_54 = arith.constant 0 : index
    %c12_55 = arith.constant 12 : index
    %c9_56 = arith.constant 9 : index
    %c0_57 = arith.constant 0 : index
    %50 = vector.load %arg1[%c0_54, %c12_55, %c9_56, %c0_57] : memref<1x34x34x4xf32, #tpu.memory_space<vmem>>, vector<1x16x16x4xf32>
    %51 = vector.shape_cast %50 : vector<1x16x16x4xf32> to vector<16x16x4xf32>
    %52 = vector.shape_cast %51 : vector<16x16x4xf32> to vector<256x4xf32>
    %c0_58 = arith.constant 0 : index
    %c7 = arith.constant 7 : index
    %c0_59 = arith.constant 0 : index
    %c0_60 = arith.constant 0 : index
    %53 = vector.load %arg2[%c0_58, %c7, %c0_59, %c0_60] : memref<3x9x4x2xf32, #tpu.memory_space<vmem>>, vector<1x1x4x2xf32>
    %54 = vector.shape_cast %53 : vector<1x1x4x2xf32> to vector<4x2xf32>
    %cst_61 = arith.constant dense<0.000000e+00> : vector<256x2xf32>
    %55 = tpu.matmul %52, %54, %cst_61 {dimension_numbers = #tpu.dot_dimension_numbers<[1], [0], [0], [1], [0, 0, 1, 1], [], []>} : vector<256x4xf32>, vector<4x2xf32>, vector<256x2xf32> -> vector<256x2xf32>
    %56 = arith.addf %49, %55 : vector<256x2xf32>
    %c0_62 = arith.constant 0 : index
    %c12_63 = arith.constant 12 : index
    %c12_64 = arith.constant 12 : index
    %c0_65 = arith.constant 0 : index
    %57 = vector.load %arg1[%c0_62, %c12_63, %c12_64, %c0_65] : memref<1x34x34x4xf32, #tpu.memory_space<vmem>>, vector<1x16x16x4xf32>
    %58 = vector.shape_cast %57 : vector<1x16x16x4xf32> to vector<16x16x4xf32>
    %59 = vector.shape_cast %58 : vector<16x16x4xf32> to vector<256x4xf32>
    %c0_66 = arith.constant 0 : index
    %c8 = arith.constant 8 : index
    %c0_67 = arith.constant 0 : index
    %c0_68 = arith.constant 0 : index
    %60 = vector.load %arg2[%c0_66, %c8, %c0_67, %c0_68] : memref<3x9x4x2xf32, #tpu.memory_space<vmem>>, vector<1x1x4x2xf32>
    %61 = vector.shape_cast %60 : vector<1x1x4x2xf32> to vector<4x2xf32>
    %cst_69 = arith.constant dense<0.000000e+00> : vector<256x2xf32>
    %62 = tpu.matmul %59, %61, %cst_69 {dimension_numbers = #tpu.dot_dimension_numbers<[1], [0], [0], [1], [0, 0, 1, 1], [], []>} : vector<256x4xf32>, vector<4x2xf32>, vector<256x2xf32> -> vector<256x2xf32>
    %63 = arith.addf %56, %62 : vector<256x2xf32>
    %c0_70 = arith.constant 0 : index
    %c0_71 = arith.constant 0 : index
    %c0_72 = arith.constant 0 : index
    %64 = vector.load %arg3[%c0_70, %c0_71, %c0_72] : memref<3x1x2xf32, #tpu.memory_space<vmem>>, vector<1x1x2xf32>
    %65 = vector.shape_cast %64 : vector<1x1x2xf32> to vector<1x2xf32>
    %66 = vector.broadcast %65 : vector<1x2xf32> to vector<256x2xf32>
    %67 = arith.addf %63, %66 : vector<256x2xf32>
    %c0_73 = arith.constant 0 : index
    %c0_74 = arith.constant 0 : index
    %c0_75 = arith.constant 0 : index
    %68 = vector.load %arg5[%c0_73, %c0_74, %c0_75] : memref<1x256x8xf32, #tpu.memory_space<vmem>>, vector<1x256x2xf32>
    %69 = vector.shape_cast %68 : vector<1x256x2xf32> to vector<256x2xf32>
    %70 = vector.shape_cast %67 : vector<256x2xf32> to vector<1x256x2xf32>
    tpu.vector_store %arg5[%c0_73, %c0_74, %c0_75], %70 {strides = array<i32>} : memref<1x256x8xf32, #tpu.memory_space<vmem>>, vector<1x256x2xf32>,
    %cst_76 = arith.constant 0.000000e+00 : f32
    %71 = vector.broadcast %cst_76 : f32 to vector<256x2xf32>
    %c0_77 = arith.constant 0 : index
    %c3_78 = arith.constant 3 : index
    %c3_79 = arith.constant 3 : index
    %c0_80 = arith.constant 0 : index
    %72 = vector.load %arg1[%c0_77, %c3_78, %c3_79, %c0_80] : memref<1x34x34x4xf32, #tpu.memory_space<vmem>>, vector<1x16x16x4xf32>
    %73 = vector.shape_cast %72 : vector<1x16x16x4xf32> to vector<16x16x4xf32>
    %74 = vector.shape_cast %73 : vector<16x16x4xf32> to vector<256x4xf32>
    %c1_81 = arith.constant 1 : index
    %c0_82 = arith.constant 0 : index
    %c0_83 = arith.constant 0 : index
    %c0_84 = arith.constant 0 : index
    %75 = vector.load %arg2[%c1_81, %c0_82, %c0_83, %c0_84] : memref<3x9x4x2xf32, #tpu.memory_space<vmem>>, vector<1x1x4x2xf32>
    %76 = vector.shape_cast %75 : vector<1x1x4x2xf32> to vector<4x2xf32>
    %cst_85 = arith.constant dense<0.000000e+00> : vector<256x2xf32>
    %77 = tpu.matmul %74, %76, %cst_85 {dimension_numbers = #tpu.dot_dimension_numbers<[1], [0], [0], [1], [0, 0, 1, 1], [], []>} : vector<256x4xf32>, vector<4x2xf32>, vector<256x2xf32> -> vector<256x2xf32>
    %78 = arith.addf %71, %77 : vector<256x2xf32>
    %c0_86 = arith.constant 0 : index
    %c3_87 = arith.constant 3 : index
    %c9_88 = arith.constant 9 : index
    %c0_89 = arith.constant 0 : index
    %79 = vector.load %arg1[%c0_86, %c3_87, %c9_88, %c0_89] : memref<1x34x34x4xf32, #tpu.memory_space<vmem>>, vector<1x16x16x4xf32>
    %80 = vector.shape_cast %79 : vector<1x16x16x4xf32> to vector<16x16x4xf32>
    %81 = vector.shape_cast %80 : vector<16x16x4xf32> to vector<256x4xf32>
    %c1_90 = arith.constant 1 : index
    %c1_91 = arith.constant 1 : index
    %c0_92 = arith.constant 0 : index
    %c0_93 = arith.constant 0 : index
    %82 = vector.load %arg2[%c1_90, %c1_91, %c0_92, %c0_93] : memref<3x9x4x2xf32, #tpu.memory_space<vmem>>, vector<1x1x4x2xf32>
    %83 = vector.shape_cast %82 : vector<1x1x4x2xf32> to vector<4x2xf32>
    %cst_94 = arith.constant dense<0.000000e+00> : vector<256x2xf32>
    %84 = tpu.matmul %81, %83, %cst_94 {dimension_numbers = #tpu.dot_dimension_numbers<[1], [0], [0], [1], [0, 0, 1, 1], [], []>} : vector<256x4xf32>, vector<4x2xf32>, vector<256x2xf32> -> vector<256x2xf32>
    %85 = arith.addf %78, %84 : vector<256x2xf32>
    %c0_95 = arith.constant 0 : index
    %c3_96 = arith.constant 3 : index
    %c15 = arith.constant 15 : index
    %c0_97 = arith.constant 0 : index
    %86 = vector.load %arg1[%c0_95, %c3_96, %c15, %c0_97] : memref<1x34x34x4xf32, #tpu.memory_space<vmem>>, vector<1x16x16x4xf32>
    %87 = vector.shape_cast %86 : vector<1x16x16x4xf32> to vector<16x16x4xf32>
    %88 = vector.shape_cast %87 : vector<16x16x4xf32> to vector<256x4xf32>
    %c1_98 = arith.constant 1 : index
    %c2_99 = arith.constant 2 : index
    %c0_100 = arith.constant 0 : index
    %c0_101 = arith.constant 0 : index
    %89 = vector.load %arg2[%c1_98, %c2_99, %c0_100, %c0_101] : memref<3x9x4x2xf32, #tpu.memory_space<vmem>>, vector<1x1x4x2xf32>
    %90 = vector.shape_cast %89 : vector<1x1x4x2xf32> to vector<4x2xf32>
    %cst_102 = arith.constant dense<0.000000e+00> : vector<256x2xf32>
    %91 = tpu.matmul %88, %90, %cst_102 {dimension_numbers = #tpu.dot_dimension_numbers<[1], [0], [0], [1], [0, 0, 1, 1], [], []>} : vector<256x4xf32>, vector<4x2xf32>, vector<256x2xf32> -> vector<256x2xf32>
    %92 = arith.addf %85, %91 : vector<256x2xf32>
    %c0_103 = arith.constant 0 : index
    %c9_104 = arith.constant 9 : index
    %c3_105 = arith.constant 3 : index
    %c0_106 = arith.constant 0 : index
    %93 = vector.load %arg1[%c0_103, %c9_104, %c3_105, %c0_106] : memref<1x34x34x4xf32, #tpu.memory_space<vmem>>, vector<1x16x16x4xf32>
    %94 = vector.shape_cast %93 : vector<1x16x16x4xf32> to vector<16x16x4xf32>
    %95 = vector.shape_cast %94 : vector<16x16x4xf32> to vector<256x4xf32>
    %c1_107 = arith.constant 1 : index
    %c3_108 = arith.constant 3 : index
    %c0_109 = arith.constant 0 : index
    %c0_110 = arith.constant 0 : index
    %96 = vector.load %arg2[%c1_107, %c3_108, %c0_109, %c0_110] : memref<3x9x4x2xf32, #tpu.memory_space<vmem>>, vector<1x1x4x2xf32>
    %97 = vector.shape_cast %96 : vector<1x1x4x2xf32> to vector<4x2xf32>
    %cst_111 = arith.constant dense<0.000000e+00> : vector<256x2xf32>
    %98 = tpu.matmul %95, %97, %cst_111 {dimension_numbers = #tpu.dot_dimension_numbers<[1], [0], [0], [1], [0, 0, 1, 1], [], []>} : vector<256x4xf32>, vector<4x2xf32>, vector<256x2xf32> -> vector<256x2xf32>
    %99 = arith.addf %92, %98 : vector<256x2xf32>
    %c0_112 = arith.constant 0 : index
    %c9_113 = arith.constant 9 : index
    %c9_114 = arith.constant 9 : index
    %c0_115 = arith.constant 0 : index
    %100 = vector.load %arg1[%c0_112, %c9_113, %c9_114, %c0_115] : memref<1x34x34x4xf32, #tpu.memory_space<vmem>>, vector<1x16x16x4xf32>
    %101 = vector.shape_cast %100 : vector<1x16x16x4xf32> to vector<16x16x4xf32>
    %102 = vector.shape_cast %101 : vector<16x16x4xf32> to vector<256x4xf32>
    %c1_116 = arith.constant 1 : index
    %c4_117 = arith.constant 4 : index
    %c0_118 = arith.constant 0 : index
    %c0_119 = arith.constant 0 : index
    %103 = vector.load %arg2[%c1_116, %c4_117, %c0_118, %c0_119] : memref<3x9x4x2xf32, #tpu.memory_space<vmem>>, vector<1x1x4x2xf32>
    %104 = vector.shape_cast %103 : vector<1x1x4x2xf32> to vector<4x2xf32>
    %cst_120 = arith.constant dense<0.000000e+00> : vector<256x2xf32>
    %105 = tpu.matmul %102, %104, %cst_120 {dimension_numbers = #tpu.dot_dimension_numbers<[1], [0], [0], [1], [0, 0, 1, 1], [], []>} : vector<256x4xf32>, vector<4x2xf32>, vector<256x2xf32> -> vector<256x2xf32>
    %106 = arith.addf %99, %105 : vector<256x2xf32>
    %c0_121 = arith.constant 0 : index
    %c9_122 = arith.constant 9 : index
    %c15_123 = arith.constant 15 : index
    %c0_124 = arith.constant 0 : index
    %107 = vector.load %arg1[%c0_121, %c9_122, %c15_123, %c0_124] : memref<1x34x34x4xf32, #tpu.memory_space<vmem>>, vector<1x16x16x4xf32>
    %108 = vector.shape_cast %107 : vector<1x16x16x4xf32> to vector<16x16x4xf32>
    %109 = vector.shape_cast %108 : vector<16x16x4xf32> to vector<256x4xf32>
    %c1_125 = arith.constant 1 : index
    %c5_126 = arith.constant 5 : index
    %c0_127 = arith.constant 0 : index
    %c0_128 = arith.constant 0 : index
    %110 = vector.load %arg2[%c1_125, %c5_126, %c0_127, %c0_128] : memref<3x9x4x2xf32, #tpu.memory_space<vmem>>, vector<1x1x4x2xf32>
    %111 = vector.shape_cast %110 : vector<1x1x4x2xf32> to vector<4x2xf32>
    %cst_129 = arith.constant dense<0.000000e+00> : vector<256x2xf32>
    %112 = tpu.matmul %109, %111, %cst_129 {dimension_numbers = #tpu.dot_dimension_numbers<[1], [0], [0], [1], [0, 0, 1, 1], [], []>} : vector<256x4xf32>, vector<4x2xf32>, vector<256x2xf32> -> vector<256x2xf32>
    %113 = arith.addf %106, %112 : vector<256x2xf32>
    %c0_130 = arith.constant 0 : index
    %c15_131 = arith.constant 15 : index
    %c3_132 = arith.constant 3 : index
    %c0_133 = arith.constant 0 : index
    %114 = vector.load %arg1[%c0_130, %c15_131, %c3_132, %c0_133] : memref<1x34x34x4xf32, #tpu.memory_space<vmem>>, vector<1x16x16x4xf32>
    %115 = vector.shape_cast %114 : vector<1x16x16x4xf32> to vector<16x16x4xf32>
    %116 = vector.shape_cast %115 : vector<16x16x4xf32> to vector<256x4xf32>
    %c1_134 = arith.constant 1 : index
    %c6_135 = arith.constant 6 : index
    %c0_136 = arith.constant 0 : index
    %c0_137 = arith.constant 0 : index
    %117 = vector.load %arg2[%c1_134, %c6_135, %c0_136, %c0_137] : memref<3x9x4x2xf32, #tpu.memory_space<vmem>>, vector<1x1x4x2xf32>
    %118 = vector.shape_cast %117 : vector<1x1x4x2xf32> to vector<4x2xf32>
    %cst_138 = arith.constant dense<0.000000e+00> : vector<256x2xf32>
    %119 = tpu.matmul %116, %118, %cst_138 {dimension_numbers = #tpu.dot_dimension_numbers<[1], [0], [0], [1], [0, 0, 1, 1], [], []>} : vector<256x4xf32>, vector<4x2xf32>, vector<256x2xf32> -> vector<256x2xf32>
    %120 = arith.addf %113, %119 : vector<256x2xf32>
    %c0_139 = arith.constant 0 : index
    %c15_140 = arith.constant 15 : index
    %c9_141 = arith.constant 9 : index
    %c0_142 = arith.constant 0 : index
    %121 = vector.load %arg1[%c0_139, %c15_140, %c9_141, %c0_142] : memref<1x34x34x4xf32, #tpu.memory_space<vmem>>, vector<1x16x16x4xf32>
    %122 = vector.shape_cast %121 : vector<1x16x16x4xf32> to vector<16x16x4xf32>
    %123 = vector.shape_cast %122 : vector<16x16x4xf32> to vector<256x4xf32>
    %c1_143 = arith.constant 1 : index
    %c7_144 = arith.constant 7 : index
    %c0_145 = arith.constant 0 : index
    %c0_146 = arith.constant 0 : index
    %124 = vector.load %arg2[%c1_143, %c7_144, %c0_145, %c0_146] : memref<3x9x4x2xf32, #tpu.memory_space<vmem>>, vector<1x1x4x2xf32>
    %125 = vector.shape_cast %124 : vector<1x1x4x2xf32> to vector<4x2xf32>
    %cst_147 = arith.constant dense<0.000000e+00> : vector<256x2xf32>
    %126 = tpu.matmul %123, %125, %cst_147 {dimension_numbers = #tpu.dot_dimension_numbers<[1], [0], [0], [1], [0, 0, 1, 1], [], []>} : vector<256x4xf32>, vector<4x2xf32>, vector<256x2xf32> -> vector<256x2xf32>
    %127 = arith.addf %120, %126 : vector<256x2xf32>
    %c0_148 = arith.constant 0 : index
    %c15_149 = arith.constant 15 : index
    %c15_150 = arith.constant 15 : index
    %c0_151 = arith.constant 0 : index
    %128 = vector.load %arg1[%c0_148, %c15_149, %c15_150, %c0_151] : memref<1x34x34x4xf32, #tpu.memory_space<vmem>>, vector<1x16x16x4xf32>
    %129 = vector.shape_cast %128 : vector<1x16x16x4xf32> to vector<16x16x4xf32>
    %130 = vector.shape_cast %129 : vector<16x16x4xf32> to vector<256x4xf32>
    %c1_152 = arith.constant 1 : index
    %c8_153 = arith.constant 8 : index
    %c0_154 = arith.constant 0 : index
    %c0_155 = arith.constant 0 : index
    %131 = vector.load %arg2[%c1_152, %c8_153, %c0_154, %c0_155] : memref<3x9x4x2xf32, #tpu.memory_space<vmem>>, vector<1x1x4x2xf32>
    %132 = vector.shape_cast %131 : vector<1x1x4x2xf32> to vector<4x2xf32>
    %cst_156 = arith.constant dense<0.000000e+00> : vector<256x2xf32>
    %133 = tpu.matmul %130, %132, %cst_156 {dimension_numbers = #tpu.dot_dimension_numbers<[1], [0], [0], [1], [0, 0, 1, 1], [], []>} : vector<256x4xf32>, vector<4x2xf32>, vector<256x2xf32> -> vector<256x2xf32>
    %134 = arith.addf %127, %133 : vector<256x2xf32>
    %c1_157 = arith.constant 1 : index
    %c0_158 = arith.constant 0 : index
    %c0_159 = arith.constant 0 : index
    %135 = vector.load %arg3[%c1_157, %c0_158, %c0_159] : memref<3x1x2xf32, #tpu.memory_space<vmem>>, vector<1x1x2xf32>
    %136 = vector.shape_cast %135 : vector<1x1x2xf32> to vector<1x2xf32>
    %137 = vector.broadcast %136 : vector<1x2xf32> to vector<256x2xf32>
    %138 = arith.addf %134, %137 : vector<256x2xf32>
    %c0_160 = arith.constant 0 : index
    %c0_161 = arith.constant 0 : index
    %c2_162 = arith.constant 2 : index
    %139 = vector.load %arg5[%c0_160, %c0_161, %c2_162] : memref<1x256x8xf32, #tpu.memory_space<vmem>>, vector<1x256x2xf32>
    %140 = vector.shape_cast %139 : vector<1x256x2xf32> to vector<256x2xf32>
    %141 = vector.shape_cast %138 : vector<256x2xf32> to vector<1x256x2xf32>
    tpu.vector_store %arg5[%c0_160, %c0_161, %c2_162], %141 {strides = array<i32>} : memref<1x256x8xf32, #tpu.memory_space<vmem>>, vector<1x256x2xf32>,
    %cst_163 = arith.constant 0.000000e+00 : f32
    %142 = vector.broadcast %cst_163 : f32 to vector<256x2xf32>
    %c0_164 = arith.constant 0 : index
    %c0_165 = arith.constant 0 : index
    %c0_166 = arith.constant 0 : index
    %c0_167 = arith.constant 0 : index
    %143 = vector.load %arg1[%c0_164, %c0_165, %c0_166, %c0_167] : memref<1x34x34x4xf32, #tpu.memory_space<vmem>>, vector<1x16x16x4xf32>
    %144 = vector.shape_cast %143 : vector<1x16x16x4xf32> to vector<16x16x4xf32>
    %145 = vector.shape_cast %144 : vector<16x16x4xf32> to vector<256x4xf32>
    %c2_168 = arith.constant 2 : index
    %c0_169 = arith.constant 0 : index
    %c0_170 = arith.constant 0 : index
    %c0_171 = arith.constant 0 : index
    %146 = vector.load %arg2[%c2_168, %c0_169, %c0_170, %c0_171] : memref<3x9x4x2xf32, #tpu.memory_space<vmem>>, vector<1x1x4x2xf32>
    %147 = vector.shape_cast %146 : vector<1x1x4x2xf32> to vector<4x2xf32>
    %cst_172 = arith.constant dense<0.000000e+00> : vector<256x2xf32>
    %148 = tpu.matmul %145, %147, %cst_172 {dimension_numbers = #tpu.dot_dimension_numbers<[1], [0], [0], [1], [0, 0, 1, 1], [], []>} : vector<256x4xf32>, vector<4x2xf32>, vector<256x2xf32> -> vector<256x2xf32>
    %149 = arith.addf %142, %148 : vector<256x2xf32>
    %c0_173 = arith.constant 0 : index
    %c0_174 = arith.constant 0 : index
    %c9_175 = arith.constant 9 : index
    %c0_176 = arith.constant 0 : index
    %150 = vector.load %arg1[%c0_173, %c0_174, %c9_175, %c0_176] : memref<1x34x34x4xf32, #tpu.memory_space<vmem>>, vector<1x16x16x4xf32>
    %151 = vector.shape_cast %150 : vector<1x16x16x4xf32> to vector<16x16x4xf32>
    %152 = vector.shape_cast %151 : vector<16x16x4xf32> to vector<256x4xf32>
    %c2_177 = arith.constant 2 : index
    %c1_178 = arith.constant 1 : index
    %c0_179 = arith.constant 0 : index
    %c0_180 = arith.constant 0 : index
    %153 = vector.load %arg2[%c2_177, %c1_178, %c0_179, %c0_180] : memref<3x9x4x2xf32, #tpu.memory_space<vmem>>, vector<1x1x4x2xf32>
    %154 = vector.shape_cast %153 : vector<1x1x4x2xf32> to vector<4x2xf32>
    %cst_181 = arith.constant dense<0.000000e+00> : vector<256x2xf32>
    %155 = tpu.matmul %152, %154, %cst_181 {dimension_numbers = #tpu.dot_dimension_numbers<[1], [0], [0], [1], [0, 0, 1, 1], [], []>} : vector<256x4xf32>, vector<4x2xf32>, vector<256x2xf32> -> vector<256x2xf32>
    %156 = arith.addf %149, %155 : vector<256x2xf32>
    %c0_182 = arith.constant 0 : index
    %c0_183 = arith.constant 0 : index
    %c18 = arith.constant 18 : index
    %c0_184 = arith.constant 0 : index
    %157 = vector.load %arg1[%c0_182, %c0_183, %c18, %c0_184] : memref<1x34x34x4xf32, #tpu.memory_space<vmem>>, vector<1x16x16x4xf32>
    %158 = vector.shape_cast %157 : vector<1x16x16x4xf32> to vector<16x16x4xf32>
    %159 = vector.shape_cast %158 : vector<16x16x4xf32> to vector<256x4xf32>
    %c2_185 = arith.constant 2 : index
    %c2_186 = arith.constant 2 : index
    %c0_187 = arith.constant 0 : index
    %c0_188 = arith.constant 0 : index
    %160 = vector.load %arg2[%c2_185, %c2_186, %c0_187, %c0_188] : memref<3x9x4x2xf32, #tpu.memory_space<vmem>>, vector<1x1x4x2xf32>
    %161 = vector.shape_cast %160 : vector<1x1x4x2xf32> to vector<4x2xf32>
    %cst_189 = arith.constant dense<0.000000e+00> : vector<256x2xf32>
    %162 = tpu.matmul %159, %161, %cst_189 {dimension_numbers = #tpu.dot_dimension_numbers<[1], [0], [0], [1], [0, 0, 1, 1], [], []>} : vector<256x4xf32>, vector<4x2xf32>, vector<256x2xf32> -> vector<256x2xf32>
    %163 = arith.addf %156, %162 : vector<256x2xf32>
    %c0_190 = arith.constant 0 : index
    %c9_191 = arith.constant 9 : index
    %c0_192 = arith.constant 0 : index
    %c0_193 = arith.constant 0 : index
    %164 = vector.load %arg1[%c0_190, %c9_191, %c0_192, %c0_193] : memref<1x34x34x4xf32, #tpu.memory_space<vmem>>, vector<1x16x16x4xf32>
    %165 = vector.shape_cast %164 : vector<1x16x16x4xf32> to vector<16x16x4xf32>
    %166 = vector.shape_cast %165 : vector<16x16x4xf32> to vector<256x4xf32>
    %c2_194 = arith.constant 2 : index
    %c3_195 = arith.constant 3 : index
    %c0_196 = arith.constant 0 : index
    %c0_197 = arith.constant 0 : index
    %167 = vector.load %arg2[%c2_194, %c3_195, %c0_196, %c0_197] : memref<3x9x4x2xf32, #tpu.memory_space<vmem>>, vector<1x1x4x2xf32>
    %168 = vector.shape_cast %167 : vector<1x1x4x2xf32> to vector<4x2xf32>
    %cst_198 = arith.constant dense<0.000000e+00> : vector<256x2xf32>
    %169 = tpu.matmul %166, %168, %cst_198 {dimension_numbers = #tpu.dot_dimension_numbers<[1], [0], [0], [1], [0, 0, 1, 1], [], []>} : vector<256x4xf32>, vector<4x2xf32>, vector<256x2xf32> -> vector<256x2xf32>
    %170 = arith.addf %163, %169 : vector<256x2xf32>
    %c0_199 = arith.constant 0 : index
    %c9_200 = arith.constant 9 : index
    %c9_201 = arith.constant 9 : index
    %c0_202 = arith.constant 0 : index
    %171 = vector.load %arg1[%c0_199, %c9_200, %c9_201, %c0_202] : memref<1x34x34x4xf32, #tpu.memory_space<vmem>>, vector<1x16x16x4xf32>
    %172 = vector.shape_cast %171 : vector<1x16x16x4xf32> to vector<16x16x4xf32>
    %173 = vector.shape_cast %172 : vector<16x16x4xf32> to vector<256x4xf32>
    %c2_203 = arith.constant 2 : index
    %c4_204 = arith.constant 4 : index
    %c0_205 = arith.constant 0 : index
    %c0_206 = arith.constant 0 : index
    %174 = vector.load %arg2[%c2_203, %c4_204, %c0_205, %c0_206] : memref<3x9x4x2xf32, #tpu.memory_space<vmem>>, vector<1x1x4x2xf32>
    %175 = vector.shape_cast %174 : vector<1x1x4x2xf32> to vector<4x2xf32>
    %cst_207 = arith.constant dense<0.000000e+00> : vector<256x2xf32>
    %176 = tpu.matmul %173, %175, %cst_207 {dimension_numbers = #tpu.dot_dimension_numbers<[1], [0], [0], [1], [0, 0, 1, 1], [], []>} : vector<256x4xf32>, vector<4x2xf32>, vector<256x2xf32> -> vector<256x2xf32>
    %177 = arith.addf %170, %176 : vector<256x2xf32>
    %c0_208 = arith.constant 0 : index
    %c9_209 = arith.constant 9 : index
    %c18_210 = arith.constant 18 : index
    %c0_211 = arith.constant 0 : index
    %178 = vector.load %arg1[%c0_208, %c9_209, %c18_210, %c0_211] : memref<1x34x34x4xf32, #tpu.memory_space<vmem>>, vector<1x16x16x4xf32>
    %179 = vector.shape_cast %178 : vector<1x16x16x4xf32> to vector<16x16x4xf32>
    %180 = vector.shape_cast %179 : vector<16x16x4xf32> to vector<256x4xf32>
    %c2_212 = arith.constant 2 : index
    %c5_213 = arith.constant 5 : index
    %c0_214 = arith.constant 0 : index
    %c0_215 = arith.constant 0 : index
    %181 = vector.load %arg2[%c2_212, %c5_213, %c0_214, %c0_215] : memref<3x9x4x2xf32, #tpu.memory_space<vmem>>, vector<1x1x4x2xf32>
    %182 = vector.shape_cast %181 : vector<1x1x4x2xf32> to vector<4x2xf32>
    %cst_216 = arith.constant dense<0.000000e+00> : vector<256x2xf32>
    %183 = tpu.matmul %180, %182, %cst_216 {dimension_numbers = #tpu.dot_dimension_numbers<[1], [0], [0], [1], [0, 0, 1, 1], [], []>} : vector<256x4xf32>, vector<4x2xf32>, vector<256x2xf32> -> vector<256x2xf32>
    %184 = arith.addf %177, %183 : vector<256x2xf32>
    %c0_217 = arith.constant 0 : index
    %c18_218 = arith.constant 18 : index
    %c0_219 = arith.constant 0 : index
    %c0_220 = arith.constant 0 : index
    %185 = vector.load %arg1[%c0_217, %c18_218, %c0_219, %c0_220] : memref<1x34x34x4xf32, #tpu.memory_space<vmem>>, vector<1x16x16x4xf32>
    %186 = vector.shape_cast %185 : vector<1x16x16x4xf32> to vector<16x16x4xf32>
    %187 = vector.shape_cast %186 : vector<16x16x4xf32> to vector<256x4xf32>
    %c2_221 = arith.constant 2 : index
    %c6_222 = arith.constant 6 : index
    %c0_223 = arith.constant 0 : index
    %c0_224 = arith.constant 0 : index
    %188 = vector.load %arg2[%c2_221, %c6_222, %c0_223, %c0_224] : memref<3x9x4x2xf32, #tpu.memory_space<vmem>>, vector<1x1x4x2xf32>
    %189 = vector.shape_cast %188 : vector<1x1x4x2xf32> to vector<4x2xf32>
    %cst_225 = arith.constant dense<0.000000e+00> : vector<256x2xf32>
    %190 = tpu.matmul %187, %189, %cst_225 {dimension_numbers = #tpu.dot_dimension_numbers<[1], [0], [0], [1], [0, 0, 1, 1], [], []>} : vector<256x4xf32>, vector<4x2xf32>, vector<256x2xf32> -> vector<256x2xf32>
    %191 = arith.addf %184, %190 : vector<256x2xf32>
    %c0_226 = arith.constant 0 : index
    %c18_227 = arith.constant 18 : index
    %c9_228 = arith.constant 9 : index
    %c0_229 = arith.constant 0 : index
    %192 = vector.load %arg1[%c0_226, %c18_227, %c9_228, %c0_229] : memref<1x34x34x4xf32, #tpu.memory_space<vmem>>, vector<1x16x16x4xf32>
    %193 = vector.shape_cast %192 : vector<1x16x16x4xf32> to vector<16x16x4xf32>
    %194 = vector.shape_cast %193 : vector<16x16x4xf32> to vector<256x4xf32>
    %c2_230 = arith.constant 2 : index
    %c7_231 = arith.constant 7 : index
    %c0_232 = arith.constant 0 : index
    %c0_233 = arith.constant 0 : index
    %195 = vector.load %arg2[%c2_230, %c7_231, %c0_232, %c0_233] : memref<3x9x4x2xf32, #tpu.memory_space<vmem>>, vector<1x1x4x2xf32>
    %196 = vector.shape_cast %195 : vector<1x1x4x2xf32> to vector<4x2xf32>
    %cst_234 = arith.constant dense<0.000000e+00> : vector<256x2xf32>
    %197 = tpu.matmul %194, %196, %cst_234 {dimension_numbers = #tpu.dot_dimension_numbers<[1], [0], [0], [1], [0, 0, 1, 1], [], []>} : vector<256x4xf32>, vector<4x2xf32>, vector<256x2xf32> -> vector<256x2xf32>
    %198 = arith.addf %191, %197 : vector<256x2xf32>
    %c0_235 = arith.constant 0 : index
    %c18_236 = arith.constant 18 : index
    %c18_237 = arith.constant 18 : index
    %c0_238 = arith.constant 0 : index
    %199 = vector.load %arg1[%c0_235, %c18_236, %c18_237, %c0_238] : memref<1x34x34x4xf32, #tpu.memory_space<vmem>>, vector<1x16x16x4xf32>
    %200 = vector.shape_cast %199 : vector<1x16x16x4xf32> to vector<16x16x4xf32>
    %201 = vector.shape_cast %200 : vector<16x16x4xf32> to vector<256x4xf32>
    %c2_239 = arith.constant 2 : index
    %c8_240 = arith.constant 8 : index
    %c0_241 = arith.constant 0 : index
    %c0_242 = arith.constant 0 : index
    %202 = vector.load %arg2[%c2_239, %c8_240, %c0_241, %c0_242] : memref<3x9x4x2xf32, #tpu.memory_space<vmem>>, vector<1x1x4x2xf32>
    %203 = vector.shape_cast %202 : vector<1x1x4x2xf32> to vector<4x2xf32>
    %cst_243 = arith.constant dense<0.000000e+00> : vector<256x2xf32>
    %204 = tpu.matmul %201, %203, %cst_243 {dimension_numbers = #tpu.dot_dimension_numbers<[1], [0], [0], [1], [0, 0, 1, 1], [], []>} : vector<256x4xf32>, vector<4x2xf32>, vector<256x2xf32> -> vector<256x2xf32>
    %205 = arith.addf %198, %204 : vector<256x2xf32>
    %c2_244 = arith.constant 2 : index
    %c0_245 = arith.constant 0 : index
    %c0_246 = arith.constant 0 : index
    %206 = vector.load %arg3[%c2_244, %c0_245, %c0_246] : memref<3x1x2xf32, #tpu.memory_space<vmem>>, vector<1x1x2xf32>
    %207 = vector.shape_cast %206 : vector<1x1x2xf32> to vector<1x2xf32>
    %208 = vector.broadcast %207 : vector<1x2xf32> to vector<256x2xf32>
    %209 = arith.addf %205, %208 : vector<256x2xf32>
    %c0_247 = arith.constant 0 : index
    %c0_248 = arith.constant 0 : index
    %c4_249 = arith.constant 4 : index
    %210 = vector.load %arg5[%c0_247, %c0_248, %c4_249] : memref<1x256x8xf32, #tpu.memory_space<vmem>>, vector<1x256x2xf32>
    %211 = vector.shape_cast %210 : vector<1x256x2xf32> to vector<256x2xf32>
    %212 = vector.shape_cast %209 : vector<256x2xf32> to vector<1x256x2xf32>
    tpu.vector_store %arg5[%c0_247, %c0_248, %c4_249], %212 {strides = array<i32>} : memref<1x256x8xf32, #tpu.memory_space<vmem>>, vector<1x256x2xf32>,
    %c0_250 = arith.constant 0 : index
    %c0_251 = arith.constant 0 : index
    %c0_252 = arith.constant 0 : index
    %213 = vector.load %arg4[%c0_250, %c0_251, %c0_252] : memref<1x1x2xf32, #tpu.memory_space<vmem>>, vector<1x1x2xf32>
    %214 = vector.shape_cast %213 : vector<1x1x2xf32> to vector<1x2xf32>
    %215 = vector.shape_cast %214 : vector<1x2xf32> to vector<1x2xf32>
    %216 = vector.broadcast %215 : vector<1x2xf32> to vector<256x2xf32>
    %c0_253 = arith.constant 0 : index
    %c0_254 = arith.constant 0 : index
    %c6_255 = arith.constant 6 : index
    %217 = vector.load %arg5[%c0_253, %c0_254, %c6_255] : memref<1x256x8xf32, #tpu.memory_space<vmem>>, vector<1x256x2xf32>
    %218 = vector.shape_cast %217 : vector<1x256x2xf32> to vector<256x2xf32>
    %219 = vector.shape_cast %216 : vector<256x2xf32> to vector<1x256x2xf32>
    tpu.vector_store %arg5[%c0_253, %c0_254, %c6_255], %219 {strides = array<i32>} : memref<1x256x8xf32, #tpu.memory_space<vmem>>, vector<1x256x2xf32>,
    return
  }
  func.func @transform_0(%arg0: i32) -> (i32, i32, i32, i32) {
    %c0_i32 = arith.constant 0 : i32
    %c0_i32_0 = arith.constant 0 : i32
    %c0_i32_1 = arith.constant 0 : i32
    %c0_i32_2 = arith.constant 0 : i32
    return %arg0, %c0_i32, %c0_i32_0, %c0_i32_1 : i32, i32, i32, i32
  }
  func.func @transform_1(%arg0: i32) -> (i32, i32, i32, i32) {
    %c0_i32 = arith.constant 0 : i32
    %c0_i32_0 = arith.constant 0 : i32
    %c0_i32_1 = arith.constant 0 : i32
    %c0_i32_2 = arith.constant 0 : i32
    %c0_i32_3 = arith.constant 0 : i32
    return %c0_i32, %c0_i32_0, %c0_i32_1, %c0_i32_2 : i32, i32, i32, i32
  }
  func.func @transform_2(%arg0: i32) -> (i32, i32, i32) {
    %c0_i32 = arith.constant 0 : i32
    %c0_i32_0 = arith.constant 0 : i32
    %c0_i32_1 = arith.constant 0 : i32
    %c0_i32_2 = arith.constant 0 : i32
    return %c0_i32, %c0_i32_0, %c0_i32_1 : i32, i32, i32
  }
  func.func @transform_3(%arg0: i32) -> (i32, i32, i32) {
    %c0_i32 = arith.constant 0 : i32
    %c0_i32_0 = arith.constant 0 : i32
    %c0_i32_1 = arith.constant 0 : i32
    return %arg0, %c0_i32, %c0_i32_0 : i32, i32, i32
  }
  func.func @transform_4(%arg0: i32) -> (i32, i32, i32) {
    %c0_i32 = arith.constant 0 : i32
    %c0_i32_0 = arith.constant 0 : i32
    %c0_i32_1 = arith.constant 0 : i32
    return %arg0, %c0_i32, %c0_i32_0 : i32, i32, i32
  }
}

</mosaic_0001>

<llo_original>
// kernel: run.1
$region0: #{run.1}
  #allocation0 [shape = 'u32[]', space=smem, size = 0x4, offset = 0x4, fixed_abs, tag = 'smem constant byte address 0x4 - core index']
  #allocation1 [shape = 'u32[144,128]{1,0:T(1,128)}', space=vmem, size = 0x12000, scoped, tag = 'internal scratch']
  %s0 = inlined_call_operand.vmem [shape: f32[2,34,34,4], index: 0, kind: input, shape index: {}]
  %s1 = inlined_call_operand.vmem [shape: f32[3,9,4,2], index: 1, kind: input, shape index: {}]
  %s2 = inlined_call_operand.vmem [shape: f32[3,1,2], index: 2, kind: input, shape index: {}]
  %s3 = inlined_call_operand.vmem [shape: f32[2,1,2], index: 3, kind: input, shape index: {}]
  %s4 = inlined_call_operand.vmem [shape: f32[2,256,8], index: 4, kind: output, shape index: {}]
  %s5 = sld [smem:[#allocation0]]
  $region49: #{run.1} parent=0
    _
  %s7 = ssub.s32 1, %s5
  %s8 = scalar_select 0, %s7, %s5
  loop: start=0, step=1, limit=4
  $region2: #{run.1} parent=0 // loop_pre_header
    _
  $region3: #{run.1} parent=0 // loop_header
    %s10 = sphi 0, %s14
    %p11 = scmp.ge.s32.totalorder %s10, 4
    %s20 = sphi 0, %s22
    %s23 = sphi 0, %s20
    %s24 = sphi 0, %s23
    %s40 = sphi 0, %s24
    %s44 = sphi 0, %s44
    %s46 = sphi 0, %s44
    %s47 = sphi 0, %s46
    %s61 = sphi 0, %s47
    %s65 = sphi 0, %s65
    %s67 = sphi 0, %s65
    %s68 = sphi 0, %s67
    %s82 = sphi 0, %s68
    %s88 = sphi 0, %s90
    %s91 = sphi 0, %s88
    %s92 = sphi 0, %s91
    %s108 = sphi 0, %s92
    %s114 = sphi 0, %s116
    %s117 = sphi 0, %s114
    %s118 = sphi 0, %s117
    %s134 = sphi 0, %s118
  $region4: #{run.1} parent=0 // loop_header_branch
    %13 = sbr.rel (%p11) target = $region8
  $region5: #{run.1} parent=0 // loop_body
    %s15 = ssub.s32 %s10, 1
    %s16 = ssub.s32 %s10, 2
    %s17 = sadd.s32 %s10, 1
    %s18 = ssub.s32 %s10, %s17
    %p19 = scmp.eq.s32.totalorder %s18, 0
    %s21 = sadd.s32 %s20, 1
    %s22 = scalar_select %p19, %s20, %s21
    %p25 = pneg %p19
    %p26 = scmp.eq.s32.totalorder %s10, 1
    %p27 = por %p25, %p26
    %p28 = scmp.ne.s32.totalorder %s20, %s23
    %p29 = scmp.eq.s32.totalorder %s10, 0
    %p30 = por %p28, %p29
    %p31 = scmp.ne.s32.totalorder %s20, %s23
    %p32 = scmp.eq.s32.totalorder %s15, 1
    %p33 = por %p31, %p32
    %p34 = scmp.ne.s32.totalorder %s23, %s24
    %p35 = scmp.eq.s32.totalorder %s15, 0
    %p36 = por %p34, %p35
    %p37 = scmp.ne.s32.totalorder %s23, %s24
    %p38 = scmp.eq.s32.totalorder %s16, 1
    %p39 = por %p37, %p38
    %p41 = scmp.ne.s32.totalorder %s24, %s40
    %p42 = scmp.eq.s32.totalorder %s16, 0
    %p43 = por %p41, %p42
    %s45 = sadd.s32 %s44, 1
    %p48 = scmp.eq.s32.totalorder %s10, 1
    %p49 = scmp.ne.s32.totalorder %s44, %s46
    %p50 = scmp.eq.s32.totalorder %s10, 0
    %p51 = por %p49, %p50
    %p52 = scmp.ne.s32.totalorder %s44, %s46
    %p53 = scmp.eq.s32.totalorder %s15, 1
    %p54 = por %p52, %p53
    %p55 = scmp.ne.s32.totalorder %s46, %s47
    %p56 = scmp.eq.s32.totalorder %s15, 0
    %p57 = por %p55, %p56
    %p58 = scmp.ne.s32.totalorder %s46, %s47
    %p59 = scmp.eq.s32.totalorder %s16, 1
    %p60 = por %p58, %p59
    %p62 = scmp.ne.s32.totalorder %s47, %s61
    %p63 = scmp.eq.s32.totalorder %s16, 0
    %p64 = por %p62, %p63
    %s66 = sadd.s32 %s65, 1
    %p69 = scmp.eq.s32.totalorder %s10, 1
    %p70 = scmp.ne.s32.totalorder %s65, %s67
    %p71 = scmp.eq.s32.totalorder %s10, 0
    %p72 = por %p70, %p71
    %p73 = scmp.ne.s32.totalorder %s65, %s67
    %p74 = scmp.eq.s32.totalorder %s15, 1
    %p75 = por %p73, %p74
    %p76 = scmp.ne.s32.totalorder %s67, %s68
    %p77 = scmp.eq.s32.totalorder %s15, 0
    %p78 = por %p76, %p77
    %p79 = scmp.ne.s32.totalorder %s67, %s68
    %p80 = scmp.eq.s32.totalorder %s16, 1
    %p81 = por %p79, %p80
    %p83 = scmp.ne.s32.totalorder %s68, %s82
    %p84 = scmp.eq.s32.totalorder %s16, 0
    %p85 = por %p83, %p84
    %s86 = ssub.s32 %s10, %s17
    %p87 = scmp.eq.s32.totalorder %s86, 0
    %s89 = sadd.s32 %s88, 1
    %s90 = scalar_select %p87, %s88, %s89
    %p93 = pneg %p87
    %p94 = scmp.eq.s32.totalorder %s10, 1
    %p95 = por %p93, %p94
    %p96 = scmp.ne.s32.totalorder %s88, %s91
    %p97 = scmp.eq.s32.totalorder %s10, 0
    %p98 = por %p96, %p97
    %p99 = scmp.ne.s32.totalorder %s88, %s91
    %p100 = scmp.eq.s32.totalorder %s15, 1
    %p101 = por %p99, %p100
    %p102 = scmp.ne.s32.totalorder %s91, %s92
    %p103 = scmp.eq.s32.totalorder %s15, 0
    %p104 = por %p102, %p103
    %p105 = scmp.ne.s32.totalorder %s91, %s92
    %p106 = scmp.eq.s32.totalorder %s16, 1
    %p107 = por %p105, %p106
    %p109 = scmp.ne.s32.totalorder %s92, %s108
    %p110 = scmp.eq.s32.totalorder %s16, 0
    %p111 = por %p109, %p110
    %s112 = ssub.s32 %s10, %s17
    %p113 = scmp.eq.s32.totalorder %s112, 0
    %s115 = sadd.s32 %s114, 1
    %s116 = scalar_select %p113, %s114, %s115
    %p119 = pneg %p113
    %p120 = scmp.eq.s32.totalorder %s10, 1
    %p121 = por %p119, %p120
    %p122 = scmp.ne.s32.totalorder %s114, %s117
    %p123 = scmp.eq.s32.totalorder %s10, 0
    %p124 = por %p122, %p123
    %p125 = scmp.ne.s32.totalorder %s114, %s117
    %p126 = scmp.eq.s32.totalorder %s15, 1
    %p127 = por %p125, %p126
    %p128 = scmp.ne.s32.totalorder %s117, %s118
    %p129 = scmp.eq.s32.totalorder %s15, 0
    %p130 = por %p128, %p129
    %p131 = scmp.ne.s32.totalorder %s117, %s118
    %p132 = scmp.eq.s32.totalorder %s16, 1
    %p133 = por %p131, %p132
    %p135 = scmp.ne.s32.totalorder %s118, %s134
    %p136 = scmp.eq.s32.totalorder %s16, 0
    %p137 = por %p135, %p136
    %p138 = scmp.le.s32.totalorder 1, %s10
    %p139 = scmp.lt.s32.totalorder %s10, 3
    %p140 = pnand %p138, %p139
    %p141 = pneg %p140
    // Predicated region
    $region9: #{run.1} parent=5 // pred_check
      _
    $region10: #{run.1} parent=5 // pred_check_branch
      %143 = sbr.rel (%p140) target = $region12
    $region11: #{run.1} parent=5 // pred_region
      %s144 = ssub.s32 %s10, 1
      // Predicated region
      $region13: #{run.1} parent=11 // pred_check
        %p145 = pneg %p57
      $region14: #{run.1} parent=11 // pred_check_branch
        %147 = sbr.rel (%p145) target = $region16
      $region15: #{run.1} parent=11 // pred_region
        _
      $region16: #{run.1} parent=11 // pred_fallthru
        _
      // Predicated region
      $region17: #{run.1} parent=11 // pred_check
        %p148 = pneg %p78
      $region18: #{run.1} parent=11 // pred_check_branch
        %150 = sbr.rel (%p148) target = $region20
      $region19: #{run.1} parent=11 // pred_region
        _
      $region20: #{run.1} parent=11 // pred_fallthru
        _
    $region12: #{run.1} parent=5 // pred_fallthru
      _
    %p151 = scmp.lt.s32.totalorder %s10, 2
    // Predicated region
    $region21: #{run.1} parent=5 // pred_check
      %p152 = pneg %p151
    $region22: #{run.1} parent=5 // pred_check_branch
      %154 = sbr.rel (%p152) target = $region24
    $region23: #{run.1} parent=5 // pred_region
      // Predicated region
      $region25: #{run.1} parent=23 // pred_check
        %p155 = pneg %p30
      $region26: #{run.1} parent=23 // pred_check_branch
        %157 = sbr.rel (%p155) target = $region28
      $region27: #{run.1} parent=23 // pred_region
        %p158 = scmp.lt.s32.totalorder %s10, 1
        %s159 = scalar_select %p158, %s10, 1
        %s160 = smul.addr %s159, 170
        %s161 = smul.addr %s160, 8
        %s162 = scalar_lea.vmem %s0, %s161
      $region28: #{run.1} parent=23 // pred_fallthru
        _
      // Predicated region
      $region29: #{run.1} parent=23 // pred_check
        %p163 = pneg %p98
      $region30: #{run.1} parent=23 // pred_check_branch
        %165 = sbr.rel (%p163) target = $region32
      $region31: #{run.1} parent=23 // pred_region
        %p166 = scmp.lt.s32.totalorder %s10, 1
        %s167 = scalar_select %p166, %s10, 1
        %s168 = scalar_lea.vmem %s3, %s167
      $region32: #{run.1} parent=23 // pred_fallthru
        _
    $region24: #{run.1} parent=5 // pred_fallthru
      _
    %p169 = scmp.le.s32.totalorder 1, %s10
    %p170 = scmp.lt.s32.totalorder %s10, 3
    %p171 = pnand %p169, %p170
    %p172 = pneg %p171
    // Predicated region
    $region33: #{run.1} parent=5 // pred_check
      _
    $region34: #{run.1} parent=5 // pred_check_branch
      %174 = sbr.rel (%p171) target = $region36
    $region35: #{run.1} parent=5 // pred_region
      %s175 = ssub.s32 %s10, 1
      %p176 = scmp.lt.s32.totalorder %s15, 1
      %s177 = scalar_select %p176, %s15, 1
      %s178 = smul.addr %s177, 170
      %s179 = smul.addr %s178, 8
      %s180 = scalar_lea.vmem %s0, %s179
      %p181 = pneg %p36
      %p182 = pneg %p33
      %p183 = pneg %p57
      %p184 = pneg %p54
      %p185 = pneg %p78
      %p186 = pneg %p75
      %p187 = scmp.lt.s32.totalorder %s15, 1
      %s188 = scalar_select %p187, %s15, 1
      %s189 = scalar_lea.vmem %s3, %s188
      %p190 = pneg %p104
      %p191 = pneg %p101
      %p192 = pneg %p130
      %p193 = pneg %p127
      %p194 = scmp.lt.s32.totalorder %s15, 1
      %s195 = scalar_select %p194, %s15, 1
      %s196 = smul.addr %s195, 32
      %s197 = smul.addr %s196, 8
      %s198 = scalar_lea.vmem %s4, %s197
      %p199 = scmp.lt.s32.totalorder %s15, 1
      %s200 = scalar_select %p199, %s15, 1
      %s201 = smul.addr %s200, 170
      %s202 = smul.addr %s201, 8
      %s203 = scalar_lea.vmem %s0, %s202
      %p204 = scmp.lt.s32.totalorder %s15, 1
      %s205 = scalar_select %p204, %s15, 1
      %s206 = scalar_lea.vmem %s3, %s205
      %p207 = scmp.lt.s32.totalorder %s15, 1
      %s208 = scalar_select %p207, %s15, 1
      %s209 = smul.addr %s208, 32
      %s210 = smul.addr %s209, 8
      %s211 = scalar_lea.vmem %s4, %s210
      %s212 = scalar_lea.vmem %s203, 240
      %v213 = vld [vmem:[%s212 + $0x6] sm:$0xff]
      %v214 = vld [vmem:[%s212 + $0xe] sm:$0xff]
      %v215 = vld [vmem:[%s212 + $0x2e] sm:$0xff]
      %v216 = vld [vmem:[%s212 + $0x36] sm:$0xff]
      %v217 = vld [vmem:[%s212 + $0x56] sm:$0xff]
      %v218 = vld [vmem:[%s212 + $0x5e] sm:$0xff]
      %v219 = vld [vmem:[%s212 + $0x7e] sm:$0xff]
      %v220 = vld [vmem:[%s212 + $0x86] sm:$0xff]
      %v221 = vld [vmem:[%s212 + $0xa6] sm:$0xff]
      %v222 = vld [vmem:[%s212 + $0xae] sm:$0xff]
      %v223 = vld [vmem:[%s212 + $0xce] sm:$0xff]
      %v224 = vld [vmem:[%s212 + $0xd6] sm:$0xff]
      %v225 = vld [vmem:[%s212 + $0xf6] sm:$0xff]
      %v226 = vld [vmem:[%s212 + $0xfe] sm:$0xff]
      %v227 = vld [vmem:[%s212 + $0x11e] sm:$0xff]
      %v228 = vld [vmem:[%s212 + $0x126] sm:$0xff]
      %v229 = vld [vmem:[%s212 + $0x146] sm:$0xff]
      %v230 = vld [vmem:[%s212 + $0x14e] sm:$0xff]
      %v231 = vld [vmem:[%s212 + $0x16e] sm:$0xff]
      %v232 = vld [vmem:[%s212 + $0x176] sm:$0xff]
      %v233 = vld [vmem:[%s212 + $0x196] sm:$0xff]
      %v234 = vld [vmem:[%s212 + $0x19e] sm:$0xff]
      %v235 = vld [vmem:[%s212 + $0x1be] sm:$0xff]
      %v236 = vld [vmem:[%s212 + $0x1c6] sm:$0xff]
      %v237 = vld [vmem:[%s212 + $0x1e6] sm:$0xff]
      %v238 = vld [vmem:[%s212 + $0x1ee] sm:$0xff]
      %v239 = vld [vmem:[%s212 + $0x20e] sm:$0xff]
      %v240 = vld [vmem:[%s212 + $0x216] sm:$0xff]
      %v241 = vld [vmem:[%s212 + $0x236] sm:$0xff]
      %v242 = vld [vmem:[%s212 + $0x23e] sm:$0xff]
      %v243 = vld [vmem:[%s212 + $0x25e] sm:$0xff]
      %v244 = vld [vmem:[%s212 + $0x266] sm:$0xff]
      %v245 = vld [vmem:[%s1] sm:$0xf]
      %v246 = vld [vmem:[%s212 + $0x9] sm:$0xff]
      %v247 = vld [vmem:[%s212 + $0x11] sm:$0xff]
      %v248 = vld [vmem:[%s212 + $0x31] sm:$0xff]
      %v249 = vld [vmem:[%s212 + $0x39] sm:$0xff]
      %v250 = vld [vmem:[%s212 + $0x59] sm:$0xff]
      %v251 = vld [vmem:[%s212 + $0x61] sm:$0xff]
      %v252 = vld [vmem:[%s212 + $0x81] sm:$0xff]
      %v253 = vld [vmem:[%s212 + $0x89] sm:$0xff]
      %v254 = vld [vmem:[%s212 + $0xa9] sm:$0xff]
      %v255 = vld [vmem:[%s212 + $0xb1] sm:$0xff]
      %v256 = vld [vmem:[%s212 + $0xd1] sm:$0xff]
      %v257 = vld [vmem:[%s212 + $0xd9] sm:$0xff]
      %v258 = vld [vmem:[%s212 + $0xf9] sm:$0xff]
      %v259 = vld [vmem:[%s212 + $0x101] sm:$0xff]
      %v260 = vld [vmem:[%s212 + $0x121] sm:$0xff]
      %v261 = vld [vmem:[%s212 + $0x129] sm:$0xff]
      %v262 = vld [vmem:[%s212 + $0x149] sm:$0xff]
      %v263 = vld [vmem:[%s212 + $0x151] sm:$0xff]
      %v264 = vld [vmem:[%s212 + $0x171] sm:$0xff]
      %v265 = vld [vmem:[%s212 + $0x179] sm:$0xff]
      %v266 = vld [vmem:[%s212 + $0x199] sm:$0xff]
      %v267 = vld [vmem:[%s212 + $0x1a1] sm:$0xff]
      %v268 = vld [vmem:[%s212 + $0x1c1] sm:$0xff]
      %v269 = vld [vmem:[%s212 + $0x1c9] sm:$0xff]
      %v270 = vld [vmem:[%s212 + $0x1e9] sm:$0xff]
      %v271 = vld [vmem:[%s212 + $0x1f1] sm:$0xff]
      %v272 = vld [vmem:[%s212 + $0x211] sm:$0xff]
      %v273 = vld [vmem:[%s212 + $0x219] sm:$0xff]
      %v274 = vld [vmem:[%s212 + $0x239] sm:$0xff]
      %v275 = vld [vmem:[%s212 + $0x241] sm:$0xff]
      %v276 = vld [vmem:[%s212 + $0x261] sm:$0xff]
      %v277 = vld [vmem:[%s212 + $0x269] sm:$0xff]
      %s278 = scalar_lea.vmem %s1, 4
      %v279 = vld [vmem:[%s278] sm:$0xf]
      %vm280 = vcmask 31744
      %v282 = vsel %vm280, %v246, 0
      %v285 = vsel %vm280, %v247, 0
      %v288 = vsel %vm280, %v248, 0
      %v291 = vsel %vm280, %v249, 0
      %v294 = vsel %vm280, %v250, 0
      %v297 = vsel %vm280, %v251, 0
      %v300 = vsel %vm280, %v252, 0
      %v303 = vsel %vm280, %v253, 0
      %v306 = vsel %vm280, %v254, 0
      %v309 = vsel %vm280, %v255, 0
      %v312 = vsel %vm280, %v256, 0
      %v315 = vsel %vm280, %v257, 0
      %v318 = vsel %vm280, %v258, 0
      %v321 = vsel %vm280, %v259, 0
      %v324 = vsel %vm280, %v260, 0
      %v327 = vsel %vm280, %v261, 0
      %v330 = vsel %vm280, %v262, 0
      %v333 = vsel %vm280, %v263, 0
      %v336 = vsel %vm280, %v264, 0
      %v339 = vsel %vm280, %v265, 0
      %v342 = vsel %vm280, %v266, 0
      %v345 = vsel %vm280, %v267, 0
      %v348 = vsel %vm280, %v268, 0
      %v351 = vsel %vm280, %v269, 0
      %v354 = vsel %vm280, %v270, 0
      %v357 = vsel %vm280, %v271, 0
      %v360 = vsel %vm280, %v272, 0
      %v363 = vsel %vm280, %v273, 0
      %v366 = vsel %vm280, %v274, 0
      %v369 = vsel %vm280, %v275, 0
      %v372 = vsel %vm280, %v276, 0
      %v375 = vsel %vm280, %v277, 0
      %vm377 = vcmask 1043456
      %v379 = vsel %vm377, %v279, 0
      %381 = vmatprep.subr.mxu0 0.0
      %382 = vmatpush1.msra.mxu0 %v379
      %383 = vmatprep.subr.mxu0 0.0
      %384 = vmatpush1.msra.mxu0 0.0
      %385 = vmatprep.subr.mxu0 0.0
      %386 = vmatpush1.msra.mxu0 0.0
      %387 = vmatprep.subr.mxu0 0.0
      %388 = vmatpush1.msra.mxu0 0.0
      %389 = vmatprep.subr.mxu0 0.0
      %390 = vmatpush1.msra.mxu0 0.0
      %391 = vmatprep.subr.mxu0 0.0
      %392 = vmatpush1.msra.mxu0 0.0
      %393 = vmatprep.subr.mxu0 0.0
      %394 = vmatpush1.msra.mxu0 0.0
      %395 = vmatprep.subr.mxu0 0.0
      %396 = vmatpush1.msra.mxu0 0.0
      %397 = vmatprep.subr.mxu0 0.0
      %398 = vmatpush1.msra.mxu0 0.0
      %399 = vmatprep.subr.mxu0 0.0
      %400 = vmatpush1.msra.mxu0 0.0
      %401 = vmatprep.subr.mxu0 0.0
      %402 = vmatpush1.msra.mxu0 0.0
      %403 = vmatprep.subr.mxu0 0.0
      %404 = vmatpush1.msra.mxu0 0.0
      %405 = vmatprep.subr.mxu0 0.0
      %406 = vmatpush1.msra.mxu0 0.0
      %407 = vmatprep.subr.mxu0 0.0
      %408 = vmatpush1.msra.mxu0 0.0
      %409 = vmatprep.subr.mxu0 0.0
      %410 = vmatpush1.msra.mxu0 0.0
      %411 = vmatprep.subr.mxu0 0.0
      %412 = vmatpush1.msra.mxu0 0.0
      %413 = vmatprep.subr.mxu0 0.0
      %414 = vmatpush1.msra.mxu0 0.0
      %415 = vmatprep.subr.mxu0 0.0
      %416 = vmatpush1.msra.mxu0 0.0
      %417 = vmatprep.subr.mxu0 0.0
      %418 = vmatpush1.msra.mxu0 0.0
      %419 = vmatprep.subr.mxu0 0.0
      %420 = vmatpush1.msra.mxu0 0.0
      %421 = vmatprep.subr.mxu0 0.0
      %422 = vmatpush1.msra.mxu0 0.0
      %423 = vmatprep.subr.mxu0 0.0
      %424 = vmatpush1.msra.mxu0 0.0
      %425 = vmatprep.subr.mxu0 0.0
      %426 = vmatpush1.msra.mxu0 0.0
      %427 = vmatprep.subr.mxu0 0.0
      %428 = vmatpush1.msra.mxu0 0.0
      %429 = vmatprep.subr.mxu0 0.0
      %430 = vmatpush1.msra.mxu0 0.0
      %431 = vmatprep.subr.mxu0 0.0
      %432 = vmatpush1.msra.mxu0 0.0
      %433 = vmatprep.subr.mxu0 0.0
      %434 = vmatpush1.msra.mxu0 0.0
      %435 = vmatprep.subr.mxu0 0.0
      %436 = vmatpush1.msra.mxu0 0.0
      %437 = vmatprep.subr.mxu0 0.0
      %438 = vmatpush1.msra.mxu0 0.0
      %439 = vmatprep.subr.mxu0 0.0
      %440 = vmatpush1.msra.mxu0 0.0
      %441 = vmatprep.subr.mxu0 0.0
      %442 = vmatpush1.msra.mxu0 0.0
      %443 = vmatprep.subr.mxu0 0.0
      %444 = vmatpush1.msra.mxu0 0.0
      %445 = vmatprep.mubr.f32.mxu0 0.0
      %446 = vmatmul.mubr.f32.gmra.mrb[0].mxu0 %v282
      %v447 = vpop.f32.mrb[0].mxu0
      %v448 = vadd.f32 0.0, %v447
      %v449 = vpop.f32.mrb[0].mxu0
      %450 = vmatprep.mubr.f32.mxu0 0.0
      %451 = vmatmul.mubr.f32.gmra.mrb[0].mxu0 %v285
      %v452 = vpop.f32.mrb[0].mxu0
      %v453 = vadd.f32 0.0, %v452
      %v454 = vpop.f32.mrb[0].mxu0
      %455 = vmatprep.mubr.f32.mxu0 0.0
      %456 = vmatmul.mubr.f32.gmra.mrb[0].mxu0 %v288
      %v457 = vpop.f32.mrb[0].mxu0
      %v458 = vadd.f32 0.0, %v457
      %v459 = vpop.f32.mrb[0].mxu0
      %460 = vmatprep.mubr.f32.mxu0 0.0
      %461 = vmatmul.mubr.f32.gmra.mrb[0].mxu0 %v291
      %v462 = vpop.f32.mrb[0].mxu0
      %v463 = vadd.f32 0.0, %v462
      %v464 = vpop.f32.mrb[0].mxu0
      %465 = vmatprep.mubr.f32.mxu0 0.0
      %466 = vmatmul.mubr.f32.gmra.mrb[0].mxu0 %v294
      %v467 = vpop.f32.mrb[0].mxu0
      %v468 = vadd.f32 0.0, %v467
      %v469 = vpop.f32.mrb[0].mxu0
      %470 = vmatprep.mubr.f32.mxu0 0.0
      %471 = vmatmul.mubr.f32.gmra.mrb[0].mxu0 %v297
      %v472 = vpop.f32.mrb[0].mxu0
      %v473 = vadd.f32 0.0, %v472
      %v474 = vpop.f32.mrb[0].mxu0
      %475 = vmatprep.mubr.f32.mxu0 0.0
      %476 = vmatmul.mubr.f32.gmra.mrb[0].mxu0 %v300
      %v477 = vpop.f32.mrb[0].mxu0
      %v478 = vadd.f32 0.0, %v477
      %v479 = vpop.f32.mrb[0].mxu0
      %480 = vmatprep.mubr.f32.mxu0 0.0
      %481 = vmatmul.mubr.f32.gmra.mrb[0].mxu0 %v303
      %v482 = vpop.f32.mrb[0].mxu0
      %v483 = vadd.f32 0.0, %v482
      %v484 = vpop.f32.mrb[0].mxu0
      %485 = vmatprep.mubr.f32.mxu0 0.0
      %486 = vmatmul.mubr.f32.gmra.mrb[0].mxu0 %v306
      %v487 = vpop.f32.mrb[0].mxu0
      %v488 = vadd.f32 0.0, %v487
      %v489 = vpop.f32.mrb[0].mxu0
      %490 = vmatprep.mubr.f32.mxu0 0.0
      %491 = vmatmul.mubr.f32.gmra.mrb[0].mxu0 %v309
      %v492 = vpop.f32.mrb[0].mxu0
      %v493 = vadd.f32 0.0, %v492
      %v494 = vpop.f32.mrb[0].mxu0
      %495 = vmatprep.mubr.f32.mxu0 0.0
      %496 = vmatmul.mubr.f32.gmra.mrb[0].mxu0 %v312
      %v497 = vpop.f32.mrb[0].mxu0
      %v498 = vadd.f32 0.0, %v497
      %v499 = vpop.f32.mrb[0].mxu0
      %500 = vmatprep.mubr.f32.mxu0 0.0
      %501 = vmatmul.mubr.f32.gmra.mrb[0].mxu0 %v315
      %v502 = vpop.f32.mrb[0].mxu0
      %v503 = vadd.f32 0.0, %v502
      %v504 = vpop.f32.mrb[0].mxu0
      %505 = vmatprep.mubr.f32.mxu0 0.0
      %506 = vmatmul.mubr.f32.gmra.mrb[0].mxu0 %v318
      %v507 = vpop.f32.mrb[0].mxu0
      %v508 = vadd.f32 0.0, %v507
      %v509 = vpop.f32.mrb[0].mxu0
      %510 = vmatprep.mubr.f32.mxu0 0.0
      %511 = vmatmul.mubr.f32.gmra.mrb[0].mxu0 %v321
      %v512 = vpop.f32.mrb[0].mxu0
      %v513 = vadd.f32 0.0, %v512
      %v514 = vpop.f32.mrb[0].mxu0
      %515 = vmatprep.mubr.f32.mxu0 0.0
      %516 = vmatmul.mubr.f32.gmra.mrb[0].mxu0 %v324
      %v517 = vpop.f32.mrb[0].mxu0
      %v518 = vadd.f32 0.0, %v517
      %v519 = vpop.f32.mrb[0].mxu0
      %520 = vmatprep.mubr.f32.mxu0 0.0
      %521 = vmatmul.mubr.f32.gmra.mrb[0].mxu0 %v327
      %v522 = vpop.f32.mrb[0].mxu0
      %v523 = vadd.f32 0.0, %v522
      %v524 = vpop.f32.mrb[0].mxu0
      %525 = vmatprep.mubr.f32.mxu0 0.0
      %526 = vmatmul.mubr.f32.gmra.mrb[0].mxu0 %v330
      %v527 = vpop.f32.mrb[0].mxu0
      %v528 = vadd.f32 0.0, %v527
      %v529 = vpop.f32.mrb[0].mxu0
      %530 = vmatprep.mubr.f32.mxu0 0.0
      %531 = vmatmul.mubr.f32.gmra.mrb[0].mxu0 %v333
      %v532 = vpop.f32.mrb[0].mxu0
      %v533 = vadd.f32 0.0, %v532
      %v534 = vpop.f32.mrb[0].mxu0
      %535 = vmatprep.mubr.f32.mxu0 0.0
      %536 = vmatmul.mubr.f32.gmra.mrb[0].mxu0 %v336
      %v537 = vpop.f32.mrb[0].mxu0
      %v538 = vadd.f32 0.0, %v537
      %v539 = vpop.f32.mrb[0].mxu0
      %540 = vmatprep.mubr.f32.mxu0 0.0
      %541 = vmatmul.mubr.f32.gmra.mrb[0].mxu0 %v339
      %v542 = vpop.f32.mrb[0].mxu0
      %v543 = vadd.f32 0.0, %v542
      %v544 = vpop.f32.mrb[0].mxu0
      %545 = vmatprep.mubr.f32.mxu0 0.0
      %546 = vmatmul.mubr.f32.gmra.mrb[0].mxu0 %v342
      %v547 = vpop.f32.mrb[0].mxu0
      %v548 = vadd.f32 0.0, %v547
      %v549 = vpop.f32.mrb[0].mxu0
      %550 = vmatprep.mubr.f32.mxu0 0.0
      %551 = vmatmul.mubr.f32.gmra.mrb[0].mxu0 %v345
      %v552 = vpop.f32.mrb[0].mxu0
      %v553 = vadd.f32 0.0, %v552
      %v554 = vpop.f32.mrb[0].mxu0
      %555 = vmatprep.mubr.f32.mxu0 0.0
      %556 = vmatmul.mubr.f32.gmra.mrb[0].mxu0 %v348
      %v557 = vpop.f32.mrb[0].mxu0
      %v558 = vadd.f32 0.0, %v557
      %v559 = vpop.f32.mrb[0].mxu0
      %560 = vmatprep.mubr.f32.mxu0 0.0
      %561 = vmatmul.mubr.f32.gmra.mrb[0].mxu0 %v351
      %v562 = vpop.f32.mrb[0].mxu0
      %v563 = vadd.f32 0.0, %v562
      %v564 = vpop.f32.mrb[0].mxu0
      %565 = vmatprep.mubr.f32.mxu0 0.0
      %566 = vmatmul.mubr.f32.gmra.mrb[0].mxu0 %v354
      %v567 = vpop.f32.mrb[0].mxu0
      %v568 = vadd.f32 0.0, %v567
      %v569 = vpop.f32.mrb[0].mxu0
      %570 = vmatprep.mubr.f32.mxu0 0.0
      %571 = vmatmul.mubr.f32.gmra.mrb[0].mxu0 %v357
      %v572 = vpop.f32.mrb[0].mxu0
      %v573 = vadd.f32 0.0, %v572
      %v574 = vpop.f32.mrb[0].mxu0
      %575 = vmatprep.mubr.f32.mxu0 0.0
      %576 = vmatmul.mubr.f32.gmra.mrb[0].mxu0 %v360
      %v577 = vpop.f32.mrb[0].mxu0
      %v578 = vadd.f32 0.0, %v577
      %v579 = vpop.f32.mrb[0].mxu0
      %580 = vmatprep.mubr.f32.mxu0 0.0
      %581 = vmatmul.mubr.f32.gmra.mrb[0].mxu0 %v363
      %v582 = vpop.f32.mrb[0].mxu0
      %v583 = vadd.f32 0.0, %v582
      %v584 = vpop.f32.mrb[0].mxu0
      %585 = vmatprep.mubr.f32.mxu0 0.0
      %586 = vmatmul.mubr.f32.gmra.mrb[0].mxu0 %v366
      %v587 = vpop.f32.mrb[0].mxu0
      %v588 = vadd.f32 0.0, %v587
      %v589 = vpop.f32.mrb[0].mxu0
      %590 = vmatprep.mubr.f32.mxu0 0.0
      %591 = vmatmul.mubr.f32.gmra.mrb[0].mxu0 %v369
      %v592 = vpop.f32.mrb[0].mxu0
      %v593 = vadd.f32 0.0, %v592
      %v594 = vpop.f32.mrb[0].mxu0
      %595 = vmatprep.mubr.f32.mxu0 0.0
      %596 = vmatmul.mubr.f32.gmra.mrb[0].mxu0 %v372
      %v597 = vpop.f32.mrb[0].mxu0
      %v598 = vadd.f32 0.0, %v597
      %v599 = vpop.f32.mrb[0].mxu0
      %600 = vmatprep.mubr.f32.mxu0 0.0
      %601 = vmatmul.mubr.f32.gmra.mrb[0].mxu0 %v375
      %v602 = vpop.f32.mrb[0].mxu0
      %v603 = vadd.f32 0.0, %v602
      %v604 = vpop.f32.mrb[0].mxu0
      %605 = vdwg.mxu0
      %v607 = vsel %vm280, %v213, 0
      %v610 = vsel %vm280, %v214, 0
      %v613 = vsel %vm280, %v215, 0
      %v616 = vsel %vm280, %v216, 0
      %v619 = vsel %vm280, %v217, 0
      %v622 = vsel %vm280, %v218, 0
      %v625 = vsel %vm280, %v219, 0
      %v628 = vsel %vm280, %v220, 0
      %v631 = vsel %vm280, %v221, 0
      %v634 = vsel %vm280, %v222, 0
      %v637 = vsel %vm280, %v223, 0
      %v640 = vsel %vm280, %v224, 0
      %v643 = vsel %vm280, %v225, 0
      %v646 = vsel %vm280, %v226, 0
      %v649 = vsel %vm280, %v227, 0
      %v652 = vsel %vm280, %v228, 0
      %v655 = vsel %vm280, %v229, 0
      %v658 = vsel %vm280, %v230, 0
      %v661 = vsel %vm280, %v231, 0
      %v664 = vsel %vm280, %v232, 0
      %v667 = vsel %vm280, %v233, 0
      %v670 = vsel %vm280, %v234, 0
      %v673 = vsel %vm280, %v235, 0
      %v676 = vsel %vm280, %v236, 0
      %v679 = vsel %vm280, %v237, 0
      %v682 = vsel %vm280, %v238, 0
      %v685 = vsel %vm280, %v239, 0
      %v688 = vsel %vm280, %v240, 0
      %v691 = vsel %vm280, %v241, 0
      %v694 = vsel %vm280, %v242, 0
      %v697 = vsel %vm280, %v243, 0
      %v700 = vsel %vm280, %v244, 0
      %v703 = vsel %vm377, %v245, 0
      %705 = vmatprep.subr.mxu0 0.0
      %706 = vmatpush1.msra.mxu0 %v703
      %707 = vmatprep.subr.mxu0 0.0
      %708 = vmatpush1.msra.mxu0 0.0
      %709 = vmatprep.subr.mxu0 0.0
      %710 = vmatpush1.msra.mxu0 0.0
      %711 = vmatprep.subr.mxu0 0.0
      %712 = vmatpush1.msra.mxu0 0.0
      %713 = vmatprep.subr.mxu0 0.0
      %714 = vmatpush1.msra.mxu0 0.0
      %715 = vmatprep.subr.mxu0 0.0
      %716 = vmatpush1.msra.mxu0 0.0
      %717 = vmatprep.subr.mxu0 0.0
      %718 = vmatpush1.msra.mxu0 0.0
      %719 = vmatprep.subr.mxu0 0.0
      %720 = vmatpush1.msra.mxu0 0.0
      %721 = vmatprep.subr.mxu0 0.0
      %722 = vmatpush1.msra.mxu0 0.0
      %723 = vmatprep.subr.mxu0 0.0
      %724 = vmatpush1.msra.mxu0 0.0
      %725 = vmatprep.subr.mxu0 0.0
      %726 = vmatpush1.msra.mxu0 0.0
      %727 = vmatprep.subr.mxu0 0.0
      %728 = vmatpush1.msra.mxu0 0.0
      %729 = vmatprep.subr.mxu0 0.0
      %730 = vmatpush1.msra.mxu0 0.0
      %731 = vmatprep.subr.mxu0 0.0
      %732 = vmatpush1.msra.mxu0 0.0
      %733 = vmatprep.subr.mxu0 0.0
      %734 = vmatpush1.msra.mxu0 0.0
      %735 = vmatprep.subr.mxu0 0.0
      %736 = vmatpush1.msra.mxu0 0.0
      %737 = vmatprep.subr.mxu0 0.0
      %738 = vmatpush1.msra.mxu0 0.0
      %739 = vmatprep.subr.mxu0 0.0
      %740 = vmatpush1.msra.mxu0 0.0
      %741 = vmatprep.subr.mxu0 0.0
      %742 = vmatpush1.msra.mxu0 0.0
      %743 = vmatprep.subr.mxu0 0.0
      %744 = vmatpush1.msra.mxu0 0.0
      %745 = vmatprep.subr.mxu0 0.0
      %746 = vmatpush1.msra.mxu0 0.0
      %747 = vmatprep.subr.mxu0 0.0
      %748 = vmatpush1.msra.mxu0 0.0
      %749 = vmatprep.subr.mxu0 0.0
      %750 = vmatpush1.msra.mxu0 0.0
      %751 = vmatprep.subr.mxu0 0.0
      %752 = vmatpush1.msra.mxu0 0.0
      %753 = vmatprep.subr.mxu0 0.0
      %754 = vmatpush1.msra.mxu0 0.0
      %755 = vmatprep.subr.mxu0 0.0
      %756 = vmatpush1.msra.mxu0 0.0
      %757 = vmatprep.subr.mxu0 0.0
      %758 = vmatpush1.msra.mxu0 0.0
      %759 = vmatprep.subr.mxu0 0.0
      %760 = vmatpush1.msra.mxu0 0.0
      %761 = vmatprep.subr.mxu0 0.0
      %762 = vmatpush1.msra.mxu0 0.0
      %763 = vmatprep.subr.mxu0 0.0
      %764 = vmatpush1.msra.mxu0 0.0
      %765 = vmatprep.subr.mxu0 0.0
      %766 = vmatpush1.msra.mxu0 0.0
      %767 = vmatprep.subr.mxu0 0.0
      %768 = vmatpush1.msra.mxu0 0.0
      %769 = vmatprep.mubr.f32.mxu0 0.0
      %770 = vmatmul.mubr.f32.gmra.mrb[0].mxu0 %v607
      %v771 = vpop.f32.mrb[0].mxu0
      %v772 = vadd.f32 %v448, %v771
      %v773 = vpop.f32.mrb[0].mxu0
      %774 = vmatprep.mubr.f32.mxu0 0.0
      %775 = vmatmul.mubr.f32.gmra.mrb[0].mxu0 %v610
      %v776 = vpop.f32.mrb[0].mxu0
      %v777 = vadd.f32 %v453, %v776
      %v778 = vpop.f32.mrb[0].mxu0
      %779 = vmatprep.mubr.f32.mxu0 0.0
      %780 = vmatmul.mubr.f32.gmra.mrb[0].mxu0 %v613
      %v781 = vpop.f32.mrb[0].mxu0
      %v782 = vadd.f32 %v458, %v781
      %v783 = vpop.f32.mrb[0].mxu0
      %784 = vmatprep.mubr.f32.mxu0 0.0
      %785 = vmatmul.mubr.f32.gmra.mrb[0].mxu0 %v616
      %v786 = vpop.f32.mrb[0].mxu0
      %v787 = vadd.f32 %v463, %v786
      %v788 = vpop.f32.mrb[0].mxu0
      %789 = vmatprep.mubr.f32.mxu0 0.0
      %790 = vmatmul.mubr.f32.gmra.mrb[0].mxu0 %v619
      %v791 = vpop.f32.mrb[0].mxu0
      %v792 = vadd.f32 %v468, %v791
      %v793 = vpop.f32.mrb[0].mxu0
      %794 = vmatprep.mubr.f32.mxu0 0.0
      %795 = vmatmul.mubr.f32.gmra.mrb[0].mxu0 %v622
      %v796 = vpop.f32.mrb[0].mxu0
      %v797 = vadd.f32 %v473, %v796
      %v798 = vpop.f32.mrb[0].mxu0
      %799 = vmatprep.mubr.f32.mxu0 0.0
      %800 = vmatmul.mubr.f32.gmra.mrb[0].mxu0 %v625
      %v801 = vpop.f32.mrb[0].mxu0
      %v802 = vadd.f32 %v478, %v801
      %v803 = vpop.f32.mrb[0].mxu0
      %804 = vmatprep.mubr.f32.mxu0 0.0
      %805 = vmatmul.mubr.f32.gmra.mrb[0].mxu0 %v628
      %v806 = vpop.f32.mrb[0].mxu0
      %v807 = vadd.f32 %v483, %v806
      %v808 = vpop.f32.mrb[0].mxu0
      %809 = vmatprep.mubr.f32.mxu0 0.0
      %810 = vmatmul.mubr.f32.gmra.mrb[0].mxu0 %v631
      %v811 = vpop.f32.mrb[0].mxu0
      %v812 = vadd.f32 %v488, %v811
      %v813 = vpop.f32.mrb[0].mxu0
      %814 = vmatprep.mubr.f32.mxu0 0.0
      %815 = vmatmul.mubr.f32.gmra.mrb[0].mxu0 %v634
      %v816 = vpop.f32.mrb[0].mxu0
      %v817 = vadd.f32 %v493, %v816
      %v818 = vpop.f32.mrb[0].mxu0
      %819 = vmatprep.mubr.f32.mxu0 0.0
      %820 = vmatmul.mubr.f32.gmra.mrb[0].mxu0 %v637
      %v821 = vpop.f32.mrb[0].mxu0
      %v822 = vadd.f32 %v498, %v821
      %v823 = vpop.f32.mrb[0].mxu0
      %824 = vmatprep.mubr.f32.mxu0 0.0
      %825 = vmatmul.mubr.f32.gmra.mrb[0].mxu0 %v640
      %v826 = vpop.f32.mrb[0].mxu0
      %v827 = vadd.f32 %v503, %v826
      %v828 = vpop.f32.mrb[0].mxu0
      %829 = vmatprep.mubr.f32.mxu0 0.0
      %830 = vmatmul.mubr.f32.gmra.mrb[0].mxu0 %v643
      %v831 = vpop.f32.mrb[0].mxu0
      %v832 = vadd.f32 %v508, %v831
      %v833 = vpop.f32.mrb[0].mxu0
      %834 = vmatprep.mubr.f32.mxu0 0.0
      %835 = vmatmul.mubr.f32.gmra.mrb[0].mxu0 %v646
      %v836 = vpop.f32.mrb[0].mxu0
      %v837 = vadd.f32 %v513, %v836
      %v838 = vpop.f32.mrb[0].mxu0
      %839 = vmatprep.mubr.f32.mxu0 0.0
      %840 = vmatmul.mubr.f32.gmra.mrb[0].mxu0 %v649
      %v841 = vpop.f32.mrb[0].mxu0
      %v842 = vadd.f32 %v518, %v841
      %v843 = vpop.f32.mrb[0].mxu0
      %844 = vmatprep.mubr.f32.mxu0 0.0
      %845 = vmatmul.mubr.f32.gmra.mrb[0].mxu0 %v652
      %v846 = vpop.f32.mrb[0].mxu0
      %v847 = vadd.f32 %v523, %v846
      %v848 = vpop.f32.mrb[0].mxu0
      %849 = vmatprep.mubr.f32.mxu0 0.0
      %850 = vmatmul.mubr.f32.gmra.mrb[0].mxu0 %v655
      %v851 = vpop.f32.mrb[0].mxu0
      %v852 = vadd.f32 %v528, %v851
      %v853 = vpop.f32.mrb[0].mxu0
      %854 = vmatprep.mubr.f32.mxu0 0.0
      %855 = vmatmul.mubr.f32.gmra.mrb[0].mxu0 %v658
      %v856 = vpop.f32.mrb[0].mxu0
      %v857 = vadd.f32 %v533, %v856
      %v858 = vpop.f32.mrb[0].mxu0
      %859 = vmatprep.mubr.f32.mxu0 0.0
      %860 = vmatmul.mubr.f32.gmra.mrb[0].mxu0 %v661
      %v861 = vpop.f32.mrb[0].mxu0
      %v862 = vadd.f32 %v538, %v861
      %v863 = vpop.f32.mrb[0].mxu0
      %864 = vmatprep.mubr.f32.mxu0 0.0
      %865 = vmatmul.mubr.f32.gmra.mrb[0].mxu0 %v664
      %v866 = vpop.f32.mrb[0].mxu0
      %v867 = vadd.f32 %v543, %v866
      %v868 = vpop.f32.mrb[0].mxu0
      %869 = vmatprep.mubr.f32.mxu0 0.0
      %870 = vmatmul.mubr.f32.gmra.mrb[0].mxu0 %v667
      %v871 = vpop.f32.mrb[0].mxu0
      %v872 = vadd.f32 %v548, %v871
      %v873 = vpop.f32.mrb[0].mxu0
      %874 = vmatprep.mubr.f32.mxu0 0.0
      %875 = vmatmul.mubr.f32.gmra.mrb[0].mxu0 %v670
      %v876 = vpop.f32.mrb[0].mxu0
      %v877 = vadd.f32 %v553, %v876
      %v878 = vpop.f32.mrb[0].mxu0
      %879 = vmatprep.mubr.f32.mxu0 0.0
      %880 = vmatmul.mubr.f32.gmra.mrb[0].mxu0 %v673
      %v881 = vpop.f32.mrb[0].mxu0
      %v882 = vadd.f32 %v558, %v881
      %v883 = vpop.f32.mrb[0].mxu0
      %884 = vmatprep.mubr.f32.mxu0 0.0
      %885 = vmatmul.mubr.f32.gmra.mrb[0].mxu0 %v676
      %v886 = vpop.f32.mrb[0].mxu0
      %v887 = vadd.f32 %v563, %v886
      %v888 = vpop.f32.mrb[0].mxu0
      %889 = vmatprep.mubr.f32.mxu0 0.0
      %890 = vmatmul.mubr.f32.gmra.mrb[0].mxu0 %v679
      %v891 = vpop.f32.mrb[0].mxu0
      %v892 = vadd.f32 %v568, %v891
      %v893 = vpop.f32.mrb[0].mxu0
      %894 = vmatprep.mubr.f32.mxu0 0.0
      %895 = vmatmul.mubr.f32.gmra.mrb[0].mxu0 %v682
      %v896 = vpop.f32.mrb[0].mxu0
      %v897 = vadd.f32 %v573, %v896
      %v898 = vpop.f32.mrb[0].mxu0
      %899 = vmatprep.mubr.f32.mxu0 0.0
      %900 = vmatmul.mubr.f32.gmra.mrb[0].mxu0 %v685
      %v901 = vpop.f32.mrb[0].mxu0
      %v902 = vadd.f32 %v578, %v901
      %v903 = vpop.f32.mrb[0].mxu0
      %904 = vmatprep.mubr.f32.mxu0 0.0
      %905 = vmatmul.mubr.f32.gmra.mrb[0].mxu0 %v688
      %v906 = vpop.f32.mrb[0].mxu0
      %v907 = vadd.f32 %v583, %v906
      %v908 = vpop.f32.mrb[0].mxu0
      %909 = vmatprep.mubr.f32.mxu0 0.0
      %910 = vmatmul.mubr.f32.gmra.mrb[0].mxu0 %v691
      %v911 = vpop.f32.mrb[0].mxu0
      %v912 = vadd.f32 %v588, %v911
      %v913 = vpop.f32.mrb[0].mxu0
      %914 = vmatprep.mubr.f32.mxu0 0.0
      %915 = vmatmul.mubr.f32.gmra.mrb[0].mxu0 %v694
      %v916 = vpop.f32.mrb[0].mxu0
      %v917 = vadd.f32 %v593, %v916
      %v918 = vpop.f32.mrb[0].mxu0
      %919 = vmatprep.mubr.f32.mxu0 0.0
      %920 = vmatmul.mubr.f32.gmra.mrb[0].mxu0 %v697
      %v921 = vpop.f32.mrb[0].mxu0
      %v922 = vadd.f32 %v598, %v921
      %v923 = vpop.f32.mrb[0].mxu0
      %924 = vmatprep.mubr.f32.mxu0 0.0
      %925 = vmatmul.mubr.f32.gmra.mrb[0].mxu0 %v700
      %v926 = vpop.f32.mrb[0].mxu0
      %v927 = vadd.f32 %v603, %v926
      %v928 = vpop.f32.mrb[0].mxu0
      %929 = vdwg.mxu0
      %v930 = vld [vmem:[%s212 + $0xc] sm:$0xff]
      %v931 = vld [vmem:[%s212 + $0x14] sm:$0xff]
      %v932 = vld [vmem:[%s212 + $0x34] sm:$0xff]
      %v933 = vld [vmem:[%s212 + $0x3c] sm:$0xff]
      %v934 = vld [vmem:[%s212 + $0x5c] sm:$0xff]
      %v935 = vld [vmem:[%s212 + $0x64] sm:$0xff]
      %v936 = vld [vmem:[%s212 + $0x84] sm:$0xff]
      %v937 = vld [vmem:[%s212 + $0x8c] sm:$0xff]
      %v938 = vld [vmem:[%s212 + $0xac] sm:$0xff]
      %v939 = vld [vmem:[%s212 + $0xb4] sm:$0xff]
      %v940 = vld [vmem:[%s212 + $0xd4] sm:$0xff]
      %v941 = vld [vmem:[%s212 + $0xdc] sm:$0xff]
      %v942 = vld [vmem:[%s212 + $0xfc] sm:$0xff]
      %v943 = vld [vmem:[%s212 + $0x104] sm:$0xff]
      %v944 = vld [vmem:[%s212 + $0x124] sm:$0xff]
      %v945 = vld [vmem:[%s212 + $0x12c] sm:$0xff]
      %v946 = vld [vmem:[%s212 + $0x14c] sm:$0xff]
      %v947 = vld [vmem:[%s212 + $0x154] sm:$0xff]
      %v948 = vld [vmem:[%s212 + $0x174] sm:$0xff]
      %v949 = vld [vmem:[%s212 + $0x17c] sm:$0xff]
      %v950 = vld [vmem:[%s212 + $0x19c] sm:$0xff]
      %v951 = vld [vmem:[%s212 + $0x1a4] sm:$0xff]
      %v952 = vld [vmem:[%s212 + $0x1c4] sm:$0xff]
      %v953 = vld [vmem:[%s212 + $0x1cc] sm:$0xff]
      %v954 = vld [vmem:[%s212 + $0x1ec] sm:$0xff]
      %v955 = vld [vmem:[%s212 + $0x1f4] sm:$0xff]
      %v956 = vld [vmem:[%s212 + $0x214] sm:$0xff]
      %v957 = vld [vmem:[%s212 + $0x21c] sm:$0xff]
      %v958 = vld [vmem:[%s212 + $0x23c] sm:$0xff]
      %v959 = vld [vmem:[%s212 + $0x244] sm:$0xff]
      %v960 = vld [vmem:[%s212 + $0x264] sm:$0xff]
      %v961 = vld [vmem:[%s212 + $0x26c] sm:$0xff]
      %s962 = scalar_lea.vmem %s1, 8
      %v963 = vld [vmem:[%s962] sm:$0xf]
      %v965 = vsel %vm280, %v930, 0
      %v968 = vsel %vm280, %v931, 0
      %v971 = vsel %vm280, %v932, 0
      %v974 = vsel %vm280, %v933, 0
      %v977 = vsel %vm280, %v934, 0
      %v980 = vsel %vm280, %v935, 0
      %v983 = vsel %vm280, %v936, 0
      %v986 = vsel %vm280, %v937, 0
      %v989 = vsel %vm280, %v938, 0
      %v992 = vsel %vm280, %v939, 0
      %v995 = vsel %vm280, %v940, 0
      %v998 = vsel %vm280, %v941, 0
      %v1001 = vsel %vm280, %v942, 0
      %v1004 = vsel %vm280, %v943, 0
      %v1007 = vsel %vm280, %v944, 0
      %v1010 = vsel %vm280, %v945, 0
      %v1013 = vsel %vm280, %v946, 0
      %v1016 = vsel %vm280, %v947, 0
      %v1019 = vsel %vm280, %v948, 0
      %v1022 = vsel %vm280, %v949, 0
      %v1025 = vsel %vm280, %v950, 0
      %v1028 = vsel %vm280, %v951, 0
      %v1031 = vsel %vm280, %v952, 0
      %v1034 = vsel %vm280, %v953, 0
      %v1037 = vsel %vm280, %v954, 0
      %v1040 = vsel %vm280, %v955, 0
      %v1043 = vsel %vm280, %v956, 0
      %v1046 = vsel %vm280, %v957, 0
      %v1049 = vsel %vm280, %v958, 0
      %v1052 = vsel %vm280, %v959, 0
      %v1055 = vsel %vm280, %v960, 0
      %v1058 = vsel %vm280, %v961, 0
      %v1061 = vsel %vm377, %v963, 0
      %1063 = vmatprep.subr.mxu0 0.0
      %1064 = vmatpush1.msra.mxu0 %v1061
      %1065 = vmatprep.subr.mxu0 0.0
      %1066 = vmatpush1.msra.mxu0 0.0
      %1067 = vmatprep.subr.mxu0 0.0
      %1068 = vmatpush1.msra.mxu0 0.0
      %1069 = vmatprep.subr.mxu0 0.0
      %1070 = vmatpush1.msra.mxu0 0.0
      %1071 = vmatprep.subr.mxu0 0.0
      %1072 = vmatpush1.msra.mxu0 0.0
      %1073 = vmatprep.subr.mxu0 0.0
      %1074 = vmatpush1.msra.mxu0 0.0
      %1075 = vmatprep.subr.mxu0 0.0
      %1076 = vmatpush1.msra.mxu0 0.0
      %1077 = vmatprep.subr.mxu0 0.0
      %1078 = vmatpush1.msra.mxu0 0.0
      %1079 = vmatprep.subr.mxu0 0.0
      %1080 = vmatpush1.msra.mxu0 0.0
      %1081 = vmatprep.subr.mxu0 0.0
      %1082 = vmatpush1.msra.mxu0 0.0
      %1083 = vmatprep.subr.mxu0 0.0
      %1084 = vmatpush1.msra.mxu0 0.0
      %1085 = vmatprep.subr.mxu0 0.0
      %1086 = vmatpush1.msra.mxu0 0.0
      %1087 = vmatprep.subr.mxu0 0.0
      %1088 = vmatpush1.msra.mxu0 0.0
      %1089 = vmatprep.subr.mxu0 0.0
      %1090 = vmatpush1.msra.mxu0 0.0
      %1091 = vmatprep.subr.mxu0 0.0
      %1092 = vmatpush1.msra.mxu0 0.0
      %1093 = vmatprep.subr.mxu0 0.0
      %1094 = vmatpush1.msra.mxu0 0.0
      %1095 = vmatprep.subr.mxu0 0.0
      %1096 = vmatpush1.msra.mxu0 0.0
      %1097 = vmatprep.subr.mxu0 0.0
      %1098 = vmatpush1.msra.mxu0 0.0
      %1099 = vmatprep.subr.mxu0 0.0
      %1100 = vmatpush1.msra.mxu0 0.0
      %1101 = vmatprep.subr.mxu0 0.0
      %1102 = vmatpush1.msra.mxu0 0.0
      %1103 = vmatprep.subr.mxu0 0.0
      %1104 = vmatpush1.msra.mxu0 0.0
      %1105 = vmatprep.subr.mxu0 0.0
      %1106 = vmatpush1.msra.mxu0 0.0
      %1107 = vmatprep.subr.mxu0 0.0
      %1108 = vmatpush1.msra.mxu0 0.0
      %1109 = vmatprep.subr.mxu0 0.0
      %1110 = vmatpush1.msra.mxu0 0.0
      %1111 = vmatprep.subr.mxu0 0.0
      %1112 = vmatpush1.msra.mxu0 0.0
      %1113 = vmatprep.subr.mxu0 0.0
      %1114 = vmatpush1.msra.mxu0 0.0
      %1115 = vmatprep.subr.mxu0 0.0
      %1116 = vmatpush1.msra.mxu0 0.0
      %1117 = vmatprep.subr.mxu0 0.0
      %1118 = vmatpush1.msra.mxu0 0.0
      %1119 = vmatprep.subr.mxu0 0.0
      %1120 = vmatpush1.msra.mxu0 0.0
      %1121 = vmatprep.subr.mxu0 0.0
      %1122 = vmatpush1.msra.mxu0 0.0
      %1123 = vmatprep.subr.mxu0 0.0
      %1124 = vmatpush1.msra.mxu0 0.0
      %1125 = vmatprep.subr.mxu0 0.0
      %1126 = vmatpush1.msra.mxu0 0.0
      %1127 = vmatprep.mubr.f32.mxu0 0.0
      %1128 = vmatmul.mubr.f32.gmra.mrb[0].mxu0 %v965
      %v1129 = vpop.f32.mrb[0].mxu0
      %v1130 = vadd.f32 0.0, %v1129
      %v1131 = vpop.f32.mrb[0].mxu0
      %1132 = vmatprep.mubr.f32.mxu0 0.0
      %1133 = vmatmul.mubr.f32.gmra.mrb[0].mxu0 %v968
      %v1134 = vpop.f32.mrb[0].mxu0
      %v1135 = vadd.f32 0.0, %v1134
      %v1136 = vpop.f32.mrb[0].mxu0
      %1137 = vmatprep.mubr.f32.mxu0 0.0
      %1138 = vmatmul.mubr.f32.gmra.mrb[0].mxu0 %v971
      %v1139 = vpop.f32.mrb[0].mxu0
      %v1140 = vadd.f32 0.0, %v1139
      %v1141 = vpop.f32.mrb[0].mxu0
      %1142 = vmatprep.mubr.f32.mxu0 0.0
      %1143 = vmatmul.mubr.f32.gmra.mrb[0].mxu0 %v974
      %v1144 = vpop.f32.mrb[0].mxu0
      %v1145 = vadd.f32 0.0, %v1144
      %v1146 = vpop.f32.mrb[0].mxu0
      %1147 = vmatprep.mubr.f32.mxu0 0.0
      %1148 = vmatmul.mubr.f32.gmra.mrb[0].mxu0 %v977
      %v1149 = vpop.f32.mrb[0].mxu0
      %v1150 = vadd.f32 0.0, %v1149
      %v1151 = vpop.f32.mrb[0].mxu0
      %1152 = vmatprep.mubr.f32.mxu0 0.0
      %1153 = vmatmul.mubr.f32.gmra.mrb[0].mxu0 %v980
      %v1154 = vpop.f32.mrb[0].mxu0
      %v1155 = vadd.f32 0.0, %v1154
      %v1156 = vpop.f32.mrb[0].mxu0
      %1157 = vmatprep.mubr.f32.mxu0 0.0
      %1158 = vmatmul.mubr.f32.gmra.mrb[0].mxu0 %v983
      %v1159 = vpop.f32.mrb[0].mxu0
      %v1160 = vadd.f32 0.0, %v1159
      %v1161 = vpop.f32.mrb[0].mxu0
      %1162 = vmatprep.mubr.f32.mxu0 0.0
      %1163 = vmatmul.mubr.f32.gmra.mrb[0].mxu0 %v986
      %v1164 = vpop.f32.mrb[0].mxu0
      %v1165 = vadd.f32 0.0, %v1164
      %v1166 = vpop.f32.mrb[0].mxu0
      %1167 = vmatprep.mubr.f32.mxu0 0.0
      %1168 = vmatmul.mubr.f32.gmra.mrb[0].mxu0 %v989
      %v1169 = vpop.f32.mrb[0].mxu0
      %v1170 = vadd.f32 0.0, %v1169
      %v1171 = vpop.f32.mrb[0].mxu0
      %1172 = vmatprep.mubr.f32.mxu0 0.0
      %1173 = vmatmul.mubr.f32.gmra.mrb[0].mxu0 %v992
      %v1174 = vpop.f32.mrb[0].mxu0
      %v1175 = vadd.f32 0.0, %v1174
      %v1176 = vpop.f32.mrb[0].mxu0
      %1177 = vmatprep.mubr.f32.mxu0 0.0
      %1178 = vmatmul.mubr.f32.gmra.mrb[0].mxu0 %v995
      %v1179 = vpop.f32.mrb[0].mxu0
      %v1180 = vadd.f32 0.0, %v1179
      %v1181 = vpop.f32.mrb[0].mxu0
      %1182 = vmatprep.mubr.f32.mxu0 0.0
      %1183 = vmatmul.mubr.f32.gmra.mrb[0].mxu0 %v998
      %v1184 = vpop.f32.mrb[0].mxu0
      %v1185 = vadd.f32 0.0, %v1184
      %v1186 = vpop.f32.mrb[0].mxu0
      %1187 = vmatprep.mubr.f32.mxu0 0.0
      %1188 = vmatmul.mubr.f32.gmra.mrb[0].mxu0 %v1001
      %v1189 = vpop.f32.mrb[0].mxu0
      %v1190 = vadd.f32 0.0, %v1189
      %v1191 = vpop.f32.mrb[0].mxu0
      %1192 = vmatprep.mubr.f32.mxu0 0.0
      %1193 = vmatmul.mubr.f32.gmra.mrb[0].mxu0 %v1004
      %v1194 = vpop.f32.mrb[0].mxu0
      %v1195 = vadd.f32 0.0, %v1194
      %v1196 = vpop.f32.mrb[0].mxu0
      %1197 = vmatprep.mubr.f32.mxu0 0.0
      %1198 = vmatmul.mubr.f32.gmra.mrb[0].mxu0 %v1007
      %v1199 = vpop.f32.mrb[0].mxu0
      %v1200 = vadd.f32 0.0, %v1199
      %v1201 = vpop.f32.mrb[0].mxu0
      %1202 = vmatprep.mubr.f32.mxu0 0.0
      %1203 = vmatmul.mubr.f32.gmra.mrb[0].mxu0 %v1010
      %v1204 = vpop.f32.mrb[0].mxu0
      %v1205 = vadd.f32 0.0, %v1204
      %v1206 = vpop.f32.mrb[0].mxu0
      %1207 = vmatprep.mubr.f32.mxu0 0.0
      %1208 = vmatmul.mubr.f32.gmra.mrb[0].mxu0 %v1013
      %v1209 = vpop.f32.mrb[0].mxu0
      %v1210 = vadd.f32 0.0, %v1209
      %v1211 = vpop.f32.mrb[0].mxu0
      %1212 = vmatprep.mubr.f32.mxu0 0.0
      %1213 = vmatmul.mubr.f32.gmra.mrb[0].mxu0 %v1016
      %v1214 = vpop.f32.mrb[0].mxu0
      %v1215 = vadd.f32 0.0, %v1214
      %v1216 = vpop.f32.mrb[0].mxu0
      %1217 = vmatprep.mubr.f32.mxu0 0.0
      %1218 = vmatmul.mubr.f32.gmra.mrb[0].mxu0 %v1019
      %v1219 = vpop.f32.mrb[0].mxu0
      %v1220 = vadd.f32 0.0, %v1219
      %v1221 = vpop.f32.mrb[0].mxu0
      %1222 = vmatprep.mubr.f32.mxu0 0.0
      %1223 = vmatmul.mubr.f32.gmra.mrb[0].mxu0 %v1022
      %v1224 = vpop.f32.mrb[0].mxu0
      %v1225 = vadd.f32 0.0, %v1224
      %v1226 = vpop.f32.mrb[0].mxu0
      %1227 = vmatprep.mubr.f32.mxu0 0.0
      %1228 = vmatmul.mubr.f32.gmra.mrb[0].mxu0 %v1025
      %v1229 = vpop.f32.mrb[0].mxu0
      %v1230 = vadd.f32 0.0, %v1229
      %v1231 = vpop.f32.mrb[0].mxu0
      %1232 = vmatprep.mubr.f32.mxu0 0.0
      %1233 = vmatmul.mubr.f32.gmra.mrb[0].mxu0 %v1028
      %v1234 = vpop.f32.mrb[0].mxu0
      %v1235 = vadd.f32 0.0, %v1234
      %v1236 = vpop.f32.mrb[0].mxu0
      %1237 = vmatprep.mubr.f32.mxu0 0.0
      %1238 = vmatmul.mubr.f32.gmra.mrb[0].mxu0 %v1031
      %v1239 = vpop.f32.mrb[0].mxu0
      %v1240 = vadd.f32 0.0, %v1239
      %v1241 = vpop.f32.mrb[0].mxu0
      %1242 = vmatprep.mubr.f32.mxu0 0.0
      %1243 = vmatmul.mubr.f32.gmra.mrb[0].mxu0 %v1034
      %v1244 = vpop.f32.mrb[0].mxu0
      %v1245 = vadd.f32 0.0, %v1244
      %v1246 = vpop.f32.mrb[0].mxu0
      %1247 = vmatprep.mubr.f32.mxu0 0.0
      %1248 = vmatmul.mubr.f32.gmra.mrb[0].mxu0 %v1037
      %v1249 = vpop.f32.mrb[0].mxu0
      %v1250 = vadd.f32 0.0, %v1249
      %v1251 = vpop.f32.mrb[0].mxu0
      %1252 = vmatprep.mubr.f32.mxu0 0.0
      %1253 = vmatmul.mubr.f32.gmra.mrb[0].mxu0 %v1040
      %v1254 = vpop.f32.mrb[0].mxu0
      %v1255 = vadd.f32 0.0, %v1254
      %v1256 = vpop.f32.mrb[0].mxu0
      %1257 = vmatprep.mubr.f32.mxu0 0.0
      %1258 = vmatmul.mubr.f32.gmra.mrb[0].mxu0 %v1043
      %v1259 = vpop.f32.mrb[0].mxu0
      %v1260 = vadd.f32 0.0, %v1259
      %v1261 = vpop.f32.mrb[0].mxu0
      %1262 = vmatprep.mubr.f32.mxu0 0.0
      %1263 = vmatmul.mubr.f32.gmra.mrb[0].mxu0 %v1046
      %v1264 = vpop.f32.mrb[0].mxu0
      %v1265 = vadd.f32 0.0, %v1264
      %v1266 = vpop.f32.mrb[0].mxu0
      %1267 = vmatprep.mubr.f32.mxu0 0.0
      %1268 = vmatmul.mubr.f32.gmra.mrb[0].mxu0 %v1049
      %v1269 = vpop.f32.mrb[0].mxu0
      %v1270 = vadd.f32 0.0, %v1269
      %v1271 = vpop.f32.mrb[0].mxu0
      %1272 = vmatprep.mubr.f32.mxu0 0.0
      %1273 = vmatmul.mubr.f32.gmra.mrb[0].mxu0 %v1052
      %v1274 = vpop.f32.mrb[0].mxu0
      %v1275 = vadd.f32 0.0, %v1274
      %v1276 = vpop.f32.mrb[0].mxu0
      %1277 = vmatprep.mubr.f32.mxu0 0.0
      %1278 = vmatmul.mubr.f32.gmra.mrb[0].mxu0 %v1055
      %v1279 = vpop.f32.mrb[0].mxu0
      %v1280 = vadd.f32 0.0, %v1279
      %v1281 = vpop.f32.mrb[0].mxu0
      %1282 = vmatprep.mubr.f32.mxu0 0.0
      %1283 = vmatmul.mubr.f32.gmra.mrb[0].mxu0 %v1058
      %v1284 = vpop.f32.mrb[0].mxu0
      %v1285 = vadd.f32 0.0, %v1284
      %v1286 = vpop.f32.mrb[0].mxu0
      %1287 = vdwg.mxu0
      %v1288 = vadd.f32 %v772, %v1130
      %v1289 = vadd.f32 %v777, %v1135
      %v1290 = vadd.f32 %v782, %v1140
      %v1291 = vadd.f32 %v787, %v1145
      %v1292 = vadd.f32 %v792, %v1150
      %v1293 = vadd.f32 %v797, %v1155
      %v1294 = vadd.f32 %v802, %v1160
      %v1295 = vadd.f32 %v807, %v1165
      %v1296 = vadd.f32 %v812, %v1170
      %v1297 = vadd.f32 %v817, %v1175
      %v1298 = vadd.f32 %v822, %v1180
      %v1299 = vadd.f32 %v827, %v1185
      %v1300 = vadd.f32 %v832, %v1190
      %v1301 = vadd.f32 %v837, %v1195
      %v1302 = vadd.f32 %v842, %v1200
      %v1303 = vadd.f32 %v847, %v1205
      %v1304 = vadd.f32 %v852, %v1210
      %v1305 = vadd.f32 %v857, %v1215
      %v1306 = vadd.f32 %v862, %v1220
      %v1307 = vadd.f32 %v867, %v1225
      %v1308 = vadd.f32 %v872, %v1230
      %v1309 = vadd.f32 %v877, %v1235
      %v1310 = vadd.f32 %v882, %v1240
      %v1311 = vadd.f32 %v887, %v1245
      %v1312 = vadd.f32 %v892, %v1250
      %v1313 = vadd.f32 %v897, %v1255
      %v1314 = vadd.f32 %v902, %v1260
      %v1315 = vadd.f32 %v907, %v1265
      %v1316 = vadd.f32 %v912, %v1270
      %v1317 = vadd.f32 %v917, %v1275
      %v1318 = vadd.f32 %v922, %v1280
      %v1319 = vadd.f32 %v927, %v1285
      %s1320 = scalar_lea.vmem %s203, 360
      %v1321 = vld [vmem:[%s1320 + $0x6] sm:$0xff]
      %v1322 = vld [vmem:[%s1320 + $0xe] sm:$0xff]
      %v1323 = vld [vmem:[%s1320 + $0x2e] sm:$0xff]
      %v1324 = vld [vmem:[%s1320 + $0x36] sm:$0xff]
      %v1325 = vld [vmem:[%s1320 + $0x56] sm:$0xff]
      %v1326 = vld [vmem:[%s1320 + $0x5e] sm:$0xff]
      %v1327 = vld [vmem:[%s1320 + $0x7e] sm:$0xff]
      %v1328 = vld [vmem:[%s1320 + $0x86] sm:$0xff]
      %v1329 = vld [vmem:[%s1320 + $0xa6] sm:$0xff]
      %v1330 = vld [vmem:[%s1320 + $0xae] sm:$0xff]
      %v1331 = vld [vmem:[%s1320 + $0xce] sm:$0xff]
      %v1332 = vld [vmem:[%s1320 + $0xd6] sm:$0xff]
      %v1333 = vld [vmem:[%s1320 + $0xf6] sm:$0xff]
      %v1334 = vld [vmem:[%s1320 + $0xfe] sm:$0xff]
      %v1335 = vld [vmem:[%s1320 + $0x11e] sm:$0xff]
      %v1336 = vld [vmem:[%s1320 + $0x126] sm:$0xff]
      %v1337 = vld [vmem:[%s1320 + $0x146] sm:$0xff]
      %v1338 = vld [vmem:[%s1320 + $0x14e] sm:$0xff]
      %v1339 = vld [vmem:[%s1320 + $0x16e] sm:$0xff]
      %v1340 = vld [vmem:[%s1320 + $0x176] sm:$0xff]
      %v1341 = vld [vmem:[%s1320 + $0x196] sm:$0xff]
      %v1342 = vld [vmem:[%s1320 + $0x19e] sm:$0xff]
      %v1343 = vld [vmem:[%s1320 + $0x1be] sm:$0xff]
      %v1344 = vld [vmem:[%s1320 + $0x1c6] sm:$0xff]
      %v1345 = vld [vmem:[%s1320 + $0x1e6] sm:$0xff]
      %v1346 = vld [vmem:[%s1320 + $0x1ee] sm:$0xff]
      %v1347 = vld [vmem:[%s1320 + $0x20e] sm:$0xff]
      %v1348 = vld [vmem:[%s1320 + $0x216] sm:$0xff]
      %v1349 = vld [vmem:[%s1320 + $0x236] sm:$0xff]
      %v1350 = vld [vmem:[%s1320 + $0x23e] sm:$0xff]
      %v1351 = vld [vmem:[%s1320 + $0x25e] sm:$0xff]
      %v1352 = vld [vmem:[%s1320 + $0x266] sm:$0xff]
      %s1353 = scalar_lea.vmem %s1, 12
      %v1354 = vld [vmem:[%s1353] sm:$0xf]
      %v1356 = vsel %vm280, %v1321, 0
      %v1359 = vsel %vm280, %v1322, 0
      %v1362 = vsel %vm280, %v1323, 0
      %v1365 = vsel %vm280, %v1324, 0
      %v1368 = vsel %vm280, %v1325, 0
      %v1371 = vsel %vm280, %v1326, 0
      %v1374 = vsel %vm280, %v1327, 0
      %v1377 = vsel %vm280, %v1328, 0
      %v1380 = vsel %vm280, %v1329, 0
      %v1383 = vsel %vm280, %v1330, 0
      %v1386 = vsel %vm280, %v1331, 0
      %v1389 = vsel %vm280, %v1332, 0
      %v1392 = vsel %vm280, %v1333, 0
      %v1395 = vsel %vm280, %v1334, 0
      %v1398 = vsel %vm280, %v1335, 0
      %v1401 = vsel %vm280, %v1336, 0
      %v1404 = vsel %vm280, %v1337, 0
      %v1407 = vsel %vm280, %v1338, 0
      %v1410 = vsel %vm280, %v1339, 0
      %v1413 = vsel %vm280, %v1340, 0
      %v1416 = vsel %vm280, %v1341, 0
      %v1419 = vsel %vm280, %v1342, 0
      %v1422 = vsel %vm280, %v1343, 0
      %v1425 = vsel %vm280, %v1344, 0
      %v1428 = vsel %vm280, %v1345, 0
      %v1431 = vsel %vm280, %v1346, 0
      %v1434 = vsel %vm280, %v1347, 0
      %v1437 = vsel %vm280, %v1348, 0
      %v1440 = vsel %vm280, %v1349, 0
      %v1443 = vsel %vm280, %v1350, 0
      %v1446 = vsel %vm280, %v1351, 0
      %v1449 = vsel %vm280, %v1352, 0
      %v1452 = vsel %vm377, %v1354, 0
      %1454 = vmatprep.subr.mxu0 0.0
      %1455 = vmatpush1.msra.mxu0 %v1452
      %1456 = vmatprep.subr.mxu0 0.0
      %1457 = vmatpush1.msra.mxu0 0.0
      %1458 = vmatprep.subr.mxu0 0.0
      %1459 = vmatpush1.msra.mxu0 0.0
      %1460 = vmatprep.subr.mxu0 0.0
      %1461 = vmatpush1.msra.mxu0 0.0
      %1462 = vmatprep.subr.mxu0 0.0
      %1463 = vmatpush1.msra.mxu0 0.0
      %1464 = vmatprep.subr.mxu0 0.0
      %1465 = vmatpush1.msra.mxu0 0.0
      %1466 = vmatprep.subr.mxu0 0.0
      %1467 = vmatpush1.msra.mxu0 0.0
      %1468 = vmatprep.subr.mxu0 0.0
      %1469 = vmatpush1.msra.mxu0 0.0
      %1470 = vmatprep.subr.mxu0 0.0
      %1471 = vmatpush1.msra.mxu0 0.0
      %1472 = vmatprep.subr.mxu0 0.0
      %1473 = vmatpush1.msra.mxu0 0.0
      %1474 = vmatprep.subr.mxu0 0.0
      %1475 = vmatpush1.msra.mxu0 0.0
      %1476 = vmatprep.subr.mxu0 0.0
      %1477 = vmatpush1.msra.mxu0 0.0
      %1478 = vmatprep.subr.mxu0 0.0
      %1479 = vmatpush1.msra.mxu0 0.0
      %1480 = vmatprep.subr.mxu0 0.0
      %1481 = vmatpush1.msra.mxu0 0.0
      %1482 = vmatprep.subr.mxu0 0.0
      %1483 = vmatpush1.msra.mxu0 0.0
      %1484 = vmatprep.subr.mxu0 0.0
      %1485 = vmatpush1.msra.mxu0 0.0
      %1486 = vmatprep.subr.mxu0 0.0
      %1487 = vmatpush1.msra.mxu0 0.0
      %1488 = vmatprep.subr.mxu0 0.0
      %1489 = vmatpush1.msra.mxu0 0.0
      %1490 = vmatprep.subr.mxu0 0.0
      %1491 = vmatpush1.msra.mxu0 0.0
      %1492 = vmatprep.subr.mxu0 0.0
      %1493 = vmatpush1.msra.mxu0 0.0
      %1494 = vmatprep.subr.mxu0 0.0
      %1495 = vmatpush1.msra.mxu0 0.0
      %1496 = vmatprep.subr.mxu0 0.0
      %1497 = vmatpush1.msra.mxu0 0.0
      %1498 = vmatprep.subr.mxu0 0.0
      %1499 = vmatpush1.msra.mxu0 0.0
      %1500 = vmatprep.subr.mxu0 0.0
      %1501 = vmatpush1.msra.mxu0 0.0
      %1502 = vmatprep.subr.mxu0 0.0
      %1503 = vmatpush1.msra.mxu0 0.0
      %1504 = vmatprep.subr.mxu0 0.0
      %1505 = vmatpush1.msra.mxu0 0.0
      %1506 = vmatprep.subr.mxu0 0.0
      %1507 = vmatpush1.msra.mxu0 0.0
      %1508 = vmatprep.subr.mxu0 0.0
      %1509 = vmatpush1.msra.mxu0 0.0
      %1510 = vmatprep.subr.mxu0 0.0
      %1511 = vmatpush1.msra.mxu0 0.0
      %1512 = vmatprep.subr.mxu0 0.0
      %1513 = vmatpush1.msra.mxu0 0.0
      %1514 = vmatprep.subr.mxu0 0.0
      %1515 = vmatpush1.msra.mxu0 0.0
      %1516 = vmatprep.subr.mxu0 0.0
      %1517 = vmatpush1.msra.mxu0 0.0
      %1518 = vmatprep.mubr.f32.mxu0 0.0
      %1519 = vmatmul.mubr.f32.gmra.mrb[0].mxu0 %v1356
      %v1520 = vpop.f32.mrb[0].mxu0
      %v1521 = vadd.f32 0.0, %v1520
      %v1522 = vpop.f32.mrb[0].mxu0
      %1523 = vmatprep.mubr.f32.mxu0 0.0
      %1524 = vmatmul.mubr.f32.gmra.mrb[0].mxu0 %v1359
      %v1525 = vpop.f32.mrb[0].mxu0
      %v1526 = vadd.f32 0.0, %v1525
      %v1527 = vpop.f32.mrb[0].mxu0
      %1528 = vmatprep.mubr.f32.mxu0 0.0
      %1529 = vmatmul.mubr.f32.gmra.mrb[0].mxu0 %v1362
      %v1530 = vpop.f32.mrb[0].mxu0
      %v1531 = vadd.f32 0.0, %v1530
      %v1532 = vpop.f32.mrb[0].mxu0
      %1533 = vmatprep.mubr.f32.mxu0 0.0
      %1534 = vmatmul.mubr.f32.gmra.mrb[0].mxu0 %v1365
      %v1535 = vpop.f32.mrb[0].mxu0
      %v1536 = vadd.f32 0.0, %v1535
      %v1537 = vpop.f32.mrb[0].mxu0
      %1538 = vmatprep.mubr.f32.mxu0 0.0
      %1539 = vmatmul.mubr.f32.gmra.mrb[0].mxu0 %v1368
      %v1540 = vpop.f32.mrb[0].mxu0
      %v1541 = vadd.f32 0.0, %v1540
      %v1542 = vpop.f32.mrb[0].mxu0
      %1543 = vmatprep.mubr.f32.mxu0 0.0
      %1544 = vmatmul.mubr.f32.gmra.mrb[0].mxu0 %v1371
      %v1545 = vpop.f32.mrb[0].mxu0
      %v1546 = vadd.f32 0.0, %v1545
      %v1547 = vpop.f32.mrb[0].mxu0
      %1548 = vmatprep.mubr.f32.mxu0 0.0
      %1549 = vmatmul.mubr.f32.gmra.mrb[0].mxu0 %v1374
      %v1550 = vpop.f32.mrb[0].mxu0
      %v1551 = vadd.f32 0.0, %v1550
      %v1552 = vpop.f32.mrb[0].mxu0
      %1553 = vmatprep.mubr.f32.mxu0 0.0
      %1554 = vmatmul.mubr.f32.gmra.mrb[0].mxu0 %v1377
      %v1555 = vpop.f32.mrb[0].mxu0
      %v1556 = vadd.f32 0.0, %v1555
      %v1557 = vpop.f32.mrb[0].mxu0
      %1558 = vmatprep.mubr.f32.mxu0 0.0
      %1559 = vmatmul.mubr.f32.gmra.mrb[0].mxu0 %v1380
      %v1560 = vpop.f32.mrb[0].mxu0
      %v1561 = vadd.f32 0.0, %v1560
      %v1562 = vpop.f32.mrb[0].mxu0
      %1563 = vmatprep.mubr.f32.mxu0 0.0
      %1564 = vmatmul.mubr.f32.gmra.mrb[0].mxu0 %v1383
      %v1565 = vpop.f32.mrb[0].mxu0
      %v1566 = vadd.f32 0.0, %v1565
      %v1567 = vpop.f32.mrb[0].mxu0
      %1568 = vmatprep.mubr.f32.mxu0 0.0
      %1569 = vmatmul.mubr.f32.gmra.mrb[0].mxu0 %v1386
      %v1570 = vpop.f32.mrb[0].mxu0
      %v1571 = vadd.f32 0.0, %v1570
      %v1572 = vpop.f32.mrb[0].mxu0
      %1573 = vmatprep.mubr.f32.mxu0 0.0
      %1574 = vmatmul.mubr.f32.gmra.mrb[0].mxu0 %v1389
      %v1575 = vpop.f32.mrb[0].mxu0
      %v1576 = vadd.f32 0.0, %v1575
      %v1577 = vpop.f32.mrb[0].mxu0
      %1578 = vmatprep.mubr.f32.mxu0 0.0
      %1579 = vmatmul.mubr.f32.gmra.mrb[0].mxu0 %v1392
      %v1580 = vpop.f32.mrb[0].mxu0
      %v1581 = vadd.f32 0.0, %v1580
      %v1582 = vpop.f32.mrb[0].mxu0
      %1583 = vmatprep.mubr.f32.mxu0 0.0
      %1584 = vmatmul.mubr.f32.gmra.mrb[0].mxu0 %v1395
      %v1585 = vpop.f32.mrb[0].mxu0
      %v1586 = vadd.f32 0.0, %v1585
      %v1587 = vpop.f32.mrb[0].mxu0
      %1588 = vmatprep.mubr.f32.mxu0 0.0
      %1589 = vmatmul.mubr.f32.gmra.mrb[0].mxu0 %v1398
      %v1590 = vpop.f32.mrb[0].mxu0
      %v1591 = vadd.f32 0.0, %v1590
      %v1592 = vpop.f32.mrb[0].mxu0
      %1593 = vmatprep.mubr.f32.mxu0 0.0
      %1594 = vmatmul.mubr.f32.gmra.mrb[0].mxu0 %v1401
      %v1595 = vpop.f32.mrb[0].mxu0
      %v1596 = vadd.f32 0.0, %v1595
      %v1597 = vpop.f32.mrb[0].mxu0
      %1598 = vmatprep.mubr.f32.mxu0 0.0
      %1599 = vmatmul.mubr.f32.gmra.mrb[0].mxu0 %v1404
      %v1600 = vpop.f32.mrb[0].mxu0
      %v1601 = vadd.f32 0.0, %v1600
      %v1602 = vpop.f32.mrb[0].mxu0
      %1603 = vmatprep.mubr.f32.mxu0 0.0
      %1604 = vmatmul.mubr.f32.gmra.mrb[0].mxu0 %v1407
      %v1605 = vpop.f32.mrb[0].mxu0
      %v1606 = vadd.f32 0.0, %v1605
      %v1607 = vpop.f32.mrb[0].mxu0
      %1608 = vmatprep.mubr.f32.mxu0 0.0
      %1609 = vmatmul.mubr.f32.gmra.mrb[0].mxu0 %v1410
      %v1610 = vpop.f32.mrb[0].mxu0
      %v1611 = vadd.f32 0.0, %v1610
      %v1612 = vpop.f32.mrb[0].mxu0
      %1613 = vmatprep.mubr.f32.mxu0 0.0
      %1614 = vmatmul.mubr.f32.gmra.mrb[0].mxu0 %v1413
      %v1615 = vpop.f32.mrb[0].mxu0
      %v1616 = vadd.f32 0.0, %v1615
      %v1617 = vpop.f32.mrb[0].mxu0
      %1618 = vmatprep.mubr.f32.mxu0 0.0
      %1619 = vmatmul.mubr.f32.gmra.mrb[0].mxu0 %v1416
      %v1620 = vpop.f32.mrb[0].mxu0
      %v1621 = vadd.f32 0.0, %v1620
      %v1622 = vpop.f32.mrb[0].mxu0
      %1623 = vmatprep.mubr.f32.mxu0 0.0
      %1624 = vmatmul.mubr.f32.gmra.mrb[0].mxu0 %v1419
      %v1625 = vpop.f32.mrb[0].mxu0
      %v1626 = vadd.f32 0.0, %v1625
      %v1627 = vpop.f32.mrb[0].mxu0
      %1628 = vmatprep.mubr.f32.mxu0 0.0
      %1629 = vmatmul.mubr.f32.gmra.mrb[0].mxu0 %v1422
      %v1630 = vpop.f32.mrb[0].mxu0
      %v1631 = vadd.f32 0.0, %v1630
      %v1632 = vpop.f32.mrb[0].mxu0
      %1633 = vmatprep.mubr.f32.mxu0 0.0
      %1634 = vmatmul.mubr.f32.gmra.mrb[0].mxu0 %v1425
      %v1635 = vpop.f32.mrb[0].mxu0
      %v1636 = vadd.f32 0.0, %v1635
      %v1637 = vpop.f32.mrb[0].mxu0
      %1638 = vmatprep.mubr.f32.mxu0 0.0
      %1639 = vmatmul.mubr.f32.gmra.mrb[0].mxu0 %v1428
      %v1640 = vpop.f32.mrb[0].mxu0
      %v1641 = vadd.f32 0.0, %v1640
      %v1642 = vpop.f32.mrb[0].mxu0
      %1643 = vmatprep.mubr.f32.mxu0 0.0
      %1644 = vmatmul.mubr.f32.gmra.mrb[0].mxu0 %v1431
      %v1645 = vpop.f32.mrb[0].mxu0
      %v1646 = vadd.f32 0.0, %v1645
      %v1647 = vpop.f32.mrb[0].mxu0
      %1648 = vmatprep.mubr.f32.mxu0 0.0
      %1649 = vmatmul.mubr.f32.gmra.mrb[0].mxu0 %v1434
      %v1650 = vpop.f32.mrb[0].mxu0
      %v1651 = vadd.f32 0.0, %v1650
      %v1652 = vpop.f32.mrb[0].mxu0
      %1653 = vmatprep.mubr.f32.mxu0 0.0
      %1654 = vmatmul.mubr.f32.gmra.mrb[0].mxu0 %v1437
      %v1655 = vpop.f32.mrb[0].mxu0
      %v1656 = vadd.f32 0.0, %v1655
      %v1657 = vpop.f32.mrb[0].mxu0
      %1658 = vmatprep.mubr.f32.mxu0 0.0
      %1659 = vmatmul.mubr.f32.gmra.mrb[0].mxu0 %v1440
      %v1660 = vpop.f32.mrb[0].mxu0
      %v1661 = vadd.f32 0.0, %v1660
      %v1662 = vpop.f32.mrb[0].mxu0
      %1663 = vmatprep.mubr.f32.mxu0 0.0
      %1664 = vmatmul.mubr.f32.gmra.mrb[0].mxu0 %v1443
      %v1665 = vpop.f32.mrb[0].mxu0
      %v1666 = vadd.f32 0.0, %v1665
      %v1667 = vpop.f32.mrb[0].mxu0
      %1668 = vmatprep.mubr.f32.mxu0 0.0
      %1669 = vmatmul.mubr.f32.gmra.mrb[0].mxu0 %v1446
      %v1670 = vpop.f32.mrb[0].mxu0
      %v1671 = vadd.f32 0.0, %v1670
      %v1672 = vpop.f32.mrb[0].mxu0
      %1673 = vmatprep.mubr.f32.mxu0 0.0
      %1674 = vmatmul.mubr.f32.gmra.mrb[0].mxu0 %v1449
      %v1675 = vpop.f32.mrb[0].mxu0
      %v1676 = vadd.f32 0.0, %v1675
      %v1677 = vpop.f32.mrb[0].mxu0
      %1678 = vdwg.mxu0
      %v1679 = vadd.f32 %v1288, %v1521
      %v1680 = vadd.f32 %v1289, %v1526
      %v1681 = vadd.f32 %v1290, %v1531
      %v1682 = vadd.f32 %v1291, %v1536
      %v1683 = vadd.f32 %v1292, %v1541
      %v1684 = vadd.f32 %v1293, %v1546
      %v1685 = vadd.f32 %v1294, %v1551
      %v1686 = vadd.f32 %v1295, %v1556
      %v1687 = vadd.f32 %v1296, %v1561
      %v1688 = vadd.f32 %v1297, %v1566
      %v1689 = vadd.f32 %v1298, %v1571
      %v1690 = vadd.f32 %v1299, %v1576
      %v1691 = vadd.f32 %v1300, %v1581
      %v1692 = vadd.f32 %v1301, %v1586
      %v1693 = vadd.f32 %v1302, %v1591
      %v1694 = vadd.f32 %v1303, %v1596
      %v1695 = vadd.f32 %v1304, %v1601
      %v1696 = vadd.f32 %v1305, %v1606
      %v1697 = vadd.f32 %v1306, %v1611
      %v1698 = vadd.f32 %v1307, %v1616
      %v1699 = vadd.f32 %v1308, %v1621
      %v1700 = vadd.f32 %v1309, %v1626
      %v1701 = vadd.f32 %v1310, %v1631
      %v1702 = vadd.f32 %v1311, %v1636
      %v1703 = vadd.f32 %v1312, %v1641
      %v1704 = vadd.f32 %v1313, %v1646
      %v1705 = vadd.f32 %v1314, %v1651
      %v1706 = vadd.f32 %v1315, %v1656
      %v1707 = vadd.f32 %v1316, %v1661
      %v1708 = vadd.f32 %v1317, %v1666
      %v1709 = vadd.f32 %v1318, %v1671
      %v1710 = vadd.f32 %v1319, %v1676
      %v1711 = vld [vmem:[%s1320 + $0x9] sm:$0xff]
      %v1712 = vld [vmem:[%s1320 + $0x11] sm:$0xff]
      %v1713 = vld [vmem:[%s1320 + $0x31] sm:$0xff]
      %v1714 = vld [vmem:[%s1320 + $0x39] sm:$0xff]
      %v1715 = vld [vmem:[%s1320 + $0x59] sm:$0xff]
      %v1716 = vld [vmem:[%s1320 + $0x61] sm:$0xff]
      %v1717 = vld [vmem:[%s1320 + $0x81] sm:$0xff]
      %v1718 = vld [vmem:[%s1320 + $0x89] sm:$0xff]
      %v1719 = vld [vmem:[%s1320 + $0xa9] sm:$0xff]
      %v1720 = vld [vmem:[%s1320 + $0xb1] sm:$0xff]
      %v1721 = vld [vmem:[%s1320 + $0xd1] sm:$0xff]
      %v1722 = vld [vmem:[%s1320 + $0xd9] sm:$0xff]
      %v1723 = vld [vmem:[%s1320 + $0xf9] sm:$0xff]
      %v1724 = vld [vmem:[%s1320 + $0x101] sm:$0xff]
      %v1725 = vld [vmem:[%s1320 + $0x121] sm:$0xff]
      %v1726 = vld [vmem:[%s1320 + $0x129] sm:$0xff]
      %v1727 = vld [vmem:[%s1320 + $0x149] sm:$0xff]
      %v1728 = vld [vmem:[%s1320 + $0x151] sm:$0xff]
      %v1729 = vld [vmem:[%s1320 + $0x171] sm:$0xff]
      %v1730 = vld [vmem:[%s1320 + $0x179] sm:$0xff]
      %v1731 = vld [vmem:[%s1320 + $0x199] sm:$0xff]
      %v1732 = vld [vmem:[%s1320 + $0x1a1] sm:$0xff]
      %v1733 = vld [vmem:[%s1320 + $0x1c1] sm:$0xff]
      %v1734 = vld [vmem:[%s1320 + $0x1c9] sm:$0xff]
      %v1735 = vld [vmem:[%s1320 + $0x1e9] sm:$0xff]
      %v1736 = vld [vmem:[%s1320 + $0x1f1] sm:$0xff]
      %v1737 = vld [vmem:[%s1320 + $0x211] sm:$0xff]
      %v1738 = vld [vmem:[%s1320 + $0x219] sm:$0xff]
      %v1739 = vld [vmem:[%s1320 + $0x239] sm:$0xff]
      %v1740 = vld [vmem:[%s1320 + $0x241] sm:$0xff]
      %v1741 = vld [vmem:[%s1320 + $0x261] sm:$0xff]
      %v1742 = vld [vmem:[%s1320 + $0x269] sm:$0xff]
      %s1743 = scalar_lea.vmem %s1, 16
      %v1744 = vld [vmem:[%s1743] sm:$0xf]
      %v1746 = vsel %vm280, %v1711, 0
      %v1749 = vsel %vm280, %v1712, 0
      %v1752 = vsel %vm280, %v1713, 0
      %v1755 = vsel %vm280, %v1714, 0
      %v1758 = vsel %vm280, %v1715, 0
      %v1761 = vsel %vm280, %v1716, 0
      %v1764 = vsel %vm280, %v1717, 0
      %v1767 = vsel %vm280, %v1718, 0
      %v1770 = vsel %vm280, %v1719, 0
      %v1773 = vsel %vm280, %v1720, 0
      %v1776 = vsel %vm280, %v1721, 0
      %v1779 = vsel %vm280, %v1722, 0
      %v1782 = vsel %vm280, %v1723, 0
      %v1785 = vsel %vm280, %v1724, 0
      %v1788 = vsel %vm280, %v1725, 0
      %v1791 = vsel %vm280, %v1726, 0
      %v1794 = vsel %vm280, %v1727, 0
      %v1797 = vsel %vm280, %v1728, 0
      %v1800 = vsel %vm280, %v1729, 0
      %v1803 = vsel %vm280, %v1730, 0
      %v1806 = vsel %vm280, %v1731, 0
      %v1809 = vsel %vm280, %v1732, 0
      %v1812 = vsel %vm280, %v1733, 0
      %v1815 = vsel %vm280, %v1734, 0
      %v1818 = vsel %vm280, %v1735, 0
      %v1821 = vsel %vm280, %v1736, 0
      %v1824 = vsel %vm280, %v1737, 0
      %v1827 = vsel %vm280, %v1738, 0
      %v1830 = vsel %vm280, %v1739, 0
      %v1833 = vsel %vm280, %v1740, 0
      %v1836 = vsel %vm280, %v1741, 0
      %v1839 = vsel %vm280, %v1742, 0
      %v1842 = vsel %vm377, %v1744, 0
      %1844 = vmatprep.subr.mxu0 0.0
      %1845 = vmatpush1.msra.mxu0 %v1842
      %1846 = vmatprep.subr.mxu0 0.0
      %1847 = vmatpush1.msra.mxu0 0.0
      %1848 = vmatprep.subr.mxu0 0.0
      %1849 = vmatpush1.msra.mxu0 0.0
      %1850 = vmatprep.subr.mxu0 0.0
      %1851 = vmatpush1.msra.mxu0 0.0
      %1852 = vmatprep.subr.mxu0 0.0
      %1853 = vmatpush1.msra.mxu0 0.0
      %1854 = vmatprep.subr.mxu0 0.0
      %1855 = vmatpush1.msra.mxu0 0.0
      %1856 = vmatprep.subr.mxu0 0.0
      %1857 = vmatpush1.msra.mxu0 0.0
      %1858 = vmatprep.subr.mxu0 0.0
      %1859 = vmatpush1.msra.mxu0 0.0
      %1860 = vmatprep.subr.mxu0 0.0
      %1861 = vmatpush1.msra.mxu0 0.0
      %1862 = vmatprep.subr.mxu0 0.0
      %1863 = vmatpush1.msra.mxu0 0.0
      %1864 = vmatprep.subr.mxu0 0.0
      %1865 = vmatpush1.msra.mxu0 0.0
      %1866 = vmatprep.subr.mxu0 0.0
      %1867 = vmatpush1.msra.mxu0 0.0
      %1868 = vmatprep.subr.mxu0 0.0
      %1869 = vmatpush1.msra.mxu0 0.0
      %1870 = vmatprep.subr.mxu0 0.0
      %1871 = vmatpush1.msra.mxu0 0.0
      %1872 = vmatprep.subr.mxu0 0.0
      %1873 = vmatpush1.msra.mxu0 0.0
      %1874 = vmatprep.subr.mxu0 0.0
      %1875 = vmatpush1.msra.mxu0 0.0
      %1876 = vmatprep.subr.mxu0 0.0
      %1877 = vmatpush1.msra.mxu0 0.0
      %1878 = vmatprep.subr.mxu0 0.0
      %1879 = vmatpush1.msra.mxu0 0.0
      %1880 = vmatprep.subr.mxu0 0.0
      %1881 = vmatpush1.msra.mxu0 0.0
      %1882 = vmatprep.subr.mxu0 0.0
      %1883 = vmatpush1.msra.mxu0 0.0
      %1884 = vmatprep.subr.mxu0 0.0
      %1885 = vmatpush1.msra.mxu0 0.0
      %1886 = vmatprep.subr.mxu0 0.0
      %1887 = vmatpush1.msra.mxu0 0.0
      %1888 = vmatprep.subr.mxu0 0.0
      %1889 = vmatpush1.msra.mxu0 0.0
      %1890 = vmatprep.subr.mxu0 0.0
      %1891 = vmatpush1.msra.mxu0 0.0
      %1892 = vmatprep.subr.mxu0 0.0
      %1893 = vmatpush1.msra.mxu0 0.0
      %1894 = vmatprep.subr.mxu0 0.0
      %1895 = vmatpush1.msra.mxu0 0.0
      %1896 = vmatprep.subr.mxu0 0.0
      %1897 = vmatpush1.msra.mxu0 0.0
      %1898 = vmatprep.subr.mxu0 0.0
      %1899 = vmatpush1.msra.mxu0 0.0
      %1900 = vmatprep.subr.mxu0 0.0
      %1901 = vmatpush1.msra.mxu0 0.0
      %1902 = vmatprep.subr.mxu0 0.0
      %1903 = vmatpush1.msra.mxu0 0.0
      %1904 = vmatprep.subr.mxu0 0.0
      %1905 = vmatpush1.msra.mxu0 0.0
      %1906 = vmatprep.subr.mxu0 0.0
      %1907 = vmatpush1.msra.mxu0 0.0
      %1908 = vmatprep.mubr.f32.mxu0 0.0
      %1909 = vmatmul.mubr.f32.gmra.mrb[0].mxu0 %v1746
      %v1910 = vpop.f32.mrb[0].mxu0
      %v1911 = vadd.f32 0.0, %v1910
      %v1912 = vpop.f32.mrb[0].mxu0
      %1913 = vmatprep.mubr.f32.mxu0 0.0
      %1914 = vmatmul.mubr.f32.gmra.mrb[0].mxu0 %v1749
      %v1915 = vpop.f32.mrb[0].mxu0
      %v1916 = vadd.f32 0.0, %v1915
      %v1917 = vpop.f32.mrb[0].mxu0
      %1918 = vmatprep.mubr.f32.mxu0 0.0
      %1919 = vmatmul.mubr.f32.gmra.mrb[0].mxu0 %v1752
      %v1920 = vpop.f32.mrb[0].mxu0
      %v1921 = vadd.f32 0.0, %v1920
      %v1922 = vpop.f32.mrb[0].mxu0
      %1923 = vmatprep.mubr.f32.mxu0 0.0
      %1924 = vmatmul.mubr.f32.gmra.mrb[0].mxu0 %v1755
      %v1925 = vpop.f32.mrb[0].mxu0
      %v1926 = vadd.f32 0.0, %v1925
      %v1927 = vpop.f32.mrb[0].mxu0
      %1928 = vmatprep.mubr.f32.mxu0 0.0
      %1929 = vmatmul.mubr.f32.gmra.mrb[0].mxu0 %v1758
      %v1930 = vpop.f32.mrb[0].mxu0
      %v1931 = vadd.f32 0.0, %v1930
      %v1932 = vpop.f32.mrb[0].mxu0
      %1933 = vmatprep.mubr.f32.mxu0 0.0
      %1934 = vmatmul.mubr.f32.gmra.mrb[0].mxu0 %v1761
      %v1935 = vpop.f32.mrb[0].mxu0
      %v1936 = vadd.f32 0.0, %v1935
      %v1937 = vpop.f32.mrb[0].mxu0
      %1938 = vmatprep.mubr.f32.mxu0 0.0
      %1939 = vmatmul.mubr.f32.gmra.mrb[0].mxu0 %v1764
      %v1940 = vpop.f32.mrb[0].mxu0
      %v1941 = vadd.f32 0.0, %v1940
      %v1942 = vpop.f32.mrb[0].mxu0
      %1943 = vmatprep.mubr.f32.mxu0 0.0
      %1944 = vmatmul.mubr.f32.gmra.mrb[0].mxu0 %v1767
      %v1945 = vpop.f32.mrb[0].mxu0
      %v1946 = vadd.f32 0.0, %v1945
      %v1947 = vpop.f32.mrb[0].mxu0
      %1948 = vmatprep.mubr.f32.mxu0 0.0
      %1949 = vmatmul.mubr.f32.gmra.mrb[0].mxu0 %v1770
      %v1950 = vpop.f32.mrb[0].mxu0
      %v1951 = vadd.f32 0.0, %v1950
      %v1952 = vpop.f32.mrb[0].mxu0
      %1953 = vmatprep.mubr.f32.mxu0 0.0
      %1954 = vmatmul.mubr.f32.gmra.mrb[0].mxu0 %v1773
      %v1955 = vpop.f32.mrb[0].mxu0
      %v1956 = vadd.f32 0.0, %v1955
      %v1957 = vpop.f32.mrb[0].mxu0
      %1958 = vmatprep.mubr.f32.mxu0 0.0
      %1959 = vmatmul.mubr.f32.gmra.mrb[0].mxu0 %v1776
      %v1960 = vpop.f32.mrb[0].mxu0
      %v1961 = vadd.f32 0.0, %v1960
      %v1962 = vpop.f32.mrb[0].mxu0
      %1963 = vmatprep.mubr.f32.mxu0 0.0
      %1964 = vmatmul.mubr.f32.gmra.mrb[0].mxu0 %v1779
      %v1965 = vpop.f32.mrb[0].mxu0
      %v1966 = vadd.f32 0.0, %v1965
      %v1967 = vpop.f32.mrb[0].mxu0
      %1968 = vmatprep.mubr.f32.mxu0 0.0
      %1969 = vmatmul.mubr.f32.gmra.mrb[0].mxu0 %v1782
      %v1970 = vpop.f32.mrb[0].mxu0
      %v1971 = vadd.f32 0.0, %v1970
      %v1972 = vpop.f32.mrb[0].mxu0
      %1973 = vmatprep.mubr.f32.mxu0 0.0
      %1974 = vmatmul.mubr.f32.gmra.mrb[0].mxu0 %v1785
      %v1975 = vpop.f32.mrb[0].mxu0
      %v1976 = vadd.f32 0.0, %v1975
      %v1977 = vpop.f32.mrb[0].mxu0
      %1978 = vmatprep.mubr.f32.mxu0 0.0
      %1979 = vmatmul.mubr.f32.gmra.mrb[0].mxu0 %v1788
      %v1980 = vpop.f32.mrb[0].mxu0
      %v1981 = vadd.f32 0.0, %v1980
      %v1982 = vpop.f32.mrb[0].mxu0
      %1983 = vmatprep.mubr.f32.mxu0 0.0
      %1984 = vmatmul.mubr.f32.gmra.mrb[0].mxu0 %v1791
      %v1985 = vpop.f32.mrb[0].mxu0
      %v1986 = vadd.f32 0.0, %v1985
      %v1987 = vpop.f32.mrb[0].mxu0
      %1988 = vmatprep.mubr.f32.mxu0 0.0
      %1989 = vmatmul.mubr.f32.gmra.mrb[0].mxu0 %v1794
      %v1990 = vpop.f32.mrb[0].mxu0
      %v1991 = vadd.f32 0.0, %v1990
      %v1992 = vpop.f32.mrb[0].mxu0
      %1993 = vmatprep.mubr.f32.mxu0 0.0
      %1994 = vmatmul.mubr.f32.gmra.mrb[0].mxu0 %v1797
      %v1995 = vpop.f32.mrb[0].mxu0
      %v1996 = vadd.f32 0.0, %v1995
      %v1997 = vpop.f32.mrb[0].mxu0
      %1998 = vmatprep.mubr.f32.mxu0 0.0
      %1999 = vmatmul.mubr.f32.gmra.mrb[0].mxu0 %v1800
      %v2000 = vpop.f32.mrb[0].mxu0
      %v2001 = vadd.f32 0.0, %v2000
      %v2002 = vpop.f32.mrb[0].mxu0
      %2003 = vmatprep.mubr.f32.mxu0 0.0
      %2004 = vmatmul.mubr.f32.gmra.mrb[0].mxu0 %v1803
      %v2005 = vpop.f32.mrb[0].mxu0
      %v2006 = vadd.f32 0.0, %v2005
      %v2007 = vpop.f32.mrb[0].mxu0
      %2008 = vmatprep.mubr.f32.mxu0 0.0
      %2009 = vmatmul.mubr.f32.gmra.mrb[0].mxu0 %v1806
      %v2010 = vpop.f32.mrb[0].mxu0
      %v2011 = vadd.f32 0.0, %v2010
      %v2012 = vpop.f32.mrb[0].mxu0
      %2013 = vmatprep.mubr.f32.mxu0 0.0
      %2014 = vmatmul.mubr.f32.gmra.mrb[0].mxu0 %v1809
      %v2015 = vpop.f32.mrb[0].mxu0
      %v2016 = vadd.f32 0.0, %v2015
      %v2017 = vpop.f32.mrb[0].mxu0
      %2018 = vmatprep.mubr.f32.mxu0 0.0
      %2019 = vmatmul.mubr.f32.gmra.mrb[0].mxu0 %v1812
      %v2020 = vpop.f32.mrb[0].mxu0
      %v2021 = vadd.f32 0.0, %v2020
      %v2022 = vpop.f32.mrb[0].mxu0
      %2023 = vmatprep.mubr.f32.mxu0 0.0
      %2024 = vmatmul.mubr.f32.gmra.mrb[0].mxu0 %v1815
      %v2025 = vpop.f32.mrb[0].mxu0
      %v2026 = vadd.f32 0.0, %v2025
      %v2027 = vpop.f32.mrb[0].mxu0
      %2028 = vmatprep.mubr.f32.mxu0 0.0
      %2029 = vmatmul.mubr.f32.gmra.mrb[0].mxu0 %v1818
      %v2030 = vpop.f32.mrb[0].mxu0
      %v2031 = vadd.f32 0.0, %v2030
      %v2032 = vpop.f32.mrb[0].mxu0
      %2033 = vmatprep.mubr.f32.mxu0 0.0
      %2034 = vmatmul.mubr.f32.gmra.mrb[0].mxu0 %v1821
      %v2035 = vpop.f32.mrb[0].mxu0
      %v2036 = vadd.f32 0.0, %v2035
      %v2037 = vpop.f32.mrb[0].mxu0
      %2038 = vmatprep.mubr.f32.mxu0 0.0
      %2039 = vmatmul.mubr.f32.gmra.mrb[0].mxu0 %v1824
      %v2040 = vpop.f32.mrb[0].mxu0
      %v2041 = vadd.f32 0.0, %v2040
      %v2042 = vpop.f32.mrb[0].mxu0
      %2043 = vmatprep.mubr.f32.mxu0 0.0
      %2044 = vmatmul.mubr.f32.gmra.mrb[0].mxu0 %v1827
      %v2045 = vpop.f32.mrb[0].mxu0
      %v2046 = vadd.f32 0.0, %v2045
      %v2047 = vpop.f32.mrb[0].mxu0
      %2048 = vmatprep.mubr.f32.mxu0 0.0
      %2049 = vmatmul.mubr.f32.gmra.mrb[0].mxu0 %v1830
      %v2050 = vpop.f32.mrb[0].mxu0
      %v2051 = vadd.f32 0.0, %v2050
      %v2052 = vpop.f32.mrb[0].mxu0
      %2053 = vmatprep.mubr.f32.mxu0 0.0
      %2054 = vmatmul.mubr.f32.gmra.mrb[0].mxu0 %v1833
      %v2055 = vpop.f32.mrb[0].mxu0
      %v2056 = vadd.f32 0.0, %v2055
      %v2057 = vpop.f32.mrb[0].mxu0
      %2058 = vmatprep.mubr.f32.mxu0 0.0
      %2059 = vmatmul.mubr.f32.gmra.mrb[0].mxu0 %v1836
      %v2060 = vpop.f32.mrb[0].mxu0
      %v2061 = vadd.f32 0.0, %v2060
      %v2062 = vpop.f32.mrb[0].mxu0
      %2063 = vmatprep.mubr.f32.mxu0 0.0
      %2064 = vmatmul.mubr.f32.gmra.mrb[0].mxu0 %v1839
      %v2065 = vpop.f32.mrb[0].mxu0
      %v2066 = vadd.f32 0.0, %v2065
      %v2067 = vpop.f32.mrb[0].mxu0
      %2068 = vdwg.mxu0
      %v2069 = vadd.f32 %v1679, %v1911
      %v2070 = vadd.f32 %v1680, %v1916
      %v2071 = vadd.f32 %v1681, %v1921
      %v2072 = vadd.f32 %v1682, %v1926
      %v2073 = vadd.f32 %v1683, %v1931
      %v2074 = vadd.f32 %v1684, %v1936
      %v2075 = vadd.f32 %v1685, %v1941
      %v2076 = vadd.f32 %v1686, %v1946
      %v2077 = vadd.f32 %v1687, %v1951
      %v2078 = vadd.f32 %v1688, %v1956
      %v2079 = vadd.f32 %v1689, %v1961
      %v2080 = vadd.f32 %v1690, %v1966
      %v2081 = vadd.f32 %v1691, %v1971
      %v2082 = vadd.f32 %v1692, %v1976
      %v2083 = vadd.f32 %v1693, %v1981
      %v2084 = vadd.f32 %v1694, %v1986
      %v2085 = vadd.f32 %v1695, %v1991
      %v2086 = vadd.f32 %v1696, %v1996
      %v2087 = vadd.f32 %v1697, %v2001
      %v2088 = vadd.f32 %v1698, %v2006
      %v2089 = vadd.f32 %v1699, %v2011
      %v2090 = vadd.f32 %v1700, %v2016
      %v2091 = vadd.f32 %v1701, %v2021
      %v2092 = vadd.f32 %v1702, %v2026
      %v2093 = vadd.f32 %v1703, %v2031
      %v2094 = vadd.f32 %v1704, %v2036
      %v2095 = vadd.f32 %v1705, %v2041
      %v2096 = vadd.f32 %v1706, %v2046
      %v2097 = vadd.f32 %v1707, %v2051
      %v2098 = vadd.f32 %v1708, %v2056
      %v2099 = vadd.f32 %v1709, %v2061
      %v2100 = vadd.f32 %v1710, %v2066
      %v2101 = vld [vmem:[%s1320 + $0xc] sm:$0xff]
      %v2102 = vld [vmem:[%s1320 + $0x14] sm:$0xff]
      %v2103 = vld [vmem:[%s1320 + $0x34] sm:$0xff]
      %v2104 = vld [vmem:[%s1320 + $0x3c] sm:$0xff]
      %v2105 = vld [vmem:[%s1320 + $0x5c] sm:$0xff]
      %v2106 = vld [vmem:[%s1320 + $0x64] sm:$0xff]
      %v2107 = vld [vmem:[%s1320 + $0x84] sm:$0xff]
      %v2108 = vld [vmem:[%s1320 + $0x8c] sm:$0xff]
      %v2109 = vld [vmem:[%s1320 + $0xac] sm:$0xff]
      %v2110 = vld [vmem:[%s1320 + $0xb4] sm:$0xff]
      %v2111 = vld [vmem:[%s1320 + $0xd4] sm:$0xff]
      %v2112 = vld [vmem:[%s1320 + $0xdc] sm:$0xff]
      %v2113 = vld [vmem:[%s1320 + $0xfc] sm:$0xff]
      %v2114 = vld [vmem:[%s1320 + $0x104] sm:$0xff]
      %v2115 = vld [vmem:[%s1320 + $0x124] sm:$0xff]
      %v2116 = vld [vmem:[%s1320 + $0x12c] sm:$0xff]
      %v2117 = vld [vmem:[%s1320 + $0x14c] sm:$0xff]
      %v2118 = vld [vmem:[%s1320 + $0x154] sm:$0xff]
      %v2119 = vld [vmem:[%s1320 + $0x174] sm:$0xff]
      %v2120 = vld [vmem:[%s1320 + $0x17c] sm:$0xff]
      %v2121 = vld [vmem:[%s1320 + $0x19c] sm:$0xff]
      %v2122 = vld [vmem:[%s1320 + $0x1a4] sm:$0xff]
      %v2123 = vld [vmem:[%s1320 + $0x1c4] sm:$0xff]
      %v2124 = vld [vmem:[%s1320 + $0x1cc] sm:$0xff]
      %v2125 = vld [vmem:[%s1320 + $0x1ec] sm:$0xff]
      %v2126 = vld [vmem:[%s1320 + $0x1f4] sm:$0xff]
      %v2127 = vld [vmem:[%s1320 + $0x214] sm:$0xff]
      %v2128 = vld [vmem:[%s1320 + $0x21c] sm:$0xff]
      %v2129 = vld [vmem:[%s1320 + $0x23c] sm:$0xff]
      %v2130 = vld [vmem:[%s1320 + $0x244] sm:$0xff]
      %v2131 = vld [vmem:[%s1320 + $0x264] sm:$0xff]
      %v2132 = vld [vmem:[%s1320 + $0x26c] sm:$0xff]
      %s2133 = scalar_lea.vmem %s1, 20
      %v2134 = vld [vmem:[%s2133] sm:$0xf]
      %v2136 = vsel %vm280, %v2101, 0
      %v2139 = vsel %vm280, %v2102, 0
      %v2142 = vsel %vm280, %v2103, 0
      %v2145 = vsel %vm280, %v2104, 0
      %v2148 = vsel %vm280, %v2105, 0
      %v2151 = vsel %vm280, %v2106, 0
      %v2154 = vsel %vm280, %v2107, 0
      %v2157 = vsel %vm280, %v2108, 0
      %v2160 = vsel %vm280, %v2109, 0
      %v2163 = vsel %vm280, %v2110, 0
      %v2166 = vsel %vm280, %v2111, 0
      %v2169 = vsel %vm280, %v2112, 0
      %v2172 = vsel %vm280, %v2113, 0
      %v2175 = vsel %vm280, %v2114, 0
      %v2178 = vsel %vm280, %v2115, 0
      %v2181 = vsel %vm280, %v2116, 0
      %v2184 = vsel %vm280, %v2117, 0
      %v2187 = vsel %vm280, %v2118, 0
      %v2190 = vsel %vm280, %v2119, 0
      %v2193 = vsel %vm280, %v2120, 0
      %v2196 = vsel %vm280, %v2121, 0
      %v2199 = vsel %vm280, %v2122, 0
      %v2202 = vsel %vm280, %v2123, 0
      %v2205 = vsel %vm280, %v2124, 0
      %v2208 = vsel %vm280, %v2125, 0
      %v2211 = vsel %vm280, %v2126, 0
      %v2214 = vsel %vm280, %v2127, 0
      %v2217 = vsel %vm280, %v2128, 0
      %v2220 = vsel %vm280, %v2129, 0
      %v2223 = vsel %vm280, %v2130, 0
      %v2226 = vsel %vm280, %v2131, 0
      %v2229 = vsel %vm280, %v2132, 0
      %v2232 = vsel %vm377, %v2134, 0
      %2234 = vmatprep.subr.mxu0 0.0
      %2235 = vmatpush1.msra.mxu0 %v2232
      %2236 = vmatprep.subr.mxu0 0.0
      %2237 = vmatpush1.msra.mxu0 0.0
      %2238 = vmatprep.subr.mxu0 0.0
      %2239 = vmatpush1.msra.mxu0 0.0
      %2240 = vmatprep.subr.mxu0 0.0
      %2241 = vmatpush1.msra.mxu0 0.0
      %2242 = vmatprep.subr.mxu0 0.0
      %2243 = vmatpush1.msra.mxu0 0.0
      %2244 = vmatprep.subr.mxu0 0.0
      %2245 = vmatpush1.msra.mxu0 0.0
      %2246 = vmatprep.subr.mxu0 0.0
      %2247 = vmatpush1.msra.mxu0 0.0
      %2248 = vmatprep.subr.mxu0 0.0
      %2249 = vmatpush1.msra.mxu0 0.0
      %2250 = vmatprep.subr.mxu0 0.0
      %2251 = vmatpush1.msra.mxu0 0.0
      %2252 = vmatprep.subr.mxu0 0.0
      %2253 = vmatpush1.msra.mxu0 0.0
      %2254 = vmatprep.subr.mxu0 0.0
      %2255 = vmatpush1.msra.mxu0 0.0
      %2256 = vmatprep.subr.mxu0 0.0
      %2257 = vmatpush1.msra.mxu0 0.0
      %2258 = vmatprep.subr.mxu0 0.0
      %2259 = vmatpush1.msra.mxu0 0.0
      %2260 = vmatprep.subr.mxu0 0.0
      %2261 = vmatpush1.msra.mxu0 0.0
      %2262 = vmatprep.subr.mxu0 0.0
      %2263 = vmatpush1.msra.mxu0 0.0
      %2264 = vmatprep.subr.mxu0 0.0
      %2265 = vmatpush1.msra.mxu0 0.0
      %2266 = vmatprep.subr.mxu0 0.0
      %2267 = vmatpush1.msra.mxu0 0.0
      %2268 = vmatprep.subr.mxu0 0.0
      %2269 = vmatpush1.msra.mxu0 0.0
      %2270 = vmatprep.subr.mxu0 0.0
      %2271 = vmatpush1.msra.mxu0 0.0
      %2272 = vmatprep.subr.mxu0 0.0
      %2273 = vmatpush1.msra.mxu0 0.0
      %2274 = vmatprep.subr.mxu0 0.0
      %2275 = vmatpush1.msra.mxu0 0.0
      %2276 = vmatprep.subr.mxu0 0.0
      %2277 = vmatpush1.msra.mxu0 0.0
      %2278 = vmatprep.subr.mxu0 0.0
      %2279 = vmatpush1.msra.mxu0 0.0
      %2280 = vmatprep.subr.mxu0 0.0
      %2281 = vmatpush1.msra.mxu0 0.0
      %2282 = vmatprep.subr.mxu0 0.0
      %2283 = vmatpush1.msra.mxu0 0.0
      %2284 = vmatprep.subr.mxu0 0.0
      %2285 = vmatpush1.msra.mxu0 0.0
      %2286 = vmatprep.subr.mxu0 0.0
      %2287 = vmatpush1.msra.mxu0 0.0
      %2288 = vmatprep.subr.mxu0 0.0
      %2289 = vmatpush1.msra.mxu0 0.0
      %2290 = vmatprep.subr.mxu0 0.0
      %2291 = vmatpush1.msra.mxu0 0.0
      %2292 = vmatprep.subr.mxu0 0.0
      %2293 = vmatpush1.msra.mxu0 0.0
      %2294 = vmatprep.subr.mxu0 0.0
      %2295 = vmatpush1.msra.mxu0 0.0
      %2296 = vmatprep.subr.mxu0 0.0
      %2297 = vmatpush1.msra.mxu0 0.0
      %2298 = vmatprep.mubr.f32.mxu0 0.0
      %2299 = vmatmul.mubr.f32.gmra.mrb[0].mxu0 %v2136
      %v2300 = vpop.f32.mrb[0].mxu0
      %v2301 = vadd.f32 0.0, %v2300
      %v2302 = vpop.f32.mrb[0].mxu0
      %2303 = vmatprep.mubr.f32.mxu0 0.0
      %2304 = vmatmul.mubr.f32.gmra.mrb[0].mxu0 %v2139
      %v2305 = vpop.f32.mrb[0].mxu0
      %v2306 = vadd.f32 0.0, %v2305
      %v2307 = vpop.f32.mrb[0].mxu0
      %2308 = vmatprep.mubr.f32.mxu0 0.0
      %2309 = vmatmul.mubr.f32.gmra.mrb[0].mxu0 %v2142
      %v2310 = vpop.f32.mrb[0].mxu0
      %v2311 = vadd.f32 0.0, %v2310
      %v2312 = vpop.f32.mrb[0].mxu0
      %2313 = vmatprep.mubr.f32.mxu0 0.0
      %2314 = vmatmul.mubr.f32.gmra.mrb[0].mxu0 %v2145
      %v2315 = vpop.f32.mrb[0].mxu0
      %v2316 = vadd.f32 0.0, %v2315
      %v2317 = vpop.f32.mrb[0].mxu0
      %2318 = vmatprep.mubr.f32.mxu0 0.0
      %2319 = vmatmul.mubr.f32.gmra.mrb[0].mxu0 %v2148
      %v2320 = vpop.f32.mrb[0].mxu0
      %v2321 = vadd.f32 0.0, %v2320
      %v2322 = vpop.f32.mrb[0].mxu0
      %2323 = vmatprep.mubr.f32.mxu0 0.0
      %2324 = vmatmul.mubr.f32.gmra.mrb[0].mxu0 %v2151
      %v2325 = vpop.f32.mrb[0].mxu0
      %v2326 = vadd.f32 0.0, %v2325
      %v2327 = vpop.f32.mrb[0].mxu0
      %2328 = vmatprep.mubr.f32.mxu0 0.0
      %2329 = vmatmul.mubr.f32.gmra.mrb[0].mxu0 %v2154
      %v2330 = vpop.f32.mrb[0].mxu0
      %v2331 = vadd.f32 0.0, %v2330
      %v2332 = vpop.f32.mrb[0].mxu0
      %2333 = vmatprep.mubr.f32.mxu0 0.0
      %2334 = vmatmul.mubr.f32.gmra.mrb[0].mxu0 %v2157
      %v2335 = vpop.f32.mrb[0].mxu0
      %v2336 = vadd.f32 0.0, %v2335
      %v2337 = vpop.f32.mrb[0].mxu0
      %2338 = vmatprep.mubr.f32.mxu0 0.0
      %2339 = vmatmul.mubr.f32.gmra.mrb[0].mxu0 %v2160
      %v2340 = vpop.f32.mrb[0].mxu0
      %v2341 = vadd.f32 0.0, %v2340
      %v2342 = vpop.f32.mrb[0].mxu0
      %2343 = vmatprep.mubr.f32.mxu0 0.0
      %2344 = vmatmul.mubr.f32.gmra.mrb[0].mxu0 %v2163
      %v2345 = vpop.f32.mrb[0].mxu0
      %v2346 = vadd.f32 0.0, %v2345
      %v2347 = vpop.f32.mrb[0].mxu0
      %2348 = vmatprep.mubr.f32.mxu0 0.0
      %2349 = vmatmul.mubr.f32.gmra.mrb[0].mxu0 %v2166
      %v2350 = vpop.f32.mrb[0].mxu0
      %v2351 = vadd.f32 0.0, %v2350
      %v2352 = vpop.f32.mrb[0].mxu0
      %2353 = vmatprep.mubr.f32.mxu0 0.0
      %2354 = vmatmul.mubr.f32.gmra.mrb[0].mxu0 %v2169
      %v2355 = vpop.f32.mrb[0].mxu0
      %v2356 = vadd.f32 0.0, %v2355
      %v2357 = vpop.f32.mrb[0].mxu0
      %2358 = vmatprep.mubr.f32.mxu0 0.0
      %2359 = vmatmul.mubr.f32.gmra.mrb[0].mxu0 %v2172
      %v2360 = vpop.f32.mrb[0].mxu0
      %v2361 = vadd.f32 0.0, %v2360
      %v2362 = vpop.f32.mrb[0].mxu0
      %2363 = vmatprep.mubr.f32.mxu0 0.0
      %2364 = vmatmul.mubr.f32.gmra.mrb[0].mxu0 %v2175
      %v2365 = vpop.f32.mrb[0].mxu0
      %v2366 = vadd.f32 0.0, %v2365
      %v2367 = vpop.f32.mrb[0].mxu0
      %2368 = vmatprep.mubr.f32.mxu0 0.0
      %2369 = vmatmul.mubr.f32.gmra.mrb[0].mxu0 %v2178
      %v2370 = vpop.f32.mrb[0].mxu0
      %v2371 = vadd.f32 0.0, %v2370
      %v2372 = vpop.f32.mrb[0].mxu0
      %2373 = vmatprep.mubr.f32.mxu0 0.0
      %2374 = vmatmul.mubr.f32.gmra.mrb[0].mxu0 %v2181
      %v2375 = vpop.f32.mrb[0].mxu0
      %v2376 = vadd.f32 0.0, %v2375
      %v2377 = vpop.f32.mrb[0].mxu0
      %2378 = vmatprep.mubr.f32.mxu0 0.0
      %2379 = vmatmul.mubr.f32.gmra.mrb[0].mxu0 %v2184
      %v2380 = vpop.f32.mrb[0].mxu0
      %v2381 = vadd.f32 0.0, %v2380
      %v2382 = vpop.f32.mrb[0].mxu0
      %2383 = vmatprep.mubr.f32.mxu0 0.0
      %2384 = vmatmul.mubr.f32.gmra.mrb[0].mxu0 %v2187
      %v2385 = vpop.f32.mrb[0].mxu0
      %v2386 = vadd.f32 0.0, %v2385
      %v2387 = vpop.f32.mrb[0].mxu0
      %2388 = vmatprep.mubr.f32.mxu0 0.0
      %2389 = vmatmul.mubr.f32.gmra.mrb[0].mxu0 %v2190
      %v2390 = vpop.f32.mrb[0].mxu0
      %v2391 = vadd.f32 0.0, %v2390
      %v2392 = vpop.f32.mrb[0].mxu0
      %2393 = vmatprep.mubr.f32.mxu0 0.0
      %2394 = vmatmul.mubr.f32.gmra.mrb[0].mxu0 %v2193
      %v2395 = vpop.f32.mrb[0].mxu0
      %v2396 = vadd.f32 0.0, %v2395
      %v2397 = vpop.f32.mrb[0].mxu0
      %2398 = vmatprep.mubr.f32.mxu0 0.0
      %2399 = vmatmul.mubr.f32.gmra.mrb[0].mxu0 %v2196
      %v2400 = vpop.f32.mrb[0].mxu0
      %v2401 = vadd.f32 0.0, %v2400
      %v2402 = vpop.f32.mrb[0].mxu0
      %2403 = vmatprep.mubr.f32.mxu0 0.0
      %2404 = vmatmul.mubr.f32.gmra.mrb[0].mxu0 %v2199
      %v2405 = vpop.f32.mrb[0].mxu0
      %v2406 = vadd.f32 0.0, %v2405
      %v2407 = vpop.f32.mrb[0].mxu0
      %2408 = vmatprep.mubr.f32.mxu0 0.0
      %2409 = vmatmul.mubr.f32.gmra.mrb[0].mxu0 %v2202
      %v2410 = vpop.f32.mrb[0].mxu0
      %v2411 = vadd.f32 0.0, %v2410
      %v2412 = vpop.f32.mrb[0].mxu0
      %2413 = vmatprep.mubr.f32.mxu0 0.0
      %2414 = vmatmul.mubr.f32.gmra.mrb[0].mxu0 %v2205
      %v2415 = vpop.f32.mrb[0].mxu0
      %v2416 = vadd.f32 0.0, %v2415
      %v2417 = vpop.f32.mrb[0].mxu0
      %2418 = vmatprep.mubr.f32.mxu0 0.0
      %2419 = vmatmul.mubr.f32.gmra.mrb[0].mxu0 %v2208
      %v2420 = vpop.f32.mrb[0].mxu0
      %v2421 = vadd.f32 0.0, %v2420
      %v2422 = vpop.f32.mrb[0].mxu0
      %2423 = vmatprep.mubr.f32.mxu0 0.0
      %2424 = vmatmul.mubr.f32.gmra.mrb[0].mxu0 %v2211
      %v2425 = vpop.f32.mrb[0].mxu0
      %v2426 = vadd.f32 0.0, %v2425
      %v2427 = vpop.f32.mrb[0].mxu0
      %2428 = vmatprep.mubr.f32.mxu0 0.0
      %2429 = vmatmul.mubr.f32.gmra.mrb[0].mxu0 %v2214
      %v2430 = vpop.f32.mrb[0].mxu0
      %v2431 = vadd.f32 0.0, %v2430
      %v2432 = vpop.f32.mrb[0].mxu0
      %2433 = vmatprep.mubr.f32.mxu0 0.0
      %2434 = vmatmul.mubr.f32.gmra.mrb[0].mxu0 %v2217
      %v2435 = vpop.f32.mrb[0].mxu0
      %v2436 = vadd.f32 0.0, %v2435
      %v2437 = vpop.f32.mrb[0].mxu0
      %2438 = vmatprep.mubr.f32.mxu0 0.0
      %2439 = vmatmul.mubr.f32.gmra.mrb[0].mxu0 %v2220
      %v2440 = vpop.f32.mrb[0].mxu0
      %v2441 = vadd.f32 0.0, %v2440
      %v2442 = vpop.f32.mrb[0].mxu0
      %2443 = vmatprep.mubr.f32.mxu0 0.0
      %2444 = vmatmul.mubr.f32.gmra.mrb[0].mxu0 %v2223
      %v2445 = vpop.f32.mrb[0].mxu0
      %v2446 = vadd.f32 0.0, %v2445
      %v2447 = vpop.f32.mrb[0].mxu0
      %2448 = vmatprep.mubr.f32.mxu0 0.0
      %2449 = vmatmul.mubr.f32.gmra.mrb[0].mxu0 %v2226
      %v2450 = vpop.f32.mrb[0].mxu0
      %v2451 = vadd.f32 0.0, %v2450
      %v2452 = vpop.f32.mrb[0].mxu0
      %2453 = vmatprep.mubr.f32.mxu0 0.0
      %2454 = vmatmul.mubr.f32.gmra.mrb[0].mxu0 %v2229
      %v2455 = vpop.f32.mrb[0].mxu0
      %v2456 = vadd.f32 0.0, %v2455
      %v2457 = vpop.f32.mrb[0].mxu0
      %2458 = vdwg.mxu0
      %v2459 = vadd.f32 %v2069, %v2301
      %v2460 = vadd.f32 %v2070, %v2306
      %v2461 = vadd.f32 %v2071, %v2311
      %v2462 = vadd.f32 %v2072, %v2316
      %v2463 = vadd.f32 %v2073, %v2321
      %v2464 = vadd.f32 %v2074, %v2326
      %v2465 = vadd.f32 %v2075, %v2331
      %v2466 = vadd.f32 %v2076, %v2336
      %v2467 = vadd.f32 %v2077, %v2341
      %v2468 = vadd.f32 %v2078, %v2346
      %v2469 = vadd.f32 %v2079, %v2351
      %v2470 = vadd.f32 %v2080, %v2356
      %v2471 = vadd.f32 %v2081, %v2361
      %v2472 = vadd.f32 %v2082, %v2366
      %v2473 = vadd.f32 %v2083, %v2371
      %v2474 = vadd.f32 %v2084, %v2376
      %v2475 = vadd.f32 %v2085, %v2381
      %v2476 = vadd.f32 %v2086, %v2386
      %v2477 = vadd.f32 %v2087, %v2391
      %v2478 = vadd.f32 %v2088, %v2396
      %v2479 = vadd.f32 %v2089, %v2401
      %v2480 = vadd.f32 %v2090, %v2406
      %v2481 = vadd.f32 %v2091, %v2411
      %v2482 = vadd.f32 %v2092, %v2416
      %v2483 = vadd.f32 %v2093, %v2421
      %v2484 = vadd.f32 %v2094, %v2426
      %v2485 = vadd.f32 %v2095, %v2431
      %v2486 = vadd.f32 %v2096, %v2436
      %v2487 = vadd.f32 %v2097, %v2441
      %v2488 = vadd.f32 %v2098, %v2446
      %v2489 = vadd.f32 %v2099, %v2451
      %v2490 = vadd.f32 %v2100, %v2456
      %s2491 = scalar_lea.vmem %s203, 480
      %v2492 = vld [vmem:[%s2491 + $0x6] sm:$0xff]
      %v2493 = vld [vmem:[%s2491 + $0xe] sm:$0xff]
      %v2494 = vld [vmem:[%s2491 + $0x2e] sm:$0xff]
      %v2495 = vld [vmem:[%s2491 + $0x36] sm:$0xff]
      %v2496 = vld [vmem:[%s2491 + $0x56] sm:$0xff]
      %v2497 = vld [vmem:[%s2491 + $0x5e] sm:$0xff]
      %v2498 = vld [vmem:[%s2491 + $0x7e] sm:$0xff]
      %v2499 = vld [vmem:[%s2491 + $0x86] sm:$0xff]
      %v2500 = vld [vmem:[%s2491 + $0xa6] sm:$0xff]
      %v2501 = vld [vmem:[%s2491 + $0xae] sm:$0xff]
      %v2502 = vld [vmem:[%s2491 + $0xce] sm:$0xff]
      %v2503 = vld [vmem:[%s2491 + $0xd6] sm:$0xff]
      %v2504 = vld [vmem:[%s2491 + $0xf6] sm:$0xff]
      %v2505 = vld [vmem:[%s2491 + $0xfe] sm:$0xff]
      %v2506 = vld [vmem:[%s2491 + $0x11e] sm:$0xff]
      %v2507 = vld [vmem:[%s2491 + $0x126] sm:$0xff]
      %v2508 = vld [vmem:[%s2491 + $0x146] sm:$0xff]
      %v2509 = vld [vmem:[%s2491 + $0x14e] sm:$0xff]
      %v2510 = vld [vmem:[%s2491 + $0x16e] sm:$0xff]
      %v2511 = vld [vmem:[%s2491 + $0x176] sm:$0xff]
      %v2512 = vld [vmem:[%s2491 + $0x196] sm:$0xff]
      %v2513 = vld [vmem:[%s2491 + $0x19e] sm:$0xff]
      %v2514 = vld [vmem:[%s2491 + $0x1be] sm:$0xff]
      %v2515 = vld [vmem:[%s2491 + $0x1c6] sm:$0xff]
      %v2516 = vld [vmem:[%s2491 + $0x1e6] sm:$0xff]
      %v2517 = vld [vmem:[%s2491 + $0x1ee] sm:$0xff]
      %v2518 = vld [vmem:[%s2491 + $0x20e] sm:$0xff]
      %v2519 = vld [vmem:[%s2491 + $0x216] sm:$0xff]
      %v2520 = vld [vmem:[%s2491 + $0x236] sm:$0xff]
      %v2521 = vld [vmem:[%s2491 + $0x23e] sm:$0xff]
      %v2522 = vld [vmem:[%s2491 + $0x25e] sm:$0xff]
      %v2523 = vld [vmem:[%s2491 + $0x266] sm:$0xff]
      %s2524 = scalar_lea.vmem %s1, 24
      %v2525 = vld [vmem:[%s2524] sm:$0xf]
      %v2527 = vsel %vm280, %v2492, 0
      %v2530 = vsel %vm280, %v2493, 0
      %v2533 = vsel %vm280, %v2494, 0
      %v2536 = vsel %vm280, %v2495, 0
      %v2539 = vsel %vm280, %v2496, 0
      %v2542 = vsel %vm280, %v2497, 0
      %v2545 = vsel %vm280, %v2498, 0
      %v2548 = vsel %vm280, %v2499, 0
      %v2551 = vsel %vm280, %v2500, 0
      %v2554 = vsel %vm280, %v2501, 0
      %v2557 = vsel %vm280, %v2502, 0
      %v2560 = vsel %vm280, %v2503, 0
      %v2563 = vsel %vm280, %v2504, 0
      %v2566 = vsel %vm280, %v2505, 0
      %v2569 = vsel %vm280, %v2506, 0
      %v2572 = vsel %vm280, %v2507, 0
      %v2575 = vsel %vm280, %v2508, 0
      %v2578 = vsel %vm280, %v2509, 0
      %v2581 = vsel %vm280, %v2510, 0
      %v2584 = vsel %vm280, %v2511, 0
      %v2587 = vsel %vm280, %v2512, 0
      %v2590 = vsel %vm280, %v2513, 0
      %v2593 = vsel %vm280, %v2514, 0
      %v2596 = vsel %vm280, %v2515, 0
      %v2599 = vsel %vm280, %v2516, 0
      %v2602 = vsel %vm280, %v2517, 0
      %v2605 = vsel %vm280, %v2518, 0
      %v2608 = vsel %vm280, %v2519, 0
      %v2611 = vsel %vm280, %v2520, 0
      %v2614 = vsel %vm280, %v2521, 0
      %v2617 = vsel %vm280, %v2522, 0
      %v2620 = vsel %vm280, %v2523, 0
      %v2623 = vsel %vm377, %v2525, 0
      %2625 = vmatprep.subr.mxu0 0.0
      %2626 = vmatpush1.msra.mxu0 %v2623
      %2627 = vmatprep.subr.mxu0 0.0
      %2628 = vmatpush1.msra.mxu0 0.0
      %2629 = vmatprep.subr.mxu0 0.0
      %2630 = vmatpush1.msra.mxu0 0.0
      %2631 = vmatprep.subr.mxu0 0.0
      %2632 = vmatpush1.msra.mxu0 0.0
      %2633 = vmatprep.subr.mxu0 0.0
      %2634 = vmatpush1.msra.mxu0 0.0
      %2635 = vmatprep.subr.mxu0 0.0
      %2636 = vmatpush1.msra.mxu0 0.0
      %2637 = vmatprep.subr.mxu0 0.0
      %2638 = vmatpush1.msra.mxu0 0.0
      %2639 = vmatprep.subr.mxu0 0.0
      %2640 = vmatpush1.msra.mxu0 0.0
      %2641 = vmatprep.subr.mxu0 0.0
      %2642 = vmatpush1.msra.mxu0 0.0
      %2643 = vmatprep.subr.mxu0 0.0
      %2644 = vmatpush1.msra.mxu0 0.0
      %2645 = vmatprep.subr.mxu0 0.0
      %2646 = vmatpush1.msra.mxu0 0.0
      %2647 = vmatprep.subr.mxu0 0.0
      %2648 = vmatpush1.msra.mxu0 0.0
      %2649 = vmatprep.subr.mxu0 0.0
      %2650 = vmatpush1.msra.mxu0 0.0
      %2651 = vmatprep.subr.mxu0 0.0
      %2652 = vmatpush1.msra.mxu0 0.0
      %2653 = vmatprep.subr.mxu0 0.0
      %2654 = vmatpush1.msra.mxu0 0.0
      %2655 = vmatprep.subr.mxu0 0.0
      %2656 = vmatpush1.msra.mxu0 0.0
      %2657 = vmatprep.subr.mxu0 0.0
      %2658 = vmatpush1.msra.mxu0 0.0
      %2659 = vmatprep.subr.mxu0 0.0
      %2660 = vmatpush1.msra.mxu0 0.0
      %2661 = vmatprep.subr.mxu0 0.0
      %2662 = vmatpush1.msra.mxu0 0.0
      %2663 = vmatprep.subr.mxu0 0.0
      %2664 = vmatpush1.msra.mxu0 0.0
      %2665 = vmatprep.subr.mxu0 0.0
      %2666 = vmatpush1.msra.mxu0 0.0
      %2667 = vmatprep.subr.mxu0 0.0
      %2668 = vmatpush1.msra.mxu0 0.0
      %2669 = vmatprep.subr.mxu0 0.0
      %2670 = vmatpush1.msra.mxu0 0.0
      %2671 = vmatprep.subr.mxu0 0.0
      %2672 = vmatpush1.msra.mxu0 0.0
      %2673 = vmatprep.subr.mxu0 0.0
      %2674 = vmatpush1.msra.mxu0 0.0
      %2675 = vmatprep.subr.mxu0 0.0
      %2676 = vmatpush1.msra.mxu0 0.0
      %2677 = vmatprep.subr.mxu0 0.0
      %2678 = vmatpush1.msra.mxu0 0.0
      %2679 = vmatprep.subr.mxu0 0.0
      %2680 = vmatpush1.msra.mxu0 0.0
      %2681 = vmatprep.subr.mxu0 0.0
      %2682 = vmatpush1.msra.mxu0 0.0
      %2683 = vmatprep.subr.mxu0 0.0
      %2684 = vmatpush1.msra.mxu0 0.0
      %2685 = vmatprep.subr.mxu0 0.0
      %2686 = vmatpush1.msra.mxu0 0.0
      %2687 = vmatprep.subr.mxu0 0.0
      %2688 = vmatpush1.msra.mxu0 0.0
      %2689 = vmatprep.mubr.f32.mxu0 0.0
      %2690 = vmatmul.mubr.f32.gmra.mrb[0].mxu0 %v2527
      %v2691 = vpop.f32.mrb[0].mxu0
      %v2692 = vadd.f32 0.0, %v2691
      %v2693 = vpop.f32.mrb[0].mxu0
      %2694 = vmatprep.mubr.f32.mxu0 0.0
      %2695 = vmatmul.mubr.f32.gmra.mrb[0].mxu0 %v2530
      %v2696 = vpop.f32.mrb[0].mxu0
      %v2697 = vadd.f32 0.0, %v2696
      %v2698 = vpop.f32.mrb[0].mxu0
      %2699 = vmatprep.mubr.f32.mxu0 0.0
      %2700 = vmatmul.mubr.f32.gmra.mrb[0].mxu0 %v2533
      %v2701 = vpop.f32.mrb[0].mxu0
      %v2702 = vadd.f32 0.0, %v2701
      %v2703 = vpop.f32.mrb[0].mxu0
      %2704 = vmatprep.mubr.f32.mxu0 0.0
      %2705 = vmatmul.mubr.f32.gmra.mrb[0].mxu0 %v2536
      %v2706 = vpop.f32.mrb[0].mxu0
      %v2707 = vadd.f32 0.0, %v2706
      %v2708 = vpop.f32.mrb[0].mxu0
      %2709 = vmatprep.mubr.f32.mxu0 0.0
      %2710 = vmatmul.mubr.f32.gmra.mrb[0].mxu0 %v2539
      %v2711 = vpop.f32.mrb[0].mxu0
      %v2712 = vadd.f32 0.0, %v2711
      %v2713 = vpop.f32.mrb[0].mxu0
      %2714 = vmatprep.mubr.f32.mxu0 0.0
      %2715 = vmatmul.mubr.f32.gmra.mrb[0].mxu0 %v2542
      %v2716 = vpop.f32.mrb[0].mxu0
      %v2717 = vadd.f32 0.0, %v2716
      %v2718 = vpop.f32.mrb[0].mxu0
      %2719 = vmatprep.mubr.f32.mxu0 0.0
      %2720 = vmatmul.mubr.f32.gmra.mrb[0].mxu0 %v2545
      %v2721 = vpop.f32.mrb[0].mxu0
      %v2722 = vadd.f32 0.0, %v2721
      %v2723 = vpop.f32.mrb[0].mxu0
      %2724 = vmatprep.mubr.f32.mxu0 0.0
      %2725 = vmatmul.mubr.f32.gmra.mrb[0].mxu0 %v2548
      %v2726 = vpop.f32.mrb[0].mxu0
      %v2727 = vadd.f32 0.0, %v2726
      %v2728 = vpop.f32.mrb[0].mxu0
      %2729 = vmatprep.mubr.f32.mxu0 0.0
      %2730 = vmatmul.mubr.f32.gmra.mrb[0].mxu0 %v2551
      %v2731 = vpop.f32.mrb[0].mxu0
      %v2732 = vadd.f32 0.0, %v2731
      %v2733 = vpop.f32.mrb[0].mxu0
      %2734 = vmatprep.mubr.f32.mxu0 0.0
      %2735 = vmatmul.mubr.f32.gmra.mrb[0].mxu0 %v2554
      %v2736 = vpop.f32.mrb[0].mxu0
      %v2737 = vadd.f32 0.0, %v2736
      %v2738 = vpop.f32.mrb[0].mxu0
      %2739 = vmatprep.mubr.f32.mxu0 0.0
      %2740 = vmatmul.mubr.f32.gmra.mrb[0].mxu0 %v2557
      %v2741 = vpop.f32.mrb[0].mxu0
      %v2742 = vadd.f32 0.0, %v2741
      %v2743 = vpop.f32.mrb[0].mxu0
      %2744 = vmatprep.mubr.f32.mxu0 0.0
      %2745 = vmatmul.mubr.f32.gmra.mrb[0].mxu0 %v2560
      %v2746 = vpop.f32.mrb[0].mxu0
      %v2747 = vadd.f32 0.0, %v2746
      %v2748 = vpop.f32.mrb[0].mxu0
      %2749 = vmatprep.mubr.f32.mxu0 0.0
      %2750 = vmatmul.mubr.f32.gmra.mrb[0].mxu0 %v2563
      %v2751 = vpop.f32.mrb[0].mxu0
      %v2752 = vadd.f32 0.0, %v2751
      %v2753 = vpop.f32.mrb[0].mxu0
      %2754 = vmatprep.mubr.f32.mxu0 0.0
      %2755 = vmatmul.mubr.f32.gmra.mrb[0].mxu0 %v2566
      %v2756 = vpop.f32.mrb[0].mxu0
      %v2757 = vadd.f32 0.0, %v2756
      %v2758 = vpop.f32.mrb[0].mxu0
      %2759 = vmatprep.mubr.f32.mxu0 0.0
      %2760 = vmatmul.mubr.f32.gmra.mrb[0].mxu0 %v2569
      %v2761 = vpop.f32.mrb[0].mxu0
      %v2762 = vadd.f32 0.0, %v2761
      %v2763 = vpop.f32.mrb[0].mxu0
      %2764 = vmatprep.mubr.f32.mxu0 0.0
      %2765 = vmatmul.mubr.f32.gmra.mrb[0].mxu0 %v2572
      %v2766 = vpop.f32.mrb[0].mxu0
      %v2767 = vadd.f32 0.0, %v2766
      %v2768 = vpop.f32.mrb[0].mxu0
      %2769 = vmatprep.mubr.f32.mxu0 0.0
      %2770 = vmatmul.mubr.f32.gmra.mrb[0].mxu0 %v2575
      %v2771 = vpop.f32.mrb[0].mxu0
      %v2772 = vadd.f32 0.0, %v2771
      %v2773 = vpop.f32.mrb[0].mxu0
      %2774 = vmatprep.mubr.f32.mxu0 0.0
      %2775 = vmatmul.mubr.f32.gmra.mrb[0].mxu0 %v2578
      %v2776 = vpop.f32.mrb[0].mxu0
      %v2777 = vadd.f32 0.0, %v2776
      %v2778 = vpop.f32.mrb[0].mxu0
      %2779 = vmatprep.mubr.f32.mxu0 0.0
      %2780 = vmatmul.mubr.f32.gmra.mrb[0].mxu0 %v2581
      %v2781 = vpop.f32.mrb[0].mxu0
      %v2782 = vadd.f32 0.0, %v2781
      %v2783 = vpop.f32.mrb[0].mxu0
      %2784 = vmatprep.mubr.f32.mxu0 0.0
      %2785 = vmatmul.mubr.f32.gmra.mrb[0].mxu0 %v2584
      %v2786 = vpop.f32.mrb[0].mxu0
      %v2787 = vadd.f32 0.0, %v2786
      %v2788 = vpop.f32.mrb[0].mxu0
      %2789 = vmatprep.mubr.f32.mxu0 0.0
      %2790 = vmatmul.mubr.f32.gmra.mrb[0].mxu0 %v2587
      %v2791 = vpop.f32.mrb[0].mxu0
      %v2792 = vadd.f32 0.0, %v2791
      %v2793 = vpop.f32.mrb[0].mxu0
      %2794 = vmatprep.mubr.f32.mxu0 0.0
      %2795 = vmatmul.mubr.f32.gmra.mrb[0].mxu0 %v2590
      %v2796 = vpop.f32.mrb[0].mxu0
      %v2797 = vadd.f32 0.0, %v2796
      %v2798 = vpop.f32.mrb[0].mxu0
      %2799 = vmatprep.mubr.f32.mxu0 0.0
      %2800 = vmatmul.mubr.f32.gmra.mrb[0].mxu0 %v2593
      %v2801 = vpop.f32.mrb[0].mxu0
      %v2802 = vadd.f32 0.0, %v2801
      %v2803 = vpop.f32.mrb[0].mxu0
      %2804 = vmatprep.mubr.f32.mxu0 0.0
      %2805 = vmatmul.mubr.f32.gmra.mrb[0].mxu0 %v2596
      %v2806 = vpop.f32.mrb[0].mxu0
      %v2807 = vadd.f32 0.0, %v2806
      %v2808 = vpop.f32.mrb[0].mxu0
      %2809 = vmatprep.mubr.f32.mxu0 0.0
      %2810 = vmatmul.mubr.f32.gmra.mrb[0].mxu0 %v2599
      %v2811 = vpop.f32.mrb[0].mxu0
      %v2812 = vadd.f32 0.0, %v2811
      %v2813 = vpop.f32.mrb[0].mxu0
      %2814 = vmatprep.mubr.f32.mxu0 0.0
      %2815 = vmatmul.mubr.f32.gmra.mrb[0].mxu0 %v2602
      %v2816 = vpop.f32.mrb[0].mxu0
      %v2817 = vadd.f32 0.0, %v2816
      %v2818 = vpop.f32.mrb[0].mxu0
      %2819 = vmatprep.mubr.f32.mxu0 0.0
      %2820 = vmatmul.mubr.f32.gmra.mrb[0].mxu0 %v2605
      %v2821 = vpop.f32.mrb[0].mxu0
      %v2822 = vadd.f32 0.0, %v2821
      %v2823 = vpop.f32.mrb[0].mxu0
      %2824 = vmatprep.mubr.f32.mxu0 0.0
      %2825 = vmatmul.mubr.f32.gmra.mrb[0].mxu0 %v2608
      %v2826 = vpop.f32.mrb[0].mxu0
      %v2827 = vadd.f32 0.0, %v2826
      %v2828 = vpop.f32.mrb[0].mxu0
      %2829 = vmatprep.mubr.f32.mxu0 0.0
      %2830 = vmatmul.mubr.f32.gmra.mrb[0].mxu0 %v2611
      %v2831 = vpop.f32.mrb[0].mxu0
      %v2832 = vadd.f32 0.0, %v2831
      %v2833 = vpop.f32.mrb[0].mxu0
      %2834 = vmatprep.mubr.f32.mxu0 0.0
      %2835 = vmatmul.mubr.f32.gmra.mrb[0].mxu0 %v2614
      %v2836 = vpop.f32.mrb[0].mxu0
      %v2837 = vadd.f32 0.0, %v2836
      %v2838 = vpop.f32.mrb[0].mxu0
      %2839 = vmatprep.mubr.f32.mxu0 0.0
      %2840 = vmatmul.mubr.f32.gmra.mrb[0].mxu0 %v2617
      %v2841 = vpop.f32.mrb[0].mxu0
      %v2842 = vadd.f32 0.0, %v2841
      %v2843 = vpop.f32.mrb[0].mxu0
      %2844 = vmatprep.mubr.f32.mxu0 0.0
      %2845 = vmatmul.mubr.f32.gmra.mrb[0].mxu0 %v2620
      %v2846 = vpop.f32.mrb[0].mxu0
      %v2847 = vadd.f32 0.0, %v2846
      %v2848 = vpop.f32.mrb[0].mxu0
      %2849 = vdwg.mxu0
      %v2850 = vadd.f32 %v2459, %v2692
      %v2851 = vadd.f32 %v2460, %v2697
      %v2852 = vadd.f32 %v2461, %v2702
      %v2853 = vadd.f32 %v2462, %v2707
      %v2854 = vadd.f32 %v2463, %v2712
      %v2855 = vadd.f32 %v2464, %v2717
      %v2856 = vadd.f32 %v2465, %v2722
      %v2857 = vadd.f32 %v2466, %v2727
      %v2858 = vadd.f32 %v2467, %v2732
      %v2859 = vadd.f32 %v2468, %v2737
      %v2860 = vadd.f32 %v2469, %v2742
      %v2861 = vadd.f32 %v2470, %v2747
      %v2862 = vadd.f32 %v2471, %v2752
      %v2863 = vadd.f32 %v2472, %v2757
      %v2864 = vadd.f32 %v2473, %v2762
      %v2865 = vadd.f32 %v2474, %v2767
      %v2866 = vadd.f32 %v2475, %v2772
      %v2867 = vadd.f32 %v2476, %v2777
      %v2868 = vadd.f32 %v2477, %v2782
      %v2869 = vadd.f32 %v2478, %v2787
      %v2870 = vadd.f32 %v2479, %v2792
      %v2871 = vadd.f32 %v2480, %v2797
      %v2872 = vadd.f32 %v2481, %v2802
      %v2873 = vadd.f32 %v2482, %v2807
      %v2874 = vadd.f32 %v2483, %v2812
      %v2875 = vadd.f32 %v2484, %v2817
      %v2876 = vadd.f32 %v2485, %v2822
      %v2877 = vadd.f32 %v2486, %v2827
      %v2878 = vadd.f32 %v2487, %v2832
      %v2879 = vadd.f32 %v2488, %v2837
      %v2880 = vadd.f32 %v2489, %v2842
      %v2881 = vadd.f32 %v2490, %v2847
      %v2882 = vld [vmem:[%s2491 + $0x9] sm:$0xff]
      %v2883 = vld [vmem:[%s2491 + $0x11] sm:$0xff]
      %v2884 = vld [vmem:[%s2491 + $0x31] sm:$0xff]
      %v2885 = vld [vmem:[%s2491 + $0x39] sm:$0xff]
      %v2886 = vld [vmem:[%s2491 + $0x59] sm:$0xff]
      %v2887 = vld [vmem:[%s2491 + $0x61] sm:$0xff]
      %v2888 = vld [vmem:[%s2491 + $0x81] sm:$0xff]
      %v2889 = vld [vmem:[%s2491 + $0x89] sm:$0xff]
      %v2890 = vld [vmem:[%s2491 + $0xa9] sm:$0xff]
      %v2891 = vld [vmem:[%s2491 + $0xb1] sm:$0xff]
      %v2892 = vld [vmem:[%s2491 + $0xd1] sm:$0xff]
      %v2893 = vld [vmem:[%s2491 + $0xd9] sm:$0xff]
      %v2894 = vld [vmem:[%s2491 + $0xf9] sm:$0xff]
      %v2895 = vld [vmem:[%s2491 + $0x101] sm:$0xff]
      %v2896 = vld [vmem:[%s2491 + $0x121] sm:$0xff]
      %v2897 = vld [vmem:[%s2491 + $0x129] sm:$0xff]
      %v2898 = vld [vmem:[%s2491 + $0x149] sm:$0xff]
      %v2899 = vld [vmem:[%s2491 + $0x151] sm:$0xff]
      %v2900 = vld [vmem:[%s2491 + $0x171] sm:$0xff]
      %v2901 = vld [vmem:[%s2491 + $0x179] sm:$0xff]
      %v2902 = vld [vmem:[%s2491 + $0x199] sm:$0xff]
      %v2903 = vld [vmem:[%s2491 + $0x1a1] sm:$0xff]
      %v2904 = vld [vmem:[%s2491 + $0x1c1] sm:$0xff]
      %v2905 = vld [vmem:[%s2491 + $0x1c9] sm:$0xff]
      %v2906 = vld [vmem:[%s2491 + $0x1e9] sm:$0xff]
      %v2907 = vld [vmem:[%s2491 + $0x1f1] sm:$0xff]
      %v2908 = vld [vmem:[%s2491 + $0x211] sm:$0xff]
      %v2909 = vld [vmem:[%s2491 + $0x219] sm:$0xff]
      %v2910 = vld [vmem:[%s2491 + $0x239] sm:$0xff]
      %v2911 = vld [vmem:[%s2491 + $0x241] sm:$0xff]
      %v2912 = vld [vmem:[%s2491 + $0x261] sm:$0xff]
      %v2913 = vld [vmem:[%s2491 + $0x269] sm:$0xff]
      %s2914 = scalar_lea.vmem %s1, 28
      %v2915 = vld [vmem:[%s2914] sm:$0xf]
      %v2917 = vsel %vm280, %v2882, 0
      %v2920 = vsel %vm280, %v2883, 0
      %v2923 = vsel %vm280, %v2884, 0
      %v2926 = vsel %vm280, %v2885, 0
      %v2929 = vsel %vm280, %v2886, 0
      %v2932 = vsel %vm280, %v2887, 0
      %v2935 = vsel %vm280, %v2888, 0
      %v2938 = vsel %vm280, %v2889, 0
      %v2941 = vsel %vm280, %v2890, 0
      %v2944 = vsel %vm280, %v2891, 0
      %v2947 = vsel %vm280, %v2892, 0
      %v2950 = vsel %vm280, %v2893, 0
      %v2953 = vsel %vm280, %v2894, 0
      %v2956 = vsel %vm280, %v2895, 0
      %v2959 = vsel %vm280, %v2896, 0
      %v2962 = vsel %vm280, %v2897, 0
      %v2965 = vsel %vm280, %v2898, 0
      %v2968 = vsel %vm280, %v2899, 0
      %v2971 = vsel %vm280, %v2900, 0
      %v2974 = vsel %vm280, %v2901, 0
      %v2977 = vsel %vm280, %v2902, 0
      %v2980 = vsel %vm280, %v2903, 0
      %v2983 = vsel %vm280, %v2904, 0
      %v2986 = vsel %vm280, %v2905, 0
      %v2989 = vsel %vm280, %v2906, 0
      %v2992 = vsel %vm280, %v2907, 0
      %v2995 = vsel %vm280, %v2908, 0
      %v2998 = vsel %vm280, %v2909, 0
      %v3001 = vsel %vm280, %v2910, 0
      %v3004 = vsel %vm280, %v2911, 0
      %v3007 = vsel %vm280, %v2912, 0
      %v3010 = vsel %vm280, %v2913, 0
      %v3013 = vsel %vm377, %v2915, 0
      %3015 = vmatprep.subr.mxu0 0.0
      %3016 = vmatpush1.msra.mxu0 %v3013
      %3017 = vmatprep.subr.mxu0 0.0
      %3018 = vmatpush1.msra.mxu0 0.0
      %3019 = vmatprep.subr.mxu0 0.0
      %3020 = vmatpush1.msra.mxu0 0.0
      %3021 = vmatprep.subr.mxu0 0.0
      %3022 = vmatpush1.msra.mxu0 0.0
      %3023 = vmatprep.subr.mxu0 0.0
      %3024 = vmatpush1.msra.mxu0 0.0
      %3025 = vmatprep.subr.mxu0 0.0
      %3026 = vmatpush1.msra.mxu0 0.0
      %3027 = vmatprep.subr.mxu0 0.0
      %3028 = vmatpush1.msra.mxu0 0.0
      %3029 = vmatprep.subr.mxu0 0.0
      %3030 = vmatpush1.msra.mxu0 0.0
      %3031 = vmatprep.subr.mxu0 0.0
      %3032 = vmatpush1.msra.mxu0 0.0
      %3033 = vmatprep.subr.mxu0 0.0
      %3034 = vmatpush1.msra.mxu0 0.0
      %3035 = vmatprep.subr.mxu0 0.0
      %3036 = vmatpush1.msra.mxu0 0.0
      %3037 = vmatprep.subr.mxu0 0.0
      %3038 = vmatpush1.msra.mxu0 0.0
      %3039 = vmatprep.subr.mxu0 0.0
      %3040 = vmatpush1.msra.mxu0 0.0
      %3041 = vmatprep.subr.mxu0 0.0
      %3042 = vmatpush1.msra.mxu0 0.0
      %3043 = vmatprep.subr.mxu0 0.0
      %3044 = vmatpush1.msra.mxu0 0.0
      %3045 = vmatprep.subr.mxu0 0.0
      %3046 = vmatpush1.msra.mxu0 0.0
      %3047 = vmatprep.subr.mxu0 0.0
      %3048 = vmatpush1.msra.mxu0 0.0
      %3049 = vmatprep.subr.mxu0 0.0
      %3050 = vmatpush1.msra.mxu0 0.0
      %3051 = vmatprep.subr.mxu0 0.0
      %3052 = vmatpush1.msra.mxu0 0.0
      %3053 = vmatprep.subr.mxu0 0.0
      %3054 = vmatpush1.msra.mxu0 0.0
      %3055 = vmatprep.subr.mxu0 0.0
      %3056 = vmatpush1.msra.mxu0 0.0
      %3057 = vmatprep.subr.mxu0 0.0
      %3058 = vmatpush1.msra.mxu0 0.0
      %3059 = vmatprep.subr.mxu0 0.0
      %3060 = vmatpush1.msra.mxu0 0.0
      %3061 = vmatprep.subr.mxu0 0.0
      %3062 = vmatpush1.msra.mxu0 0.0
      %3063 = vmatprep.subr.mxu0 0.0
      %3064 = vmatpush1.msra.mxu0 0.0
      %3065 = vmatprep.subr.mxu0 0.0
      %3066 = vmatpush1.msra.mxu0 0.0
      %3067 = vmatprep.subr.mxu0 0.0
      %3068 = vmatpush1.msra.mxu0 0.0
      %3069 = vmatprep.subr.mxu0 0.0
      %3070 = vmatpush1.msra.mxu0 0.0
      %3071 = vmatprep.subr.mxu0 0.0
      %3072 = vmatpush1.msra.mxu0 0.0
      %3073 = vmatprep.subr.mxu0 0.0
      %3074 = vmatpush1.msra.mxu0 0.0
      %3075 = vmatprep.subr.mxu0 0.0
      %3076 = vmatpush1.msra.mxu0 0.0
      %3077 = vmatprep.subr.mxu0 0.0
      %3078 = vmatpush1.msra.mxu0 0.0
      %3079 = vmatprep.mubr.f32.mxu0 0.0
      %3080 = vmatmul.mubr.f32.gmra.mrb[0].mxu0 %v2917
      %v3081 = vpop.f32.mrb[0].mxu0
      %v3082 = vadd.f32 0.0, %v3081
      %v3083 = vpop.f32.mrb[0].mxu0
      %3084 = vmatprep.mubr.f32.mxu0 0.0
      %3085 = vmatmul.mubr.f32.gmra.mrb[0].mxu0 %v2920
      %v3086 = vpop.f32.mrb[0].mxu0
      %v3087 = vadd.f32 0.0, %v3086
      %v3088 = vpop.f32.mrb[0].mxu0
      %3089 = vmatprep.mubr.f32.mxu0 0.0
      %3090 = vmatmul.mubr.f32.gmra.mrb[0].mxu0 %v2923
      %v3091 = vpop.f32.mrb[0].mxu0
      %v3092 = vadd.f32 0.0, %v3091
      %v3093 = vpop.f32.mrb[0].mxu0
      %3094 = vmatprep.mubr.f32.mxu0 0.0
      %3095 = vmatmul.mubr.f32.gmra.mrb[0].mxu0 %v2926
      %v3096 = vpop.f32.mrb[0].mxu0
      %v3097 = vadd.f32 0.0, %v3096
      %v3098 = vpop.f32.mrb[0].mxu0
      %3099 = vmatprep.mubr.f32.mxu0 0.0
      %3100 = vmatmul.mubr.f32.gmra.mrb[0].mxu0 %v2929
      %v3101 = vpop.f32.mrb[0].mxu0
      %v3102 = vadd.f32 0.0, %v3101
      %v3103 = vpop.f32.mrb[0].mxu0
      %3104 = vmatprep.mubr.f32.mxu0 0.0
      %3105 = vmatmul.mubr.f32.gmra.mrb[0].mxu0 %v2932
      %v3106 = vpop.f32.mrb[0].mxu0
      %v3107 = vadd.f32 0.0, %v3106
      %v3108 = vpop.f32.mrb[0].mxu0
      %3109 = vmatprep.mubr.f32.mxu0 0.0
      %3110 = vmatmul.mubr.f32.gmra.mrb[0].mxu0 %v2935
      %v3111 = vpop.f32.mrb[0].mxu0
      %v3112 = vadd.f32 0.0, %v3111
      %v3113 = vpop.f32.mrb[0].mxu0
      %3114 = vmatprep.mubr.f32.mxu0 0.0
      %3115 = vmatmul.mubr.f32.gmra.mrb[0].mxu0 %v2938
      %v3116 = vpop.f32.mrb[0].mxu0
      %v3117 = vadd.f32 0.0, %v3116
      %v3118 = vpop.f32.mrb[0].mxu0
      %3119 = vmatprep.mubr.f32.mxu0 0.0
      %3120 = vmatmul.mubr.f32.gmra.mrb[0].mxu0 %v2941
      %v3121 = vpop.f32.mrb[0].mxu0
      %v3122 = vadd.f32 0.0, %v3121
      %v3123 = vpop.f32.mrb[0].mxu0
      %3124 = vmatprep.mubr.f32.mxu0 0.0
      %3125 = vmatmul.mubr.f32.gmra.mrb[0].mxu0 %v2944
      %v3126 = vpop.f32.mrb[0].mxu0
      %v3127 = vadd.f32 0.0, %v3126
      %v3128 = vpop.f32.mrb[0].mxu0
      %3129 = vmatprep.mubr.f32.mxu0 0.0
      %3130 = vmatmul.mubr.f32.gmra.mrb[0].mxu0 %v2947
      %v3131 = vpop.f32.mrb[0].mxu0
      %v3132 = vadd.f32 0.0, %v3131
      %v3133 = vpop.f32.mrb[0].mxu0
      %3134 = vmatprep.mubr.f32.mxu0 0.0
      %3135 = vmatmul.mubr.f32.gmra.mrb[0].mxu0 %v2950
      %v3136 = vpop.f32.mrb[0].mxu0
      %v3137 = vadd.f32 0.0, %v3136
      %v3138 = vpop.f32.mrb[0].mxu0
      %3139 = vmatprep.mubr.f32.mxu0 0.0
      %3140 = vmatmul.mubr.f32.gmra.mrb[0].mxu0 %v2953
      %v3141 = vpop.f32.mrb[0].mxu0
      %v3142 = vadd.f32 0.0, %v3141
      %v3143 = vpop.f32.mrb[0].mxu0
      %3144 = vmatprep.mubr.f32.mxu0 0.0
      %3145 = vmatmul.mubr.f32.gmra.mrb[0].mxu0 %v2956
      %v3146 = vpop.f32.mrb[0].mxu0
      %v3147 = vadd.f32 0.0, %v3146
      %v3148 = vpop.f32.mrb[0].mxu0
      %3149 = vmatprep.mubr.f32.mxu0 0.0
      %3150 = vmatmul.mubr.f32.gmra.mrb[0].mxu0 %v2959
      %v3151 = vpop.f32.mrb[0].mxu0
      %v3152 = vadd.f32 0.0, %v3151
      %v3153 = vpop.f32.mrb[0].mxu0
      %3154 = vmatprep.mubr.f32.mxu0 0.0
      %3155 = vmatmul.mubr.f32.gmra.mrb[0].mxu0 %v2962
      %v3156 = vpop.f32.mrb[0].mxu0
      %v3157 = vadd.f32 0.0, %v3156
      %v3158 = vpop.f32.mrb[0].mxu0
      %3159 = vmatprep.mubr.f32.mxu0 0.0
      %3160 = vmatmul.mubr.f32.gmra.mrb[0].mxu0 %v2965
      %v3161 = vpop.f32.mrb[0].mxu0
      %v3162 = vadd.f32 0.0, %v3161
      %v3163 = vpop.f32.mrb[0].mxu0
      %3164 = vmatprep.mubr.f32.mxu0 0.0
      %3165 = vmatmul.mubr.f32.gmra.mrb[0].mxu0 %v2968
      %v3166 = vpop.f32.mrb[0].mxu0
      %v3167 = vadd.f32 0.0, %v3166
      %v3168 = vpop.f32.mrb[0].mxu0
      %3169 = vmatprep.mubr.f32.mxu0 0.0
      %3170 = vmatmul.mubr.f32.gmra.mrb[0].mxu0 %v2971
      %v3171 = vpop.f32.mrb[0].mxu0
      %v3172 = vadd.f32 0.0, %v3171
      %v3173 = vpop.f32.mrb[0].mxu0
      %3174 = vmatprep.mubr.f32.mxu0 0.0
      %3175 = vmatmul.mubr.f32.gmra.mrb[0].mxu0 %v2974
      %v3176 = vpop.f32.mrb[0].mxu0
      %v3177 = vadd.f32 0.0, %v3176
      %v3178 = vpop.f32.mrb[0].mxu0
      %3179 = vmatprep.mubr.f32.mxu0 0.0
      %3180 = vmatmul.mubr.f32.gmra.mrb[0].mxu0 %v2977
      %v3181 = vpop.f32.mrb[0].mxu0
      %v3182 = vadd.f32 0.0, %v3181
      %v3183 = vpop.f32.mrb[0].mxu0
      %3184 = vmatprep.mubr.f32.mxu0 0.0
      %3185 = vmatmul.mubr.f32.gmra.mrb[0].mxu0 %v2980
      %v3186 = vpop.f32.mrb[0].mxu0
      %v3187 = vadd.f32 0.0, %v3186
      %v3188 = vpop.f32.mrb[0].mxu0
      %3189 = vmatprep.mubr.f32.mxu0 0.0
      %3190 = vmatmul.mubr.f32.gmra.mrb[0].mxu0 %v2983
      %v3191 = vpop.f32.mrb[0].mxu0
      %v3192 = vadd.f32 0.0, %v3191
      %v3193 = vpop.f32.mrb[0].mxu0
      %3194 = vmatprep.mubr.f32.mxu0 0.0
      %3195 = vmatmul.mubr.f32.gmra.mrb[0].mxu0 %v2986
      %v3196 = vpop.f32.mrb[0].mxu0
      %v3197 = vadd.f32 0.0, %v3196
      %v3198 = vpop.f32.mrb[0].mxu0
      %3199 = vmatprep.mubr.f32.mxu0 0.0
      %3200 = vmatmul.mubr.f32.gmra.mrb[0].mxu0 %v2989
      %v3201 = vpop.f32.mrb[0].mxu0
      %v3202 = vadd.f32 0.0, %v3201
      %v3203 = vpop.f32.mrb[0].mxu0
      %3204 = vmatprep.mubr.f32.mxu0 0.0
      %3205 = vmatmul.mubr.f32.gmra.mrb[0].mxu0 %v2992
      %v3206 = vpop.f32.mrb[0].mxu0
      %v3207 = vadd.f32 0.0, %v3206
      %v3208 = vpop.f32.mrb[0].mxu0
      %3209 = vmatprep.mubr.f32.mxu0 0.0
      %3210 = vmatmul.mubr.f32.gmra.mrb[0].mxu0 %v2995
      %v3211 = vpop.f32.mrb[0].mxu0
      %v3212 = vadd.f32 0.0, %v3211
      %v3213 = vpop.f32.mrb[0].mxu0
      %3214 = vmatprep.mubr.f32.mxu0 0.0
      %3215 = vmatmul.mubr.f32.gmra.mrb[0].mxu0 %v2998
      %v3216 = vpop.f32.mrb[0].mxu0
      %v3217 = vadd.f32 0.0, %v3216
      %v3218 = vpop.f32.mrb[0].mxu0
      %3219 = vmatprep.mubr.f32.mxu0 0.0
      %3220 = vmatmul.mubr.f32.gmra.mrb[0].mxu0 %v3001
      %v3221 = vpop.f32.mrb[0].mxu0
      %v3222 = vadd.f32 0.0, %v3221
      %v3223 = vpop.f32.mrb[0].mxu0
      %3224 = vmatprep.mubr.f32.mxu0 0.0
      %3225 = vmatmul.mubr.f32.gmra.mrb[0].mxu0 %v3004
      %v3226 = vpop.f32.mrb[0].mxu0
      %v3227 = vadd.f32 0.0, %v3226
      %v3228 = vpop.f32.mrb[0].mxu0
      %3229 = vmatprep.mubr.f32.mxu0 0.0
      %3230 = vmatmul.mubr.f32.gmra.mrb[0].mxu0 %v3007
      %v3231 = vpop.f32.mrb[0].mxu0
      %v3232 = vadd.f32 0.0, %v3231
      %v3233 = vpop.f32.mrb[0].mxu0
      %3234 = vmatprep.mubr.f32.mxu0 0.0
      %3235 = vmatmul.mubr.f32.gmra.mrb[0].mxu0 %v3010
      %v3236 = vpop.f32.mrb[0].mxu0
      %v3237 = vadd.f32 0.0, %v3236
      %v3238 = vpop.f32.mrb[0].mxu0
      %3239 = vdwg.mxu0
      %v3240 = vadd.f32 %v2850, %v3082
      %v3241 = vadd.f32 %v2851, %v3087
      %v3242 = vadd.f32 %v2852, %v3092
      %v3243 = vadd.f32 %v2853, %v3097
      %v3244 = vadd.f32 %v2854, %v3102
      %v3245 = vadd.f32 %v2855, %v3107
      %v3246 = vadd.f32 %v2856, %v3112
      %v3247 = vadd.f32 %v2857, %v3117
      %v3248 = vadd.f32 %v2858, %v3122
      %v3249 = vadd.f32 %v2859, %v3127
      %v3250 = vadd.f32 %v2860, %v3132
      %v3251 = vadd.f32 %v2861, %v3137
      %v3252 = vadd.f32 %v2862, %v3142
      %v3253 = vadd.f32 %v2863, %v3147
      %v3254 = vadd.f32 %v2864, %v3152
      %v3255 = vadd.f32 %v2865, %v3157
      %v3256 = vadd.f32 %v2866, %v3162
      %v3257 = vadd.f32 %v2867, %v3167
      %v3258 = vadd.f32 %v2868, %v3172
      %v3259 = vadd.f32 %v2869, %v3177
      %v3260 = vadd.f32 %v2870, %v3182
      %v3261 = vadd.f32 %v2871, %v3187
      %v3262 = vadd.f32 %v2872, %v3192
      %v3263 = vadd.f32 %v2873, %v3197
      %v3264 = vadd.f32 %v2874, %v3202
      %v3265 = vadd.f32 %v2875, %v3207
      %v3266 = vadd.f32 %v2876, %v3212
      %v3267 = vadd.f32 %v2877, %v3217
      %v3268 = vadd.f32 %v2878, %v3222
      %v3269 = vadd.f32 %v2879, %v3227
      %v3270 = vadd.f32 %v2880, %v3232
      %v3271 = vadd.f32 %v2881, %v3237
      %v3272 = vld [vmem:[%s2491 + $0xc] sm:$0xff]
      %v3273 = vld [vmem:[%s2491 + $0x14] sm:$0xff]
      %v3274 = vld [vmem:[%s2491 + $0x34] sm:$0xff]
      %v3275 = vld [vmem:[%s2491 + $0x3c] sm:$0xff]
      %v3276 = vld [vmem:[%s2491 + $0x5c] sm:$0xff]
      %v3277 = vld [vmem:[%s2491 + $0x64] sm:$0xff]
      %v3278 = vld [vmem:[%s2491 + $0x84] sm:$0xff]
      %v3279 = vld [vmem:[%s2491 + $0x8c] sm:$0xff]
      %v3280 = vld [vmem:[%s2491 + $0xac] sm:$0xff]
      %v3281 = vld [vmem:[%s2491 + $0xb4] sm:$0xff]
      %v3282 = vld [vmem:[%s2491 + $0xd4] sm:$0xff]
      %v3283 = vld [vmem:[%s2491 + $0xdc] sm:$0xff]
      %v3284 = vld [vmem:[%s2491 + $0xfc] sm:$0xff]
      %v3285 = vld [vmem:[%s2491 + $0x104] sm:$0xff]
      %v3286 = vld [vmem:[%s2491 + $0x124] sm:$0xff]
      %v3287 = vld [vmem:[%s2491 + $0x12c] sm:$0xff]
      %v3288 = vld [vmem:[%s2491 + $0x14c] sm:$0xff]
      %v3289 = vld [vmem:[%s2491 + $0x154] sm:$0xff]
      %v3290 = vld [vmem:[%s2491 + $0x174] sm:$0xff]
      %v3291 = vld [vmem:[%s2491 + $0x17c] sm:$0xff]
      %v3292 = vld [vmem:[%s2491 + $0x19c] sm:$0xff]
      %v3293 = vld [vmem:[%s2491 + $0x1a4] sm:$0xff]
      %v3294 = vld [vmem:[%s2491 + $0x1c4] sm:$0xff]
      %v3295 = vld [vmem:[%s2491 + $0x1cc] sm:$0xff]
      %v3296 = vld [vmem:[%s2491 + $0x1ec] sm:$0xff]
      %v3297 = vld [vmem:[%s2491 + $0x1f4] sm:$0xff]
      %v3298 = vld [vmem:[%s2491 + $0x214] sm:$0xff]
      %v3299 = vld [vmem:[%s2491 + $0x21c] sm:$0xff]
      %v3300 = vld [vmem:[%s2491 + $0x23c] sm:$0xff]
      %v3301 = vld [vmem:[%s2491 + $0x244] sm:$0xff]
      %v3302 = vld [vmem:[%s2491 + $0x264] sm:$0xff]
      %v3303 = vld [vmem:[%s2491 + $0x26c] sm:$0xff]
      %s3304 = scalar_lea.vmem %s1, 32
      %v3305 = vld [vmem:[%s3304] sm:$0xf]
      %v3307 = vsel %vm280, %v3272, 0
      %v3310 = vsel %vm280, %v3273, 0
      %v3313 = vsel %vm280, %v3274, 0
      %v3316 = vsel %vm280, %v3275, 0
      %v3319 = vsel %vm280, %v3276, 0
      %v3322 = vsel %vm280, %v3277, 0
      %v3325 = vsel %vm280, %v3278, 0
      %v3328 = vsel %vm280, %v3279, 0
      %v3331 = vsel %vm280, %v3280, 0
      %v3334 = vsel %vm280, %v3281, 0
      %v3337 = vsel %vm280, %v3282, 0
      %v3340 = vsel %vm280, %v3283, 0
      %v3343 = vsel %vm280, %v3284, 0
      %v3346 = vsel %vm280, %v3285, 0
      %v3349 = vsel %vm280, %v3286, 0
      %v3352 = vsel %vm280, %v3287, 0
      %v3355 = vsel %vm280, %v3288, 0
      %v3358 = vsel %vm280, %v3289, 0
      %v3361 = vsel %vm280, %v3290, 0
      %v3364 = vsel %vm280, %v3291, 0
      %v3367 = vsel %vm280, %v3292, 0
      %v3370 = vsel %vm280, %v3293, 0
      %v3373 = vsel %vm280, %v3294, 0
      %v3376 = vsel %vm280, %v3295, 0
      %v3379 = vsel %vm280, %v3296, 0
      %v3382 = vsel %vm280, %v3297, 0
      %v3385 = vsel %vm280, %v3298, 0
      %v3388 = vsel %vm280, %v3299, 0
      %v3391 = vsel %vm280, %v3300, 0
      %v3394 = vsel %vm280, %v3301, 0
      %v3397 = vsel %vm280, %v3302, 0
      %v3400 = vsel %vm280, %v3303, 0
      %v3403 = vsel %vm377, %v3305, 0
      %3405 = vmatprep.subr.mxu0 0.0
      %3406 = vmatpush1.msra.mxu0 %v3403
      %3407 = vmatprep.subr.mxu0 0.0
      %3408 = vmatpush1.msra.mxu0 0.0
      %3409 = vmatprep.subr.mxu0 0.0
      %3410 = vmatpush1.msra.mxu0 0.0
      %3411 = vmatprep.subr.mxu0 0.0
      %3412 = vmatpush1.msra.mxu0 0.0
      %3413 = vmatprep.subr.mxu0 0.0
      %3414 = vmatpush1.msra.mxu0 0.0
      %3415 = vmatprep.subr.mxu0 0.0
      %3416 = vmatpush1.msra.mxu0 0.0
      %3417 = vmatprep.subr.mxu0 0.0
      %3418 = vmatpush1.msra.mxu0 0.0
      %3419 = vmatprep.subr.mxu0 0.0
      %3420 = vmatpush1.msra.mxu0 0.0
      %3421 = vmatprep.subr.mxu0 0.0
      %3422 = vmatpush1.msra.mxu0 0.0
      %3423 = vmatprep.subr.mxu0 0.0
      %3424 = vmatpush1.msra.mxu0 0.0
      %3425 = vmatprep.subr.mxu0 0.0
      %3426 = vmatpush1.msra.mxu0 0.0
      %3427 = vmatprep.subr.mxu0 0.0
      %3428 = vmatpush1.msra.mxu0 0.0
      %3429 = vmatprep.subr.mxu0 0.0
      %3430 = vmatpush1.msra.mxu0 0.0
      %3431 = vmatprep.subr.mxu0 0.0
      %3432 = vmatpush1.msra.mxu0 0.0
      %3433 = vmatprep.subr.mxu0 0.0
      %3434 = vmatpush1.msra.mxu0 0.0
      %3435 = vmatprep.subr.mxu0 0.0
      %3436 = vmatpush1.msra.mxu0 0.0
      %3437 = vmatprep.subr.mxu0 0.0
      %3438 = vmatpush1.msra.mxu0 0.0
      %3439 = vmatprep.subr.mxu0 0.0
      %3440 = vmatpush1.msra.mxu0 0.0
      %3441 = vmatprep.subr.mxu0 0.0
      %3442 = vmatpush1.msra.mxu0 0.0
      %3443 = vmatprep.subr.mxu0 0.0
      %3444 = vmatpush1.msra.mxu0 0.0
      %3445 = vmatprep.subr.mxu0 0.0
      %3446 = vmatpush1.msra.mxu0 0.0
      %3447 = vmatprep.subr.mxu0 0.0
      %3448 = vmatpush1.msra.mxu0 0.0
      %3449 = vmatprep.subr.mxu0 0.0
      %3450 = vmatpush1.msra.mxu0 0.0
      %3451 = vmatprep.subr.mxu0 0.0
      %3452 = vmatpush1.msra.mxu0 0.0
      %3453 = vmatprep.subr.mxu0 0.0
      %3454 = vmatpush1.msra.mxu0 0.0
      %3455 = vmatprep.subr.mxu0 0.0
      %3456 = vmatpush1.msra.mxu0 0.0
      %3457 = vmatprep.subr.mxu0 0.0
      %3458 = vmatpush1.msra.mxu0 0.0
      %3459 = vmatprep.subr.mxu0 0.0
      %3460 = vmatpush1.msra.mxu0 0.0
      %3461 = vmatprep.subr.mxu0 0.0
      %3462 = vmatpush1.msra.mxu0 0.0
      %3463 = vmatprep.subr.mxu0 0.0
      %3464 = vmatpush1.msra.mxu0 0.0
      %3465 = vmatprep.subr.mxu0 0.0
      %3466 = vmatpush1.msra.mxu0 0.0
      %3467 = vmatprep.subr.mxu0 0.0
      %3468 = vmatpush1.msra.mxu0 0.0
      %3469 = vmatprep.mubr.f32.mxu0 0.0
      %3470 = vmatmul.mubr.f32.gmra.mrb[0].mxu0 %v3307
      %v3471 = vpop.f32.mrb[0].mxu0
      %v3472 = vadd.f32 0.0, %v3471
      %v3473 = vpop.f32.mrb[0].mxu0
      %3474 = vmatprep.mubr.f32.mxu0 0.0
      %3475 = vmatmul.mubr.f32.gmra.mrb[0].mxu0 %v3310
      %v3476 = vpop.f32.mrb[0].mxu0
      %v3477 = vadd.f32 0.0, %v3476
      %v3478 = vpop.f32.mrb[0].mxu0
      %3479 = vmatprep.mubr.f32.mxu0 0.0
      %3480 = vmatmul.mubr.f32.gmra.mrb[0].mxu0 %v3313
      %v3481 = vpop.f32.mrb[0].mxu0
      %v3482 = vadd.f32 0.0, %v3481
      %v3483 = vpop.f32.mrb[0].mxu0
      %3484 = vmatprep.mubr.f32.mxu0 0.0
      %3485 = vmatmul.mubr.f32.gmra.mrb[0].mxu0 %v3316
      %v3486 = vpop.f32.mrb[0].mxu0
      %v3487 = vadd.f32 0.0, %v3486
      %v3488 = vpop.f32.mrb[0].mxu0
      %3489 = vmatprep.mubr.f32.mxu0 0.0
      %3490 = vmatmul.mubr.f32.gmra.mrb[0].mxu0 %v3319
      %v3491 = vpop.f32.mrb[0].mxu0
      %v3492 = vadd.f32 0.0, %v3491
      %v3493 = vpop.f32.mrb[0].mxu0
      %3494 = vmatprep.mubr.f32.mxu0 0.0
      %3495 = vmatmul.mubr.f32.gmra.mrb[0].mxu0 %v3322
      %v3496 = vpop.f32.mrb[0].mxu0
      %v3497 = vadd.f32 0.0, %v3496
      %v3498 = vpop.f32.mrb[0].mxu0
      %3499 = vmatprep.mubr.f32.mxu0 0.0
      %3500 = vmatmul.mubr.f32.gmra.mrb[0].mxu0 %v3325
      %v3501 = vpop.f32.mrb[0].mxu0
      %v3502 = vadd.f32 0.0, %v3501
      %v3503 = vpop.f32.mrb[0].mxu0
      %3504 = vmatprep.mubr.f32.mxu0 0.0
      %3505 = vmatmul.mubr.f32.gmra.mrb[0].mxu0 %v3328
      %v3506 = vpop.f32.mrb[0].mxu0
      %v3507 = vadd.f32 0.0, %v3506
      %v3508 = vpop.f32.mrb[0].mxu0
      %3509 = vmatprep.mubr.f32.mxu0 0.0
      %3510 = vmatmul.mubr.f32.gmra.mrb[0].mxu0 %v3331
      %v3511 = vpop.f32.mrb[0].mxu0
      %v3512 = vadd.f32 0.0, %v3511
      %v3513 = vpop.f32.mrb[0].mxu0
      %3514 = vmatprep.mubr.f32.mxu0 0.0
      %3515 = vmatmul.mubr.f32.gmra.mrb[0].mxu0 %v3334
      %v3516 = vpop.f32.mrb[0].mxu0
      %v3517 = vadd.f32 0.0, %v3516
      %v3518 = vpop.f32.mrb[0].mxu0
      %3519 = vmatprep.mubr.f32.mxu0 0.0
      %3520 = vmatmul.mubr.f32.gmra.mrb[0].mxu0 %v3337
      %v3521 = vpop.f32.mrb[0].mxu0
      %v3522 = vadd.f32 0.0, %v3521
      %v3523 = vpop.f32.mrb[0].mxu0
      %3524 = vmatprep.mubr.f32.mxu0 0.0
      %3525 = vmatmul.mubr.f32.gmra.mrb[0].mxu0 %v3340
      %v3526 = vpop.f32.mrb[0].mxu0
      %v3527 = vadd.f32 0.0, %v3526
      %v3528 = vpop.f32.mrb[0].mxu0
      %3529 = vmatprep.mubr.f32.mxu0 0.0
      %3530 = vmatmul.mubr.f32.gmra.mrb[0].mxu0 %v3343
      %v3531 = vpop.f32.mrb[0].mxu0
      %v3532 = vadd.f32 0.0, %v3531
      %v3533 = vpop.f32.mrb[0].mxu0
      %3534 = vmatprep.mubr.f32.mxu0 0.0
      %3535 = vmatmul.mubr.f32.gmra.mrb[0].mxu0 %v3346
      %v3536 = vpop.f32.mrb[0].mxu0
      %v3537 = vadd.f32 0.0, %v3536
      %v3538 = vpop.f32.mrb[0].mxu0
      %3539 = vmatprep.mubr.f32.mxu0 0.0
      %3540 = vmatmul.mubr.f32.gmra.mrb[0].mxu0 %v3349
      %v3541 = vpop.f32.mrb[0].mxu0
      %v3542 = vadd.f32 0.0, %v3541
      %v3543 = vpop.f32.mrb[0].mxu0
      %3544 = vmatprep.mubr.f32.mxu0 0.0
      %3545 = vmatmul.mubr.f32.gmra.mrb[0].mxu0 %v3352
      %v3546 = vpop.f32.mrb[0].mxu0
      %v3547 = vadd.f32 0.0, %v3546
      %v3548 = vpop.f32.mrb[0].mxu0
      %3549 = vmatprep.mubr.f32.mxu0 0.0
      %3550 = vmatmul.mubr.f32.gmra.mrb[0].mxu0 %v3355
      %v3551 = vpop.f32.mrb[0].mxu0
      %v3552 = vadd.f32 0.0, %v3551
      %v3553 = vpop.f32.mrb[0].mxu0
      %3554 = vmatprep.mubr.f32.mxu0 0.0
      %3555 = vmatmul.mubr.f32.gmra.mrb[0].mxu0 %v3358
      %v3556 = vpop.f32.mrb[0].mxu0
      %v3557 = vadd.f32 0.0, %v3556
      %v3558 = vpop.f32.mrb[0].mxu0
      %3559 = vmatprep.mubr.f32.mxu0 0.0
      %3560 = vmatmul.mubr.f32.gmra.mrb[0].mxu0 %v3361
      %v3561 = vpop.f32.mrb[0].mxu0
      %v3562 = vadd.f32 0.0, %v3561
      %v3563 = vpop.f32.mrb[0].mxu0
      %3564 = vmatprep.mubr.f32.mxu0 0.0
      %3565 = vmatmul.mubr.f32.gmra.mrb[0].mxu0 %v3364
      %v3566 = vpop.f32.mrb[0].mxu0
      %v3567 = vadd.f32 0.0, %v3566
      %v3568 = vpop.f32.mrb[0].mxu0
      %3569 = vmatprep.mubr.f32.mxu0 0.0
      %3570 = vmatmul.mubr.f32.gmra.mrb[0].mxu0 %v3367
      %v3571 = vpop.f32.mrb[0].mxu0
      %v3572 = vadd.f32 0.0, %v3571
      %v3573 = vpop.f32.mrb[0].mxu0
      %3574 = vmatprep.mubr.f32.mxu0 0.0
      %3575 = vmatmul.mubr.f32.gmra.mrb[0].mxu0 %v3370
      %v3576 = vpop.f32.mrb[0].mxu0
      %v3577 = vadd.f32 0.0, %v3576
      %v3578 = vpop.f32.mrb[0].mxu0
      %3579 = vmatprep.mubr.f32.mxu0 0.0
      %3580 = vmatmul.mubr.f32.gmra.mrb[0].mxu0 %v3373
      %v3581 = vpop.f32.mrb[0].mxu0
      %v3582 = vadd.f32 0.0, %v3581
      %v3583 = vpop.f32.mrb[0].mxu0
      %3584 = vmatprep.mubr.f32.mxu0 0.0
      %3585 = vmatmul.mubr.f32.gmra.mrb[0].mxu0 %v3376
      %v3586 = vpop.f32.mrb[0].mxu0
      %v3587 = vadd.f32 0.0, %v3586
      %v3588 = vpop.f32.mrb[0].mxu0
      %3589 = vmatprep.mubr.f32.mxu0 0.0
      %3590 = vmatmul.mubr.f32.gmra.mrb[0].mxu0 %v3379
      %v3591 = vpop.f32.mrb[0].mxu0
      %v3592 = vadd.f32 0.0, %v3591
      %v3593 = vpop.f32.mrb[0].mxu0
      %3594 = vmatprep.mubr.f32.mxu0 0.0
      %3595 = vmatmul.mubr.f32.gmra.mrb[0].mxu0 %v3382
      %v3596 = vpop.f32.mrb[0].mxu0
      %v3597 = vadd.f32 0.0, %v3596
      %v3598 = vpop.f32.mrb[0].mxu0
      %3599 = vmatprep.mubr.f32.mxu0 0.0
      %3600 = vmatmul.mubr.f32.gmra.mrb[0].mxu0 %v3385
      %v3601 = vpop.f32.mrb[0].mxu0
      %v3602 = vadd.f32 0.0, %v3601
      %v3603 = vpop.f32.mrb[0].mxu0
      %3604 = vmatprep.mubr.f32.mxu0 0.0
      %3605 = vmatmul.mubr.f32.gmra.mrb[0].mxu0 %v3388
      %v3606 = vpop.f32.mrb[0].mxu0
      %v3607 = vadd.f32 0.0, %v3606
      %v3608 = vpop.f32.mrb[0].mxu0
      %3609 = vmatprep.mubr.f32.mxu0 0.0
      %3610 = vmatmul.mubr.f32.gmra.mrb[0].mxu0 %v3391
      %v3611 = vpop.f32.mrb[0].mxu0
      %v3612 = vadd.f32 0.0, %v3611
      %v3613 = vpop.f32.mrb[0].mxu0
      %3614 = vmatprep.mubr.f32.mxu0 0.0
      %3615 = vmatmul.mubr.f32.gmra.mrb[0].mxu0 %v3394
      %v3616 = vpop.f32.mrb[0].mxu0
      %v3617 = vadd.f32 0.0, %v3616
      %v3618 = vpop.f32.mrb[0].mxu0
      %3619 = vmatprep.mubr.f32.mxu0 0.0
      %3620 = vmatmul.mubr.f32.gmra.mrb[0].mxu0 %v3397
      %v3621 = vpop.f32.mrb[0].mxu0
      %v3622 = vadd.f32 0.0, %v3621
      %v3623 = vpop.f32.mrb[0].mxu0
      %3624 = vmatprep.mubr.f32.mxu0 0.0
      %3625 = vmatmul.mubr.f32.gmra.mrb[0].mxu0 %v3400
      %v3626 = vpop.f32.mrb[0].mxu0
      %v3627 = vadd.f32 0.0, %v3626
      %v3628 = vpop.f32.mrb[0].mxu0
      %3629 = vdwg.mxu0
      %v3630 = vadd.f32 %v3240, %v3472
      %v3631 = vadd.f32 %v3241, %v3477
      %v3632 = vadd.f32 %v3242, %v3482
      %v3633 = vadd.f32 %v3243, %v3487
      %v3634 = vadd.f32 %v3244, %v3492
      %v3635 = vadd.f32 %v3245, %v3497
      %v3636 = vadd.f32 %v3246, %v3502
      %v3637 = vadd.f32 %v3247, %v3507
      %v3638 = vadd.f32 %v3248, %v3512
      %v3639 = vadd.f32 %v3249, %v3517
      %v3640 = vadd.f32 %v3250, %v3522
      %v3641 = vadd.f32 %v3251, %v3527
      %v3642 = vadd.f32 %v3252, %v3532
      %v3643 = vadd.f32 %v3253, %v3537
      %v3644 = vadd.f32 %v3254, %v3542
      %v3645 = vadd.f32 %v3255, %v3547
      %v3646 = vadd.f32 %v3256, %v3552
      %v3647 = vadd.f32 %v3257, %v3557
      %v3648 = vadd.f32 %v3258, %v3562
      %v3649 = vadd.f32 %v3259, %v3567
      %v3650 = vadd.f32 %v3260, %v3572
      %v3651 = vadd.f32 %v3261, %v3577
      %v3652 = vadd.f32 %v3262, %v3582
      %v3653 = vadd.f32 %v3263, %v3587
      %v3654 = vadd.f32 %v3264, %v3592
      %v3655 = vadd.f32 %v3265, %v3597
      %v3656 = vadd.f32 %v3266, %v3602
      %v3657 = vadd.f32 %v3267, %v3607
      %v3658 = vadd.f32 %v3268, %v3612
      %v3659 = vadd.f32 %v3269, %v3617
      %v3660 = vadd.f32 %v3270, %v3622
      %v3661 = vadd.f32 %v3271, %v3627
      %v3662 = vld [vmem:[%s2] sm:$0x1]
      %v3664 = vlaneseq
      %v3665 = vshrl.u32 %v3664, 7
      %v3666 = vsub.s32 0, %v3665
      %v3667 = vrot.slane %v3662, %v3666
      %v3669 = vadd.f32 %v3630, %v3667
      %v3670 = vadd.f32 %v3631, %v3667
      %v3671 = vadd.f32 %v3632, %v3667
      %v3672 = vadd.f32 %v3633, %v3667
      %v3673 = vadd.f32 %v3634, %v3667
      %v3674 = vadd.f32 %v3635, %v3667
      %v3675 = vadd.f32 %v3636, %v3667
      %v3676 = vadd.f32 %v3637, %v3667
      %v3677 = vadd.f32 %v3638, %v3667
      %v3678 = vadd.f32 %v3639, %v3667
      %v3679 = vadd.f32 %v3640, %v3667
      %v3680 = vadd.f32 %v3641, %v3667
      %v3681 = vadd.f32 %v3642, %v3667
      %v3682 = vadd.f32 %v3643, %v3667
      %v3683 = vadd.f32 %v3644, %v3667
      %v3684 = vadd.f32 %v3645, %v3667
      %v3685 = vadd.f32 %v3646, %v3667
      %v3686 = vadd.f32 %v3647, %v3667
      %v3687 = vadd.f32 %v3648, %v3667
      %v3688 = vadd.f32 %v3649, %v3667
      %v3689 = vadd.f32 %v3650, %v3667
      %v3690 = vadd.f32 %v3651, %v3667
      %v3691 = vadd.f32 %v3652, %v3667
      %v3692 = vadd.f32 %v3653, %v3667
      %v3693 = vadd.f32 %v3654, %v3667
      %v3694 = vadd.f32 %v3655, %v3667
      %v3695 = vadd.f32 %v3656, %v3667
      %v3696 = vadd.f32 %v3657, %v3667
      %v3697 = vadd.f32 %v3658, %v3667
      %v3698 = vadd.f32 %v3659, %v3667
      %v3699 = vadd.f32 %v3660, %v3667
      %v3700 = vadd.f32 %v3661, %v3667
      %vm3701 = vcmask 15360
      %3702 = vst.msk [vmem:[%s211] sm:$0xff] %vm3701, %v3669
      %3703 = vst.msk [vmem:[%s211 + $0x8] sm:$0xff] %vm3701, %v3670
      %3704 = vst.msk [vmem:[%s211 + $0x10] sm:$0xff] %vm3701, %v3671
      %3705 = vst.msk [vmem:[%s211 + $0x18] sm:$0xff] %vm3701, %v3672
      %3706 = vst.msk [vmem:[%s211 + $0x20] sm:$0xff] %vm3701, %v3673
      %3707 = vst.msk [vmem:[%s211 + $0x28] sm:$0xff] %vm3701, %v3674
      %3708 = vst.msk [vmem:[%s211 + $0x30] sm:$0xff] %vm3701, %v3675
      %3709 = vst.msk [vmem:[%s211 + $0x38] sm:$0xff] %vm3701, %v3676
      %3710 = vst.msk [vmem:[%s211 + $0x40] sm:$0xff] %vm3701, %v3677
      %3711 = vst.msk [vmem:[%s211 + $0x48] sm:$0xff] %vm3701, %v3678
      %3712 = vst.msk [vmem:[%s211 + $0x50] sm:$0xff] %vm3701, %v3679
      %3713 = vst.msk [vmem:[%s211 + $0x58] sm:$0xff] %vm3701, %v3680
      %3714 = vst.msk [vmem:[%s211 + $0x60] sm:$0xff] %vm3701, %v3681
      %3715 = vst.msk [vmem:[%s211 + $0x68] sm:$0xff] %vm3701, %v3682
      %3716 = vst.msk [vmem:[%s211 + $0x70] sm:$0xff] %vm3701, %v3683
      %3717 = vst.msk [vmem:[%s211 + $0x78] sm:$0xff] %vm3701, %v3684
      %3718 = vst.msk [vmem:[%s211 + $0x80] sm:$0xff] %vm3701, %v3685
      %3719 = vst.msk [vmem:[%s211 + $0x88] sm:$0xff] %vm3701, %v3686
      %3720 = vst.msk [vmem:[%s211 + $0x90] sm:$0xff] %vm3701, %v3687
      %3721 = vst.msk [vmem:[%s211 + $0x98] sm:$0xff] %vm3701, %v3688
      %3722 = vst.msk [vmem:[%s211 + $0xa0] sm:$0xff] %vm3701, %v3689
      %3723 = vst.msk [vmem:[%s211 + $0xa8] sm:$0xff] %vm3701, %v3690
      %3724 = vst.msk [vmem:[%s211 + $0xb0] sm:$0xff] %vm3701, %v3691
      %3725 = vst.msk [vmem:[%s211 + $0xb8] sm:$0xff] %vm3701, %v3692
      %3726 = vst.msk [vmem:[%s211 + $0xc0] sm:$0xff] %vm3701, %v3693
      %3727 = vst.msk [vmem:[%s211 + $0xc8] sm:$0xff] %vm3701, %v3694
      %3728 = vst.msk [vmem:[%s211 + $0xd0] sm:$0xff] %vm3701, %v3695
      %3729 = vst.msk [vmem:[%s211 + $0xd8] sm:$0xff] %vm3701, %v3696
      %3730 = vst.msk [vmem:[%s211 + $0xe0] sm:$0xff] %vm3701, %v3697
      %3731 = vst.msk [vmem:[%s211 + $0xe8] sm:$0xff] %vm3701, %v3698
      %3732 = vst.msk [vmem:[%s211 + $0xf0] sm:$0xff] %vm3701, %v3699
      %3733 = vst.msk [vmem:[%s211 + $0xf8] sm:$0xff] %vm3701, %v3700
      %s3734 = scalar_lea.vmem %s203, 120
      %v3735 = vld [vmem:[%s3734 + $0x3] sm:$0xff]
      %v3736 = vld [vmem:[%s3734 + $0xb] sm:$0xff]
      %v3737 = vld [vmem:[%s3734 + $0x2b] sm:$0xff]
      %v3738 = vld [vmem:[%s3734 + $0x33] sm:$0xff]
      %v3739 = vld [vmem:[%s3734 + $0x53] sm:$0xff]
      %v3740 = vld [vmem:[%s3734 + $0x5b] sm:$0xff]
      %v3741 = vld [vmem:[%s3734 + $0x7b] sm:$0xff]
      %v3742 = vld [vmem:[%s3734 + $0x83] sm:$0xff]
      %v3743 = vld [vmem:[%s3734 + $0xa3] sm:$0xff]
      %v3744 = vld [vmem:[%s3734 + $0xab] sm:$0xff]
      %v3745 = vld [vmem:[%s3734 + $0xcb] sm:$0xff]
      %v3746 = vld [vmem:[%s3734 + $0xd3] sm:$0xff]
      %v3747 = vld [vmem:[%s3734 + $0xf3] sm:$0xff]
      %v3748 = vld [vmem:[%s3734 + $0xfb] sm:$0xff]
      %v3749 = vld [vmem:[%s3734 + $0x11b] sm:$0xff]
      %v3750 = vld [vmem:[%s3734 + $0x123] sm:$0xff]
      %v3751 = vld [vmem:[%s3734 + $0x143] sm:$0xff]
      %v3752 = vld [vmem:[%s3734 + $0x14b] sm:$0xff]
      %v3753 = vld [vmem:[%s3734 + $0x16b] sm:$0xff]
      %v3754 = vld [vmem:[%s3734 + $0x173] sm:$0xff]
      %v3755 = vld [vmem:[%s3734 + $0x193] sm:$0xff]
      %v3756 = vld [vmem:[%s3734 + $0x19b] sm:$0xff]
      %v3757 = vld [vmem:[%s3734 + $0x1bb] sm:$0xff]
      %v3758 = vld [vmem:[%s3734 + $0x1c3] sm:$0xff]
      %v3759 = vld [vmem:[%s3734 + $0x1e3] sm:$0xff]
      %v3760 = vld [vmem:[%s3734 + $0x1eb] sm:$0xff]
      %v3761 = vld [vmem:[%s3734 + $0x20b] sm:$0xff]
      %v3762 = vld [vmem:[%s3734 + $0x213] sm:$0xff]
      %v3763 = vld [vmem:[%s3734 + $0x233] sm:$0xff]
      %v3764 = vld [vmem:[%s3734 + $0x23b] sm:$0xff]
      %v3765 = vld [vmem:[%s3734 + $0x25b] sm:$0xff]
      %v3766 = vld [vmem:[%s3734 + $0x263] sm:$0xff]
      %s3767 = scalar_lea.vmem %s1, 36
      %v3768 = vld [vmem:[%s3767] sm:$0xf]
      %v3769 = vld [vmem:[%s3734 + $0x9] sm:$0xff]
      %v3770 = vld [vmem:[%s3734 + $0x11] sm:$0xff]
      %v3771 = vld [vmem:[%s3734 + $0x31] sm:$0xff]
      %v3772 = vld [vmem:[%s3734 + $0x39] sm:$0xff]
      %v3773 = vld [vmem:[%s3734 + $0x59] sm:$0xff]
      %v3774 = vld [vmem:[%s3734 + $0x61] sm:$0xff]
      %v3775 = vld [vmem:[%s3734 + $0x81] sm:$0xff]
      %v3776 = vld [vmem:[%s3734 + $0x89] sm:$0xff]
      %v3777 = vld [vmem:[%s3734 + $0xa9] sm:$0xff]
      %v3778 = vld [vmem:[%s3734 + $0xb1] sm:$0xff]
      %v3779 = vld [vmem:[%s3734 + $0xd1] sm:$0xff]
      %v3780 = vld [vmem:[%s3734 + $0xd9] sm:$0xff]
      %v3781 = vld [vmem:[%s3734 + $0xf9] sm:$0xff]
      %v3782 = vld [vmem:[%s3734 + $0x101] sm:$0xff]
      %v3783 = vld [vmem:[%s3734 + $0x121] sm:$0xff]
      %v3784 = vld [vmem:[%s3734 + $0x129] sm:$0xff]
      %v3785 = vld [vmem:[%s3734 + $0x149] sm:$0xff]
      %v3786 = vld [vmem:[%s3734 + $0x151] sm:$0xff]
      %v3787 = vld [vmem:[%s3734 + $0x171] sm:$0xff]
      %v3788 = vld [vmem:[%s3734 + $0x179] sm:$0xff]
      %v3789 = vld [vmem:[%s3734 + $0x199] sm:$0xff]
      %v3790 = vld [vmem:[%s3734 + $0x1a1] sm:$0xff]
      %v3791 = vld [vmem:[%s3734 + $0x1c1] sm:$0xff]
      %v3792 = vld [vmem:[%s3734 + $0x1c9] sm:$0xff]
      %v3793 = vld [vmem:[%s3734 + $0x1e9] sm:$0xff]
      %v3794 = vld [vmem:[%s3734 + $0x1f1] sm:$0xff]
      %v3795 = vld [vmem:[%s3734 + $0x211] sm:$0xff]
      %v3796 = vld [vmem:[%s3734 + $0x219] sm:$0xff]
      %v3797 = vld [vmem:[%s3734 + $0x239] sm:$0xff]
      %v3798 = vld [vmem:[%s3734 + $0x241] sm:$0xff]
      %v3799 = vld [vmem:[%s3734 + $0x261] sm:$0xff]
      %v3800 = vld [vmem:[%s3734 + $0x269] sm:$0xff]
      %s3801 = scalar_lea.vmem %s1, 40
      %v3802 = vld [vmem:[%s3801] sm:$0xf]
      %v3804 = vsel %vm280, %v3769, 0
      %v3807 = vsel %vm280, %v3770, 0
      %v3810 = vsel %vm280, %v3771, 0
      %v3813 = vsel %vm280, %v3772, 0
      %v3816 = vsel %vm280, %v3773, 0
      %v3819 = vsel %vm280, %v3774, 0
      %v3822 = vsel %vm280, %v3775, 0
      %v3825 = vsel %vm280, %v3776, 0
      %v3828 = vsel %vm280, %v3777, 0
      %v3831 = vsel %vm280, %v3778, 0
      %v3834 = vsel %vm280, %v3779, 0
      %v3837 = vsel %vm280, %v3780, 0
      %v3840 = vsel %vm280, %v3781, 0
      %v3843 = vsel %vm280, %v3782, 0
      %v3846 = vsel %vm280, %v3783, 0
      %v3849 = vsel %vm280, %v3784, 0
      %v3852 = vsel %vm280, %v3785, 0
      %v3855 = vsel %vm280, %v3786, 0
      %v3858 = vsel %vm280, %v3787, 0
      %v3861 = vsel %vm280, %v3788, 0
      %v3864 = vsel %vm280, %v3789, 0
      %v3867 = vsel %vm280, %v3790, 0
      %v3870 = vsel %vm280, %v3791, 0
      %v3873 = vsel %vm280, %v3792, 0
      %v3876 = vsel %vm280, %v3793, 0
      %v3879 = vsel %vm280, %v3794, 0
      %v3882 = vsel %vm280, %v3795, 0
      %v3885 = vsel %vm280, %v3796, 0
      %v3888 = vsel %vm280, %v3797, 0
      %v3891 = vsel %vm280, %v3798, 0
      %v3894 = vsel %vm280, %v3799, 0
      %v3897 = vsel %vm280, %v3800, 0
      %v3900 = vsel %vm377, %v3802, 0
      %3902 = vmatprep.subr.mxu0 0.0
      %3903 = vmatpush1.msra.mxu0 %v3900
      %3904 = vmatprep.subr.mxu0 0.0
      %3905 = vmatpush1.msra.mxu0 0.0
      %3906 = vmatprep.subr.mxu0 0.0
      %3907 = vmatpush1.msra.mxu0 0.0
      %3908 = vmatprep.subr.mxu0 0.0
      %3909 = vmatpush1.msra.mxu0 0.0
      %3910 = vmatprep.subr.mxu0 0.0
      %3911 = vmatpush1.msra.mxu0 0.0
      %3912 = vmatprep.subr.mxu0 0.0
      %3913 = vmatpush1.msra.mxu0 0.0
      %3914 = vmatprep.subr.mxu0 0.0
      %3915 = vmatpush1.msra.mxu0 0.0
      %3916 = vmatprep.subr.mxu0 0.0
      %3917 = vmatpush1.msra.mxu0 0.0
      %3918 = vmatprep.subr.mxu0 0.0
      %3919 = vmatpush1.msra.mxu0 0.0
      %3920 = vmatprep.subr.mxu0 0.0
      %3921 = vmatpush1.msra.mxu0 0.0
      %3922 = vmatprep.subr.mxu0 0.0
      %3923 = vmatpush1.msra.mxu0 0.0
      %3924 = vmatprep.subr.mxu0 0.0
      %3925 = vmatpush1.msra.mxu0 0.0
      %3926 = vmatprep.subr.mxu0 0.0
      %3927 = vmatpush1.msra.mxu0 0.0
      %3928 = vmatprep.subr.mxu0 0.0
      %3929 = vmatpush1.msra.mxu0 0.0
      %3930 = vmatprep.subr.mxu0 0.0
      %3931 = vmatpush1.msra.mxu0 0.0
      %3932 = vmatprep.subr.mxu0 0.0
      %3933 = vmatpush1.msra.mxu0 0.0
      %3934 = vmatprep.subr.mxu0 0.0
      %3935 = vmatpush1.msra.mxu0 0.0
      %3936 = vmatprep.subr.mxu0 0.0
      %3937 = vmatpush1.msra.mxu0 0.0
      %3938 = vmatprep.subr.mxu0 0.0
      %3939 = vmatpush1.msra.mxu0 0.0
      %3940 = vmatprep.subr.mxu0 0.0
      %3941 = vmatpush1.msra.mxu0 0.0
      %3942 = vmatprep.subr.mxu0 0.0
      %3943 = vmatpush1.msra.mxu0 0.0
      %3944 = vmatprep.subr.mxu0 0.0
      %3945 = vmatpush1.msra.mxu0 0.0
      %3946 = vmatprep.subr.mxu0 0.0
      %3947 = vmatpush1.msra.mxu0 0.0
      %3948 = vmatprep.subr.mxu0 0.0
      %3949 = vmatpush1.msra.mxu0 0.0
      %3950 = vmatprep.subr.mxu0 0.0
      %3951 = vmatpush1.msra.mxu0 0.0
      %3952 = vmatprep.subr.mxu0 0.0
      %3953 = vmatpush1.msra.mxu0 0.0
      %3954 = vmatprep.subr.mxu0 0.0
      %3955 = vmatpush1.msra.mxu0 0.0
      %3956 = vmatprep.subr.mxu0 0.0
      %3957 = vmatpush1.msra.mxu0 0.0
      %3958 = vmatprep.subr.mxu0 0.0
      %3959 = vmatpush1.msra.mxu0 0.0
      %3960 = vmatprep.subr.mxu0 0.0
      %3961 = vmatpush1.msra.mxu0 0.0
      %3962 = vmatprep.subr.mxu0 0.0
      %3963 = vmatpush1.msra.mxu0 0.0
      %3964 = vmatprep.subr.mxu0 0.0
      %3965 = vmatpush1.msra.mxu0 0.0
      %3966 = vmatprep.mubr.f32.mxu0 0.0
      %3967 = vmatmul.mubr.f32.gmra.mrb[0].mxu0 %v3804
      %v3968 = vpop.f32.mrb[0].mxu0
      %v3969 = vadd.f32 0.0, %v3968
      %v3970 = vpop.f32.mrb[0].mxu0
      %3971 = vmatprep.mubr.f32.mxu0 0.0
      %3972 = vmatmul.mubr.f32.gmra.mrb[0].mxu0 %v3807
      %v3973 = vpop.f32.mrb[0].mxu0
      %v3974 = vadd.f32 0.0, %v3973
      %v3975 = vpop.f32.mrb[0].mxu0
      %3976 = vmatprep.mubr.f32.mxu0 0.0
      %3977 = vmatmul.mubr.f32.gmra.mrb[0].mxu0 %v3810
      %v3978 = vpop.f32.mrb[0].mxu0
      %v3979 = vadd.f32 0.0, %v3978
      %v3980 = vpop.f32.mrb[0].mxu0
      %3981 = vmatprep.mubr.f32.mxu0 0.0
      %3982 = vmatmul.mubr.f32.gmra.mrb[0].mxu0 %v3813
      %v3983 = vpop.f32.mrb[0].mxu0
      %v3984 = vadd.f32 0.0, %v3983
      %v3985 = vpop.f32.mrb[0].mxu0
      %3986 = vmatprep.mubr.f32.mxu0 0.0
      %3987 = vmatmul.mubr.f32.gmra.mrb[0].mxu0 %v3816
      %v3988 = vpop.f32.mrb[0].mxu0
      %v3989 = vadd.f32 0.0, %v3988
      %v3990 = vpop.f32.mrb[0].mxu0
      %3991 = vmatprep.mubr.f32.mxu0 0.0
      %3992 = vmatmul.mubr.f32.gmra.mrb[0].mxu0 %v3819
      %v3993 = vpop.f32.mrb[0].mxu0
      %v3994 = vadd.f32 0.0, %v3993
      %v3995 = vpop.f32.mrb[0].mxu0
      %3996 = vmatprep.mubr.f32.mxu0 0.0
      %3997 = vmatmul.mubr.f32.gmra.mrb[0].mxu0 %v3822
      %v3998 = vpop.f32.mrb[0].mxu0
      %v3999 = vadd.f32 0.0, %v3998
      %v4000 = vpop.f32.mrb[0].mxu0
      %4001 = vmatprep.mubr.f32.mxu0 0.0
      %4002 = vmatmul.mubr.f32.gmra.mrb[0].mxu0 %v3825
      %v4003 = vpop.f32.mrb[0].mxu0
      %v4004 = vadd.f32 0.0, %v4003
      %v4005 = vpop.f32.mrb[0].mxu0
      %4006 = vmatprep.mubr.f32.mxu0 0.0
      %4007 = vmatmul.mubr.f32.gmra.mrb[0].mxu0 %v3828
      %v4008 = vpop.f32.mrb[0].mxu0
      %v4009 = vadd.f32 0.0, %v4008
      %v4010 = vpop.f32.mrb[0].mxu0
      %4011 = vmatprep.mubr.f32.mxu0 0.0
      %4012 = vmatmul.mubr.f32.gmra.mrb[0].mxu0 %v3831
      %v4013 = vpop.f32.mrb[0].mxu0
      %v4014 = vadd.f32 0.0, %v4013
      %v4015 = vpop.f32.mrb[0].mxu0
      %4016 = vmatprep.mubr.f32.mxu0 0.0
      %4017 = vmatmul.mubr.f32.gmra.mrb[0].mxu0 %v3834
      %v4018 = vpop.f32.mrb[0].mxu0
      %v4019 = vadd.f32 0.0, %v4018
      %v4020 = vpop.f32.mrb[0].mxu0
      %4021 = vmatprep.mubr.f32.mxu0 0.0
      %4022 = vmatmul.mubr.f32.gmra.mrb[0].mxu0 %v3837
      %v4023 = vpop.f32.mrb[0].mxu0
      %v4024 = vadd.f32 0.0, %v4023
      %v4025 = vpop.f32.mrb[0].mxu0
      %4026 = vmatprep.mubr.f32.mxu0 0.0
      %4027 = vmatmul.mubr.f32.gmra.mrb[0].mxu0 %v3840
      %v4028 = vpop.f32.mrb[0].mxu0
      %v4029 = vadd.f32 0.0, %v4028
      %v4030 = vpop.f32.mrb[0].mxu0
      %4031 = vmatprep.mubr.f32.mxu0 0.0
      %4032 = vmatmul.mubr.f32.gmra.mrb[0].mxu0 %v3843
      %v4033 = vpop.f32.mrb[0].mxu0
      %v4034 = vadd.f32 0.0, %v4033
      %v4035 = vpop.f32.mrb[0].mxu0
      %4036 = vmatprep.mubr.f32.mxu0 0.0
      %4037 = vmatmul.mubr.f32.gmra.mrb[0].mxu0 %v3846
      %v4038 = vpop.f32.mrb[0].mxu0
      %v4039 = vadd.f32 0.0, %v4038
      %v4040 = vpop.f32.mrb[0].mxu0
      %4041 = vmatprep.mubr.f32.mxu0 0.0
      %4042 = vmatmul.mubr.f32.gmra.mrb[0].mxu0 %v3849
      %v4043 = vpop.f32.mrb[0].mxu0
      %v4044 = vadd.f32 0.0, %v4043
      %v4045 = vpop.f32.mrb[0].mxu0
      %4046 = vmatprep.mubr.f32.mxu0 0.0
      %4047 = vmatmul.mubr.f32.gmra.mrb[0].mxu0 %v3852
      %v4048 = vpop.f32.mrb[0].mxu0
      %v4049 = vadd.f32 0.0, %v4048
      %v4050 = vpop.f32.mrb[0].mxu0
      %4051 = vmatprep.mubr.f32.mxu0 0.0
      %4052 = vmatmul.mubr.f32.gmra.mrb[0].mxu0 %v3855
      %v4053 = vpop.f32.mrb[0].mxu0
      %v4054 = vadd.f32 0.0, %v4053
      %v4055 = vpop.f32.mrb[0].mxu0
      %4056 = vmatprep.mubr.f32.mxu0 0.0
      %4057 = vmatmul.mubr.f32.gmra.mrb[0].mxu0 %v3858
      %v4058 = vpop.f32.mrb[0].mxu0
      %v4059 = vadd.f32 0.0, %v4058
      %v4060 = vpop.f32.mrb[0].mxu0
      %4061 = vmatprep.mubr.f32.mxu0 0.0
      %4062 = vmatmul.mubr.f32.gmra.mrb[0].mxu0 %v3861
      %v4063 = vpop.f32.mrb[0].mxu0
      %v4064 = vadd.f32 0.0, %v4063
      %v4065 = vpop.f32.mrb[0].mxu0
      %4066 = vmatprep.mubr.f32.mxu0 0.0
      %4067 = vmatmul.mubr.f32.gmra.mrb[0].mxu0 %v3864
      %v4068 = vpop.f32.mrb[0].mxu0
      %v4069 = vadd.f32 0.0, %v4068
      %v4070 = vpop.f32.mrb[0].mxu0
      %4071 = vmatprep.mubr.f32.mxu0 0.0
      %4072 = vmatmul.mubr.f32.gmra.mrb[0].mxu0 %v3867
      %v4073 = vpop.f32.mrb[0].mxu0
      %v4074 = vadd.f32 0.0, %v4073
      %v4075 = vpop.f32.mrb[0].mxu0
      %4076 = vmatprep.mubr.f32.mxu0 0.0
      %4077 = vmatmul.mubr.f32.gmra.mrb[0].mxu0 %v3870
      %v4078 = vpop.f32.mrb[0].mxu0
      %v4079 = vadd.f32 0.0, %v4078
      %v4080 = vpop.f32.mrb[0].mxu0
      %4081 = vmatprep.mubr.f32.mxu0 0.0
      %4082 = vmatmul.mubr.f32.gmra.mrb[0].mxu0 %v3873
      %v4083 = vpop.f32.mrb[0].mxu0
      %v4084 = vadd.f32 0.0, %v4083
      %v4085 = vpop.f32.mrb[0].mxu0
      %4086 = vmatprep.mubr.f32.mxu0 0.0
      %4087 = vmatmul.mubr.f32.gmra.mrb[0].mxu0 %v3876
      %v4088 = vpop.f32.mrb[0].mxu0
      %v4089 = vadd.f32 0.0, %v4088
      %v4090 = vpop.f32.mrb[0].mxu0
      %4091 = vmatprep.mubr.f32.mxu0 0.0
      %4092 = vmatmul.mubr.f32.gmra.mrb[0].mxu0 %v3879
      %v4093 = vpop.f32.mrb[0].mxu0
      %v4094 = vadd.f32 0.0, %v4093
      %v4095 = vpop.f32.mrb[0].mxu0
      %4096 = vmatprep.mubr.f32.mxu0 0.0
      %4097 = vmatmul.mubr.f32.gmra.mrb[0].mxu0 %v3882
      %v4098 = vpop.f32.mrb[0].mxu0
      %v4099 = vadd.f32 0.0, %v4098
      %v4100 = vpop.f32.mrb[0].mxu0
      %4101 = vmatprep.mubr.f32.mxu0 0.0
      %4102 = vmatmul.mubr.f32.gmra.mrb[0].mxu0 %v3885
      %v4103 = vpop.f32.mrb[0].mxu0
      %v4104 = vadd.f32 0.0, %v4103
      %v4105 = vpop.f32.mrb[0].mxu0
      %4106 = vmatprep.mubr.f32.mxu0 0.0
      %4107 = vmatmul.mubr.f32.gmra.mrb[0].mxu0 %v3888
      %v4108 = vpop.f32.mrb[0].mxu0
      %v4109 = vadd.f32 0.0, %v4108
      %v4110 = vpop.f32.mrb[0].mxu0
      %4111 = vmatprep.mubr.f32.mxu0 0.0
      %4112 = vmatmul.mubr.f32.gmra.mrb[0].mxu0 %v3891
      %v4113 = vpop.f32.mrb[0].mxu0
      %v4114 = vadd.f32 0.0, %v4113
      %v4115 = vpop.f32.mrb[0].mxu0
      %4116 = vmatprep.mubr.f32.mxu0 0.0
      %4117 = vmatmul.mubr.f32.gmra.mrb[0].mxu0 %v3894
      %v4118 = vpop.f32.mrb[0].mxu0
      %v4119 = vadd.f32 0.0, %v4118
      %v4120 = vpop.f32.mrb[0].mxu0
      %4121 = vmatprep.mubr.f32.mxu0 0.0
      %4122 = vmatmul.mubr.f32.gmra.mrb[0].mxu0 %v3897
      %v4123 = vpop.f32.mrb[0].mxu0
      %v4124 = vadd.f32 0.0, %v4123
      %v4125 = vpop.f32.mrb[0].mxu0
      %4126 = vdwg.mxu0
      %v4128 = vsel %vm280, %v3735, 0
      %v4131 = vsel %vm280, %v3736, 0
      %v4134 = vsel %vm280, %v3737, 0
      %v4137 = vsel %vm280, %v3738, 0
      %v4140 = vsel %vm280, %v3739, 0
      %v4143 = vsel %vm280, %v3740, 0
      %v4146 = vsel %vm280, %v3741, 0
      %v4149 = vsel %vm280, %v3742, 0
      %v4152 = vsel %vm280, %v3743, 0
      %v4155 = vsel %vm280, %v3744, 0
      %v4158 = vsel %vm280, %v3745, 0
      %v4161 = vsel %vm280, %v3746, 0
      %v4164 = vsel %vm280, %v3747, 0
      %v4167 = vsel %vm280, %v3748, 0
      %v4170 = vsel %vm280, %v3749, 0
      %v4173 = vsel %vm280, %v3750, 0
      %v4176 = vsel %vm280, %v3751, 0
      %v4179 = vsel %vm280, %v3752, 0
      %v4182 = vsel %vm280, %v3753, 0
      %v4185 = vsel %vm280, %v3754, 0
      %v4188 = vsel %vm280, %v3755, 0
      %v4191 = vsel %vm280, %v3756, 0
      %v4194 = vsel %vm280, %v3757, 0
      %v4197 = vsel %vm280, %v3758, 0
      %v4200 = vsel %vm280, %v3759, 0
      %v4203 = vsel %vm280, %v3760, 0
      %v4206 = vsel %vm280, %v3761, 0
      %v4209 = vsel %vm280, %v3762, 0
      %v4212 = vsel %vm280, %v3763, 0
      %v4215 = vsel %vm280, %v3764, 0
      %v4218 = vsel %vm280, %v3765, 0
      %v4221 = vsel %vm280, %v3766, 0
      %v4224 = vsel %vm377, %v3768, 0
      %4226 = vmatprep.subr.mxu0 0.0
      %4227 = vmatpush1.msra.mxu0 %v4224
      %4228 = vmatprep.subr.mxu0 0.0
      %4229 = vmatpush1.msra.mxu0 0.0
      %4230 = vmatprep.subr.mxu0 0.0
      %4231 = vmatpush1.msra.mxu0 0.0
      %4232 = vmatprep.subr.mxu0 0.0
      %4233 = vmatpush1.msra.mxu0 0.0
      %4234 = vmatprep.subr.mxu0 0.0
      %4235 = vmatpush1.msra.mxu0 0.0
      %4236 = vmatprep.subr.mxu0 0.0
      %4237 = vmatpush1.msra.mxu0 0.0
      %4238 = vmatprep.subr.mxu0 0.0
      %4239 = vmatpush1.msra.mxu0 0.0
      %4240 = vmatprep.subr.mxu0 0.0
      %4241 = vmatpush1.msra.mxu0 0.0
      %4242 = vmatprep.subr.mxu0 0.0
      %4243 = vmatpush1.msra.mxu0 0.0
      %4244 = vmatprep.subr.mxu0 0.0
      %4245 = vmatpush1.msra.mxu0 0.0
      %4246 = vmatprep.subr.mxu0 0.0
      %4247 = vmatpush1.msra.mxu0 0.0
      %4248 = vmatprep.subr.mxu0 0.0
      %4249 = vmatpush1.msra.mxu0 0.0
      %4250 = vmatprep.subr.mxu0 0.0
      %4251 = vmatpush1.msra.mxu0 0.0
      %4252 = vmatprep.subr.mxu0 0.0
      %4253 = vmatpush1.msra.mxu0 0.0
      %4254 = vmatprep.subr.mxu0 0.0
      %4255 = vmatpush1.msra.mxu0 0.0
      %4256 = vmatprep.subr.mxu0 0.0
      %4257 = vmatpush1.msra.mxu0 0.0
      %4258 = vmatprep.subr.mxu0 0.0
      %4259 = vmatpush1.msra.mxu0 0.0
      %4260 = vmatprep.subr.mxu0 0.0
      %4261 = vmatpush1.msra.mxu0 0.0
      %4262 = vmatprep.subr.mxu0 0.0
      %4263 = vmatpush1.msra.mxu0 0.0
      %4264 = vmatprep.subr.mxu0 0.0
      %4265 = vmatpush1.msra.mxu0 0.0
      %4266 = vmatprep.subr.mxu0 0.0
      %4267 = vmatpush1.msra.mxu0 0.0
      %4268 = vmatprep.subr.mxu0 0.0
      %4269 = vmatpush1.msra.mxu0 0.0
      %4270 = vmatprep.subr.mxu0 0.0
      %4271 = vmatpush1.msra.mxu0 0.0
      %4272 = vmatprep.subr.mxu0 0.0
      %4273 = vmatpush1.msra.mxu0 0.0
      %4274 = vmatprep.subr.mxu0 0.0
      %4275 = vmatpush1.msra.mxu0 0.0
      %4276 = vmatprep.subr.mxu0 0.0
      %4277 = vmatpush1.msra.mxu0 0.0
      %4278 = vmatprep.subr.mxu0 0.0
      %4279 = vmatpush1.msra.mxu0 0.0
      %4280 = vmatprep.subr.mxu0 0.0
      %4281 = vmatpush1.msra.mxu0 0.0
      %4282 = vmatprep.subr.mxu0 0.0
      %4283 = vmatpush1.msra.mxu0 0.0
      %4284 = vmatprep.subr.mxu0 0.0
      %4285 = vmatpush1.msra.mxu0 0.0
      %4286 = vmatprep.subr.mxu0 0.0
      %4287 = vmatpush1.msra.mxu0 0.0
      %4288 = vmatprep.subr.mxu0 0.0
      %4289 = vmatpush1.msra.mxu0 0.0
      %4290 = vmatprep.mubr.f32.mxu0 0.0
      %4291 = vmatmul.mubr.f32.gmra.mrb[0].mxu0 %v4128
      %v4292 = vpop.f32.mrb[0].mxu0
      %v4293 = vadd.f32 %v3969, %v4292
      %v4294 = vpop.f32.mrb[0].mxu0
      %4295 = vmatprep.mubr.f32.mxu0 0.0
      %4296 = vmatmul.mubr.f32.gmra.mrb[0].mxu0 %v4131
      %v4297 = vpop.f32.mrb[0].mxu0
      %v4298 = vadd.f32 %v3974, %v4297
      %v4299 = vpop.f32.mrb[0].mxu0
      %4300 = vmatprep.mubr.f32.mxu0 0.0
      %4301 = vmatmul.mubr.f32.gmra.mrb[0].mxu0 %v4134
      %v4302 = vpop.f32.mrb[0].mxu0
      %v4303 = vadd.f32 %v3979, %v4302
      %v4304 = vpop.f32.mrb[0].mxu0
      %4305 = vmatprep.mubr.f32.mxu0 0.0
      %4306 = vmatmul.mubr.f32.gmra.mrb[0].mxu0 %v4137
      %v4307 = vpop.f32.mrb[0].mxu0
      %v4308 = vadd.f32 %v3984, %v4307
      %v4309 = vpop.f32.mrb[0].mxu0
      %4310 = vmatprep.mubr.f32.mxu0 0.0
      %4311 = vmatmul.mubr.f32.gmra.mrb[0].mxu0 %v4140
      %v4312 = vpop.f32.mrb[0].mxu0
      %v4313 = vadd.f32 %v3989, %v4312
      %v4314 = vpop.f32.mrb[0].mxu0
      %4315 = vmatprep.mubr.f32.mxu0 0.0
      %4316 = vmatmul.mubr.f32.gmra.mrb[0].mxu0 %v4143
      %v4317 = vpop.f32.mrb[0].mxu0
      %v4318 = vadd.f32 %v3994, %v4317
      %v4319 = vpop.f32.mrb[0].mxu0
      %4320 = vmatprep.mubr.f32.mxu0 0.0
      %4321 = vmatmul.mubr.f32.gmra.mrb[0].mxu0 %v4146
      %v4322 = vpop.f32.mrb[0].mxu0
      %v4323 = vadd.f32 %v3999, %v4322
      %v4324 = vpop.f32.mrb[0].mxu0
      %4325 = vmatprep.mubr.f32.mxu0 0.0
      %4326 = vmatmul.mubr.f32.gmra.mrb[0].mxu0 %v4149
      %v4327 = vpop.f32.mrb[0].mxu0
      %v4328 = vadd.f32 %v4004, %v4327
      %v4329 = vpop.f32.mrb[0].mxu0
      %4330 = vmatprep.mubr.f32.mxu0 0.0
      %4331 = vmatmul.mubr.f32.gmra.mrb[0].mxu0 %v4152
      %v4332 = vpop.f32.mrb[0].mxu0
      %v4333 = vadd.f32 %v4009, %v4332
      %v4334 = vpop.f32.mrb[0].mxu0
      %4335 = vmatprep.mubr.f32.mxu0 0.0
      %4336 = vmatmul.mubr.f32.gmra.mrb[0].mxu0 %v4155
      %v4337 = vpop.f32.mrb[0].mxu0
      %v4338 = vadd.f32 %v4014, %v4337
      %v4339 = vpop.f32.mrb[0].mxu0
      %4340 = vmatprep.mubr.f32.mxu0 0.0
      %4341 = vmatmul.mubr.f32.gmra.mrb[0].mxu0 %v4158
      %v4342 = vpop.f32.mrb[0].mxu0
      %v4343 = vadd.f32 %v4019, %v4342
      %v4344 = vpop.f32.mrb[0].mxu0
      %4345 = vmatprep.mubr.f32.mxu0 0.0
      %4346 = vmatmul.mubr.f32.gmra.mrb[0].mxu0 %v4161
      %v4347 = vpop.f32.mrb[0].mxu0
      %v4348 = vadd.f32 %v4024, %v4347
      %v4349 = vpop.f32.mrb[0].mxu0
      %4350 = vmatprep.mubr.f32.mxu0 0.0
      %4351 = vmatmul.mubr.f32.gmra.mrb[0].mxu0 %v4164
      %v4352 = vpop.f32.mrb[0].mxu0
      %v4353 = vadd.f32 %v4029, %v4352
      %v4354 = vpop.f32.mrb[0].mxu0
      %4355 = vmatprep.mubr.f32.mxu0 0.0
      %4356 = vmatmul.mubr.f32.gmra.mrb[0].mxu0 %v4167
      %v4357 = vpop.f32.mrb[0].mxu0
      %v4358 = vadd.f32 %v4034, %v4357
      %v4359 = vpop.f32.mrb[0].mxu0
      %4360 = vmatprep.mubr.f32.mxu0 0.0
      %4361 = vmatmul.mubr.f32.gmra.mrb[0].mxu0 %v4170
      %v4362 = vpop.f32.mrb[0].mxu0
      %v4363 = vadd.f32 %v4039, %v4362
      %v4364 = vpop.f32.mrb[0].mxu0
      %4365 = vmatprep.mubr.f32.mxu0 0.0
      %4366 = vmatmul.mubr.f32.gmra.mrb[0].mxu0 %v4173
      %v4367 = vpop.f32.mrb[0].mxu0
      %v4368 = vadd.f32 %v4044, %v4367
      %v4369 = vpop.f32.mrb[0].mxu0
      %4370 = vmatprep.mubr.f32.mxu0 0.0
      %4371 = vmatmul.mubr.f32.gmra.mrb[0].mxu0 %v4176
      %v4372 = vpop.f32.mrb[0].mxu0
      %v4373 = vadd.f32 %v4049, %v4372
      %v4374 = vpop.f32.mrb[0].mxu0
      %4375 = vmatprep.mubr.f32.mxu0 0.0
      %4376 = vmatmul.mubr.f32.gmra.mrb[0].mxu0 %v4179
      %v4377 = vpop.f32.mrb[0].mxu0
      %v4378 = vadd.f32 %v4054, %v4377
      %v4379 = vpop.f32.mrb[0].mxu0
      %4380 = vmatprep.mubr.f32.mxu0 0.0
      %4381 = vmatmul.mubr.f32.gmra.mrb[0].mxu0 %v4182
      %v4382 = vpop.f32.mrb[0].mxu0
      %v4383 = vadd.f32 %v4059, %v4382
      %v4384 = vpop.f32.mrb[0].mxu0
      %4385 = vmatprep.mubr.f32.mxu0 0.0
      %4386 = vmatmul.mubr.f32.gmra.mrb[0].mxu0 %v4185
      %v4387 = vpop.f32.mrb[0].mxu0
      %v4388 = vadd.f32 %v4064, %v4387
      %v4389 = vpop.f32.mrb[0].mxu0
      %4390 = vmatprep.mubr.f32.mxu0 0.0
      %4391 = vmatmul.mubr.f32.gmra.mrb[0].mxu0 %v4188
      %v4392 = vpop.f32.mrb[0].mxu0
      %v4393 = vadd.f32 %v4069, %v4392
      %v4394 = vpop.f32.mrb[0].mxu0
      %4395 = vmatprep.mubr.f32.mxu0 0.0
      %4396 = vmatmul.mubr.f32.gmra.mrb[0].mxu0 %v4191
      %v4397 = vpop.f32.mrb[0].mxu0
      %v4398 = vadd.f32 %v4074, %v4397
      %v4399 = vpop.f32.mrb[0].mxu0
      %4400 = vmatprep.mubr.f32.mxu0 0.0
      %4401 = vmatmul.mubr.f32.gmra.mrb[0].mxu0 %v4194
      %v4402 = vpop.f32.mrb[0].mxu0
      %v4403 = vadd.f32 %v4079, %v4402
      %v4404 = vpop.f32.mrb[0].mxu0
      %4405 = vmatprep.mubr.f32.mxu0 0.0
      %4406 = vmatmul.mubr.f32.gmra.mrb[0].mxu0 %v4197
      %v4407 = vpop.f32.mrb[0].mxu0
      %v4408 = vadd.f32 %v4084, %v4407
      %v4409 = vpop.f32.mrb[0].mxu0
      %4410 = vmatprep.mubr.f32.mxu0 0.0
      %4411 = vmatmul.mubr.f32.gmra.mrb[0].mxu0 %v4200
      %v4412 = vpop.f32.mrb[0].mxu0
      %v4413 = vadd.f32 %v4089, %v4412
      %v4414 = vpop.f32.mrb[0].mxu0
      %4415 = vmatprep.mubr.f32.mxu0 0.0
      %4416 = vmatmul.mubr.f32.gmra.mrb[0].mxu0 %v4203
      %v4417 = vpop.f32.mrb[0].mxu0
      %v4418 = vadd.f32 %v4094, %v4417
      %v4419 = vpop.f32.mrb[0].mxu0
      %4420 = vmatprep.mubr.f32.mxu0 0.0
      %4421 = vmatmul.mubr.f32.gmra.mrb[0].mxu0 %v4206
      %v4422 = vpop.f32.mrb[0].mxu0
      %v4423 = vadd.f32 %v4099, %v4422
      %v4424 = vpop.f32.mrb[0].mxu0
      %4425 = vmatprep.mubr.f32.mxu0 0.0
      %4426 = vmatmul.mubr.f32.gmra.mrb[0].mxu0 %v4209
      %v4427 = vpop.f32.mrb[0].mxu0
      %v4428 = vadd.f32 %v4104, %v4427
      %v4429 = vpop.f32.mrb[0].mxu0
      %4430 = vmatprep.mubr.f32.mxu0 0.0
      %4431 = vmatmul.mubr.f32.gmra.mrb[0].mxu0 %v4212
      %v4432 = vpop.f32.mrb[0].mxu0
      %v4433 = vadd.f32 %v4109, %v4432
      %v4434 = vpop.f32.mrb[0].mxu0
      %4435 = vmatprep.mubr.f32.mxu0 0.0
      %4436 = vmatmul.mubr.f32.gmra.mrb[0].mxu0 %v4215
      %v4437 = vpop.f32.mrb[0].mxu0
      %v4438 = vadd.f32 %v4114, %v4437
      %v4439 = vpop.f32.mrb[0].mxu0
      %4440 = vmatprep.mubr.f32.mxu0 0.0
      %4441 = vmatmul.mubr.f32.gmra.mrb[0].mxu0 %v4218
      %v4442 = vpop.f32.mrb[0].mxu0
      %v4443 = vadd.f32 %v4119, %v4442
      %v4444 = vpop.f32.mrb[0].mxu0
      %4445 = vmatprep.mubr.f32.mxu0 0.0
      %4446 = vmatmul.mubr.f32.gmra.mrb[0].mxu0 %v4221
      %v4447 = vpop.f32.mrb[0].mxu0
      %v4448 = vadd.f32 %v4124, %v4447
      %v4449 = vpop.f32.mrb[0].mxu0
      %4450 = vdwg.mxu0
      %v4451 = vld [vmem:[%s3734 + $0xf] sm:$0xff]
      %v4452 = vld [vmem:[%s3734 + $0x17] sm:$0xff]
      %v4453 = vld [vmem:[%s3734 + $0x37] sm:$0xff]
      %v4454 = vld [vmem:[%s3734 + $0x3f] sm:$0xff]
      %v4455 = vld [vmem:[%s3734 + $0x5f] sm:$0xff]
      %v4456 = vld [vmem:[%s3734 + $0x67] sm:$0xff]
      %v4457 = vld [vmem:[%s3734 + $0x87] sm:$0xff]
      %v4458 = vld [vmem:[%s3734 + $0x8f] sm:$0xff]
      %v4459 = vld [vmem:[%s3734 + $0xaf] sm:$0xff]
      %v4460 = vld [vmem:[%s3734 + $0xb7] sm:$0xff]
      %v4461 = vld [vmem:[%s3734 + $0xd7] sm:$0xff]
      %v4462 = vld [vmem:[%s3734 + $0xdf] sm:$0xff]
      %v4463 = vld [vmem:[%s3734 + $0xff] sm:$0xff]
      %v4464 = vld [vmem:[%s3734 + $0x107] sm:$0xff]
      %v4465 = vld [vmem:[%s3734 + $0x127] sm:$0xff]
      %v4466 = vld [vmem:[%s3734 + $0x12f] sm:$0xff]
      %v4467 = vld [vmem:[%s3734 + $0x14f] sm:$0xff]
      %v4468 = vld [vmem:[%s3734 + $0x157] sm:$0xff]
      %v4469 = vld [vmem:[%s3734 + $0x177] sm:$0xff]
      %v4470 = vld [vmem:[%s3734 + $0x17f] sm:$0xff]
      %v4471 = vld [vmem:[%s3734 + $0x19f] sm:$0xff]
      %v4472 = vld [vmem:[%s3734 + $0x1a7] sm:$0xff]
      %v4473 = vld [vmem:[%s3734 + $0x1c7] sm:$0xff]
      %v4474 = vld [vmem:[%s3734 + $0x1cf] sm:$0xff]
      %v4475 = vld [vmem:[%s3734 + $0x1ef] sm:$0xff]
      %v4476 = vld [vmem:[%s3734 + $0x1f7] sm:$0xff]
      %v4477 = vld [vmem:[%s3734 + $0x217] sm:$0xff]
      %v4478 = vld [vmem:[%s3734 + $0x21f] sm:$0xff]
      %v4479 = vld [vmem:[%s3734 + $0x23f] sm:$0xff]
      %v4480 = vld [vmem:[%s3734 + $0x247] sm:$0xff]
      %v4481 = vld [vmem:[%s3734 + $0x267] sm:$0xff]
      %v4482 = vld [vmem:[%s3734 + $0x26f] sm:$0xff]
      %s4483 = scalar_lea.vmem %s1, 44
      %v4484 = vld [vmem:[%s4483] sm:$0xf]
      %v4486 = vsel %vm280, %v4451, 0
      %v4489 = vsel %vm280, %v4452, 0
      %v4492 = vsel %vm280, %v4453, 0
      %v4495 = vsel %vm280, %v4454, 0
      %v4498 = vsel %vm280, %v4455, 0
      %v4501 = vsel %vm280, %v4456, 0
      %v4504 = vsel %vm280, %v4457, 0
      %v4507 = vsel %vm280, %v4458, 0
      %v4510 = vsel %vm280, %v4459, 0
      %v4513 = vsel %vm280, %v4460, 0
      %v4516 = vsel %vm280, %v4461, 0
      %v4519 = vsel %vm280, %v4462, 0
      %v4522 = vsel %vm280, %v4463, 0
      %v4525 = vsel %vm280, %v4464, 0
      %v4528 = vsel %vm280, %v4465, 0
      %v4531 = vsel %vm280, %v4466, 0
      %v4534 = vsel %vm280, %v4467, 0
      %v4537 = vsel %vm280, %v4468, 0
      %v4540 = vsel %vm280, %v4469, 0
      %v4543 = vsel %vm280, %v4470, 0
      %v4546 = vsel %vm280, %v4471, 0
      %v4549 = vsel %vm280, %v4472, 0
      %v4552 = vsel %vm280, %v4473, 0
      %v4555 = vsel %vm280, %v4474, 0
      %v4558 = vsel %vm280, %v4475, 0
      %v4561 = vsel %vm280, %v4476, 0
      %v4564 = vsel %vm280, %v4477, 0
      %v4567 = vsel %vm280, %v4478, 0
      %v4570 = vsel %vm280, %v4479, 0
      %v4573 = vsel %vm280, %v4480, 0
      %v4576 = vsel %vm280, %v4481, 0
      %v4579 = vsel %vm280, %v4482, 0
      %v4582 = vsel %vm377, %v4484, 0
      %4584 = vmatprep.subr.mxu0 0.0
      %4585 = vmatpush1.msra.mxu0 %v4582
      %4586 = vmatprep.subr.mxu0 0.0
      %4587 = vmatpush1.msra.mxu0 0.0
      %4588 = vmatprep.subr.mxu0 0.0
      %4589 = vmatpush1.msra.mxu0 0.0
      %4590 = vmatprep.subr.mxu0 0.0
      %4591 = vmatpush1.msra.mxu0 0.0
      %4592 = vmatprep.subr.mxu0 0.0
      %4593 = vmatpush1.msra.mxu0 0.0
      %4594 = vmatprep.subr.mxu0 0.0
      %4595 = vmatpush1.msra.mxu0 0.0
      %4596 = vmatprep.subr.mxu0 0.0
      %4597 = vmatpush1.msra.mxu0 0.0
      %4598 = vmatprep.subr.mxu0 0.0
      %4599 = vmatpush1.msra.mxu0 0.0
      %4600 = vmatprep.subr.mxu0 0.0
      %4601 = vmatpush1.msra.mxu0 0.0
      %4602 = vmatprep.subr.mxu0 0.0
      %4603 = vmatpush1.msra.mxu0 0.0
      %4604 = vmatprep.subr.mxu0 0.0
      %4605 = vmatpush1.msra.mxu0 0.0
      %4606 = vmatprep.subr.mxu0 0.0
      %4607 = vmatpush1.msra.mxu0 0.0
      %4608 = vmatprep.subr.mxu0 0.0
      %4609 = vmatpush1.msra.mxu0 0.0
      %4610 = vmatprep.subr.mxu0 0.0
      %4611 = vmatpush1.msra.mxu0 0.0
      %4612 = vmatprep.subr.mxu0 0.0
      %4613 = vmatpush1.msra.mxu0 0.0
      %4614 = vmatprep.subr.mxu0 0.0
      %4615 = vmatpush1.msra.mxu0 0.0
      %4616 = vmatprep.subr.mxu0 0.0
      %4617 = vmatpush1.msra.mxu0 0.0
      %4618 = vmatprep.subr.mxu0 0.0
      %4619 = vmatpush1.msra.mxu0 0.0
      %4620 = vmatprep.subr.mxu0 0.0
      %4621 = vmatpush1.msra.mxu0 0.0
      %4622 = vmatprep.subr.mxu0 0.0
      %4623 = vmatpush1.msra.mxu0 0.0
      %4624 = vmatprep.subr.mxu0 0.0
      %4625 = vmatpush1.msra.mxu0 0.0
      %4626 = vmatprep.subr.mxu0 0.0
      %4627 = vmatpush1.msra.mxu0 0.0
      %4628 = vmatprep.subr.mxu0 0.0
      %4629 = vmatpush1.msra.mxu0 0.0
      %4630 = vmatprep.subr.mxu0 0.0
      %4631 = vmatpush1.msra.mxu0 0.0
      %4632 = vmatprep.subr.mxu0 0.0
      %4633 = vmatpush1.msra.mxu0 0.0
      %4634 = vmatprep.subr.mxu0 0.0
      %4635 = vmatpush1.msra.mxu0 0.0
      %4636 = vmatprep.subr.mxu0 0.0
      %4637 = vmatpush1.msra.mxu0 0.0
      %4638 = vmatprep.subr.mxu0 0.0
      %4639 = vmatpush1.msra.mxu0 0.0
      %4640 = vmatprep.subr.mxu0 0.0
      %4641 = vmatpush1.msra.mxu0 0.0
      %4642 = vmatprep.subr.mxu0 0.0
      %4643 = vmatpush1.msra.mxu0 0.0
      %4644 = vmatprep.subr.mxu0 0.0
      %4645 = vmatpush1.msra.mxu0 0.0
      %4646 = vmatprep.subr.mxu0 0.0
      %4647 = vmatpush1.msra.mxu0 0.0
      %4648 = vmatprep.mubr.f32.mxu0 0.0
      %4649 = vmatmul.mubr.f32.gmra.mrb[0].mxu0 %v4486
      %v4650 = vpop.f32.mrb[0].mxu0
      %v4651 = vadd.f32 0.0, %v4650
      %v4652 = vpop.f32.mrb[0].mxu0
      %4653 = vmatprep.mubr.f32.mxu0 0.0
      %4654 = vmatmul.mubr.f32.gmra.mrb[0].mxu0 %v4489
      %v4655 = vpop.f32.mrb[0].mxu0
      %v4656 = vadd.f32 0.0, %v4655
      %v4657 = vpop.f32.mrb[0].mxu0
      %4658 = vmatprep.mubr.f32.mxu0 0.0
      %4659 = vmatmul.mubr.f32.gmra.mrb[0].mxu0 %v4492
      %v4660 = vpop.f32.mrb[0].mxu0
      %v4661 = vadd.f32 0.0, %v4660
      %v4662 = vpop.f32.mrb[0].mxu0
      %4663 = vmatprep.mubr.f32.mxu0 0.0
      %4664 = vmatmul.mubr.f32.gmra.mrb[0].mxu0 %v4495
      %v4665 = vpop.f32.mrb[0].mxu0
      %v4666 = vadd.f32 0.0, %v4665
      %v4667 = vpop.f32.mrb[0].mxu0
      %4668 = vmatprep.mubr.f32.mxu0 0.0
      %4669 = vmatmul.mubr.f32.gmra.mrb[0].mxu0 %v4498
      %v4670 = vpop.f32.mrb[0].mxu0
      %v4671 = vadd.f32 0.0, %v4670
      %v4672 = vpop.f32.mrb[0].mxu0
      %4673 = vmatprep.mubr.f32.mxu0 0.0
      %4674 = vmatmul.mubr.f32.gmra.mrb[0].mxu0 %v4501
      %v4675 = vpop.f32.mrb[0].mxu0
      %v4676 = vadd.f32 0.0, %v4675
      %v4677 = vpop.f32.mrb[0].mxu0
      %4678 = vmatprep.mubr.f32.mxu0 0.0
      %4679 = vmatmul.mubr.f32.gmra.mrb[0].mxu0 %v4504
      %v4680 = vpop.f32.mrb[0].mxu0
      %v4681 = vadd.f32 0.0, %v4680
      %v4682 = vpop.f32.mrb[0].mxu0
      %4683 = vmatprep.mubr.f32.mxu0 0.0
      %4684 = vmatmul.mubr.f32.gmra.mrb[0].mxu0 %v4507
      %v4685 = vpop.f32.mrb[0].mxu0
      %v4686 = vadd.f32 0.0, %v4685
      %v4687 = vpop.f32.mrb[0].mxu0
      %4688 = vmatprep.mubr.f32.mxu0 0.0
      %4689 = vmatmul.mubr.f32.gmra.mrb[0].mxu0 %v4510
      %v4690 = vpop.f32.mrb[0].mxu0
      %v4691 = vadd.f32 0.0, %v4690
      %v4692 = vpop.f32.mrb[0].mxu0
      %4693 = vmatprep.mubr.f32.mxu0 0.0
      %4694 = vmatmul.mubr.f32.gmra.mrb[0].mxu0 %v4513
      %v4695 = vpop.f32.mrb[0].mxu0
      %v4696 = vadd.f32 0.0, %v4695
      %v4697 = vpop.f32.mrb[0].mxu0
      %4698 = vmatprep.mubr.f32.mxu0 0.0
      %4699 = vmatmul.mubr.f32.gmra.mrb[0].mxu0 %v4516
      %v4700 = vpop.f32.mrb[0].mxu0
      %v4701 = vadd.f32 0.0, %v4700
      %v4702 = vpop.f32.mrb[0].mxu0
      %4703 = vmatprep.mubr.f32.mxu0 0.0
      %4704 = vmatmul.mubr.f32.gmra.mrb[0].mxu0 %v4519
      %v4705 = vpop.f32.mrb[0].mxu0
      %v4706 = vadd.f32 0.0, %v4705
      %v4707 = vpop.f32.mrb[0].mxu0
      %4708 = vmatprep.mubr.f32.mxu0 0.0
      %4709 = vmatmul.mubr.f32.gmra.mrb[0].mxu0 %v4522
      %v4710 = vpop.f32.mrb[0].mxu0
      %v4711 = vadd.f32 0.0, %v4710
      %v4712 = vpop.f32.mrb[0].mxu0
      %4713 = vmatprep.mubr.f32.mxu0 0.0
      %4714 = vmatmul.mubr.f32.gmra.mrb[0].mxu0 %v4525
      %v4715 = vpop.f32.mrb[0].mxu0
      %v4716 = vadd.f32 0.0, %v4715
      %v4717 = vpop.f32.mrb[0].mxu0
      %4718 = vmatprep.mubr.f32.mxu0 0.0
      %4719 = vmatmul.mubr.f32.gmra.mrb[0].mxu0 %v4528
      %v4720 = vpop.f32.mrb[0].mxu0
      %v4721 = vadd.f32 0.0, %v4720
      %v4722 = vpop.f32.mrb[0].mxu0
      %4723 = vmatprep.mubr.f32.mxu0 0.0
      %4724 = vmatmul.mubr.f32.gmra.mrb[0].mxu0 %v4531
      %v4725 = vpop.f32.mrb[0].mxu0
      %v4726 = vadd.f32 0.0, %v4725
      %v4727 = vpop.f32.mrb[0].mxu0
      %4728 = vmatprep.mubr.f32.mxu0 0.0
      %4729 = vmatmul.mubr.f32.gmra.mrb[0].mxu0 %v4534
      %v4730 = vpop.f32.mrb[0].mxu0
      %v4731 = vadd.f32 0.0, %v4730
      %v4732 = vpop.f32.mrb[0].mxu0
      %4733 = vmatprep.mubr.f32.mxu0 0.0
      %4734 = vmatmul.mubr.f32.gmra.mrb[0].mxu0 %v4537
      %v4735 = vpop.f32.mrb[0].mxu0
      %v4736 = vadd.f32 0.0, %v4735
      %v4737 = vpop.f32.mrb[0].mxu0
      %4738 = vmatprep.mubr.f32.mxu0 0.0
      %4739 = vmatmul.mubr.f32.gmra.mrb[0].mxu0 %v4540
      %v4740 = vpop.f32.mrb[0].mxu0
      %v4741 = vadd.f32 0.0, %v4740
      %v4742 = vpop.f32.mrb[0].mxu0
      %4743 = vmatprep.mubr.f32.mxu0 0.0
      %4744 = vmatmul.mubr.f32.gmra.mrb[0].mxu0 %v4543
      %v4745 = vpop.f32.mrb[0].mxu0
      %v4746 = vadd.f32 0.0, %v4745
      %v4747 = vpop.f32.mrb[0].mxu0
      %4748 = vmatprep.mubr.f32.mxu0 0.0
      %4749 = vmatmul.mubr.f32.gmra.mrb[0].mxu0 %v4546
      %v4750 = vpop.f32.mrb[0].mxu0
      %v4751 = vadd.f32 0.0, %v4750
      %v4752 = vpop.f32.mrb[0].mxu0
      %4753 = vmatprep.mubr.f32.mxu0 0.0
      %4754 = vmatmul.mubr.f32.gmra.mrb[0].mxu0 %v4549
      %v4755 = vpop.f32.mrb[0].mxu0
      %v4756 = vadd.f32 0.0, %v4755
      %v4757 = vpop.f32.mrb[0].mxu0
      %4758 = vmatprep.mubr.f32.mxu0 0.0
      %4759 = vmatmul.mubr.f32.gmra.mrb[0].mxu0 %v4552
      %v4760 = vpop.f32.mrb[0].mxu0
      %v4761 = vadd.f32 0.0, %v4760
      %v4762 = vpop.f32.mrb[0].mxu0
      %4763 = vmatprep.mubr.f32.mxu0 0.0
      %4764 = vmatmul.mubr.f32.gmra.mrb[0].mxu0 %v4555
      %v4765 = vpop.f32.mrb[0].mxu0
      %v4766 = vadd.f32 0.0, %v4765
      %v4767 = vpop.f32.mrb[0].mxu0
      %4768 = vmatprep.mubr.f32.mxu0 0.0
      %4769 = vmatmul.mubr.f32.gmra.mrb[0].mxu0 %v4558
      %v4770 = vpop.f32.mrb[0].mxu0
      %v4771 = vadd.f32 0.0, %v4770
      %v4772 = vpop.f32.mrb[0].mxu0
      %4773 = vmatprep.mubr.f32.mxu0 0.0
      %4774 = vmatmul.mubr.f32.gmra.mrb[0].mxu0 %v4561
      %v4775 = vpop.f32.mrb[0].mxu0
      %v4776 = vadd.f32 0.0, %v4775
      %v4777 = vpop.f32.mrb[0].mxu0
      %4778 = vmatprep.mubr.f32.mxu0 0.0
      %4779 = vmatmul.mubr.f32.gmra.mrb[0].mxu0 %v4564
      %v4780 = vpop.f32.mrb[0].mxu0
      %v4781 = vadd.f32 0.0, %v4780
      %v4782 = vpop.f32.mrb[0].mxu0
      %4783 = vmatprep.mubr.f32.mxu0 0.0
      %4784 = vmatmul.mubr.f32.gmra.mrb[0].mxu0 %v4567
      %v4785 = vpop.f32.mrb[0].mxu0
      %v4786 = vadd.f32 0.0, %v4785
      %v4787 = vpop.f32.mrb[0].mxu0
      %4788 = vmatprep.mubr.f32.mxu0 0.0
      %4789 = vmatmul.mubr.f32.gmra.mrb[0].mxu0 %v4570
      %v4790 = vpop.f32.mrb[0].mxu0
      %v4791 = vadd.f32 0.0, %v4790
      %v4792 = vpop.f32.mrb[0].mxu0
      %4793 = vmatprep.mubr.f32.mxu0 0.0
      %4794 = vmatmul.mubr.f32.gmra.mrb[0].mxu0 %v4573
      %v4795 = vpop.f32.mrb[0].mxu0
      %v4796 = vadd.f32 0.0, %v4795
      %v4797 = vpop.f32.mrb[0].mxu0
      %4798 = vmatprep.mubr.f32.mxu0 0.0
      %4799 = vmatmul.mubr.f32.gmra.mrb[0].mxu0 %v4576
      %v4800 = vpop.f32.mrb[0].mxu0
      %v4801 = vadd.f32 0.0, %v4800
      %v4802 = vpop.f32.mrb[0].mxu0
      %4803 = vmatprep.mubr.f32.mxu0 0.0
      %4804 = vmatmul.mubr.f32.gmra.mrb[0].mxu0 %v4579
      %v4805 = vpop.f32.mrb[0].mxu0
      %v4806 = vadd.f32 0.0, %v4805
      %v4807 = vpop.f32.mrb[0].mxu0
      %4808 = vdwg.mxu0
      %v4809 = vadd.f32 %v4293, %v4651
      %v4810 = vadd.f32 %v4298, %v4656
      %v4811 = vadd.f32 %v4303, %v4661
      %v4812 = vadd.f32 %v4308, %v4666
      %v4813 = vadd.f32 %v4313, %v4671
      %v4814 = vadd.f32 %v4318, %v4676
      %v4815 = vadd.f32 %v4323, %v4681
      %v4816 = vadd.f32 %v4328, %v4686
      %v4817 = vadd.f32 %v4333, %v4691
      %v4818 = vadd.f32 %v4338, %v4696
      %v4819 = vadd.f32 %v4343, %v4701
      %v4820 = vadd.f32 %v4348, %v4706
      %v4821 = vadd.f32 %v4353, %v4711
      %v4822 = vadd.f32 %v4358, %v4716
      %v4823 = vadd.f32 %v4363, %v4721
      %v4824 = vadd.f32 %v4368, %v4726
      %v4825 = vadd.f32 %v4373, %v4731
      %v4826 = vadd.f32 %v4378, %v4736
      %v4827 = vadd.f32 %v4383, %v4741
      %v4828 = vadd.f32 %v4388, %v4746
      %v4829 = vadd.f32 %v4393, %v4751
      %v4830 = vadd.f32 %v4398, %v4756
      %v4831 = vadd.f32 %v4403, %v4761
      %v4832 = vadd.f32 %v4408, %v4766
      %v4833 = vadd.f32 %v4413, %v4771
      %v4834 = vadd.f32 %v4418, %v4776
      %v4835 = vadd.f32 %v4423, %v4781
      %v4836 = vadd.f32 %v4428, %v4786
      %v4837 = vadd.f32 %v4433, %v4791
      %v4838 = vadd.f32 %v4438, %v4796
      %v4839 = vadd.f32 %v4443, %v4801
      %v4840 = vadd.f32 %v4448, %v4806
      %v4841 = vld [vmem:[%s1320 + $0x3] sm:$0xff]
      %v4842 = vld [vmem:[%s1320 + $0xb] sm:$0xff]
      %v4843 = vld [vmem:[%s1320 + $0x2b] sm:$0xff]
      %v4844 = vld [vmem:[%s1320 + $0x33] sm:$0xff]
      %v4845 = vld [vmem:[%s1320 + $0x53] sm:$0xff]
      %v4846 = vld [vmem:[%s1320 + $0x5b] sm:$0xff]
      %v4847 = vld [vmem:[%s1320 + $0x7b] sm:$0xff]
      %v4848 = vld [vmem:[%s1320 + $0x83] sm:$0xff]
      %v4849 = vld [vmem:[%s1320 + $0xa3] sm:$0xff]
      %v4850 = vld [vmem:[%s1320 + $0xab] sm:$0xff]
      %v4851 = vld [vmem:[%s1320 + $0xcb] sm:$0xff]
      %v4852 = vld [vmem:[%s1320 + $0xd3] sm:$0xff]
      %v4853 = vld [vmem:[%s1320 + $0xf3] sm:$0xff]
      %v4854 = vld [vmem:[%s1320 + $0xfb] sm:$0xff]
      %v4855 = vld [vmem:[%s1320 + $0x11b] sm:$0xff]
      %v4856 = vld [vmem:[%s1320 + $0x123] sm:$0xff]
      %v4857 = vld [vmem:[%s1320 + $0x143] sm:$0xff]
      %v4858 = vld [vmem:[%s1320 + $0x14b] sm:$0xff]
      %v4859 = vld [vmem:[%s1320 + $0x16b] sm:$0xff]
      %v4860 = vld [vmem:[%s1320 + $0x173] sm:$0xff]
      %v4861 = vld [vmem:[%s1320 + $0x193] sm:$0xff]
      %v4862 = vld [vmem:[%s1320 + $0x19b] sm:$0xff]
      %v4863 = vld [vmem:[%s1320 + $0x1bb] sm:$0xff]
      %v4864 = vld [vmem:[%s1320 + $0x1c3] sm:$0xff]
      %v4865 = vld [vmem:[%s1320 + $0x1e3] sm:$0xff]
      %v4866 = vld [vmem:[%s1320 + $0x1eb] sm:$0xff]
      %v4867 = vld [vmem:[%s1320 + $0x20b] sm:$0xff]
      %v4868 = vld [vmem:[%s1320 + $0x213] sm:$0xff]
      %v4869 = vld [vmem:[%s1320 + $0x233] sm:$0xff]
      %v4870 = vld [vmem:[%s1320 + $0x23b] sm:$0xff]
      %v4871 = vld [vmem:[%s1320 + $0x25b] sm:$0xff]
      %v4872 = vld [vmem:[%s1320 + $0x263] sm:$0xff]
      %s4873 = scalar_lea.vmem %s1, 48
      %v4874 = vld [vmem:[%s4873] sm:$0xf]
      %v4876 = vsel %vm280, %v4841, 0
      %v4879 = vsel %vm280, %v4842, 0
      %v4882 = vsel %vm280, %v4843, 0
      %v4885 = vsel %vm280, %v4844, 0
      %v4888 = vsel %vm280, %v4845, 0
      %v4891 = vsel %vm280, %v4846, 0
      %v4894 = vsel %vm280, %v4847, 0
      %v4897 = vsel %vm280, %v4848, 0
      %v4900 = vsel %vm280, %v4849, 0
      %v4903 = vsel %vm280, %v4850, 0
      %v4906 = vsel %vm280, %v4851, 0
      %v4909 = vsel %vm280, %v4852, 0
      %v4912 = vsel %vm280, %v4853, 0
      %v4915 = vsel %vm280, %v4854, 0
      %v4918 = vsel %vm280, %v4855, 0
      %v4921 = vsel %vm280, %v4856, 0
      %v4924 = vsel %vm280, %v4857, 0
      %v4927 = vsel %vm280, %v4858, 0
      %v4930 = vsel %vm280, %v4859, 0
      %v4933 = vsel %vm280, %v4860, 0
      %v4936 = vsel %vm280, %v4861, 0
      %v4939 = vsel %vm280, %v4862, 0
      %v4942 = vsel %vm280, %v4863, 0
      %v4945 = vsel %vm280, %v4864, 0
      %v4948 = vsel %vm280, %v4865, 0
      %v4951 = vsel %vm280, %v4866, 0
      %v4954 = vsel %vm280, %v4867, 0
      %v4957 = vsel %vm280, %v4868, 0
      %v4960 = vsel %vm280, %v4869, 0
      %v4963 = vsel %vm280, %v4870, 0
      %v4966 = vsel %vm280, %v4871, 0
      %v4969 = vsel %vm280, %v4872, 0
      %v4972 = vsel %vm377, %v4874, 0
      %4974 = vmatprep.subr.mxu0 0.0
      %4975 = vmatpush1.msra.mxu0 %v4972
      %4976 = vmatprep.subr.mxu0 0.0
      %4977 = vmatpush1.msra.mxu0 0.0
      %4978 = vmatprep.subr.mxu0 0.0
      %4979 = vmatpush1.msra.mxu0 0.0
      %4980 = vmatprep.subr.mxu0 0.0
      %4981 = vmatpush1.msra.mxu0 0.0
      %4982 = vmatprep.subr.mxu0 0.0
      %4983 = vmatpush1.msra.mxu0 0.0
      %4984 = vmatprep.subr.mxu0 0.0
      %4985 = vmatpush1.msra.mxu0 0.0
      %4986 = vmatprep.subr.mxu0 0.0
      %4987 = vmatpush1.msra.mxu0 0.0
      %4988 = vmatprep.subr.mxu0 0.0
      %4989 = vmatpush1.msra.mxu0 0.0
      %4990 = vmatprep.subr.mxu0 0.0
      %4991 = vmatpush1.msra.mxu0 0.0
      %4992 = vmatprep.subr.mxu0 0.0
      %4993 = vmatpush1.msra.mxu0 0.0
      %4994 = vmatprep.subr.mxu0 0.0
      %4995 = vmatpush1.msra.mxu0 0.0
      %4996 = vmatprep.subr.mxu0 0.0
      %4997 = vmatpush1.msra.mxu0 0.0
      %4998 = vmatprep.subr.mxu0 0.0
      %4999 = vmatpush1.msra.mxu0 0.0
      %5000 = vmatprep.subr.mxu0 0.0
      %5001 = vmatpush1.msra.mxu0 0.0
      %5002 = vmatprep.subr.mxu0 0.0
      %5003 = vmatpush1.msra.mxu0 0.0
      %5004 = vmatprep.subr.mxu0 0.0
      %5005 = vmatpush1.msra.mxu0 0.0
      %5006 = vmatprep.subr.mxu0 0.0
      %5007 = vmatpush1.msra.mxu0 0.0
      %5008 = vmatprep.subr.mxu0 0.0
      %5009 = vmatpush1.msra.mxu0 0.0
      %5010 = vmatprep.subr.mxu0 0.0
      %5011 = vmatpush1.msra.mxu0 0.0
      %5012 = vmatprep.subr.mxu0 0.0
      %5013 = vmatpush1.msra.mxu0 0.0
      %5014 = vmatprep.subr.mxu0 0.0
      %5015 = vmatpush1.msra.mxu0 0.0
      %5016 = vmatprep.subr.mxu0 0.0
      %5017 = vmatpush1.msra.mxu0 0.0
      %5018 = vmatprep.subr.mxu0 0.0
      %5019 = vmatpush1.msra.mxu0 0.0
      %5020 = vmatprep.subr.mxu0 0.0
      %5021 = vmatpush1.msra.mxu0 0.0
      %5022 = vmatprep.subr.mxu0 0.0
      %5023 = vmatpush1.msra.mxu0 0.0
      %5024 = vmatprep.subr.mxu0 0.0
      %5025 = vmatpush1.msra.mxu0 0.0
      %5026 = vmatprep.subr.mxu0 0.0
      %5027 = vmatpush1.msra.mxu0 0.0
      %5028 = vmatprep.subr.mxu0 0.0
      %5029 = vmatpush1.msra.mxu0 0.0
      %5030 = vmatprep.subr.mxu0 0.0
      %5031 = vmatpush1.msra.mxu0 0.0
      %5032 = vmatprep.subr.mxu0 0.0
      %5033 = vmatpush1.msra.mxu0 0.0
      %5034 = vmatprep.subr.mxu0 0.0
      %5035 = vmatpush1.msra.mxu0 0.0
      %5036 = vmatprep.subr.mxu0 0.0
      %5037 = vmatpush1.msra.mxu0 0.0
      %5038 = vmatprep.mubr.f32.mxu0 0.0
      %5039 = vmatmul.mubr.f32.gmra.mrb[0].mxu0 %v4876
      %v5040 = vpop.f32.mrb[0].mxu0
      %v5041 = vadd.f32 0.0, %v5040
      %v5042 = vpop.f32.mrb[0].mxu0
      %5043 = vmatprep.mubr.f32.mxu0 0.0
      %5044 = vmatmul.mubr.f32.gmra.mrb[0].mxu0 %v4879
      %v5045 = vpop.f32.mrb[0].mxu0
      %v5046 = vadd.f32 0.0, %v5045
      %v5047 = vpop.f32.mrb[0].mxu0
      %5048 = vmatprep.mubr.f32.mxu0 0.0
      %5049 = vmatmul.mubr.f32.gmra.mrb[0].mxu0 %v4882
      %v5050 = vpop.f32.mrb[0].mxu0
      %v5051 = vadd.f32 0.0, %v5050
      %v5052 = vpop.f32.mrb[0].mxu0
      %5053 = vmatprep.mubr.f32.mxu0 0.0
      %5054 = vmatmul.mubr.f32.gmra.mrb[0].mxu0 %v4885
      %v5055 = vpop.f32.mrb[0].mxu0
      %v5056 = vadd.f32 0.0, %v5055
      %v5057 = vpop.f32.mrb[0].mxu0
      %5058 = vmatprep.mubr.f32.mxu0 0.0
      %5059 = vmatmul.mubr.f32.gmra.mrb[0].mxu0 %v4888
      %v5060 = vpop.f32.mrb[0].mxu0
      %v5061 = vadd.f32 0.0, %v5060
      %v5062 = vpop.f32.mrb[0].mxu0
      %5063 = vmatprep.mubr.f32.mxu0 0.0
      %5064 = vmatmul.mubr.f32.gmra.mrb[0].mxu0 %v4891
      %v5065 = vpop.f32.mrb[0].mxu0
      %v5066 = vadd.f32 0.0, %v5065
      %v5067 = vpop.f32.mrb[0].mxu0
      %5068 = vmatprep.mubr.f32.mxu0 0.0
      %5069 = vmatmul.mubr.f32.gmra.mrb[0].mxu0 %v4894
      %v5070 = vpop.f32.mrb[0].mxu0
      %v5071 = vadd.f32 0.0, %v5070
      %v5072 = vpop.f32.mrb[0].mxu0
      %5073 = vmatprep.mubr.f32.mxu0 0.0
      %5074 = vmatmul.mubr.f32.gmra.mrb[0].mxu0 %v4897
      %v5075 = vpop.f32.mrb[0].mxu0
      %v5076 = vadd.f32 0.0, %v5075
      %v5077 = vpop.f32.mrb[0].mxu0
      %5078 = vmatprep.mubr.f32.mxu0 0.0
      %5079 = vmatmul.mubr.f32.gmra.mrb[0].mxu0 %v4900
      %v5080 = vpop.f32.mrb[0].mxu0
      %v5081 = vadd.f32 0.0, %v5080
      %v5082 = vpop.f32.mrb[0].mxu0
      %5083 = vmatprep.mubr.f32.mxu0 0.0
      %5084 = vmatmul.mubr.f32.gmra.mrb[0].mxu0 %v4903
      %v5085 = vpop.f32.mrb[0].mxu0
      %v5086 = vadd.f32 0.0, %v5085
      %v5087 = vpop.f32.mrb[0].mxu0
      %5088 = vmatprep.mubr.f32.mxu0 0.0
      %5089 = vmatmul.mubr.f32.gmra.mrb[0].mxu0 %v4906
      %v5090 = vpop.f32.mrb[0].mxu0
      %v5091 = vadd.f32 0.0, %v5090
      %v5092 = vpop.f32.mrb[0].mxu0
      %5093 = vmatprep.mubr.f32.mxu0 0.0
      %5094 = vmatmul.mubr.f32.gmra.mrb[0].mxu0 %v4909
      %v5095 = vpop.f32.mrb[0].mxu0
      %v5096 = vadd.f32 0.0, %v5095
      %v5097 = vpop.f32.mrb[0].mxu0
      %5098 = vmatprep.mubr.f32.mxu0 0.0
      %5099 = vmatmul.mubr.f32.gmra.mrb[0].mxu0 %v4912
      %v5100 = vpop.f32.mrb[0].mxu0
      %v5101 = vadd.f32 0.0, %v5100
      %v5102 = vpop.f32.mrb[0].mxu0
      %5103 = vmatprep.mubr.f32.mxu0 0.0
      %5104 = vmatmul.mubr.f32.gmra.mrb[0].mxu0 %v4915
      %v5105 = vpop.f32.mrb[0].mxu0
      %v5106 = vadd.f32 0.0, %v5105
      %v5107 = vpop.f32.mrb[0].mxu0
      %5108 = vmatprep.mubr.f32.mxu0 0.0
      %5109 = vmatmul.mubr.f32.gmra.mrb[0].mxu0 %v4918
      %v5110 = vpop.f32.mrb[0].mxu0
      %v5111 = vadd.f32 0.0, %v5110
      %v5112 = vpop.f32.mrb[0].mxu0
      %5113 = vmatprep.mubr.f32.mxu0 0.0
      %5114 = vmatmul.mubr.f32.gmra.mrb[0].mxu0 %v4921
      %v5115 = vpop.f32.mrb[0].mxu0
      %v5116 = vadd.f32 0.0, %v5115
      %v5117 = vpop.f32.mrb[0].mxu0
      %5118 = vmatprep.mubr.f32.mxu0 0.0
      %5119 = vmatmul.mubr.f32.gmra.mrb[0].mxu0 %v4924
      %v5120 = vpop.f32.mrb[0].mxu0
      %v5121 = vadd.f32 0.0, %v5120
      %v5122 = vpop.f32.mrb[0].mxu0
      %5123 = vmatprep.mubr.f32.mxu0 0.0
      %5124 = vmatmul.mubr.f32.gmra.mrb[0].mxu0 %v4927
      %v5125 = vpop.f32.mrb[0].mxu0
      %v5126 = vadd.f32 0.0, %v5125
      %v5127 = vpop.f32.mrb[0].mxu0
      %5128 = vmatprep.mubr.f32.mxu0 0.0
      %5129 = vmatmul.mubr.f32.gmra.mrb[0].mxu0 %v4930
      %v5130 = vpop.f32.mrb[0].mxu0
      %v5131 = vadd.f32 0.0, %v5130
      %v5132 = vpop.f32.mrb[0].mxu0
      %5133 = vmatprep.mubr.f32.mxu0 0.0
      %5134 = vmatmul.mubr.f32.gmra.mrb[0].mxu0 %v4933
      %v5135 = vpop.f32.mrb[0].mxu0
      %v5136 = vadd.f32 0.0, %v5135
      %v5137 = vpop.f32.mrb[0].mxu0
      %5138 = vmatprep.mubr.f32.mxu0 0.0
      %5139 = vmatmul.mubr.f32.gmra.mrb[0].mxu0 %v4936
      %v5140 = vpop.f32.mrb[0].mxu0
      %v5141 = vadd.f32 0.0, %v5140
      %v5142 = vpop.f32.mrb[0].mxu0
      %5143 = vmatprep.mubr.f32.mxu0 0.0
      %5144 = vmatmul.mubr.f32.gmra.mrb[0].mxu0 %v4939
      %v5145 = vpop.f32.mrb[0].mxu0
      %v5146 = vadd.f32 0.0, %v5145
      %v5147 = vpop.f32.mrb[0].mxu0
      %5148 = vmatprep.mubr.f32.mxu0 0.0
      %5149 = vmatmul.mubr.f32.gmra.mrb[0].mxu0 %v4942
      %v5150 = vpop.f32.mrb[0].mxu0
      %v5151 = vadd.f32 0.0, %v5150
      %v5152 = vpop.f32.mrb[0].mxu0
      %5153 = vmatprep.mubr.f32.mxu0 0.0
      %5154 = vmatmul.mubr.f32.gmra.mrb[0].mxu0 %v4945
      %v5155 = vpop.f32.mrb[0].mxu0
      %v5156 = vadd.f32 0.0, %v5155
      %v5157 = vpop.f32.mrb[0].mxu0
      %5158 = vmatprep.mubr.f32.mxu0 0.0
      %5159 = vmatmul.mubr.f32.gmra.mrb[0].mxu0 %v4948
      %v5160 = vpop.f32.mrb[0].mxu0
      %v5161 = vadd.f32 0.0, %v5160
      %v5162 = vpop.f32.mrb[0].mxu0
      %5163 = vmatprep.mubr.f32.mxu0 0.0
      %5164 = vmatmul.mubr.f32.gmra.mrb[0].mxu0 %v4951
      %v5165 = vpop.f32.mrb[0].mxu0
      %v5166 = vadd.f32 0.0, %v5165
      %v5167 = vpop.f32.mrb[0].mxu0
      %5168 = vmatprep.mubr.f32.mxu0 0.0
      %5169 = vmatmul.mubr.f32.gmra.mrb[0].mxu0 %v4954
      %v5170 = vpop.f32.mrb[0].mxu0
      %v5171 = vadd.f32 0.0, %v5170
      %v5172 = vpop.f32.mrb[0].mxu0
      %5173 = vmatprep.mubr.f32.mxu0 0.0
      %5174 = vmatmul.mubr.f32.gmra.mrb[0].mxu0 %v4957
      %v5175 = vpop.f32.mrb[0].mxu0
      %v5176 = vadd.f32 0.0, %v5175
      %v5177 = vpop.f32.mrb[0].mxu0
      %5178 = vmatprep.mubr.f32.mxu0 0.0
      %5179 = vmatmul.mubr.f32.gmra.mrb[0].mxu0 %v4960
      %v5180 = vpop.f32.mrb[0].mxu0
      %v5181 = vadd.f32 0.0, %v5180
      %v5182 = vpop.f32.mrb[0].mxu0
      %5183 = vmatprep.mubr.f32.mxu0 0.0
      %5184 = vmatmul.mubr.f32.gmra.mrb[0].mxu0 %v4963
      %v5185 = vpop.f32.mrb[0].mxu0
      %v5186 = vadd.f32 0.0, %v5185
      %v5187 = vpop.f32.mrb[0].mxu0
      %5188 = vmatprep.mubr.f32.mxu0 0.0
      %5189 = vmatmul.mubr.f32.gmra.mrb[0].mxu0 %v4966
      %v5190 = vpop.f32.mrb[0].mxu0
      %v5191 = vadd.f32 0.0, %v5190
      %v5192 = vpop.f32.mrb[0].mxu0
      %5193 = vmatprep.mubr.f32.mxu0 0.0
      %5194 = vmatmul.mubr.f32.gmra.mrb[0].mxu0 %v4969
      %v5195 = vpop.f32.mrb[0].mxu0
      %v5196 = vadd.f32 0.0, %v5195
      %v5197 = vpop.f32.mrb[0].mxu0
      %5198 = vdwg.mxu0
      %v5199 = vadd.f32 %v4809, %v5041
      %v5200 = vadd.f32 %v4810, %v5046
      %v5201 = vadd.f32 %v4811, %v5051
      %v5202 = vadd.f32 %v4812, %v5056
      %v5203 = vadd.f32 %v4813, %v5061
      %v5204 = vadd.f32 %v4814, %v5066
      %v5205 = vadd.f32 %v4815, %v5071
      %v5206 = vadd.f32 %v4816, %v5076
      %v5207 = vadd.f32 %v4817, %v5081
      %v5208 = vadd.f32 %v4818, %v5086
      %v5209 = vadd.f32 %v4819, %v5091
      %v5210 = vadd.f32 %v4820, %v5096
      %v5211 = vadd.f32 %v4821, %v5101
      %v5212 = vadd.f32 %v4822, %v5106
      %v5213 = vadd.f32 %v4823, %v5111
      %v5214 = vadd.f32 %v4824, %v5116
      %v5215 = vadd.f32 %v4825, %v5121
      %v5216 = vadd.f32 %v4826, %v5126
      %v5217 = vadd.f32 %v4827, %v5131
      %v5218 = vadd.f32 %v4828, %v5136
      %v5219 = vadd.f32 %v4829, %v5141
      %v5220 = vadd.f32 %v4830, %v5146
      %v5221 = vadd.f32 %v4831, %v5151
      %v5222 = vadd.f32 %v4832, %v5156
      %v5223 = vadd.f32 %v4833, %v5161
      %v5224 = vadd.f32 %v4834, %v5166
      %v5225 = vadd.f32 %v4835, %v5171
      %v5226 = vadd.f32 %v4836, %v5176
      %v5227 = vadd.f32 %v4837, %v5181
      %v5228 = vadd.f32 %v4838, %v5186
      %v5229 = vadd.f32 %v4839, %v5191
      %v5230 = vadd.f32 %v4840, %v5196
      %v5231 = vld [vmem:[%s1320 + $0x9] sm:$0xff]
      %v5232 = vld [vmem:[%s1320 + $0x11] sm:$0xff]
      %v5233 = vld [vmem:[%s1320 + $0x31] sm:$0xff]
      %v5234 = vld [vmem:[%s1320 + $0x39] sm:$0xff]
      %v5235 = vld [vmem:[%s1320 + $0x59] sm:$0xff]
      %v5236 = vld [vmem:[%s1320 + $0x61] sm:$0xff]
      %v5237 = vld [vmem:[%s1320 + $0x81] sm:$0xff]
      %v5238 = vld [vmem:[%s1320 + $0x89] sm:$0xff]
      %v5239 = vld [vmem:[%s1320 + $0xa9] sm:$0xff]
      %v5240 = vld [vmem:[%s1320 + $0xb1] sm:$0xff]
      %v5241 = vld [vmem:[%s1320 + $0xd1] sm:$0xff]
      %v5242 = vld [vmem:[%s1320 + $0xd9] sm:$0xff]
      %v5243 = vld [vmem:[%s1320 + $0xf9] sm:$0xff]
      %v5244 = vld [vmem:[%s1320 + $0x101] sm:$0xff]
      %v5245 = vld [vmem:[%s1320 + $0x121] sm:$0xff]
      %v5246 = vld [vmem:[%s1320 + $0x129] sm:$0xff]
      %v5247 = vld [vmem:[%s1320 + $0x149] sm:$0xff]
      %v5248 = vld [vmem:[%s1320 + $0x151] sm:$0xff]
      %v5249 = vld [vmem:[%s1320 + $0x171] sm:$0xff]
      %v5250 = vld [vmem:[%s1320 + $0x179] sm:$0xff]
      %v5251 = vld [vmem:[%s1320 + $0x199] sm:$0xff]
      %v5252 = vld [vmem:[%s1320 + $0x1a1] sm:$0xff]
      %v5253 = vld [vmem:[%s1320 + $0x1c1] sm:$0xff]
      %v5254 = vld [vmem:[%s1320 + $0x1c9] sm:$0xff]
      %v5255 = vld [vmem:[%s1320 + $0x1e9] sm:$0xff]
      %v5256 = vld [vmem:[%s1320 + $0x1f1] sm:$0xff]
      %v5257 = vld [vmem:[%s1320 + $0x211] sm:$0xff]
      %v5258 = vld [vmem:[%s1320 + $0x219] sm:$0xff]
      %v5259 = vld [vmem:[%s1320 + $0x239] sm:$0xff]
      %v5260 = vld [vmem:[%s1320 + $0x241] sm:$0xff]
      %v5261 = vld [vmem:[%s1320 + $0x261] sm:$0xff]
      %v5262 = vld [vmem:[%s1320 + $0x269] sm:$0xff]
      %s5263 = scalar_lea.vmem %s1, 52
      %v5264 = vld [vmem:[%s5263] sm:$0xf]
      %v5266 = vsel %vm280, %v5231, 0
      %v5269 = vsel %vm280, %v5232, 0
      %v5272 = vsel %vm280, %v5233, 0
      %v5275 = vsel %vm280, %v5234, 0
      %v5278 = vsel %vm280, %v5235, 0
      %v5281 = vsel %vm280, %v5236, 0
      %v5284 = vsel %vm280, %v5237, 0
      %v5287 = vsel %vm280, %v5238, 0
      %v5290 = vsel %vm280, %v5239, 0
      %v5293 = vsel %vm280, %v5240, 0
      %v5296 = vsel %vm280, %v5241, 0
      %v5299 = vsel %vm280, %v5242, 0
      %v5302 = vsel %vm280, %v5243, 0
      %v5305 = vsel %vm280, %v5244, 0
      %v5308 = vsel %vm280, %v5245, 0
      %v5311 = vsel %vm280, %v5246, 0
      %v5314 = vsel %vm280, %v5247, 0
      %v5317 = vsel %vm280, %v5248, 0
      %v5320 = vsel %vm280, %v5249, 0
      %v5323 = vsel %vm280, %v5250, 0
      %v5326 = vsel %vm280, %v5251, 0
      %v5329 = vsel %vm280, %v5252, 0
      %v5332 = vsel %vm280, %v5253, 0
      %v5335 = vsel %vm280, %v5254, 0
      %v5338 = vsel %vm280, %v5255, 0
      %v5341 = vsel %vm280, %v5256, 0
      %v5344 = vsel %vm280, %v5257, 0
      %v5347 = vsel %vm280, %v5258, 0
      %v5350 = vsel %vm280, %v5259, 0
      %v5353 = vsel %vm280, %v5260, 0
      %v5356 = vsel %vm280, %v5261, 0
      %v5359 = vsel %vm280, %v5262, 0
      %v5362 = vsel %vm377, %v5264, 0
      %5364 = vmatprep.subr.mxu0 0.0
      %5365 = vmatpush1.msra.mxu0 %v5362
      %5366 = vmatprep.subr.mxu0 0.0
      %5367 = vmatpush1.msra.mxu0 0.0
      %5368 = vmatprep.subr.mxu0 0.0
      %5369 = vmatpush1.msra.mxu0 0.0
      %5370 = vmatprep.subr.mxu0 0.0
      %5371 = vmatpush1.msra.mxu0 0.0
      %5372 = vmatprep.subr.mxu0 0.0
      %5373 = vmatpush1.msra.mxu0 0.0
      %5374 = vmatprep.subr.mxu0 0.0
      %5375 = vmatpush1.msra.mxu0 0.0
      %5376 = vmatprep.subr.mxu0 0.0
      %5377 = vmatpush1.msra.mxu0 0.0
      %5378 = vmatprep.subr.mxu0 0.0
      %5379 = vmatpush1.msra.mxu0 0.0
      %5380 = vmatprep.subr.mxu0 0.0
      %5381 = vmatpush1.msra.mxu0 0.0
      %5382 = vmatprep.subr.mxu0 0.0
      %5383 = vmatpush1.msra.mxu0 0.0
      %5384 = vmatprep.subr.mxu0 0.0
      %5385 = vmatpush1.msra.mxu0 0.0
      %5386 = vmatprep.subr.mxu0 0.0
      %5387 = vmatpush1.msra.mxu0 0.0
      %5388 = vmatprep.subr.mxu0 0.0
      %5389 = vmatpush1.msra.mxu0 0.0
      %5390 = vmatprep.subr.mxu0 0.0
      %5391 = vmatpush1.msra.mxu0 0.0
      %5392 = vmatprep.subr.mxu0 0.0
      %5393 = vmatpush1.msra.mxu0 0.0
      %5394 = vmatprep.subr.mxu0 0.0
      %5395 = vmatpush1.msra.mxu0 0.0
      %5396 = vmatprep.subr.mxu0 0.0
      %5397 = vmatpush1.msra.mxu0 0.0
      %5398 = vmatprep.subr.mxu0 0.0
      %5399 = vmatpush1.msra.mxu0 0.0
      %5400 = vmatprep.subr.mxu0 0.0
      %5401 = vmatpush1.msra.mxu0 0.0
      %5402 = vmatprep.subr.mxu0 0.0
      %5403 = vmatpush1.msra.mxu0 0.0
      %5404 = vmatprep.subr.mxu0 0.0
      %5405 = vmatpush1.msra.mxu0 0.0
      %5406 = vmatprep.subr.mxu0 0.0
      %5407 = vmatpush1.msra.mxu0 0.0
      %5408 = vmatprep.subr.mxu0 0.0
      %5409 = vmatpush1.msra.mxu0 0.0
      %5410 = vmatprep.subr.mxu0 0.0
      %5411 = vmatpush1.msra.mxu0 0.0
      %5412 = vmatprep.subr.mxu0 0.0
      %5413 = vmatpush1.msra.mxu0 0.0
      %5414 = vmatprep.subr.mxu0 0.0
      %5415 = vmatpush1.msra.mxu0 0.0
      %5416 = vmatprep.subr.mxu0 0.0
      %5417 = vmatpush1.msra.mxu0 0.0
      %5418 = vmatprep.subr.mxu0 0.0
      %5419 = vmatpush1.msra.mxu0 0.0
      %5420 = vmatprep.subr.mxu0 0.0
      %5421 = vmatpush1.msra.mxu0 0.0
      %5422 = vmatprep.subr.mxu0 0.0
      %5423 = vmatpush1.msra.mxu0 0.0
      %5424 = vmatprep.subr.mxu0 0.0
      %5425 = vmatpush1.msra.mxu0 0.0
      %5426 = vmatprep.subr.mxu0 0.0
      %5427 = vmatpush1.msra.mxu0 0.0
      %5428 = vmatprep.mubr.f32.mxu0 0.0
      %5429 = vmatmul.mubr.f32.gmra.mrb[0].mxu0 %v5266
      %v5430 = vpop.f32.mrb[0].mxu0
      %v5431 = vadd.f32 0.0, %v5430
      %v5432 = vpop.f32.mrb[0].mxu0
      %5433 = vmatprep.mubr.f32.mxu0 0.0
      %5434 = vmatmul.mubr.f32.gmra.mrb[0].mxu0 %v5269
      %v5435 = vpop.f32.mrb[0].mxu0
      %v5436 = vadd.f32 0.0, %v5435
      %v5437 = vpop.f32.mrb[0].mxu0
      %5438 = vmatprep.mubr.f32.mxu0 0.0
      %5439 = vmatmul.mubr.f32.gmra.mrb[0].mxu0 %v5272
      %v5440 = vpop.f32.mrb[0].mxu0
      %v5441 = vadd.f32 0.0, %v5440
      %v5442 = vpop.f32.mrb[0].mxu0
      %5443 = vmatprep.mubr.f32.mxu0 0.0
      %5444 = vmatmul.mubr.f32.gmra.mrb[0].mxu0 %v5275
      %v5445 = vpop.f32.mrb[0].mxu0
      %v5446 = vadd.f32 0.0, %v5445
      %v5447 = vpop.f32.mrb[0].mxu0
      %5448 = vmatprep.mubr.f32.mxu0 0.0
      %5449 = vmatmul.mubr.f32.gmra.mrb[0].mxu0 %v5278
      %v5450 = vpop.f32.mrb[0].mxu0
      %v5451 = vadd.f32 0.0, %v5450
      %v5452 = vpop.f32.mrb[0].mxu0
      %5453 = vmatprep.mubr.f32.mxu0 0.0
      %5454 = vmatmul.mubr.f32.gmra.mrb[0].mxu0 %v5281
      %v5455 = vpop.f32.mrb[0].mxu0
      %v5456 = vadd.f32 0.0, %v5455
      %v5457 = vpop.f32.mrb[0].mxu0
      %5458 = vmatprep.mubr.f32.mxu0 0.0
      %5459 = vmatmul.mubr.f32.gmra.mrb[0].mxu0 %v5284
      %v5460 = vpop.f32.mrb[0].mxu0
      %v5461 = vadd.f32 0.0, %v5460
      %v5462 = vpop.f32.mrb[0].mxu0
      %5463 = vmatprep.mubr.f32.mxu0 0.0
      %5464 = vmatmul.mubr.f32.gmra.mrb[0].mxu0 %v5287
      %v5465 = vpop.f32.mrb[0].mxu0
      %v5466 = vadd.f32 0.0, %v5465
      %v5467 = vpop.f32.mrb[0].mxu0
      %5468 = vmatprep.mubr.f32.mxu0 0.0
      %5469 = vmatmul.mubr.f32.gmra.mrb[0].mxu0 %v5290
      %v5470 = vpop.f32.mrb[0].mxu0
      %v5471 = vadd.f32 0.0, %v5470
      %v5472 = vpop.f32.mrb[0].mxu0
      %5473 = vmatprep.mubr.f32.mxu0 0.0
      %5474 = vmatmul.mubr.f32.gmra.mrb[0].mxu0 %v5293
      %v5475 = vpop.f32.mrb[0].mxu0
      %v5476 = vadd.f32 0.0, %v5475
      %v5477 = vpop.f32.mrb[0].mxu0
      %5478 = vmatprep.mubr.f32.mxu0 0.0
      %5479 = vmatmul.mubr.f32.gmra.mrb[0].mxu0 %v5296
      %v5480 = vpop.f32.mrb[0].mxu0
      %v5481 = vadd.f32 0.0, %v5480
      %v5482 = vpop.f32.mrb[0].mxu0
      %5483 = vmatprep.mubr.f32.mxu0 0.0
      %5484 = vmatmul.mubr.f32.gmra.mrb[0].mxu0 %v5299
      %v5485 = vpop.f32.mrb[0].mxu0
      %v5486 = vadd.f32 0.0, %v5485
      %v5487 = vpop.f32.mrb[0].mxu0
      %5488 = vmatprep.mubr.f32.mxu0 0.0
      %5489 = vmatmul.mubr.f32.gmra.mrb[0].mxu0 %v5302
      %v5490 = vpop.f32.mrb[0].mxu0
      %v5491 = vadd.f32 0.0, %v5490
      %v5492 = vpop.f32.mrb[0].mxu0
      %5493 = vmatprep.mubr.f32.mxu0 0.0
      %5494 = vmatmul.mubr.f32.gmra.mrb[0].mxu0 %v5305
      %v5495 = vpop.f32.mrb[0].mxu0
      %v5496 = vadd.f32 0.0, %v5495
      %v5497 = vpop.f32.mrb[0].mxu0
      %5498 = vmatprep.mubr.f32.mxu0 0.0
      %5499 = vmatmul.mubr.f32.gmra.mrb[0].mxu0 %v5308
      %v5500 = vpop.f32.mrb[0].mxu0
      %v5501 = vadd.f32 0.0, %v5500
      %v5502 = vpop.f32.mrb[0].mxu0
      %5503 = vmatprep.mubr.f32.mxu0 0.0
      %5504 = vmatmul.mubr.f32.gmra.mrb[0].mxu0 %v5311
      %v5505 = vpop.f32.mrb[0].mxu0
      %v5506 = vadd.f32 0.0, %v5505
      %v5507 = vpop.f32.mrb[0].mxu0
      %5508 = vmatprep.mubr.f32.mxu0 0.0
      %5509 = vmatmul.mubr.f32.gmra.mrb[0].mxu0 %v5314
      %v5510 = vpop.f32.mrb[0].mxu0
      %v5511 = vadd.f32 0.0, %v5510
      %v5512 = vpop.f32.mrb[0].mxu0
      %5513 = vmatprep.mubr.f32.mxu0 0.0
      %5514 = vmatmul.mubr.f32.gmra.mrb[0].mxu0 %v5317
      %v5515 = vpop.f32.mrb[0].mxu0
      %v5516 = vadd.f32 0.0, %v5515
      %v5517 = vpop.f32.mrb[0].mxu0
      %5518 = vmatprep.mubr.f32.mxu0 0.0
      %5519 = vmatmul.mubr.f32.gmra.mrb[0].mxu0 %v5320
      %v5520 = vpop.f32.mrb[0].mxu0
      %v5521 = vadd.f32 0.0, %v5520
      %v5522 = vpop.f32.mrb[0].mxu0
      %5523 = vmatprep.mubr.f32.mxu0 0.0
      %5524 = vmatmul.mubr.f32.gmra.mrb[0].mxu0 %v5323
      %v5525 = vpop.f32.mrb[0].mxu0
      %v5526 = vadd.f32 0.0, %v5525
      %v5527 = vpop.f32.mrb[0].mxu0
      %5528 = vmatprep.mubr.f32.mxu0 0.0
      %5529 = vmatmul.mubr.f32.gmra.mrb[0].mxu0 %v5326
      %v5530 = vpop.f32.mrb[0].mxu0
      %v5531 = vadd.f32 0.0, %v5530
      %v5532 = vpop.f32.mrb[0].mxu0
      %5533 = vmatprep.mubr.f32.mxu0 0.0
      %5534 = vmatmul.mubr.f32.gmra.mrb[0].mxu0 %v5329
      %v5535 = vpop.f32.mrb[0].mxu0
      %v5536 = vadd.f32 0.0, %v5535
      %v5537 = vpop.f32.mrb[0].mxu0
      %5538 = vmatprep.mubr.f32.mxu0 0.0
      %5539 = vmatmul.mubr.f32.gmra.mrb[0].mxu0 %v5332
      %v5540 = vpop.f32.mrb[0].mxu0
      %v5541 = vadd.f32 0.0, %v5540
      %v5542 = vpop.f32.mrb[0].mxu0
      %5543 = vmatprep.mubr.f32.mxu0 0.0
      %5544 = vmatmul.mubr.f32.gmra.mrb[0].mxu0 %v5335
      %v5545 = vpop.f32.mrb[0].mxu0
      %v5546 = vadd.f32 0.0, %v5545
      %v5547 = vpop.f32.mrb[0].mxu0
      %5548 = vmatprep.mubr.f32.mxu0 0.0
      %5549 = vmatmul.mubr.f32.gmra.mrb[0].mxu0 %v5338
      %v5550 = vpop.f32.mrb[0].mxu0
      %v5551 = vadd.f32 0.0, %v5550
      %v5552 = vpop.f32.mrb[0].mxu0
      %5553 = vmatprep.mubr.f32.mxu0 0.0
      %5554 = vmatmul.mubr.f32.gmra.mrb[0].mxu0 %v5341
      %v5555 = vpop.f32.mrb[0].mxu0
      %v5556 = vadd.f32 0.0, %v5555
      %v5557 = vpop.f32.mrb[0].mxu0
      %5558 = vmatprep.mubr.f32.mxu0 0.0
      %5559 = vmatmul.mubr.f32.gmra.mrb[0].mxu0 %v5344
      %v5560 = vpop.f32.mrb[0].mxu0
      %v5561 = vadd.f32 0.0, %v5560
      %v5562 = vpop.f32.mrb[0].mxu0
      %5563 = vmatprep.mubr.f32.mxu0 0.0
      %5564 = vmatmul.mubr.f32.gmra.mrb[0].mxu0 %v5347
      %v5565 = vpop.f32.mrb[0].mxu0
      %v5566 = vadd.f32 0.0, %v5565
      %v5567 = vpop.f32.mrb[0].mxu0
      %5568 = vmatprep.mubr.f32.mxu0 0.0
      %5569 = vmatmul.mubr.f32.gmra.mrb[0].mxu0 %v5350
      %v5570 = vpop.f32.mrb[0].mxu0
      %v5571 = vadd.f32 0.0, %v5570
      %v5572 = vpop.f32.mrb[0].mxu0
      %5573 = vmatprep.mubr.f32.mxu0 0.0
      %5574 = vmatmul.mubr.f32.gmra.mrb[0].mxu0 %v5353
      %v5575 = vpop.f32.mrb[0].mxu0
      %v5576 = vadd.f32 0.0, %v5575
      %v5577 = vpop.f32.mrb[0].mxu0
      %5578 = vmatprep.mubr.f32.mxu0 0.0
      %5579 = vmatmul.mubr.f32.gmra.mrb[0].mxu0 %v5356
      %v5580 = vpop.f32.mrb[0].mxu0
      %v5581 = vadd.f32 0.0, %v5580
      %v5582 = vpop.f32.mrb[0].mxu0
      %5583 = vmatprep.mubr.f32.mxu0 0.0
      %5584 = vmatmul.mubr.f32.gmra.mrb[0].mxu0 %v5359
      %v5585 = vpop.f32.mrb[0].mxu0
      %v5586 = vadd.f32 0.0, %v5585
      %v5587 = vpop.f32.mrb[0].mxu0
      %5588 = vdwg.mxu0
      %v5589 = vadd.f32 %v5199, %v5431
      %v5590 = vadd.f32 %v5200, %v5436
      %v5591 = vadd.f32 %v5201, %v5441
      %v5592 = vadd.f32 %v5202, %v5446
      %v5593 = vadd.f32 %v5203, %v5451
      %v5594 = vadd.f32 %v5204, %v5456
      %v5595 = vadd.f32 %v5205, %v5461
      %v5596 = vadd.f32 %v5206, %v5466
      %v5597 = vadd.f32 %v5207, %v5471
      %v5598 = vadd.f32 %v5208, %v5476
      %v5599 = vadd.f32 %v5209, %v5481
      %v5600 = vadd.f32 %v5210, %v5486
      %v5601 = vadd.f32 %v5211, %v5491
      %v5602 = vadd.f32 %v5212, %v5496
      %v5603 = vadd.f32 %v5213, %v5501
      %v5604 = vadd.f32 %v5214, %v5506
      %v5605 = vadd.f32 %v5215, %v5511
      %v5606 = vadd.f32 %v5216, %v5516
      %v5607 = vadd.f32 %v5217, %v5521
      %v5608 = vadd.f32 %v5218, %v5526
      %v5609 = vadd.f32 %v5219, %v5531
      %v5610 = vadd.f32 %v5220, %v5536
      %v5611 = vadd.f32 %v5221, %v5541
      %v5612 = vadd.f32 %v5222, %v5546
      %v5613 = vadd.f32 %v5223, %v5551
      %v5614 = vadd.f32 %v5224, %v5556
      %v5615 = vadd.f32 %v5225, %v5561
      %v5616 = vadd.f32 %v5226, %v5566
      %v5617 = vadd.f32 %v5227, %v5571
      %v5618 = vadd.f32 %v5228, %v5576
      %v5619 = vadd.f32 %v5229, %v5581
      %v5620 = vadd.f32 %v5230, %v5586
      %v5621 = vld [vmem:[%s1320 + $0xf] sm:$0xff]
      %v5622 = vld [vmem:[%s1320 + $0x17] sm:$0xff]
      %v5623 = vld [vmem:[%s1320 + $0x37] sm:$0xff]
      %v5624 = vld [vmem:[%s1320 + $0x3f] sm:$0xff]
      %v5625 = vld [vmem:[%s1320 + $0x5f] sm:$0xff]
      %v5626 = vld [vmem:[%s1320 + $0x67] sm:$0xff]
      %v5627 = vld [vmem:[%s1320 + $0x87] sm:$0xff]
      %v5628 = vld [vmem:[%s1320 + $0x8f] sm:$0xff]
      %v5629 = vld [vmem:[%s1320 + $0xaf] sm:$0xff]
      %v5630 = vld [vmem:[%s1320 + $0xb7] sm:$0xff]
      %v5631 = vld [vmem:[%s1320 + $0xd7] sm:$0xff]
      %v5632 = vld [vmem:[%s1320 + $0xdf] sm:$0xff]
      %v5633 = vld [vmem:[%s1320 + $0xff] sm:$0xff]
      %v5634 = vld [vmem:[%s1320 + $0x107] sm:$0xff]
      %v5635 = vld [vmem:[%s1320 + $0x127] sm:$0xff]
      %v5636 = vld [vmem:[%s1320 + $0x12f] sm:$0xff]
      %v5637 = vld [vmem:[%s1320 + $0x14f] sm:$0xff]
      %v5638 = vld [vmem:[%s1320 + $0x157] sm:$0xff]
      %v5639 = vld [vmem:[%s1320 + $0x177] sm:$0xff]
      %v5640 = vld [vmem:[%s1320 + $0x17f] sm:$0xff]
      %v5641 = vld [vmem:[%s1320 + $0x19f] sm:$0xff]
      %v5642 = vld [vmem:[%s1320 + $0x1a7] sm:$0xff]
      %v5643 = vld [vmem:[%s1320 + $0x1c7] sm:$0xff]
      %v5644 = vld [vmem:[%s1320 + $0x1cf] sm:$0xff]
      %v5645 = vld [vmem:[%s1320 + $0x1ef] sm:$0xff]
      %v5646 = vld [vmem:[%s1320 + $0x1f7] sm:$0xff]
      %v5647 = vld [vmem:[%s1320 + $0x217] sm:$0xff]
      %v5648 = vld [vmem:[%s1320 + $0x21f] sm:$0xff]
      %v5649 = vld [vmem:[%s1320 + $0x23f] sm:$0xff]
      %v5650 = vld [vmem:[%s1320 + $0x247] sm:$0xff]
      %v5651 = vld [vmem:[%s1320 + $0x267] sm:$0xff]
      %v5652 = vld [vmem:[%s1320 + $0x26f] sm:$0xff]
      %s5653 = scalar_lea.vmem %s1, 56
      %v5654 = vld [vmem:[%s5653] sm:$0xf]
      %v5656 = vsel %vm280, %v5621, 0
      %v5659 = vsel %vm280, %v5622, 0
      %v5662 = vsel %vm280, %v5623, 0
      %v5665 = vsel %vm280, %v5624, 0
      %v5668 = vsel %vm280, %v5625, 0
      %v5671 = vsel %vm280, %v5626, 0
      %v5674 = vsel %vm280, %v5627, 0
      %v5677 = vsel %vm280, %v5628, 0
      %v5680 = vsel %vm280, %v5629, 0
      %v5683 = vsel %vm280, %v5630, 0
      %v5686 = vsel %vm280, %v5631, 0
      %v5689 = vsel %vm280, %v5632, 0
      %v5692 = vsel %vm280, %v5633, 0
      %v5695 = vsel %vm280, %v5634, 0
      %v5698 = vsel %vm280, %v5635, 0
      %v5701 = vsel %vm280, %v5636, 0
      %v5704 = vsel %vm280, %v5637, 0
      %v5707 = vsel %vm280, %v5638, 0
      %v5710 = vsel %vm280, %v5639, 0
      %v5713 = vsel %vm280, %v5640, 0
      %v5716 = vsel %vm280, %v5641, 0
      %v5719 = vsel %vm280, %v5642, 0
      %v5722 = vsel %vm280, %v5643, 0
      %v5725 = vsel %vm280, %v5644, 0
      %v5728 = vsel %vm280, %v5645, 0
      %v5731 = vsel %vm280, %v5646, 0
      %v5734 = vsel %vm280, %v5647, 0
      %v5737 = vsel %vm280, %v5648, 0
      %v5740 = vsel %vm280, %v5649, 0
      %v5743 = vsel %vm280, %v5650, 0
      %v5746 = vsel %vm280, %v5651, 0
      %v5749 = vsel %vm280, %v5652, 0
      %v5752 = vsel %vm377, %v5654, 0
      %5754 = vmatprep.subr.mxu0 0.0
      %5755 = vmatpush1.msra.mxu0 %v5752
      %5756 = vmatprep.subr.mxu0 0.0
      %5757 = vmatpush1.msra.mxu0 0.0
      %5758 = vmatprep.subr.mxu0 0.0
      %5759 = vmatpush1.msra.mxu0 0.0
      %5760 = vmatprep.subr.mxu0 0.0
      %5761 = vmatpush1.msra.mxu0 0.0
      %5762 = vmatprep.subr.mxu0 0.0
      %5763 = vmatpush1.msra.mxu0 0.0
      %5764 = vmatprep.subr.mxu0 0.0
      %5765 = vmatpush1.msra.mxu0 0.0
      %5766 = vmatprep.subr.mxu0 0.0
      %5767 = vmatpush1.msra.mxu0 0.0
      %5768 = vmatprep.subr.mxu0 0.0
      %5769 = vmatpush1.msra.mxu0 0.0
      %5770 = vmatprep.subr.mxu0 0.0
      %5771 = vmatpush1.msra.mxu0 0.0
      %5772 = vmatprep.subr.mxu0 0.0
      %5773 = vmatpush1.msra.mxu0 0.0
      %5774 = vmatprep.subr.mxu0 0.0
      %5775 = vmatpush1.msra.mxu0 0.0
      %5776 = vmatprep.subr.mxu0 0.0
      %5777 = vmatpush1.msra.mxu0 0.0
      %5778 = vmatprep.subr.mxu0 0.0
      %5779 = vmatpush1.msra.mxu0 0.0
      %5780 = vmatprep.subr.mxu0 0.0
      %5781 = vmatpush1.msra.mxu0 0.0
      %5782 = vmatprep.subr.mxu0 0.0
      %5783 = vmatpush1.msra.mxu0 0.0
      %5784 = vmatprep.subr.mxu0 0.0
      %5785 = vmatpush1.msra.mxu0 0.0
      %5786 = vmatprep.subr.mxu0 0.0
      %5787 = vmatpush1.msra.mxu0 0.0
      %5788 = vmatprep.subr.mxu0 0.0
      %5789 = vmatpush1.msra.mxu0 0.0
      %5790 = vmatprep.subr.mxu0 0.0
      %5791 = vmatpush1.msra.mxu0 0.0
      %5792 = vmatprep.subr.mxu0 0.0
      %5793 = vmatpush1.msra.mxu0 0.0
      %5794 = vmatprep.subr.mxu0 0.0
      %5795 = vmatpush1.msra.mxu0 0.0
      %5796 = vmatprep.subr.mxu0 0.0
      %5797 = vmatpush1.msra.mxu0 0.0
      %5798 = vmatprep.subr.mxu0 0.0
      %5799 = vmatpush1.msra.mxu0 0.0
      %5800 = vmatprep.subr.mxu0 0.0
      %5801 = vmatpush1.msra.mxu0 0.0
      %5802 = vmatprep.subr.mxu0 0.0
      %5803 = vmatpush1.msra.mxu0 0.0
      %5804 = vmatprep.subr.mxu0 0.0
      %5805 = vmatpush1.msra.mxu0 0.0
      %5806 = vmatprep.subr.mxu0 0.0
      %5807 = vmatpush1.msra.mxu0 0.0
      %5808 = vmatprep.subr.mxu0 0.0
      %5809 = vmatpush1.msra.mxu0 0.0
      %5810 = vmatprep.subr.mxu0 0.0
      %5811 = vmatpush1.msra.mxu0 0.0
      %5812 = vmatprep.subr.mxu0 0.0
      %5813 = vmatpush1.msra.mxu0 0.0
      %5814 = vmatprep.subr.mxu0 0.0
      %5815 = vmatpush1.msra.mxu0 0.0
      %5816 = vmatprep.subr.mxu0 0.0
      %5817 = vmatpush1.msra.mxu0 0.0
      %5818 = vmatprep.mubr.f32.mxu0 0.0
      %5819 = vmatmul.mubr.f32.gmra.mrb[0].mxu0 %v5656
      %v5820 = vpop.f32.mrb[0].mxu0
      %v5821 = vadd.f32 0.0, %v5820
      %v5822 = vpop.f32.mrb[0].mxu0
      %5823 = vmatprep.mubr.f32.mxu0 0.0
      %5824 = vmatmul.mubr.f32.gmra.mrb[0].mxu0 %v5659
      %v5825 = vpop.f32.mrb[0].mxu0
      %v5826 = vadd.f32 0.0, %v5825
      %v5827 = vpop.f32.mrb[0].mxu0
      %5828 = vmatprep.mubr.f32.mxu0 0.0
      %5829 = vmatmul.mubr.f32.gmra.mrb[0].mxu0 %v5662
      %v5830 = vpop.f32.mrb[0].mxu0
      %v5831 = vadd.f32 0.0, %v5830
      %v5832 = vpop.f32.mrb[0].mxu0
      %5833 = vmatprep.mubr.f32.mxu0 0.0
      %5834 = vmatmul.mubr.f32.gmra.mrb[0].mxu0 %v5665
      %v5835 = vpop.f32.mrb[0].mxu0
      %v5836 = vadd.f32 0.0, %v5835
      %v5837 = vpop.f32.mrb[0].mxu0
      %5838 = vmatprep.mubr.f32.mxu0 0.0
      %5839 = vmatmul.mubr.f32.gmra.mrb[0].mxu0 %v5668
      %v5840 = vpop.f32.mrb[0].mxu0
      %v5841 = vadd.f32 0.0, %v5840
      %v5842 = vpop.f32.mrb[0].mxu0
      %5843 = vmatprep.mubr.f32.mxu0 0.0
      %5844 = vmatmul.mubr.f32.gmra.mrb[0].mxu0 %v5671
      %v5845 = vpop.f32.mrb[0].mxu0
      %v5846 = vadd.f32 0.0, %v5845
      %v5847 = vpop.f32.mrb[0].mxu0
      %5848 = vmatprep.mubr.f32.mxu0 0.0
      %5849 = vmatmul.mubr.f32.gmra.mrb[0].mxu0 %v5674
      %v5850 = vpop.f32.mrb[0].mxu0
      %v5851 = vadd.f32 0.0, %v5850
      %v5852 = vpop.f32.mrb[0].mxu0
      %5853 = vmatprep.mubr.f32.mxu0 0.0
      %5854 = vmatmul.mubr.f32.gmra.mrb[0].mxu0 %v5677
      %v5855 = vpop.f32.mrb[0].mxu0
      %v5856 = vadd.f32 0.0, %v5855
      %v5857 = vpop.f32.mrb[0].mxu0
      %5858 = vmatprep.mubr.f32.mxu0 0.0
      %5859 = vmatmul.mubr.f32.gmra.mrb[0].mxu0 %v5680
      %v5860 = vpop.f32.mrb[0].mxu0
      %v5861 = vadd.f32 0.0, %v5860
      %v5862 = vpop.f32.mrb[0].mxu0
      %5863 = vmatprep.mubr.f32.mxu0 0.0
      %5864 = vmatmul.mubr.f32.gmra.mrb[0].mxu0 %v5683
      %v5865 = vpop.f32.mrb[0].mxu0
      %v5866 = vadd.f32 0.0, %v5865
      %v5867 = vpop.f32.mrb[0].mxu0
      %5868 = vmatprep.mubr.f32.mxu0 0.0
      %5869 = vmatmul.mubr.f32.gmra.mrb[0].mxu0 %v5686
      %v5870 = vpop.f32.mrb[0].mxu0
      %v5871 = vadd.f32 0.0, %v5870
      %v5872 = vpop.f32.mrb[0].mxu0
      %5873 = vmatprep.mubr.f32.mxu0 0.0
      %5874 = vmatmul.mubr.f32.gmra.mrb[0].mxu0 %v5689
      %v5875 = vpop.f32.mrb[0].mxu0
      %v5876 = vadd.f32 0.0, %v5875
      %v5877 = vpop.f32.mrb[0].mxu0
      %5878 = vmatprep.mubr.f32.mxu0 0.0
      %5879 = vmatmul.mubr.f32.gmra.mrb[0].mxu0 %v5692
      %v5880 = vpop.f32.mrb[0].mxu0
      %v5881 = vadd.f32 0.0, %v5880
      %v5882 = vpop.f32.mrb[0].mxu0
      %5883 = vmatprep.mubr.f32.mxu0 0.0
      %5884 = vmatmul.mubr.f32.gmra.mrb[0].mxu0 %v5695
      %v5885 = vpop.f32.mrb[0].mxu0
      %v5886 = vadd.f32 0.0, %v5885
      %v5887 = vpop.f32.mrb[0].mxu0
      %5888 = vmatprep.mubr.f32.mxu0 0.0
      %5889 = vmatmul.mubr.f32.gmra.mrb[0].mxu0 %v5698
      %v5890 = vpop.f32.mrb[0].mxu0
      %v5891 = vadd.f32 0.0, %v5890
      %v5892 = vpop.f32.mrb[0].mxu0
      %5893 = vmatprep.mubr.f32.mxu0 0.0
      %5894 = vmatmul.mubr.f32.gmra.mrb[0].mxu0 %v5701
      %v5895 = vpop.f32.mrb[0].mxu0
      %v5896 = vadd.f32 0.0, %v5895
      %v5897 = vpop.f32.mrb[0].mxu0
      %5898 = vmatprep.mubr.f32.mxu0 0.0
      %5899 = vmatmul.mubr.f32.gmra.mrb[0].mxu0 %v5704
      %v5900 = vpop.f32.mrb[0].mxu0
      %v5901 = vadd.f32 0.0, %v5900
      %v5902 = vpop.f32.mrb[0].mxu0
      %5903 = vmatprep.mubr.f32.mxu0 0.0
      %5904 = vmatmul.mubr.f32.gmra.mrb[0].mxu0 %v5707
      %v5905 = vpop.f32.mrb[0].mxu0
      %v5906 = vadd.f32 0.0, %v5905
      %v5907 = vpop.f32.mrb[0].mxu0
      %5908 = vmatprep.mubr.f32.mxu0 0.0
      %5909 = vmatmul.mubr.f32.gmra.mrb[0].mxu0 %v5710
      %v5910 = vpop.f32.mrb[0].mxu0
      %v5911 = vadd.f32 0.0, %v5910
      %v5912 = vpop.f32.mrb[0].mxu0
      %5913 = vmatprep.mubr.f32.mxu0 0.0
      %5914 = vmatmul.mubr.f32.gmra.mrb[0].mxu0 %v5713
      %v5915 = vpop.f32.mrb[0].mxu0
      %v5916 = vadd.f32 0.0, %v5915
      %v5917 = vpop.f32.mrb[0].mxu0
      %5918 = vmatprep.mubr.f32.mxu0 0.0
      %5919 = vmatmul.mubr.f32.gmra.mrb[0].mxu0 %v5716
      %v5920 = vpop.f32.mrb[0].mxu0
      %v5921 = vadd.f32 0.0, %v5920
      %v5922 = vpop.f32.mrb[0].mxu0
      %5923 = vmatprep.mubr.f32.mxu0 0.0
      %5924 = vmatmul.mubr.f32.gmra.mrb[0].mxu0 %v5719
      %v5925 = vpop.f32.mrb[0].mxu0
      %v5926 = vadd.f32 0.0, %v5925
      %v5927 = vpop.f32.mrb[0].mxu0
      %5928 = vmatprep.mubr.f32.mxu0 0.0
      %5929 = vmatmul.mubr.f32.gmra.mrb[0].mxu0 %v5722
      %v5930 = vpop.f32.mrb[0].mxu0
      %v5931 = vadd.f32 0.0, %v5930
      %v5932 = vpop.f32.mrb[0].mxu0
      %5933 = vmatprep.mubr.f32.mxu0 0.0
      %5934 = vmatmul.mubr.f32.gmra.mrb[0].mxu0 %v5725
      %v5935 = vpop.f32.mrb[0].mxu0
      %v5936 = vadd.f32 0.0, %v5935
      %v5937 = vpop.f32.mrb[0].mxu0
      %5938 = vmatprep.mubr.f32.mxu0 0.0
      %5939 = vmatmul.mubr.f32.gmra.mrb[0].mxu0 %v5728
      %v5940 = vpop.f32.mrb[0].mxu0
      %v5941 = vadd.f32 0.0, %v5940
      %v5942 = vpop.f32.mrb[0].mxu0
      %5943 = vmatprep.mubr.f32.mxu0 0.0
      %5944 = vmatmul.mubr.f32.gmra.mrb[0].mxu0 %v5731
      %v5945 = vpop.f32.mrb[0].mxu0
      %v5946 = vadd.f32 0.0, %v5945
      %v5947 = vpop.f32.mrb[0].mxu0
      %5948 = vmatprep.mubr.f32.mxu0 0.0
      %5949 = vmatmul.mubr.f32.gmra.mrb[0].mxu0 %v5734
      %v5950 = vpop.f32.mrb[0].mxu0
      %v5951 = vadd.f32 0.0, %v5950
      %v5952 = vpop.f32.mrb[0].mxu0
      %5953 = vmatprep.mubr.f32.mxu0 0.0
      %5954 = vmatmul.mubr.f32.gmra.mrb[0].mxu0 %v5737
      %v5955 = vpop.f32.mrb[0].mxu0
      %v5956 = vadd.f32 0.0, %v5955
      %v5957 = vpop.f32.mrb[0].mxu0
      %5958 = vmatprep.mubr.f32.mxu0 0.0
      %5959 = vmatmul.mubr.f32.gmra.mrb[0].mxu0 %v5740
      %v5960 = vpop.f32.mrb[0].mxu0
      %v5961 = vadd.f32 0.0, %v5960
      %v5962 = vpop.f32.mrb[0].mxu0
      %5963 = vmatprep.mubr.f32.mxu0 0.0
      %5964 = vmatmul.mubr.f32.gmra.mrb[0].mxu0 %v5743
      %v5965 = vpop.f32.mrb[0].mxu0
      %v5966 = vadd.f32 0.0, %v5965
      %v5967 = vpop.f32.mrb[0].mxu0
      %5968 = vmatprep.mubr.f32.mxu0 0.0
      %5969 = vmatmul.mubr.f32.gmra.mrb[0].mxu0 %v5746
      %v5970 = vpop.f32.mrb[0].mxu0
      %v5971 = vadd.f32 0.0, %v5970
      %v5972 = vpop.f32.mrb[0].mxu0
      %5973 = vmatprep.mubr.f32.mxu0 0.0
      %5974 = vmatmul.mubr.f32.gmra.mrb[0].mxu0 %v5749
      %v5975 = vpop.f32.mrb[0].mxu0
      %v5976 = vadd.f32 0.0, %v5975
      %v5977 = vpop.f32.mrb[0].mxu0
      %5978 = vdwg.mxu0
      %v5979 = vadd.f32 %v5589, %v5821
      %v5980 = vadd.f32 %v5590, %v5826
      %v5981 = vadd.f32 %v5591, %v5831
      %v5982 = vadd.f32 %v5592, %v5836
      %v5983 = vadd.f32 %v5593, %v5841
      %v5984 = vadd.f32 %v5594, %v5846
      %v5985 = vadd.f32 %v5595, %v5851
      %v5986 = vadd.f32 %v5596, %v5856
      %v5987 = vadd.f32 %v5597, %v5861
      %v5988 = vadd.f32 %v5598, %v5866
      %v5989 = vadd.f32 %v5599, %v5871
      %v5990 = vadd.f32 %v5600, %v5876
      %v5991 = vadd.f32 %v5601, %v5881
      %v5992 = vadd.f32 %v5602, %v5886
      %v5993 = vadd.f32 %v5603, %v5891
      %v5994 = vadd.f32 %v5604, %v5896
      %v5995 = vadd.f32 %v5605, %v5901
      %v5996 = vadd.f32 %v5606, %v5906
      %v5997 = vadd.f32 %v5607, %v5911
      %v5998 = vadd.f32 %v5608, %v5916
      %v5999 = vadd.f32 %v5609, %v5921
      %v6000 = vadd.f32 %v5610, %v5926
      %v6001 = vadd.f32 %v5611, %v5931
      %v6002 = vadd.f32 %v5612, %v5936
      %v6003 = vadd.f32 %v5613, %v5941
      %v6004 = vadd.f32 %v5614, %v5946
      %v6005 = vadd.f32 %v5615, %v5951
      %v6006 = vadd.f32 %v5616, %v5956
      %v6007 = vadd.f32 %v5617, %v5961
      %v6008 = vadd.f32 %v5618, %v5966
      %v6009 = vadd.f32 %v5619, %v5971
      %v6010 = vadd.f32 %v5620, %v5976
      %s6011 = scalar_lea.vmem %s203, 600
      %v6012 = vld [vmem:[%s6011 + $0x3] sm:$0xff]
      %v6013 = vld [vmem:[%s6011 + $0xb] sm:$0xff]
      %v6014 = vld [vmem:[%s6011 + $0x2b] sm:$0xff]
      %v6015 = vld [vmem:[%s6011 + $0x33] sm:$0xff]
      %v6016 = vld [vmem:[%s6011 + $0x53] sm:$0xff]
      %v6017 = vld [vmem:[%s6011 + $0x5b] sm:$0xff]
      %v6018 = vld [vmem:[%s6011 + $0x7b] sm:$0xff]
      %v6019 = vld [vmem:[%s6011 + $0x83] sm:$0xff]
      %v6020 = vld [vmem:[%s6011 + $0xa3] sm:$0xff]
      %v6021 = vld [vmem:[%s6011 + $0xab] sm:$0xff]
      %v6022 = vld [vmem:[%s6011 + $0xcb] sm:$0xff]
      %v6023 = vld [vmem:[%s6011 + $0xd3] sm:$0xff]
      %v6024 = vld [vmem:[%s6011 + $0xf3] sm:$0xff]
      %v6025 = vld [vmem:[%s6011 + $0xfb] sm:$0xff]
      %v6026 = vld [vmem:[%s6011 + $0x11b] sm:$0xff]
      %v6027 = vld [vmem:[%s6011 + $0x123] sm:$0xff]
      %v6028 = vld [vmem:[%s6011 + $0x143] sm:$0xff]
      %v6029 = vld [vmem:[%s6011 + $0x14b] sm:$0xff]
      %v6030 = vld [vmem:[%s6011 + $0x16b] sm:$0xff]
      %v6031 = vld [vmem:[%s6011 + $0x173] sm:$0xff]
      %v6032 = vld [vmem:[%s6011 + $0x193] sm:$0xff]
      %v6033 = vld [vmem:[%s6011 + $0x19b] sm:$0xff]
      %v6034 = vld [vmem:[%s6011 + $0x1bb] sm:$0xff]
      %v6035 = vld [vmem:[%s6011 + $0x1c3] sm:$0xff]
      %v6036 = vld [vmem:[%s6011 + $0x1e3] sm:$0xff]
      %v6037 = vld [vmem:[%s6011 + $0x1eb] sm:$0xff]
      %v6038 = vld [vmem:[%s6011 + $0x20b] sm:$0xff]
      %v6039 = vld [vmem:[%s6011 + $0x213] sm:$0xff]
      %v6040 = vld [vmem:[%s6011 + $0x233] sm:$0xff]
      %v6041 = vld [vmem:[%s6011 + $0x23b] sm:$0xff]
      %v6042 = vld [vmem:[%s6011 + $0x25b] sm:$0xff]
      %v6043 = vld [vmem:[%s6011 + $0x263] sm:$0xff]
      %s6044 = scalar_lea.vmem %s1, 60
      %v6045 = vld [vmem:[%s6044] sm:$0xf]
      %v6047 = vsel %vm280, %v6012, 0
      %v6050 = vsel %vm280, %v6013, 0
      %v6053 = vsel %vm280, %v6014, 0
      %v6056 = vsel %vm280, %v6015, 0
      %v6059 = vsel %vm280, %v6016, 0
      %v6062 = vsel %vm280, %v6017, 0
      %v6065 = vsel %vm280, %v6018, 0
      %v6068 = vsel %vm280, %v6019, 0
      %v6071 = vsel %vm280, %v6020, 0
      %v6074 = vsel %vm280, %v6021, 0
      %v6077 = vsel %vm280, %v6022, 0
      %v6080 = vsel %vm280, %v6023, 0
      %v6083 = vsel %vm280, %v6024, 0
      %v6086 = vsel %vm280, %v6025, 0
      %v6089 = vsel %vm280, %v6026, 0
      %v6092 = vsel %vm280, %v6027, 0
      %v6095 = vsel %vm280, %v6028, 0
      %v6098 = vsel %vm280, %v6029, 0
      %v6101 = vsel %vm280, %v6030, 0
      %v6104 = vsel %vm280, %v6031, 0
      %v6107 = vsel %vm280, %v6032, 0
      %v6110 = vsel %vm280, %v6033, 0
      %v6113 = vsel %vm280, %v6034, 0
      %v6116 = vsel %vm280, %v6035, 0
      %v6119 = vsel %vm280, %v6036, 0
      %v6122 = vsel %vm280, %v6037, 0
      %v6125 = vsel %vm280, %v6038, 0
      %v6128 = vsel %vm280, %v6039, 0
      %v6131 = vsel %vm280, %v6040, 0
      %v6134 = vsel %vm280, %v6041, 0
      %v6137 = vsel %vm280, %v6042, 0
      %v6140 = vsel %vm280, %v6043, 0
      %v6143 = vsel %vm377, %v6045, 0
      %6145 = vmatprep.subr.mxu0 0.0
      %6146 = vmatpush1.msra.mxu0 %v6143
      %6147 = vmatprep.subr.mxu0 0.0
      %6148 = vmatpush1.msra.mxu0 0.0
      %6149 = vmatprep.subr.mxu0 0.0
      %6150 = vmatpush1.msra.mxu0 0.0
      %6151 = vmatprep.subr.mxu0 0.0
      %6152 = vmatpush1.msra.mxu0 0.0
      %6153 = vmatprep.subr.mxu0 0.0
      %6154 = vmatpush1.msra.mxu0 0.0
      %6155 = vmatprep.subr.mxu0 0.0
      %6156 = vmatpush1.msra.mxu0 0.0
      %6157 = vmatprep.subr.mxu0 0.0
      %6158 = vmatpush1.msra.mxu0 0.0
      %6159 = vmatprep.subr.mxu0 0.0
      %6160 = vmatpush1.msra.mxu0 0.0
      %6161 = vmatprep.subr.mxu0 0.0
      %6162 = vmatpush1.msra.mxu0 0.0
      %6163 = vmatprep.subr.mxu0 0.0
      %6164 = vmatpush1.msra.mxu0 0.0
      %6165 = vmatprep.subr.mxu0 0.0
      %6166 = vmatpush1.msra.mxu0 0.0
      %6167 = vmatprep.subr.mxu0 0.0
      %6168 = vmatpush1.msra.mxu0 0.0
      %6169 = vmatprep.subr.mxu0 0.0
      %6170 = vmatpush1.msra.mxu0 0.0
      %6171 = vmatprep.subr.mxu0 0.0
      %6172 = vmatpush1.msra.mxu0 0.0
      %6173 = vmatprep.subr.mxu0 0.0
      %6174 = vmatpush1.msra.mxu0 0.0
      %6175 = vmatprep.subr.mxu0 0.0
      %6176 = vmatpush1.msra.mxu0 0.0
      %6177 = vmatprep.subr.mxu0 0.0
      %6178 = vmatpush1.msra.mxu0 0.0
      %6179 = vmatprep.subr.mxu0 0.0
      %6180 = vmatpush1.msra.mxu0 0.0
      %6181 = vmatprep.subr.mxu0 0.0
      %6182 = vmatpush1.msra.mxu0 0.0
      %6183 = vmatprep.subr.mxu0 0.0
      %6184 = vmatpush1.msra.mxu0 0.0
      %6185 = vmatprep.subr.mxu0 0.0
      %6186 = vmatpush1.msra.mxu0 0.0
      %6187 = vmatprep.subr.mxu0 0.0
      %6188 = vmatpush1.msra.mxu0 0.0
      %6189 = vmatprep.subr.mxu0 0.0
      %6190 = vmatpush1.msra.mxu0 0.0
      %6191 = vmatprep.subr.mxu0 0.0
      %6192 = vmatpush1.msra.mxu0 0.0
      %6193 = vmatprep.subr.mxu0 0.0
      %6194 = vmatpush1.msra.mxu0 0.0
      %6195 = vmatprep.subr.mxu0 0.0
      %6196 = vmatpush1.msra.mxu0 0.0
      %6197 = vmatprep.subr.mxu0 0.0
      %6198 = vmatpush1.msra.mxu0 0.0
      %6199 = vmatprep.subr.mxu0 0.0
      %6200 = vmatpush1.msra.mxu0 0.0
      %6201 = vmatprep.subr.mxu0 0.0
      %6202 = vmatpush1.msra.mxu0 0.0
      %6203 = vmatprep.subr.mxu0 0.0
      %6204 = vmatpush1.msra.mxu0 0.0
      %6205 = vmatprep.subr.mxu0 0.0
      %6206 = vmatpush1.msra.mxu0 0.0
      %6207 = vmatprep.subr.mxu0 0.0
      %6208 = vmatpush1.msra.mxu0 0.0
      %6209 = vmatprep.mubr.f32.mxu0 0.0
      %6210 = vmatmul.mubr.f32.gmra.mrb[0].mxu0 %v6047
      %v6211 = vpop.f32.mrb[0].mxu0
      %v6212 = vadd.f32 0.0, %v6211
      %v6213 = vpop.f32.mrb[0].mxu0
      %6214 = vmatprep.mubr.f32.mxu0 0.0
      %6215 = vmatmul.mubr.f32.gmra.mrb[0].mxu0 %v6050
      %v6216 = vpop.f32.mrb[0].mxu0
      %v6217 = vadd.f32 0.0, %v6216
      %v6218 = vpop.f32.mrb[0].mxu0
      %6219 = vmatprep.mubr.f32.mxu0 0.0
      %6220 = vmatmul.mubr.f32.gmra.mrb[0].mxu0 %v6053
      %v6221 = vpop.f32.mrb[0].mxu0
      %v6222 = vadd.f32 0.0, %v6221
      %v6223 = vpop.f32.mrb[0].mxu0
      %6224 = vmatprep.mubr.f32.mxu0 0.0
      %6225 = vmatmul.mubr.f32.gmra.mrb[0].mxu0 %v6056
      %v6226 = vpop.f32.mrb[0].mxu0
      %v6227 = vadd.f32 0.0, %v6226
      %v6228 = vpop.f32.mrb[0].mxu0
      %6229 = vmatprep.mubr.f32.mxu0 0.0
      %6230 = vmatmul.mubr.f32.gmra.mrb[0].mxu0 %v6059
      %v6231 = vpop.f32.mrb[0].mxu0
      %v6232 = vadd.f32 0.0, %v6231
      %v6233 = vpop.f32.mrb[0].mxu0
      %6234 = vmatprep.mubr.f32.mxu0 0.0
      %6235 = vmatmul.mubr.f32.gmra.mrb[0].mxu0 %v6062
      %v6236 = vpop.f32.mrb[0].mxu0
      %v6237 = vadd.f32 0.0, %v6236
      %v6238 = vpop.f32.mrb[0].mxu0
      %6239 = vmatprep.mubr.f32.mxu0 0.0
      %6240 = vmatmul.mubr.f32.gmra.mrb[0].mxu0 %v6065
      %v6241 = vpop.f32.mrb[0].mxu0
      %v6242 = vadd.f32 0.0, %v6241
      %v6243 = vpop.f32.mrb[0].mxu0
      %6244 = vmatprep.mubr.f32.mxu0 0.0
      %6245 = vmatmul.mubr.f32.gmra.mrb[0].mxu0 %v6068
      %v6246 = vpop.f32.mrb[0].mxu0
      %v6247 = vadd.f32 0.0, %v6246
      %v6248 = vpop.f32.mrb[0].mxu0
      %6249 = vmatprep.mubr.f32.mxu0 0.0
      %6250 = vmatmul.mubr.f32.gmra.mrb[0].mxu0 %v6071
      %v6251 = vpop.f32.mrb[0].mxu0
      %v6252 = vadd.f32 0.0, %v6251
      %v6253 = vpop.f32.mrb[0].mxu0
      %6254 = vmatprep.mubr.f32.mxu0 0.0
      %6255 = vmatmul.mubr.f32.gmra.mrb[0].mxu0 %v6074
      %v6256 = vpop.f32.mrb[0].mxu0
      %v6257 = vadd.f32 0.0, %v6256
      %v6258 = vpop.f32.mrb[0].mxu0
      %6259 = vmatprep.mubr.f32.mxu0 0.0
      %6260 = vmatmul.mubr.f32.gmra.mrb[0].mxu0 %v6077
      %v6261 = vpop.f32.mrb[0].mxu0
      %v6262 = vadd.f32 0.0, %v6261
      %v6263 = vpop.f32.mrb[0].mxu0
      %6264 = vmatprep.mubr.f32.mxu0 0.0
      %6265 = vmatmul.mubr.f32.gmra.mrb[0].mxu0 %v6080
      %v6266 = vpop.f32.mrb[0].mxu0
      %v6267 = vadd.f32 0.0, %v6266
      %v6268 = vpop.f32.mrb[0].mxu0
      %6269 = vmatprep.mubr.f32.mxu0 0.0
      %6270 = vmatmul.mubr.f32.gmra.mrb[0].mxu0 %v6083
      %v6271 = vpop.f32.mrb[0].mxu0
      %v6272 = vadd.f32 0.0, %v6271
      %v6273 = vpop.f32.mrb[0].mxu0
      %6274 = vmatprep.mubr.f32.mxu0 0.0
      %6275 = vmatmul.mubr.f32.gmra.mrb[0].mxu0 %v6086
      %v6276 = vpop.f32.mrb[0].mxu0
      %v6277 = vadd.f32 0.0, %v6276
      %v6278 = vpop.f32.mrb[0].mxu0
      %6279 = vmatprep.mubr.f32.mxu0 0.0
      %6280 = vmatmul.mubr.f32.gmra.mrb[0].mxu0 %v6089
      %v6281 = vpop.f32.mrb[0].mxu0
      %v6282 = vadd.f32 0.0, %v6281
      %v6283 = vpop.f32.mrb[0].mxu0
      %6284 = vmatprep.mubr.f32.mxu0 0.0
      %6285 = vmatmul.mubr.f32.gmra.mrb[0].mxu0 %v6092
      %v6286 = vpop.f32.mrb[0].mxu0
      %v6287 = vadd.f32 0.0, %v6286
      %v6288 = vpop.f32.mrb[0].mxu0
      %6289 = vmatprep.mubr.f32.mxu0 0.0
      %6290 = vmatmul.mubr.f32.gmra.mrb[0].mxu0 %v6095
      %v6291 = vpop.f32.mrb[0].mxu0
      %v6292 = vadd.f32 0.0, %v6291
      %v6293 = vpop.f32.mrb[0].mxu0
      %6294 = vmatprep.mubr.f32.mxu0 0.0
      %6295 = vmatmul.mubr.f32.gmra.mrb[0].mxu0 %v6098
      %v6296 = vpop.f32.mrb[0].mxu0
      %v6297 = vadd.f32 0.0, %v6296
      %v6298 = vpop.f32.mrb[0].mxu0
      %6299 = vmatprep.mubr.f32.mxu0 0.0
      %6300 = vmatmul.mubr.f32.gmra.mrb[0].mxu0 %v6101
      %v6301 = vpop.f32.mrb[0].mxu0
      %v6302 = vadd.f32 0.0, %v6301
      %v6303 = vpop.f32.mrb[0].mxu0
      %6304 = vmatprep.mubr.f32.mxu0 0.0
      %6305 = vmatmul.mubr.f32.gmra.mrb[0].mxu0 %v6104
      %v6306 = vpop.f32.mrb[0].mxu0
      %v6307 = vadd.f32 0.0, %v6306
      %v6308 = vpop.f32.mrb[0].mxu0
      %6309 = vmatprep.mubr.f32.mxu0 0.0
      %6310 = vmatmul.mubr.f32.gmra.mrb[0].mxu0 %v6107
      %v6311 = vpop.f32.mrb[0].mxu0
      %v6312 = vadd.f32 0.0, %v6311
      %v6313 = vpop.f32.mrb[0].mxu0
      %6314 = vmatprep.mubr.f32.mxu0 0.0
      %6315 = vmatmul.mubr.f32.gmra.mrb[0].mxu0 %v6110
      %v6316 = vpop.f32.mrb[0].mxu0
      %v6317 = vadd.f32 0.0, %v6316
      %v6318 = vpop.f32.mrb[0].mxu0
      %6319 = vmatprep.mubr.f32.mxu0 0.0
      %6320 = vmatmul.mubr.f32.gmra.mrb[0].mxu0 %v6113
      %v6321 = vpop.f32.mrb[0].mxu0
      %v6322 = vadd.f32 0.0, %v6321
      %v6323 = vpop.f32.mrb[0].mxu0
      %6324 = vmatprep.mubr.f32.mxu0 0.0
      %6325 = vmatmul.mubr.f32.gmra.mrb[0].mxu0 %v6116
      %v6326 = vpop.f32.mrb[0].mxu0
      %v6327 = vadd.f32 0.0, %v6326
      %v6328 = vpop.f32.mrb[0].mxu0
      %6329 = vmatprep.mubr.f32.mxu0 0.0
      %6330 = vmatmul.mubr.f32.gmra.mrb[0].mxu0 %v6119
      %v6331 = vpop.f32.mrb[0].mxu0
      %v6332 = vadd.f32 0.0, %v6331
      %v6333 = vpop.f32.mrb[0].mxu0
      %6334 = vmatprep.mubr.f32.mxu0 0.0
      %6335 = vmatmul.mubr.f32.gmra.mrb[0].mxu0 %v6122
      %v6336 = vpop.f32.mrb[0].mxu0
      %v6337 = vadd.f32 0.0, %v6336
      %v6338 = vpop.f32.mrb[0].mxu0
      %6339 = vmatprep.mubr.f32.mxu0 0.0
      %6340 = vmatmul.mubr.f32.gmra.mrb[0].mxu0 %v6125
      %v6341 = vpop.f32.mrb[0].mxu0
      %v6342 = vadd.f32 0.0, %v6341
      %v6343 = vpop.f32.mrb[0].mxu0
      %6344 = vmatprep.mubr.f32.mxu0 0.0
      %6345 = vmatmul.mubr.f32.gmra.mrb[0].mxu0 %v6128
      %v6346 = vpop.f32.mrb[0].mxu0
      %v6347 = vadd.f32 0.0, %v6346
      %v6348 = vpop.f32.mrb[0].mxu0
      %6349 = vmatprep.mubr.f32.mxu0 0.0
      %6350 = vmatmul.mubr.f32.gmra.mrb[0].mxu0 %v6131
      %v6351 = vpop.f32.mrb[0].mxu0
      %v6352 = vadd.f32 0.0, %v6351
      %v6353 = vpop.f32.mrb[0].mxu0
      %6354 = vmatprep.mubr.f32.mxu0 0.0
      %6355 = vmatmul.mubr.f32.gmra.mrb[0].mxu0 %v6134
      %v6356 = vpop.f32.mrb[0].mxu0
      %v6357 = vadd.f32 0.0, %v6356
      %v6358 = vpop.f32.mrb[0].mxu0
      %6359 = vmatprep.mubr.f32.mxu0 0.0
      %6360 = vmatmul.mubr.f32.gmra.mrb[0].mxu0 %v6137
      %v6361 = vpop.f32.mrb[0].mxu0
      %v6362 = vadd.f32 0.0, %v6361
      %v6363 = vpop.f32.mrb[0].mxu0
      %6364 = vmatprep.mubr.f32.mxu0 0.0
      %6365 = vmatmul.mubr.f32.gmra.mrb[0].mxu0 %v6140
      %v6366 = vpop.f32.mrb[0].mxu0
      %v6367 = vadd.f32 0.0, %v6366
      %v6368 = vpop.f32.mrb[0].mxu0
      %6369 = vdwg.mxu0
      %v6370 = vadd.f32 %v5979, %v6212
      %v6371 = vadd.f32 %v5980, %v6217
      %v6372 = vadd.f32 %v5981, %v6222
      %v6373 = vadd.f32 %v5982, %v6227
      %v6374 = vadd.f32 %v5983, %v6232
      %v6375 = vadd.f32 %v5984, %v6237
      %v6376 = vadd.f32 %v5985, %v6242
      %v6377 = vadd.f32 %v5986, %v6247
      %v6378 = vadd.f32 %v5987, %v6252
      %v6379 = vadd.f32 %v5988, %v6257
      %v6380 = vadd.f32 %v5989, %v6262
      %v6381 = vadd.f32 %v5990, %v6267
      %v6382 = vadd.f32 %v5991, %v6272
      %v6383 = vadd.f32 %v5992, %v6277
      %v6384 = vadd.f32 %v5993, %v6282
      %v6385 = vadd.f32 %v5994, %v6287
      %v6386 = vadd.f32 %v5995, %v6292
      %v6387 = vadd.f32 %v5996, %v6297
      %v6388 = vadd.f32 %v5997, %v6302
      %v6389 = vadd.f32 %v5998, %v6307
      %v6390 = vadd.f32 %v5999, %v6312
      %v6391 = vadd.f32 %v6000, %v6317
      %v6392 = vadd.f32 %v6001, %v6322
      %v6393 = vadd.f32 %v6002, %v6327
      %v6394 = vadd.f32 %v6003, %v6332
      %v6395 = vadd.f32 %v6004, %v6337
      %v6396 = vadd.f32 %v6005, %v6342
      %v6397 = vadd.f32 %v6006, %v6347
      %v6398 = vadd.f32 %v6007, %v6352
      %v6399 = vadd.f32 %v6008, %v6357
      %v6400 = vadd.f32 %v6009, %v6362
      %v6401 = vadd.f32 %v6010, %v6367
      %v6402 = vld [vmem:[%s6011 + $0x9] sm:$0xff]
      %v6403 = vld [vmem:[%s6011 + $0x11] sm:$0xff]
      %v6404 = vld [vmem:[%s6011 + $0x31] sm:$0xff]
      %v6405 = vld [vmem:[%s6011 + $0x39] sm:$0xff]
      %v6406 = vld [vmem:[%s6011 + $0x59] sm:$0xff]
      %v6407 = vld [vmem:[%s6011 + $0x61] sm:$0xff]
      %v6408 = vld [vmem:[%s6011 + $0x81] sm:$0xff]
      %v6409 = vld [vmem:[%s6011 + $0x89] sm:$0xff]
      %v6410 = vld [vmem:[%s6011 + $0xa9] sm:$0xff]
      %v6411 = vld [vmem:[%s6011 + $0xb1] sm:$0xff]
      %v6412 = vld [vmem:[%s6011 + $0xd1] sm:$0xff]
      %v6413 = vld [vmem:[%s6011 + $0xd9] sm:$0xff]
      %v6414 = vld [vmem:[%s6011 + $0xf9] sm:$0xff]
      %v6415 = vld [vmem:[%s6011 + $0x101] sm:$0xff]
      %v6416 = vld [vmem:[%s6011 + $0x121] sm:$0xff]
      %v6417 = vld [vmem:[%s6011 + $0x129] sm:$0xff]
      %v6418 = vld [vmem:[%s6011 + $0x149] sm:$0xff]
      %v6419 = vld [vmem:[%s6011 + $0x151] sm:$0xff]
      %v6420 = vld [vmem:[%s6011 + $0x171] sm:$0xff]
      %v6421 = vld [vmem:[%s6011 + $0x179] sm:$0xff]
      %v6422 = vld [vmem:[%s6011 + $0x199] sm:$0xff]
      %v6423 = vld [vmem:[%s6011 + $0x1a1] sm:$0xff]
      %v6424 = vld [vmem:[%s6011 + $0x1c1] sm:$0xff]
      %v6425 = vld [vmem:[%s6011 + $0x1c9] sm:$0xff]
      %v6426 = vld [vmem:[%s6011 + $0x1e9] sm:$0xff]
      %v6427 = vld [vmem:[%s6011 + $0x1f1] sm:$0xff]
      %v6428 = vld [vmem:[%s6011 + $0x211] sm:$0xff]
      %v6429 = vld [vmem:[%s6011 + $0x219] sm:$0xff]
      %v6430 = vld [vmem:[%s6011 + $0x239] sm:$0xff]
      %v6431 = vld [vmem:[%s6011 + $0x241] sm:$0xff]
      %v6432 = vld [vmem:[%s6011 + $0x261] sm:$0xff]
      %v6433 = vld [vmem:[%s6011 + $0x269] sm:$0xff]
      %s6434 = scalar_lea.vmem %s1, 64
      %v6435 = vld [vmem:[%s6434] sm:$0xf]
      %v6437 = vsel %vm280, %v6402, 0
      %v6440 = vsel %vm280, %v6403, 0
      %v6443 = vsel %vm280, %v6404, 0
      %v6446 = vsel %vm280, %v6405, 0
      %v6449 = vsel %vm280, %v6406, 0
      %v6452 = vsel %vm280, %v6407, 0
      %v6455 = vsel %vm280, %v6408, 0
      %v6458 = vsel %vm280, %v6409, 0
      %v6461 = vsel %vm280, %v6410, 0
      %v6464 = vsel %vm280, %v6411, 0
      %v6467 = vsel %vm280, %v6412, 0
      %v6470 = vsel %vm280, %v6413, 0
      %v6473 = vsel %vm280, %v6414, 0
      %v6476 = vsel %vm280, %v6415, 0
      %v6479 = vsel %vm280, %v6416, 0
      %v6482 = vsel %vm280, %v6417, 0
      %v6485 = vsel %vm280, %v6418, 0
      %v6488 = vsel %vm280, %v6419, 0
      %v6491 = vsel %vm280, %v6420, 0
      %v6494 = vsel %vm280, %v6421, 0
      %v6497 = vsel %vm280, %v6422, 0
      %v6500 = vsel %vm280, %v6423, 0
      %v6503 = vsel %vm280, %v6424, 0
      %v6506 = vsel %vm280, %v6425, 0
      %v6509 = vsel %vm280, %v6426, 0
      %v6512 = vsel %vm280, %v6427, 0
      %v6515 = vsel %vm280, %v6428, 0
      %v6518 = vsel %vm280, %v6429, 0
      %v6521 = vsel %vm280, %v6430, 0
      %v6524 = vsel %vm280, %v6431, 0
      %v6527 = vsel %vm280, %v6432, 0
      %v6530 = vsel %vm280, %v6433, 0
      %v6533 = vsel %vm377, %v6435, 0
      %6535 = vmatprep.subr.mxu0 0.0
      %6536 = vmatpush1.msra.mxu0 %v6533
      %6537 = vmatprep.subr.mxu0 0.0
      %6538 = vmatpush1.msra.mxu0 0.0
      %6539 = vmatprep.subr.mxu0 0.0
      %6540 = vmatpush1.msra.mxu0 0.0
      %6541 = vmatprep.subr.mxu0 0.0
      %6542 = vmatpush1.msra.mxu0 0.0
      %6543 = vmatprep.subr.mxu0 0.0
      %6544 = vmatpush1.msra.mxu0 0.0
      %6545 = vmatprep.subr.mxu0 0.0
      %6546 = vmatpush1.msra.mxu0 0.0
      %6547 = vmatprep.subr.mxu0 0.0
      %6548 = vmatpush1.msra.mxu0 0.0
      %6549 = vmatprep.subr.mxu0 0.0
      %6550 = vmatpush1.msra.mxu0 0.0
      %6551 = vmatprep.subr.mxu0 0.0
      %6552 = vmatpush1.msra.mxu0 0.0
      %6553 = vmatprep.subr.mxu0 0.0
      %6554 = vmatpush1.msra.mxu0 0.0
      %6555 = vmatprep.subr.mxu0 0.0
      %6556 = vmatpush1.msra.mxu0 0.0
      %6557 = vmatprep.subr.mxu0 0.0
      %6558 = vmatpush1.msra.mxu0 0.0
      %6559 = vmatprep.subr.mxu0 0.0
      %6560 = vmatpush1.msra.mxu0 0.0
      %6561 = vmatprep.subr.mxu0 0.0
      %6562 = vmatpush1.msra.mxu0 0.0
      %6563 = vmatprep.subr.mxu0 0.0
      %6564 = vmatpush1.msra.mxu0 0.0
      %6565 = vmatprep.subr.mxu0 0.0
      %6566 = vmatpush1.msra.mxu0 0.0
      %6567 = vmatprep.subr.mxu0 0.0
      %6568 = vmatpush1.msra.mxu0 0.0
      %6569 = vmatprep.subr.mxu0 0.0
      %6570 = vmatpush1.msra.mxu0 0.0
      %6571 = vmatprep.subr.mxu0 0.0
      %6572 = vmatpush1.msra.mxu0 0.0
      %6573 = vmatprep.subr.mxu0 0.0
      %6574 = vmatpush1.msra.mxu0 0.0
      %6575 = vmatprep.subr.mxu0 0.0
      %6576 = vmatpush1.msra.mxu0 0.0
      %6577 = vmatprep.subr.mxu0 0.0
      %6578 = vmatpush1.msra.mxu0 0.0
      %6579 = vmatprep.subr.mxu0 0.0
      %6580 = vmatpush1.msra.mxu0 0.0
      %6581 = vmatprep.subr.mxu0 0.0
      %6582 = vmatpush1.msra.mxu0 0.0
      %6583 = vmatprep.subr.mxu0 0.0
      %6584 = vmatpush1.msra.mxu0 0.0
      %6585 = vmatprep.subr.mxu0 0.0
      %6586 = vmatpush1.msra.mxu0 0.0
      %6587 = vmatprep.subr.mxu0 0.0
      %6588 = vmatpush1.msra.mxu0 0.0
      %6589 = vmatprep.subr.mxu0 0.0
      %6590 = vmatpush1.msra.mxu0 0.0
      %6591 = vmatprep.subr.mxu0 0.0
      %6592 = vmatpush1.msra.mxu0 0.0
      %6593 = vmatprep.subr.mxu0 0.0
      %6594 = vmatpush1.msra.mxu0 0.0
      %6595 = vmatprep.subr.mxu0 0.0
      %6596 = vmatpush1.msra.mxu0 0.0
      %6597 = vmatprep.subr.mxu0 0.0
      %6598 = vmatpush1.msra.mxu0 0.0
      %6599 = vmatprep.mubr.f32.mxu0 0.0
      %6600 = vmatmul.mubr.f32.gmra.mrb[0].mxu0 %v6437
      %v6601 = vpop.f32.mrb[0].mxu0
      %v6602 = vadd.f32 0.0, %v6601
      %v6603 = vpop.f32.mrb[0].mxu0
      %6604 = vmatprep.mubr.f32.mxu0 0.0
      %6605 = vmatmul.mubr.f32.gmra.mrb[0].mxu0 %v6440
      %v6606 = vpop.f32.mrb[0].mxu0
      %v6607 = vadd.f32 0.0, %v6606
      %v6608 = vpop.f32.mrb[0].mxu0
      %6609 = vmatprep.mubr.f32.mxu0 0.0
      %6610 = vmatmul.mubr.f32.gmra.mrb[0].mxu0 %v6443
      %v6611 = vpop.f32.mrb[0].mxu0
      %v6612 = vadd.f32 0.0, %v6611
      %v6613 = vpop.f32.mrb[0].mxu0
      %6614 = vmatprep.mubr.f32.mxu0 0.0
      %6615 = vmatmul.mubr.f32.gmra.mrb[0].mxu0 %v6446
      %v6616 = vpop.f32.mrb[0].mxu0
      %v6617 = vadd.f32 0.0, %v6616
      %v6618 = vpop.f32.mrb[0].mxu0
      %6619 = vmatprep.mubr.f32.mxu0 0.0
      %6620 = vmatmul.mubr.f32.gmra.mrb[0].mxu0 %v6449
      %v6621 = vpop.f32.mrb[0].mxu0
      %v6622 = vadd.f32 0.0, %v6621
      %v6623 = vpop.f32.mrb[0].mxu0
      %6624 = vmatprep.mubr.f32.mxu0 0.0
      %6625 = vmatmul.mubr.f32.gmra.mrb[0].mxu0 %v6452
      %v6626 = vpop.f32.mrb[0].mxu0
      %v6627 = vadd.f32 0.0, %v6626
      %v6628 = vpop.f32.mrb[0].mxu0
      %6629 = vmatprep.mubr.f32.mxu0 0.0
      %6630 = vmatmul.mubr.f32.gmra.mrb[0].mxu0 %v6455
      %v6631 = vpop.f32.mrb[0].mxu0
      %v6632 = vadd.f32 0.0, %v6631
      %v6633 = vpop.f32.mrb[0].mxu0
      %6634 = vmatprep.mubr.f32.mxu0 0.0
      %6635 = vmatmul.mubr.f32.gmra.mrb[0].mxu0 %v6458
      %v6636 = vpop.f32.mrb[0].mxu0
      %v6637 = vadd.f32 0.0, %v6636
      %v6638 = vpop.f32.mrb[0].mxu0
      %6639 = vmatprep.mubr.f32.mxu0 0.0
      %6640 = vmatmul.mubr.f32.gmra.mrb[0].mxu0 %v6461
      %v6641 = vpop.f32.mrb[0].mxu0
      %v6642 = vadd.f32 0.0, %v6641
      %v6643 = vpop.f32.mrb[0].mxu0
      %6644 = vmatprep.mubr.f32.mxu0 0.0
      %6645 = vmatmul.mubr.f32.gmra.mrb[0].mxu0 %v6464
      %v6646 = vpop.f32.mrb[0].mxu0
      %v6647 = vadd.f32 0.0, %v6646
      %v6648 = vpop.f32.mrb[0].mxu0
      %6649 = vmatprep.mubr.f32.mxu0 0.0
      %6650 = vmatmul.mubr.f32.gmra.mrb[0].mxu0 %v6467
      %v6651 = vpop.f32.mrb[0].mxu0
      %v6652 = vadd.f32 0.0, %v6651
      %v6653 = vpop.f32.mrb[0].mxu0
      %6654 = vmatprep.mubr.f32.mxu0 0.0
      %6655 = vmatmul.mubr.f32.gmra.mrb[0].mxu0 %v6470
      %v6656 = vpop.f32.mrb[0].mxu0
      %v6657 = vadd.f32 0.0, %v6656
      %v6658 = vpop.f32.mrb[0].mxu0
      %6659 = vmatprep.mubr.f32.mxu0 0.0
      %6660 = vmatmul.mubr.f32.gmra.mrb[0].mxu0 %v6473
      %v6661 = vpop.f32.mrb[0].mxu0
      %v6662 = vadd.f32 0.0, %v6661
      %v6663 = vpop.f32.mrb[0].mxu0
      %6664 = vmatprep.mubr.f32.mxu0 0.0
      %6665 = vmatmul.mubr.f32.gmra.mrb[0].mxu0 %v6476
      %v6666 = vpop.f32.mrb[0].mxu0
      %v6667 = vadd.f32 0.0, %v6666
      %v6668 = vpop.f32.mrb[0].mxu0
      %6669 = vmatprep.mubr.f32.mxu0 0.0
      %6670 = vmatmul.mubr.f32.gmra.mrb[0].mxu0 %v6479
      %v6671 = vpop.f32.mrb[0].mxu0
      %v6672 = vadd.f32 0.0, %v6671
      %v6673 = vpop.f32.mrb[0].mxu0
      %6674 = vmatprep.mubr.f32.mxu0 0.0
      %6675 = vmatmul.mubr.f32.gmra.mrb[0].mxu0 %v6482
      %v6676 = vpop.f32.mrb[0].mxu0
      %v6677 = vadd.f32 0.0, %v6676
      %v6678 = vpop.f32.mrb[0].mxu0
      %6679 = vmatprep.mubr.f32.mxu0 0.0
      %6680 = vmatmul.mubr.f32.gmra.mrb[0].mxu0 %v6485
      %v6681 = vpop.f32.mrb[0].mxu0
      %v6682 = vadd.f32 0.0, %v6681
      %v6683 = vpop.f32.mrb[0].mxu0
      %6684 = vmatprep.mubr.f32.mxu0 0.0
      %6685 = vmatmul.mubr.f32.gmra.mrb[0].mxu0 %v6488
      %v6686 = vpop.f32.mrb[0].mxu0
      %v6687 = vadd.f32 0.0, %v6686
      %v6688 = vpop.f32.mrb[0].mxu0
      %6689 = vmatprep.mubr.f32.mxu0 0.0
      %6690 = vmatmul.mubr.f32.gmra.mrb[0].mxu0 %v6491
      %v6691 = vpop.f32.mrb[0].mxu0
      %v6692 = vadd.f32 0.0, %v6691
      %v6693 = vpop.f32.mrb[0].mxu0
      %6694 = vmatprep.mubr.f32.mxu0 0.0
      %6695 = vmatmul.mubr.f32.gmra.mrb[0].mxu0 %v6494
      %v6696 = vpop.f32.mrb[0].mxu0
      %v6697 = vadd.f32 0.0, %v6696
      %v6698 = vpop.f32.mrb[0].mxu0
      %6699 = vmatprep.mubr.f32.mxu0 0.0
      %6700 = vmatmul.mubr.f32.gmra.mrb[0].mxu0 %v6497
      %v6701 = vpop.f32.mrb[0].mxu0
      %v6702 = vadd.f32 0.0, %v6701
      %v6703 = vpop.f32.mrb[0].mxu0
      %6704 = vmatprep.mubr.f32.mxu0 0.0
      %6705 = vmatmul.mubr.f32.gmra.mrb[0].mxu0 %v6500
      %v6706 = vpop.f32.mrb[0].mxu0
      %v6707 = vadd.f32 0.0, %v6706
      %v6708 = vpop.f32.mrb[0].mxu0
      %6709 = vmatprep.mubr.f32.mxu0 0.0
      %6710 = vmatmul.mubr.f32.gmra.mrb[0].mxu0 %v6503
      %v6711 = vpop.f32.mrb[0].mxu0
      %v6712 = vadd.f32 0.0, %v6711
      %v6713 = vpop.f32.mrb[0].mxu0
      %6714 = vmatprep.mubr.f32.mxu0 0.0
      %6715 = vmatmul.mubr.f32.gmra.mrb[0].mxu0 %v6506
      %v6716 = vpop.f32.mrb[0].mxu0
      %v6717 = vadd.f32 0.0, %v6716
      %v6718 = vpop.f32.mrb[0].mxu0
      %6719 = vmatprep.mubr.f32.mxu0 0.0
      %6720 = vmatmul.mubr.f32.gmra.mrb[0].mxu0 %v6509
      %v6721 = vpop.f32.mrb[0].mxu0
      %v6722 = vadd.f32 0.0, %v6721
      %v6723 = vpop.f32.mrb[0].mxu0
      %6724 = vmatprep.mubr.f32.mxu0 0.0
      %6725 = vmatmul.mubr.f32.gmra.mrb[0].mxu0 %v6512
      %v6726 = vpop.f32.mrb[0].mxu0
      %v6727 = vadd.f32 0.0, %v6726
      %v6728 = vpop.f32.mrb[0].mxu0
      %6729 = vmatprep.mubr.f32.mxu0 0.0
      %6730 = vmatmul.mubr.f32.gmra.mrb[0].mxu0 %v6515
      %v6731 = vpop.f32.mrb[0].mxu0
      %v6732 = vadd.f32 0.0, %v6731
      %v6733 = vpop.f32.mrb[0].mxu0
      %6734 = vmatprep.mubr.f32.mxu0 0.0
      %6735 = vmatmul.mubr.f32.gmra.mrb[0].mxu0 %v6518
      %v6736 = vpop.f32.mrb[0].mxu0
      %v6737 = vadd.f32 0.0, %v6736
      %v6738 = vpop.f32.mrb[0].mxu0
      %6739 = vmatprep.mubr.f32.mxu0 0.0
      %6740 = vmatmul.mubr.f32.gmra.mrb[0].mxu0 %v6521
      %v6741 = vpop.f32.mrb[0].mxu0
      %v6742 = vadd.f32 0.0, %v6741
      %v6743 = vpop.f32.mrb[0].mxu0
      %6744 = vmatprep.mubr.f32.mxu0 0.0
      %6745 = vmatmul.mubr.f32.gmra.mrb[0].mxu0 %v6524
      %v6746 = vpop.f32.mrb[0].mxu0
      %v6747 = vadd.f32 0.0, %v6746
      %v6748 = vpop.f32.mrb[0].mxu0
      %6749 = vmatprep.mubr.f32.mxu0 0.0
      %6750 = vmatmul.mubr.f32.gmra.mrb[0].mxu0 %v6527
      %v6751 = vpop.f32.mrb[0].mxu0
      %v6752 = vadd.f32 0.0, %v6751
      %v6753 = vpop.f32.mrb[0].mxu0
      %6754 = vmatprep.mubr.f32.mxu0 0.0
      %6755 = vmatmul.mubr.f32.gmra.mrb[0].mxu0 %v6530
      %v6756 = vpop.f32.mrb[0].mxu0
      %v6757 = vadd.f32 0.0, %v6756
      %v6758 = vpop.f32.mrb[0].mxu0
      %6759 = vdwg.mxu0
      %v6760 = vadd.f32 %v6370, %v6602
      %v6761 = vadd.f32 %v6371, %v6607
      %v6762 = vadd.f32 %v6372, %v6612
      %v6763 = vadd.f32 %v6373, %v6617
      %v6764 = vadd.f32 %v6374, %v6622
      %v6765 = vadd.f32 %v6375, %v6627
      %v6766 = vadd.f32 %v6376, %v6632
      %v6767 = vadd.f32 %v6377, %v6637
      %v6768 = vadd.f32 %v6378, %v6642
      %v6769 = vadd.f32 %v6379, %v6647
      %v6770 = vadd.f32 %v6380, %v6652
      %v6771 = vadd.f32 %v6381, %v6657
      %v6772 = vadd.f32 %v6382, %v6662
      %v6773 = vadd.f32 %v6383, %v6667
      %v6774 = vadd.f32 %v6384, %v6672
      %v6775 = vadd.f32 %v6385, %v6677
      %v6776 = vadd.f32 %v6386, %v6682
      %v6777 = vadd.f32 %v6387, %v6687
      %v6778 = vadd.f32 %v6388, %v6692
      %v6779 = vadd.f32 %v6389, %v6697
      %v6780 = vadd.f32 %v6390, %v6702
      %v6781 = vadd.f32 %v6391, %v6707
      %v6782 = vadd.f32 %v6392, %v6712
      %v6783 = vadd.f32 %v6393, %v6717
      %v6784 = vadd.f32 %v6394, %v6722
      %v6785 = vadd.f32 %v6395, %v6727
      %v6786 = vadd.f32 %v6396, %v6732
      %v6787 = vadd.f32 %v6397, %v6737
      %v6788 = vadd.f32 %v6398, %v6742
      %v6789 = vadd.f32 %v6399, %v6747
      %v6790 = vadd.f32 %v6400, %v6752
      %v6791 = vadd.f32 %v6401, %v6757
      %v6792 = vld [vmem:[%s6011 + $0xf] sm:$0xff]
      %v6793 = vld [vmem:[%s6011 + $0x17] sm:$0xff]
      %v6794 = vld [vmem:[%s6011 + $0x37] sm:$0xff]
      %v6795 = vld [vmem:[%s6011 + $0x3f] sm:$0xff]
      %v6796 = vld [vmem:[%s6011 + $0x5f] sm:$0xff]
      %v6797 = vld [vmem:[%s6011 + $0x67] sm:$0xff]
      %v6798 = vld [vmem:[%s6011 + $0x87] sm:$0xff]
      %v6799 = vld [vmem:[%s6011 + $0x8f] sm:$0xff]
      %v6800 = vld [vmem:[%s6011 + $0xaf] sm:$0xff]
      %v6801 = vld [vmem:[%s6011 + $0xb7] sm:$0xff]
      %v6802 = vld [vmem:[%s6011 + $0xd7] sm:$0xff]
      %v6803 = vld [vmem:[%s6011 + $0xdf] sm:$0xff]
      %v6804 = vld [vmem:[%s6011 + $0xff] sm:$0xff]
      %v6805 = vld [vmem:[%s6011 + $0x107] sm:$0xff]
      %v6806 = vld [vmem:[%s6011 + $0x127] sm:$0xff]
      %v6807 = vld [vmem:[%s6011 + $0x12f] sm:$0xff]
      %v6808 = vld [vmem:[%s6011 + $0x14f] sm:$0xff]
      %v6809 = vld [vmem:[%s6011 + $0x157] sm:$0xff]
      %v6810 = vld [vmem:[%s6011 + $0x177] sm:$0xff]
      %v6811 = vld [vmem:[%s6011 + $0x17f] sm:$0xff]
      %v6812 = vld [vmem:[%s6011 + $0x19f] sm:$0xff]
      %v6813 = vld [vmem:[%s6011 + $0x1a7] sm:$0xff]
      %v6814 = vld [vmem:[%s6011 + $0x1c7] sm:$0xff]
      %v6815 = vld [vmem:[%s6011 + $0x1cf] sm:$0xff]
      %v6816 = vld [vmem:[%s6011 + $0x1ef] sm:$0xff]
      %v6817 = vld [vmem:[%s6011 + $0x1f7] sm:$0xff]
      %v6818 = vld [vmem:[%s6011 + $0x217] sm:$0xff]
      %v6819 = vld [vmem:[%s6011 + $0x21f] sm:$0xff]
      %v6820 = vld [vmem:[%s6011 + $0x23f] sm:$0xff]
      %v6821 = vld [vmem:[%s6011 + $0x247] sm:$0xff]
      %v6822 = vld [vmem:[%s6011 + $0x267] sm:$0xff]
      %v6823 = vld [vmem:[%s6011 + $0x26f] sm:$0xff]
      %s6824 = scalar_lea.vmem %s1, 68
      %v6825 = vld [vmem:[%s6824] sm:$0xf]
      %v6827 = vsel %vm280, %v6792, 0
      %v6830 = vsel %vm280, %v6793, 0
      %v6833 = vsel %vm280, %v6794, 0
      %v6836 = vsel %vm280, %v6795, 0
      %v6839 = vsel %vm280, %v6796, 0
      %v6842 = vsel %vm280, %v6797, 0
      %v6845 = vsel %vm280, %v6798, 0
      %v6848 = vsel %vm280, %v6799, 0
      %v6851 = vsel %vm280, %v6800, 0
      %v6854 = vsel %vm280, %v6801, 0
      %v6857 = vsel %vm280, %v6802, 0
      %v6860 = vsel %vm280, %v6803, 0
      %v6863 = vsel %vm280, %v6804, 0
      %v6866 = vsel %vm280, %v6805, 0
      %v6869 = vsel %vm280, %v6806, 0
      %v6872 = vsel %vm280, %v6807, 0
      %v6875 = vsel %vm280, %v6808, 0
      %v6878 = vsel %vm280, %v6809, 0
      %v6881 = vsel %vm280, %v6810, 0
      %v6884 = vsel %vm280, %v6811, 0
      %v6887 = vsel %vm280, %v6812, 0
      %v6890 = vsel %vm280, %v6813, 0
      %v6893 = vsel %vm280, %v6814, 0
      %v6896 = vsel %vm280, %v6815, 0
      %v6899 = vsel %vm280, %v6816, 0
      %v6902 = vsel %vm280, %v6817, 0
      %v6905 = vsel %vm280, %v6818, 0
      %v6908 = vsel %vm280, %v6819, 0
      %v6911 = vsel %vm280, %v6820, 0
      %v6914 = vsel %vm280, %v6821, 0
      %v6917 = vsel %vm280, %v6822, 0
      %v6920 = vsel %vm280, %v6823, 0
      %v6923 = vsel %vm377, %v6825, 0
      %6925 = vmatprep.subr.mxu0 0.0
      %6926 = vmatpush1.msra.mxu0 %v6923
      %6927 = vmatprep.subr.mxu0 0.0
      %6928 = vmatpush1.msra.mxu0 0.0
      %6929 = vmatprep.subr.mxu0 0.0
      %6930 = vmatpush1.msra.mxu0 0.0
      %6931 = vmatprep.subr.mxu0 0.0
      %6932 = vmatpush1.msra.mxu0 0.0
      %6933 = vmatprep.subr.mxu0 0.0
      %6934 = vmatpush1.msra.mxu0 0.0
      %6935 = vmatprep.subr.mxu0 0.0
      %6936 = vmatpush1.msra.mxu0 0.0
      %6937 = vmatprep.subr.mxu0 0.0
      %6938 = vmatpush1.msra.mxu0 0.0
      %6939 = vmatprep.subr.mxu0 0.0
      %6940 = vmatpush1.msra.mxu0 0.0
      %6941 = vmatprep.subr.mxu0 0.0
      %6942 = vmatpush1.msra.mxu0 0.0
      %6943 = vmatprep.subr.mxu0 0.0
      %6944 = vmatpush1.msra.mxu0 0.0
      %6945 = vmatprep.subr.mxu0 0.0
      %6946 = vmatpush1.msra.mxu0 0.0
      %6947 = vmatprep.subr.mxu0 0.0
      %6948 = vmatpush1.msra.mxu0 0.0
      %6949 = vmatprep.subr.mxu0 0.0
      %6950 = vmatpush1.msra.mxu0 0.0
      %6951 = vmatprep.subr.mxu0 0.0
      %6952 = vmatpush1.msra.mxu0 0.0
      %6953 = vmatprep.subr.mxu0 0.0
      %6954 = vmatpush1.msra.mxu0 0.0
      %6955 = vmatprep.subr.mxu0 0.0
      %6956 = vmatpush1.msra.mxu0 0.0
      %6957 = vmatprep.subr.mxu0 0.0
      %6958 = vmatpush1.msra.mxu0 0.0
      %6959 = vmatprep.subr.mxu0 0.0
      %6960 = vmatpush1.msra.mxu0 0.0
      %6961 = vmatprep.subr.mxu0 0.0
      %6962 = vmatpush1.msra.mxu0 0.0
      %6963 = vmatprep.subr.mxu0 0.0
      %6964 = vmatpush1.msra.mxu0 0.0
      %6965 = vmatprep.subr.mxu0 0.0
      %6966 = vmatpush1.msra.mxu0 0.0
      %6967 = vmatprep.subr.mxu0 0.0
      %6968 = vmatpush1.msra.mxu0 0.0
      %6969 = vmatprep.subr.mxu0 0.0
      %6970 = vmatpush1.msra.mxu0 0.0
      %6971 = vmatprep.subr.mxu0 0.0
      %6972 = vmatpush1.msra.mxu0 0.0
      %6973 = vmatprep.subr.mxu0 0.0
      %6974 = vmatpush1.msra.mxu0 0.0
      %6975 = vmatprep.subr.mxu0 0.0
      %6976 = vmatpush1.msra.mxu0 0.0
      %6977 = vmatprep.subr.mxu0 0.0
      %6978 = vmatpush1.msra.mxu0 0.0
      %6979 = vmatprep.subr.mxu0 0.0
      %6980 = vmatpush1.msra.mxu0 0.0
      %6981 = vmatprep.subr.mxu0 0.0
      %6982 = vmatpush1.msra.mxu0 0.0
      %6983 = vmatprep.subr.mxu0 0.0
      %6984 = vmatpush1.msra.mxu0 0.0
      %6985 = vmatprep.subr.mxu0 0.0
      %6986 = vmatpush1.msra.mxu0 0.0
      %6987 = vmatprep.subr.mxu0 0.0
      %6988 = vmatpush1.msra.mxu0 0.0
      %6989 = vmatprep.mubr.f32.mxu0 0.0
      %6990 = vmatmul.mubr.f32.gmra.mrb[0].mxu0 %v6827
      %v6991 = vpop.f32.mrb[0].mxu0
      %v6992 = vadd.f32 0.0, %v6991
      %v6993 = vpop.f32.mrb[0].mxu0
      %6994 = vmatprep.mubr.f32.mxu0 0.0
      %6995 = vmatmul.mubr.f32.gmra.mrb[0].mxu0 %v6830
      %v6996 = vpop.f32.mrb[0].mxu0
      %v6997 = vadd.f32 0.0, %v6996
      %v6998 = vpop.f32.mrb[0].mxu0
      %6999 = vmatprep.mubr.f32.mxu0 0.0
      %7000 = vmatmul.mubr.f32.gmra.mrb[0].mxu0 %v6833
      %v7001 = vpop.f32.mrb[0].mxu0
      %v7002 = vadd.f32 0.0, %v7001
      %v7003 = vpop.f32.mrb[0].mxu0
      %7004 = vmatprep.mubr.f32.mxu0 0.0
      %7005 = vmatmul.mubr.f32.gmra.mrb[0].mxu0 %v6836
      %v7006 = vpop.f32.mrb[0].mxu0
      %v7007 = vadd.f32 0.0, %v7006
      %v7008 = vpop.f32.mrb[0].mxu0
      %7009 = vmatprep.mubr.f32.mxu0 0.0
      %7010 = vmatmul.mubr.f32.gmra.mrb[0].mxu0 %v6839
      %v7011 = vpop.f32.mrb[0].mxu0
      %v7012 = vadd.f32 0.0, %v7011
      %v7013 = vpop.f32.mrb[0].mxu0
      %7014 = vmatprep.mubr.f32.mxu0 0.0
      %7015 = vmatmul.mubr.f32.gmra.mrb[0].mxu0 %v6842
      %v7016 = vpop.f32.mrb[0].mxu0
      %v7017 = vadd.f32 0.0, %v7016
      %v7018 = vpop.f32.mrb[0].mxu0
      %7019 = vmatprep.mubr.f32.mxu0 0.0
      %7020 = vmatmul.mubr.f32.gmra.mrb[0].mxu0 %v6845
      %v7021 = vpop.f32.mrb[0].mxu0
      %v7022 = vadd.f32 0.0, %v7021
      %v7023 = vpop.f32.mrb[0].mxu0
      %7024 = vmatprep.mubr.f32.mxu0 0.0
      %7025 = vmatmul.mubr.f32.gmra.mrb[0].mxu0 %v6848
      %v7026 = vpop.f32.mrb[0].mxu0
      %v7027 = vadd.f32 0.0, %v7026
      %v7028 = vpop.f32.mrb[0].mxu0
      %7029 = vmatprep.mubr.f32.mxu0 0.0
      %7030 = vmatmul.mubr.f32.gmra.mrb[0].mxu0 %v6851
      %v7031 = vpop.f32.mrb[0].mxu0
      %v7032 = vadd.f32 0.0, %v7031
      %v7033 = vpop.f32.mrb[0].mxu0
      %7034 = vmatprep.mubr.f32.mxu0 0.0
      %7035 = vmatmul.mubr.f32.gmra.mrb[0].mxu0 %v6854
      %v7036 = vpop.f32.mrb[0].mxu0
      %v7037 = vadd.f32 0.0, %v7036
      %v7038 = vpop.f32.mrb[0].mxu0
      %7039 = vmatprep.mubr.f32.mxu0 0.0
      %7040 = vmatmul.mubr.f32.gmra.mrb[0].mxu0 %v6857
      %v7041 = vpop.f32.mrb[0].mxu0
      %v7042 = vadd.f32 0.0, %v7041
      %v7043 = vpop.f32.mrb[0].mxu0
      %7044 = vmatprep.mubr.f32.mxu0 0.0
      %7045 = vmatmul.mubr.f32.gmra.mrb[0].mxu0 %v6860
      %v7046 = vpop.f32.mrb[0].mxu0
      %v7047 = vadd.f32 0.0, %v7046
      %v7048 = vpop.f32.mrb[0].mxu0
      %7049 = vmatprep.mubr.f32.mxu0 0.0
      %7050 = vmatmul.mubr.f32.gmra.mrb[0].mxu0 %v6863
      %v7051 = vpop.f32.mrb[0].mxu0
      %v7052 = vadd.f32 0.0, %v7051
      %v7053 = vpop.f32.mrb[0].mxu0
      %7054 = vmatprep.mubr.f32.mxu0 0.0
      %7055 = vmatmul.mubr.f32.gmra.mrb[0].mxu0 %v6866
      %v7056 = vpop.f32.mrb[0].mxu0
      %v7057 = vadd.f32 0.0, %v7056
      %v7058 = vpop.f32.mrb[0].mxu0
      %7059 = vmatprep.mubr.f32.mxu0 0.0
      %7060 = vmatmul.mubr.f32.gmra.mrb[0].mxu0 %v6869
      %v7061 = vpop.f32.mrb[0].mxu0
      %v7062 = vadd.f32 0.0, %v7061
      %v7063 = vpop.f32.mrb[0].mxu0
      %7064 = vmatprep.mubr.f32.mxu0 0.0
      %7065 = vmatmul.mubr.f32.gmra.mrb[0].mxu0 %v6872
      %v7066 = vpop.f32.mrb[0].mxu0
      %v7067 = vadd.f32 0.0, %v7066
      %v7068 = vpop.f32.mrb[0].mxu0
      %7069 = vmatprep.mubr.f32.mxu0 0.0
      %7070 = vmatmul.mubr.f32.gmra.mrb[0].mxu0 %v6875
      %v7071 = vpop.f32.mrb[0].mxu0
      %v7072 = vadd.f32 0.0, %v7071
      %v7073 = vpop.f32.mrb[0].mxu0
      %7074 = vmatprep.mubr.f32.mxu0 0.0
      %7075 = vmatmul.mubr.f32.gmra.mrb[0].mxu0 %v6878
      %v7076 = vpop.f32.mrb[0].mxu0
      %v7077 = vadd.f32 0.0, %v7076
      %v7078 = vpop.f32.mrb[0].mxu0
      %7079 = vmatprep.mubr.f32.mxu0 0.0
      %7080 = vmatmul.mubr.f32.gmra.mrb[0].mxu0 %v6881
      %v7081 = vpop.f32.mrb[0].mxu0
      %v7082 = vadd.f32 0.0, %v7081
      %v7083 = vpop.f32.mrb[0].mxu0
      %7084 = vmatprep.mubr.f32.mxu0 0.0
      %7085 = vmatmul.mubr.f32.gmra.mrb[0].mxu0 %v6884
      %v7086 = vpop.f32.mrb[0].mxu0
      %v7087 = vadd.f32 0.0, %v7086
      %v7088 = vpop.f32.mrb[0].mxu0
      %7089 = vmatprep.mubr.f32.mxu0 0.0
      %7090 = vmatmul.mubr.f32.gmra.mrb[0].mxu0 %v6887
      %v7091 = vpop.f32.mrb[0].mxu0
      %v7092 = vadd.f32 0.0, %v7091
      %v7093 = vpop.f32.mrb[0].mxu0
      %7094 = vmatprep.mubr.f32.mxu0 0.0
      %7095 = vmatmul.mubr.f32.gmra.mrb[0].mxu0 %v6890
      %v7096 = vpop.f32.mrb[0].mxu0
      %v7097 = vadd.f32 0.0, %v7096
      %v7098 = vpop.f32.mrb[0].mxu0
      %7099 = vmatprep.mubr.f32.mxu0 0.0
      %7100 = vmatmul.mubr.f32.gmra.mrb[0].mxu0 %v6893
      %v7101 = vpop.f32.mrb[0].mxu0
      %v7102 = vadd.f32 0.0, %v7101
      %v7103 = vpop.f32.mrb[0].mxu0
      %7104 = vmatprep.mubr.f32.mxu0 0.0
      %7105 = vmatmul.mubr.f32.gmra.mrb[0].mxu0 %v6896
      %v7106 = vpop.f32.mrb[0].mxu0
      %v7107 = vadd.f32 0.0, %v7106
      %v7108 = vpop.f32.mrb[0].mxu0
      %7109 = vmatprep.mubr.f32.mxu0 0.0
      %7110 = vmatmul.mubr.f32.gmra.mrb[0].mxu0 %v6899
      %v7111 = vpop.f32.mrb[0].mxu0
      %v7112 = vadd.f32 0.0, %v7111
      %v7113 = vpop.f32.mrb[0].mxu0
      %7114 = vmatprep.mubr.f32.mxu0 0.0
      %7115 = vmatmul.mubr.f32.gmra.mrb[0].mxu0 %v6902
      %v7116 = vpop.f32.mrb[0].mxu0
      %v7117 = vadd.f32 0.0, %v7116
      %v7118 = vpop.f32.mrb[0].mxu0
      %7119 = vmatprep.mubr.f32.mxu0 0.0
      %7120 = vmatmul.mubr.f32.gmra.mrb[0].mxu0 %v6905
      %v7121 = vpop.f32.mrb[0].mxu0
      %v7122 = vadd.f32 0.0, %v7121
      %v7123 = vpop.f32.mrb[0].mxu0
      %7124 = vmatprep.mubr.f32.mxu0 0.0
      %7125 = vmatmul.mubr.f32.gmra.mrb[0].mxu0 %v6908
      %v7126 = vpop.f32.mrb[0].mxu0
      %v7127 = vadd.f32 0.0, %v7126
      %v7128 = vpop.f32.mrb[0].mxu0
      %7129 = vmatprep.mubr.f32.mxu0 0.0
      %7130 = vmatmul.mubr.f32.gmra.mrb[0].mxu0 %v6911
      %v7131 = vpop.f32.mrb[0].mxu0
      %v7132 = vadd.f32 0.0, %v7131
      %v7133 = vpop.f32.mrb[0].mxu0
      %7134 = vmatprep.mubr.f32.mxu0 0.0
      %7135 = vmatmul.mubr.f32.gmra.mrb[0].mxu0 %v6914
      %v7136 = vpop.f32.mrb[0].mxu0
      %v7137 = vadd.f32 0.0, %v7136
      %v7138 = vpop.f32.mrb[0].mxu0
      %7139 = vmatprep.mubr.f32.mxu0 0.0
      %7140 = vmatmul.mubr.f32.gmra.mrb[0].mxu0 %v6917
      %v7141 = vpop.f32.mrb[0].mxu0
      %v7142 = vadd.f32 0.0, %v7141
      %v7143 = vpop.f32.mrb[0].mxu0
      %7144 = vmatprep.mubr.f32.mxu0 0.0
      %7145 = vmatmul.mubr.f32.gmra.mrb[0].mxu0 %v6920
      %v7146 = vpop.f32.mrb[0].mxu0
      %v7147 = vadd.f32 0.0, %v7146
      %v7148 = vpop.f32.mrb[0].mxu0
      %7149 = vdwg.mxu0
      %v7150 = vadd.f32 %v6760, %v6992
      %v7151 = vadd.f32 %v6761, %v6997
      %v7152 = vadd.f32 %v6762, %v7002
      %v7153 = vadd.f32 %v6763, %v7007
      %v7154 = vadd.f32 %v6764, %v7012
      %v7155 = vadd.f32 %v6765, %v7017
      %v7156 = vadd.f32 %v6766, %v7022
      %v7157 = vadd.f32 %v6767, %v7027
      %v7158 = vadd.f32 %v6768, %v7032
      %v7159 = vadd.f32 %v6769, %v7037
      %v7160 = vadd.f32 %v6770, %v7042
      %v7161 = vadd.f32 %v6771, %v7047
      %v7162 = vadd.f32 %v6772, %v7052
      %v7163 = vadd.f32 %v6773, %v7057
      %v7164 = vadd.f32 %v6774, %v7062
      %v7165 = vadd.f32 %v6775, %v7067
      %v7166 = vadd.f32 %v6776, %v7072
      %v7167 = vadd.f32 %v6777, %v7077
      %v7168 = vadd.f32 %v6778, %v7082
      %v7169 = vadd.f32 %v6779, %v7087
      %v7170 = vadd.f32 %v6780, %v7092
      %v7171 = vadd.f32 %v6781, %v7097
      %v7172 = vadd.f32 %v6782, %v7102
      %v7173 = vadd.f32 %v6783, %v7107
      %v7174 = vadd.f32 %v6784, %v7112
      %v7175 = vadd.f32 %v6785, %v7117
      %v7176 = vadd.f32 %v6786, %v7122
      %v7177 = vadd.f32 %v6787, %v7127
      %v7178 = vadd.f32 %v6788, %v7132
      %v7179 = vadd.f32 %v6789, %v7137
      %v7180 = vadd.f32 %v6790, %v7142
      %v7181 = vadd.f32 %v6791, %v7147
      %s7182 = scalar_lea.vmem %s2, 1
      %v7183 = vld [vmem:[%s7182] sm:$0x1]
      %v7185 = vlaneseq
      %v7186 = vshrl.u32 %v7185, 7
      %v7187 = vsub.s32 0, %v7186
      %v7188 = vrot.slane %v7183, %v7187
      %v7190 = vadd.f32 %v7150, %v7188
      %v7191 = vadd.f32 %v7151, %v7188
      %v7192 = vadd.f32 %v7152, %v7188
      %v7193 = vadd.f32 %v7153, %v7188
      %v7194 = vadd.f32 %v7154, %v7188
      %v7195 = vadd.f32 %v7155, %v7188
      %v7196 = vadd.f32 %v7156, %v7188
      %v7197 = vadd.f32 %v7157, %v7188
      %v7198 = vadd.f32 %v7158, %v7188
      %v7199 = vadd.f32 %v7159, %v7188
      %v7200 = vadd.f32 %v7160, %v7188
      %v7201 = vadd.f32 %v7161, %v7188
      %v7202 = vadd.f32 %v7162, %v7188
      %v7203 = vadd.f32 %v7163, %v7188
      %v7204 = vadd.f32 %v7164, %v7188
      %v7205 = vadd.f32 %v7165, %v7188
      %v7206 = vadd.f32 %v7166, %v7188
      %v7207 = vadd.f32 %v7167, %v7188
      %v7208 = vadd.f32 %v7168, %v7188
      %v7209 = vadd.f32 %v7169, %v7188
      %v7210 = vadd.f32 %v7170, %v7188
      %v7211 = vadd.f32 %v7171, %v7188
      %v7212 = vadd.f32 %v7172, %v7188
      %v7213 = vadd.f32 %v7173, %v7188
      %v7214 = vadd.f32 %v7174, %v7188
      %v7215 = vadd.f32 %v7175, %v7188
      %v7216 = vadd.f32 %v7176, %v7188
      %v7217 = vadd.f32 %v7177, %v7188
      %v7218 = vadd.f32 %v7178, %v7188
      %v7219 = vadd.f32 %v7179, %v7188
      %v7220 = vadd.f32 %v7180, %v7188
      %v7221 = vadd.f32 %v7181, %v7188
      %7254 = vrot.lane.b32.xlu0 %v7190, 2
      %v7255 = vpop.permute.xlu0 %7254
      %7256 = vrot.lane.b32.xlu0 %v7191, 2
      %v7257 = vpop.permute.xlu0 %7256
      %7258 = vrot.lane.b32.xlu0 %v7192, 2
      %v7259 = vpop.permute.xlu0 %7258
      %7260 = vrot.lane.b32.xlu0 %v7193, 2
      %v7261 = vpop.permute.xlu0 %7260
      %7262 = vrot.lane.b32.xlu0 %v7194, 2
      %v7263 = vpop.permute.xlu0 %7262
      %7264 = vrot.lane.b32.xlu0 %v7195, 2
      %v7265 = vpop.permute.xlu0 %7264
      %7266 = vrot.lane.b32.xlu0 %v7196, 2
      %v7267 = vpop.permute.xlu0 %7266
      %7268 = vrot.lane.b32.xlu0 %v7197, 2
      %v7269 = vpop.permute.xlu0 %7268
      %7270 = vrot.lane.b32.xlu0 %v7198, 2
      %v7271 = vpop.permute.xlu0 %7270
      %7272 = vrot.lane.b32.xlu0 %v7199, 2
      %v7273 = vpop.permute.xlu0 %7272
      %7274 = vrot.lane.b32.xlu0 %v7200, 2
      %v7275 = vpop.permute.xlu0 %7274
      %7276 = vrot.lane.b32.xlu0 %v7201, 2
      %v7277 = vpop.permute.xlu0 %7276
      %7278 = vrot.lane.b32.xlu0 %v7202, 2
      %v7279 = vpop.permute.xlu0 %7278
      %7280 = vrot.lane.b32.xlu0 %v7203, 2
      %v7281 = vpop.permute.xlu0 %7280
      %7282 = vrot.lane.b32.xlu0 %v7204, 2
      %v7283 = vpop.permute.xlu0 %7282
      %7284 = vrot.lane.b32.xlu0 %v7205, 2
      %v7285 = vpop.permute.xlu0 %7284
      %7286 = vrot.lane.b32.xlu0 %v7206, 2
      %v7287 = vpop.permute.xlu0 %7286
      %7288 = vrot.lane.b32.xlu0 %v7207, 2
      %v7289 = vpop.permute.xlu0 %7288
      %7290 = vrot.lane.b32.xlu0 %v7208, 2
      %v7291 = vpop.permute.xlu0 %7290
      %7292 = vrot.lane.b32.xlu0 %v7209, 2
      %v7293 = vpop.permute.xlu0 %7292
      %7294 = vrot.lane.b32.xlu0 %v7210, 2
      %v7295 = vpop.permute.xlu0 %7294
      %7296 = vrot.lane.b32.xlu0 %v7211, 2
      %v7297 = vpop.permute.xlu0 %7296
      %7298 = vrot.lane.b32.xlu0 %v7212, 2
      %v7299 = vpop.permute.xlu0 %7298
      %7300 = vrot.lane.b32.xlu0 %v7213, 2
      %v7301 = vpop.permute.xlu0 %7300
      %7302 = vrot.lane.b32.xlu0 %v7214, 2
      %v7303 = vpop.permute.xlu0 %7302
      %7304 = vrot.lane.b32.xlu0 %v7215, 2
      %v7305 = vpop.permute.xlu0 %7304
      %7306 = vrot.lane.b32.xlu0 %v7216, 2
      %v7307 = vpop.permute.xlu0 %7306
      %7308 = vrot.lane.b32.xlu0 %v7217, 2
      %v7309 = vpop.permute.xlu0 %7308
      %7310 = vrot.lane.b32.xlu0 %v7218, 2
      %v7311 = vpop.permute.xlu0 %7310
      %7312 = vrot.lane.b32.xlu0 %v7219, 2
      %v7313 = vpop.permute.xlu0 %7312
      %7314 = vrot.lane.b32.xlu0 %v7220, 2
      %v7315 = vpop.permute.xlu0 %7314
      %7316 = vrot.lane.b32.xlu0 %v7221, 2
      %v7317 = vpop.permute.xlu0 %7316
      %vm7350 = vcmask 31760
      %7351 = vst.msk [vmem:[%s211] sm:$0xff] %vm7350, %v7255
      %7352 = vst.msk [vmem:[%s211 + $0x8] sm:$0xff] %vm7350, %v7257
      %7353 = vst.msk [vmem:[%s211 + $0x10] sm:$0xff] %vm7350, %v7259
      %7354 = vst.msk [vmem:[%s211 + $0x18] sm:$0xff] %vm7350, %v7261
      %7355 = vst.msk [vmem:[%s211 + $0x20] sm:$0xff] %vm7350, %v7263
      %7356 = vst.msk [vmem:[%s211 + $0x28] sm:$0xff] %vm7350, %v7265
      %7357 = vst.msk [vmem:[%s211 + $0x30] sm:$0xff] %vm7350, %v7267
      %7358 = vst.msk [vmem:[%s211 + $0x38] sm:$0xff] %vm7350, %v7269
      %7359 = vst.msk [vmem:[%s211 + $0x40] sm:$0xff] %vm7350, %v7271
      %7360 = vst.msk [vmem:[%s211 + $0x48] sm:$0xff] %vm7350, %v7273
      %7361 = vst.msk [vmem:[%s211 + $0x50] sm:$0xff] %vm7350, %v7275
      %7362 = vst.msk [vmem:[%s211 + $0x58] sm:$0xff] %vm7350, %v7277
      %7363 = vst.msk [vmem:[%s211 + $0x60] sm:$0xff] %vm7350, %v7279
      %7364 = vst.msk [vmem:[%s211 + $0x68] sm:$0xff] %vm7350, %v7281
      %7365 = vst.msk [vmem:[%s211 + $0x70] sm:$0xff] %vm7350, %v7283
      %7366 = vst.msk [vmem:[%s211 + $0x78] sm:$0xff] %vm7350, %v7285
      %7367 = vst.msk [vmem:[%s211 + $0x80] sm:$0xff] %vm7350, %v7287
      %7368 = vst.msk [vmem:[%s211 + $0x88] sm:$0xff] %vm7350, %v7289
      %7369 = vst.msk [vmem:[%s211 + $0x90] sm:$0xff] %vm7350, %v7291
      %7370 = vst.msk [vmem:[%s211 + $0x98] sm:$0xff] %vm7350, %v7293
      %7371 = vst.msk [vmem:[%s211 + $0xa0] sm:$0xff] %vm7350, %v7295
      %7372 = vst.msk [vmem:[%s211 + $0xa8] sm:$0xff] %vm7350, %v7297
      %7373 = vst.msk [vmem:[%s211 + $0xb0] sm:$0xff] %vm7350, %v7299
      %7374 = vst.msk [vmem:[%s211 + $0xb8] sm:$0xff] %vm7350, %v7301
      %7375 = vst.msk [vmem:[%s211 + $0xc0] sm:$0xff] %vm7350, %v7303
      %7376 = vst.msk [vmem:[%s211 + $0xc8] sm:$0xff] %vm7350, %v7305
      %7377 = vst.msk [vmem:[%s211 + $0xd0] sm:$0xff] %vm7350, %v7307
      %7378 = vst.msk [vmem:[%s211 + $0xd8] sm:$0xff] %vm7350, %v7309
      %7379 = vst.msk [vmem:[%s211 + $0xe0] sm:$0xff] %vm7350, %v7311
      %7380 = vst.msk [vmem:[%s211 + $0xe8] sm:$0xff] %vm7350, %v7313
      %7381 = vst.msk [vmem:[%s211 + $0xf0] sm:$0xff] %vm7350, %v7315
      %7382 = vst.msk [vmem:[%s211 + $0xf8] sm:$0xff] %vm7350, %v7317
      %v7383 = vld [vmem:[%s203] sm:$0xff]
      %v7384 = vld [vmem:[%s203 + $0x8] sm:$0xff]
      %v7385 = vld [vmem:[%s203 + $0x28] sm:$0xff]
      %v7386 = vld [vmem:[%s203 + $0x30] sm:$0xff]
      %v7387 = vld [vmem:[%s203 + $0x50] sm:$0xff]
      %v7388 = vld [vmem:[%s203 + $0x58] sm:$0xff]
      %v7389 = vld [vmem:[%s203 + $0x78] sm:$0xff]
      %v7390 = vld [vmem:[%s203 + $0x80] sm:$0xff]
      %v7391 = vld [vmem:[%s203 + $0xa0] sm:$0xff]
      %v7392 = vld [vmem:[%s203 + $0xa8] sm:$0xff]
      %v7393 = vld [vmem:[%s203 + $0xc8] sm:$0xff]
      %v7394 = vld [vmem:[%s203 + $0xd0] sm:$0xff]
      %v7395 = vld [vmem:[%s203 + $0xf0] sm:$0xff]
      %v7396 = vld [vmem:[%s203 + $0xf8] sm:$0xff]
      %v7397 = vld [vmem:[%s203 + $0x118] sm:$0xff]
      %v7398 = vld [vmem:[%s203 + $0x120] sm:$0xff]
      %v7399 = vld [vmem:[%s203 + $0x140] sm:$0xff]
      %v7400 = vld [vmem:[%s203 + $0x148] sm:$0xff]
      %v7401 = vld [vmem:[%s203 + $0x168] sm:$0xff]
      %v7402 = vld [vmem:[%s203 + $0x170] sm:$0xff]
      %v7403 = vld [vmem:[%s203 + $0x190] sm:$0xff]
      %v7404 = vld [vmem:[%s203 + $0x198] sm:$0xff]
      %v7405 = vld [vmem:[%s203 + $0x1b8] sm:$0xff]
      %v7406 = vld [vmem:[%s203 + $0x1c0] sm:$0xff]
      %v7407 = vld [vmem:[%s203 + $0x1e0] sm:$0xff]
      %v7408 = vld [vmem:[%s203 + $0x1e8] sm:$0xff]
      %v7409 = vld [vmem:[%s203 + $0x208] sm:$0xff]
      %v7410 = vld [vmem:[%s203 + $0x210] sm:$0xff]
      %v7411 = vld [vmem:[%s203 + $0x230] sm:$0xff]
      %v7412 = vld [vmem:[%s203 + $0x238] sm:$0xff]
      %v7413 = vld [vmem:[%s203 + $0x258] sm:$0xff]
      %v7414 = vld [vmem:[%s203 + $0x260] sm:$0xff]
      %s7415 = scalar_lea.vmem %s1, 72
      %v7416 = vld [vmem:[%s7415] sm:$0xf]
      %v7417 = vld [vmem:[%s203 + $0x9] sm:$0xff]
      %v7418 = vld [vmem:[%s203 + $0x11] sm:$0xff]
      %v7419 = vld [vmem:[%s203 + $0x31] sm:$0xff]
      %v7420 = vld [vmem:[%s203 + $0x39] sm:$0xff]
      %v7421 = vld [vmem:[%s203 + $0x59] sm:$0xff]
      %v7422 = vld [vmem:[%s203 + $0x61] sm:$0xff]
      %v7423 = vld [vmem:[%s203 + $0x81] sm:$0xff]
      %v7424 = vld [vmem:[%s203 + $0x89] sm:$0xff]
      %v7425 = vld [vmem:[%s203 + $0xa9] sm:$0xff]
      %v7426 = vld [vmem:[%s203 + $0xb1] sm:$0xff]
      %v7427 = vld [vmem:[%s203 + $0xd1] sm:$0xff]
      %v7428 = vld [vmem:[%s203 + $0xd9] sm:$0xff]
      %v7429 = vld [vmem:[%s203 + $0xf9] sm:$0xff]
      %v7430 = vld [vmem:[%s203 + $0x101] sm:$0xff]
      %v7431 = vld [vmem:[%s203 + $0x121] sm:$0xff]
      %v7432 = vld [vmem:[%s203 + $0x129] sm:$0xff]
      %v7433 = vld [vmem:[%s203 + $0x149] sm:$0xff]
      %v7434 = vld [vmem:[%s203 + $0x151] sm:$0xff]
      %v7435 = vld [vmem:[%s203 + $0x171] sm:$0xff]
      %v7436 = vld [vmem:[%s203 + $0x179] sm:$0xff]
      %v7437 = vld [vmem:[%s203 + $0x199] sm:$0xff]
      %v7438 = vld [vmem:[%s203 + $0x1a1] sm:$0xff]
      %v7439 = vld [vmem:[%s203 + $0x1c1] sm:$0xff]
      %v7440 = vld [vmem:[%s203 + $0x1c9] sm:$0xff]
      %v7441 = vld [vmem:[%s203 + $0x1e9] sm:$0xff]
      %v7442 = vld [vmem:[%s203 + $0x1f1] sm:$0xff]
      %v7443 = vld [vmem:[%s203 + $0x211] sm:$0xff]
      %v7444 = vld [vmem:[%s203 + $0x219] sm:$0xff]
      %v7445 = vld [vmem:[%s203 + $0x239] sm:$0xff]
      %v7446 = vld [vmem:[%s203 + $0x241] sm:$0xff]
      %v7447 = vld [vmem:[%s203 + $0x261] sm:$0xff]
      %v7448 = vld [vmem:[%s203 + $0x269] sm:$0xff]
      %s7449 = scalar_lea.vmem %s1, 76
      %v7450 = vld [vmem:[%s7449] sm:$0xf]
      %v7452 = vsel %vm280, %v7417, 0
      %v7455 = vsel %vm280, %v7418, 0
      %v7458 = vsel %vm280, %v7419, 0
      %v7461 = vsel %vm280, %v7420, 0
      %v7464 = vsel %vm280, %v7421, 0
      %v7467 = vsel %vm280, %v7422, 0
      %v7470 = vsel %vm280, %v7423, 0
      %v7473 = vsel %vm280, %v7424, 0
      %v7476 = vsel %vm280, %v7425, 0
      %v7479 = vsel %vm280, %v7426, 0
      %v7482 = vsel %vm280, %v7427, 0
      %v7485 = vsel %vm280, %v7428, 0
      %v7488 = vsel %vm280, %v7429, 0
      %v7491 = vsel %vm280, %v7430, 0
      %v7494 = vsel %vm280, %v7431, 0
      %v7497 = vsel %vm280, %v7432, 0
      %v7500 = vsel %vm280, %v7433, 0
      %v7503 = vsel %vm280, %v7434, 0
      %v7506 = vsel %vm280, %v7435, 0
      %v7509 = vsel %vm280, %v7436, 0
      %v7512 = vsel %vm280, %v7437, 0
      %v7515 = vsel %vm280, %v7438, 0
      %v7518 = vsel %vm280, %v7439, 0
      %v7521 = vsel %vm280, %v7440, 0
      %v7524 = vsel %vm280, %v7441, 0
      %v7527 = vsel %vm280, %v7442, 0
      %v7530 = vsel %vm280, %v7443, 0
      %v7533 = vsel %vm280, %v7444, 0
      %v7536 = vsel %vm280, %v7445, 0
      %v7539 = vsel %vm280, %v7446, 0
      %v7542 = vsel %vm280, %v7447, 0
      %v7545 = vsel %vm280, %v7448, 0
      %v7548 = vsel %vm377, %v7450, 0
      %7550 = vmatprep.subr.mxu0 0.0
      %7551 = vmatpush1.msra.mxu0 %v7548
      %7552 = vmatprep.subr.mxu0 0.0
      %7553 = vmatpush1.msra.mxu0 0.0
      %7554 = vmatprep.subr.mxu0 0.0
      %7555 = vmatpush1.msra.mxu0 0.0
      %7556 = vmatprep.subr.mxu0 0.0
      %7557 = vmatpush1.msra.mxu0 0.0
      %7558 = vmatprep.subr.mxu0 0.0
      %7559 = vmatpush1.msra.mxu0 0.0
      %7560 = vmatprep.subr.mxu0 0.0
      %7561 = vmatpush1.msra.mxu0 0.0
      %7562 = vmatprep.subr.mxu0 0.0
      %7563 = vmatpush1.msra.mxu0 0.0
      %7564 = vmatprep.subr.mxu0 0.0
      %7565 = vmatpush1.msra.mxu0 0.0
      %7566 = vmatprep.subr.mxu0 0.0
      %7567 = vmatpush1.msra.mxu0 0.0
      %7568 = vmatprep.subr.mxu0 0.0
      %7569 = vmatpush1.msra.mxu0 0.0
      %7570 = vmatprep.subr.mxu0 0.0
      %7571 = vmatpush1.msra.mxu0 0.0
      %7572 = vmatprep.subr.mxu0 0.0
      %7573 = vmatpush1.msra.mxu0 0.0
      %7574 = vmatprep.subr.mxu0 0.0
      %7575 = vmatpush1.msra.mxu0 0.0
      %7576 = vmatprep.subr.mxu0 0.0
      %7577 = vmatpush1.msra.mxu0 0.0
      %7578 = vmatprep.subr.mxu0 0.0
      %7579 = vmatpush1.msra.mxu0 0.0
      %7580 = vmatprep.subr.mxu0 0.0
      %7581 = vmatpush1.msra.mxu0 0.0
      %7582 = vmatprep.subr.mxu0 0.0
      %7583 = vmatpush1.msra.mxu0 0.0
      %7584 = vmatprep.subr.mxu0 0.0
      %7585 = vmatpush1.msra.mxu0 0.0
      %7586 = vmatprep.subr.mxu0 0.0
      %7587 = vmatpush1.msra.mxu0 0.0
      %7588 = vmatprep.subr.mxu0 0.0
      %7589 = vmatpush1.msra.mxu0 0.0
      %7590 = vmatprep.subr.mxu0 0.0
      %7591 = vmatpush1.msra.mxu0 0.0
      %7592 = vmatprep.subr.mxu0 0.0
      %7593 = vmatpush1.msra.mxu0 0.0
      %7594 = vmatprep.subr.mxu0 0.0
      %7595 = vmatpush1.msra.mxu0 0.0
      %7596 = vmatprep.subr.mxu0 0.0
      %7597 = vmatpush1.msra.mxu0 0.0
      %7598 = vmatprep.subr.mxu0 0.0
      %7599 = vmatpush1.msra.mxu0 0.0
      %7600 = vmatprep.subr.mxu0 0.0
      %7601 = vmatpush1.msra.mxu0 0.0
      %7602 = vmatprep.subr.mxu0 0.0
      %7603 = vmatpush1.msra.mxu0 0.0
      %7604 = vmatprep.subr.mxu0 0.0
      %7605 = vmatpush1.msra.mxu0 0.0
      %7606 = vmatprep.subr.mxu0 0.0
      %7607 = vmatpush1.msra.mxu0 0.0
      %7608 = vmatprep.subr.mxu0 0.0
      %7609 = vmatpush1.msra.mxu0 0.0
      %7610 = vmatprep.subr.mxu0 0.0
      %7611 = vmatpush1.msra.mxu0 0.0
      %7612 = vmatprep.subr.mxu0 0.0
      %7613 = vmatpush1.msra.mxu0 0.0
      %7614 = vmatprep.mubr.f32.mxu0 0.0
      %7615 = vmatmul.mubr.f32.gmra.mrb[0].mxu0 %v7452
      %v7616 = vpop.f32.mrb[0].mxu0
      %v7617 = vadd.f32 0.0, %v7616
      %v7618 = vpop.f32.mrb[0].mxu0
      %7619 = vmatprep.mubr.f32.mxu0 0.0
      %7620 = vmatmul.mubr.f32.gmra.mrb[0].mxu0 %v7455
      %v7621 = vpop.f32.mrb[0].mxu0
      %v7622 = vadd.f32 0.0, %v7621
      %v7623 = vpop.f32.mrb[0].mxu0
      %7624 = vmatprep.mubr.f32.mxu0 0.0
      %7625 = vmatmul.mubr.f32.gmra.mrb[0].mxu0 %v7458
      %v7626 = vpop.f32.mrb[0].mxu0
      %v7627 = vadd.f32 0.0, %v7626
      %v7628 = vpop.f32.mrb[0].mxu0
      %7629 = vmatprep.mubr.f32.mxu0 0.0
      %7630 = vmatmul.mubr.f32.gmra.mrb[0].mxu0 %v7461
      %v7631 = vpop.f32.mrb[0].mxu0
      %v7632 = vadd.f32 0.0, %v7631
      %v7633 = vpop.f32.mrb[0].mxu0
      %7634 = vmatprep.mubr.f32.mxu0 0.0
      %7635 = vmatmul.mubr.f32.gmra.mrb[0].mxu0 %v7464
      %v7636 = vpop.f32.mrb[0].mxu0
      %v7637 = vadd.f32 0.0, %v7636
      %v7638 = vpop.f32.mrb[0].mxu0
      %7639 = vmatprep.mubr.f32.mxu0 0.0
      %7640 = vmatmul.mubr.f32.gmra.mrb[0].mxu0 %v7467
      %v7641 = vpop.f32.mrb[0].mxu0
      %v7642 = vadd.f32 0.0, %v7641
      %v7643 = vpop.f32.mrb[0].mxu0
      %7644 = vmatprep.mubr.f32.mxu0 0.0
      %7645 = vmatmul.mubr.f32.gmra.mrb[0].mxu0 %v7470
      %v7646 = vpop.f32.mrb[0].mxu0
      %v7647 = vadd.f32 0.0, %v7646
      %v7648 = vpop.f32.mrb[0].mxu0
      %7649 = vmatprep.mubr.f32.mxu0 0.0
      %7650 = vmatmul.mubr.f32.gmra.mrb[0].mxu0 %v7473
      %v7651 = vpop.f32.mrb[0].mxu0
      %v7652 = vadd.f32 0.0, %v7651
      %v7653 = vpop.f32.mrb[0].mxu0
      %7654 = vmatprep.mubr.f32.mxu0 0.0
      %7655 = vmatmul.mubr.f32.gmra.mrb[0].mxu0 %v7476
      %v7656 = vpop.f32.mrb[0].mxu0
      %v7657 = vadd.f32 0.0, %v7656
      %v7658 = vpop.f32.mrb[0].mxu0
      %7659 = vmatprep.mubr.f32.mxu0 0.0
      %7660 = vmatmul.mubr.f32.gmra.mrb[0].mxu0 %v7479
      %v7661 = vpop.f32.mrb[0].mxu0
      %v7662 = vadd.f32 0.0, %v7661
      %v7663 = vpop.f32.mrb[0].mxu0
      %7664 = vmatprep.mubr.f32.mxu0 0.0
      %7665 = vmatmul.mubr.f32.gmra.mrb[0].mxu0 %v7482
      %v7666 = vpop.f32.mrb[0].mxu0
      %v7667 = vadd.f32 0.0, %v7666
      %v7668 = vpop.f32.mrb[0].mxu0
      %7669 = vmatprep.mubr.f32.mxu0 0.0
      %7670 = vmatmul.mubr.f32.gmra.mrb[0].mxu0 %v7485
      %v7671 = vpop.f32.mrb[0].mxu0
      %v7672 = vadd.f32 0.0, %v7671
      %v7673 = vpop.f32.mrb[0].mxu0
      %7674 = vmatprep.mubr.f32.mxu0 0.0
      %7675 = vmatmul.mubr.f32.gmra.mrb[0].mxu0 %v7488
      %v7676 = vpop.f32.mrb[0].mxu0
      %v7677 = vadd.f32 0.0, %v7676
      %v7678 = vpop.f32.mrb[0].mxu0
      %7679 = vmatprep.mubr.f32.mxu0 0.0
      %7680 = vmatmul.mubr.f32.gmra.mrb[0].mxu0 %v7491
      %v7681 = vpop.f32.mrb[0].mxu0
      %v7682 = vadd.f32 0.0, %v7681
      %v7683 = vpop.f32.mrb[0].mxu0
      %7684 = vmatprep.mubr.f32.mxu0 0.0
      %7685 = vmatmul.mubr.f32.gmra.mrb[0].mxu0 %v7494
      %v7686 = vpop.f32.mrb[0].mxu0
      %v7687 = vadd.f32 0.0, %v7686
      %v7688 = vpop.f32.mrb[0].mxu0
      %7689 = vmatprep.mubr.f32.mxu0 0.0
      %7690 = vmatmul.mubr.f32.gmra.mrb[0].mxu0 %v7497
      %v7691 = vpop.f32.mrb[0].mxu0
      %v7692 = vadd.f32 0.0, %v7691
      %v7693 = vpop.f32.mrb[0].mxu0
      %7694 = vmatprep.mubr.f32.mxu0 0.0
      %7695 = vmatmul.mubr.f32.gmra.mrb[0].mxu0 %v7500
      %v7696 = vpop.f32.mrb[0].mxu0
      %v7697 = vadd.f32 0.0, %v7696
      %v7698 = vpop.f32.mrb[0].mxu0
      %7699 = vmatprep.mubr.f32.mxu0 0.0
      %7700 = vmatmul.mubr.f32.gmra.mrb[0].mxu0 %v7503
      %v7701 = vpop.f32.mrb[0].mxu0
      %v7702 = vadd.f32 0.0, %v7701
      %v7703 = vpop.f32.mrb[0].mxu0
      %7704 = vmatprep.mubr.f32.mxu0 0.0
      %7705 = vmatmul.mubr.f32.gmra.mrb[0].mxu0 %v7506
      %v7706 = vpop.f32.mrb[0].mxu0
      %v7707 = vadd.f32 0.0, %v7706
      %v7708 = vpop.f32.mrb[0].mxu0
      %7709 = vmatprep.mubr.f32.mxu0 0.0
      %7710 = vmatmul.mubr.f32.gmra.mrb[0].mxu0 %v7509
      %v7711 = vpop.f32.mrb[0].mxu0
      %v7712 = vadd.f32 0.0, %v7711
      %v7713 = vpop.f32.mrb[0].mxu0
      %7714 = vmatprep.mubr.f32.mxu0 0.0
      %7715 = vmatmul.mubr.f32.gmra.mrb[0].mxu0 %v7512
      %v7716 = vpop.f32.mrb[0].mxu0
      %v7717 = vadd.f32 0.0, %v7716
      %v7718 = vpop.f32.mrb[0].mxu0
      %7719 = vmatprep.mubr.f32.mxu0 0.0
      %7720 = vmatmul.mubr.f32.gmra.mrb[0].mxu0 %v7515
      %v7721 = vpop.f32.mrb[0].mxu0
      %v7722 = vadd.f32 0.0, %v7721
      %v7723 = vpop.f32.mrb[0].mxu0
      %7724 = vmatprep.mubr.f32.mxu0 0.0
      %7725 = vmatmul.mubr.f32.gmra.mrb[0].mxu0 %v7518
      %v7726 = vpop.f32.mrb[0].mxu0
      %v7727 = vadd.f32 0.0, %v7726
      %v7728 = vpop.f32.mrb[0].mxu0
      %7729 = vmatprep.mubr.f32.mxu0 0.0
      %7730 = vmatmul.mubr.f32.gmra.mrb[0].mxu0 %v7521
      %v7731 = vpop.f32.mrb[0].mxu0
      %v7732 = vadd.f32 0.0, %v7731
      %v7733 = vpop.f32.mrb[0].mxu0
      %7734 = vmatprep.mubr.f32.mxu0 0.0
      %7735 = vmatmul.mubr.f32.gmra.mrb[0].mxu0 %v7524
      %v7736 = vpop.f32.mrb[0].mxu0
      %v7737 = vadd.f32 0.0, %v7736
      %v7738 = vpop.f32.mrb[0].mxu0
      %7739 = vmatprep.mubr.f32.mxu0 0.0
      %7740 = vmatmul.mubr.f32.gmra.mrb[0].mxu0 %v7527
      %v7741 = vpop.f32.mrb[0].mxu0
      %v7742 = vadd.f32 0.0, %v7741
      %v7743 = vpop.f32.mrb[0].mxu0
      %7744 = vmatprep.mubr.f32.mxu0 0.0
      %7745 = vmatmul.mubr.f32.gmra.mrb[0].mxu0 %v7530
      %v7746 = vpop.f32.mrb[0].mxu0
      %v7747 = vadd.f32 0.0, %v7746
      %v7748 = vpop.f32.mrb[0].mxu0
      %7749 = vmatprep.mubr.f32.mxu0 0.0
      %7750 = vmatmul.mubr.f32.gmra.mrb[0].mxu0 %v7533
      %v7751 = vpop.f32.mrb[0].mxu0
      %v7752 = vadd.f32 0.0, %v7751
      %v7753 = vpop.f32.mrb[0].mxu0
      %7754 = vmatprep.mubr.f32.mxu0 0.0
      %7755 = vmatmul.mubr.f32.gmra.mrb[0].mxu0 %v7536
      %v7756 = vpop.f32.mrb[0].mxu0
      %v7757 = vadd.f32 0.0, %v7756
      %v7758 = vpop.f32.mrb[0].mxu0
      %7759 = vmatprep.mubr.f32.mxu0 0.0
      %7760 = vmatmul.mubr.f32.gmra.mrb[0].mxu0 %v7539
      %v7761 = vpop.f32.mrb[0].mxu0
      %v7762 = vadd.f32 0.0, %v7761
      %v7763 = vpop.f32.mrb[0].mxu0
      %7764 = vmatprep.mubr.f32.mxu0 0.0
      %7765 = vmatmul.mubr.f32.gmra.mrb[0].mxu0 %v7542
      %v7766 = vpop.f32.mrb[0].mxu0
      %v7767 = vadd.f32 0.0, %v7766
      %v7768 = vpop.f32.mrb[0].mxu0
      %7769 = vmatprep.mubr.f32.mxu0 0.0
      %7770 = vmatmul.mubr.f32.gmra.mrb[0].mxu0 %v7545
      %v7771 = vpop.f32.mrb[0].mxu0
      %v7772 = vadd.f32 0.0, %v7771
      %v7773 = vpop.f32.mrb[0].mxu0
      %7774 = vdwg.mxu0
      %v7776 = vsel %vm280, %v7383, 0
      %v7779 = vsel %vm280, %v7384, 0
      %v7782 = vsel %vm280, %v7385, 0
      %v7785 = vsel %vm280, %v7386, 0
      %v7788 = vsel %vm280, %v7387, 0
      %v7791 = vsel %vm280, %v7388, 0
      %v7794 = vsel %vm280, %v7389, 0
      %v7797 = vsel %vm280, %v7390, 0
      %v7800 = vsel %vm280, %v7391, 0
      %v7803 = vsel %vm280, %v7392, 0
      %v7806 = vsel %vm280, %v7393, 0
      %v7809 = vsel %vm280, %v7394, 0
      %v7812 = vsel %vm280, %v7395, 0
      %v7815 = vsel %vm280, %v7396, 0
      %v7818 = vsel %vm280, %v7397, 0
      %v7821 = vsel %vm280, %v7398, 0
      %v7824 = vsel %vm280, %v7399, 0
      %v7827 = vsel %vm280, %v7400, 0
      %v7830 = vsel %vm280, %v7401, 0
      %v7833 = vsel %vm280, %v7402, 0
      %v7836 = vsel %vm280, %v7403, 0
      %v7839 = vsel %vm280, %v7404, 0
      %v7842 = vsel %vm280, %v7405, 0
      %v7845 = vsel %vm280, %v7406, 0
      %v7848 = vsel %vm280, %v7407, 0
      %v7851 = vsel %vm280, %v7408, 0
      %v7854 = vsel %vm280, %v7409, 0
      %v7857 = vsel %vm280, %v7410, 0
      %v7860 = vsel %vm280, %v7411, 0
      %v7863 = vsel %vm280, %v7412, 0
      %v7866 = vsel %vm280, %v7413, 0
      %v7869 = vsel %vm280, %v7414, 0
      %v7872 = vsel %vm377, %v7416, 0
      %7874 = vmatprep.subr.mxu0 0.0
      %7875 = vmatpush1.msra.mxu0 %v7872
      %7876 = vmatprep.subr.mxu0 0.0
      %7877 = vmatpush1.msra.mxu0 0.0
      %7878 = vmatprep.subr.mxu0 0.0
      %7879 = vmatpush1.msra.mxu0 0.0
      %7880 = vmatprep.subr.mxu0 0.0
      %7881 = vmatpush1.msra.mxu0 0.0
      %7882 = vmatprep.subr.mxu0 0.0
      %7883 = vmatpush1.msra.mxu0 0.0
      %7884 = vmatprep.subr.mxu0 0.0
      %7885 = vmatpush1.msra.mxu0 0.0
      %7886 = vmatprep.subr.mxu0 0.0
      %7887 = vmatpush1.msra.mxu0 0.0
      %7888 = vmatprep.subr.mxu0 0.0
      %7889 = vmatpush1.msra.mxu0 0.0
      %7890 = vmatprep.subr.mxu0 0.0
      %7891 = vmatpush1.msra.mxu0 0.0
      %7892 = vmatprep.subr.mxu0 0.0
      %7893 = vmatpush1.msra.mxu0 0.0
      %7894 = vmatprep.subr.mxu0 0.0
      %7895 = vmatpush1.msra.mxu0 0.0
      %7896 = vmatprep.subr.mxu0 0.0
      %7897 = vmatpush1.msra.mxu0 0.0
      %7898 = vmatprep.subr.mxu0 0.0
      %7899 = vmatpush1.msra.mxu0 0.0
      %7900 = vmatprep.subr.mxu0 0.0
      %7901 = vmatpush1.msra.mxu0 0.0
      %7902 = vmatprep.subr.mxu0 0.0
      %7903 = vmatpush1.msra.mxu0 0.0
      %7904 = vmatprep.subr.mxu0 0.0
      %7905 = vmatpush1.msra.mxu0 0.0
      %7906 = vmatprep.subr.mxu0 0.0
      %7907 = vmatpush1.msra.mxu0 0.0
      %7908 = vmatprep.subr.mxu0 0.0
      %7909 = vmatpush1.msra.mxu0 0.0
      %7910 = vmatprep.subr.mxu0 0.0
      %7911 = vmatpush1.msra.mxu0 0.0
      %7912 = vmatprep.subr.mxu0 0.0
      %7913 = vmatpush1.msra.mxu0 0.0
      %7914 = vmatprep.subr.mxu0 0.0
      %7915 = vmatpush1.msra.mxu0 0.0
      %7916 = vmatprep.subr.mxu0 0.0
      %7917 = vmatpush1.msra.mxu0 0.0
      %7918 = vmatprep.subr.mxu0 0.0
      %7919 = vmatpush1.msra.mxu0 0.0
      %7920 = vmatprep.subr.mxu0 0.0
      %7921 = vmatpush1.msra.mxu0 0.0
      %7922 = vmatprep.subr.mxu0 0.0
      %7923 = vmatpush1.msra.mxu0 0.0
      %7924 = vmatprep.subr.mxu0 0.0
      %7925 = vmatpush1.msra.mxu0 0.0
      %7926 = vmatprep.subr.mxu0 0.0
      %7927 = vmatpush1.msra.mxu0 0.0
      %7928 = vmatprep.subr.mxu0 0.0
      %7929 = vmatpush1.msra.mxu0 0.0
      %7930 = vmatprep.subr.mxu0 0.0
      %7931 = vmatpush1.msra.mxu0 0.0
      %7932 = vmatprep.subr.mxu0 0.0
      %7933 = vmatpush1.msra.mxu0 0.0
      %7934 = vmatprep.subr.mxu0 0.0
      %7935 = vmatpush1.msra.mxu0 0.0
      %7936 = vmatprep.subr.mxu0 0.0
      %7937 = vmatpush1.msra.mxu0 0.0
      %7938 = vmatprep.mubr.f32.mxu0 0.0
      %7939 = vmatmul.mubr.f32.gmra.mrb[0].mxu0 %v7776
      %v7940 = vpop.f32.mrb[0].mxu0
      %v7941 = vadd.f32 %v7617, %v7940
      %v7942 = vpop.f32.mrb[0].mxu0
      %7943 = vmatprep.mubr.f32.mxu0 0.0
      %7944 = vmatmul.mubr.f32.gmra.mrb[0].mxu0 %v7779
      %v7945 = vpop.f32.mrb[0].mxu0
      %v7946 = vadd.f32 %v7622, %v7945
      %v7947 = vpop.f32.mrb[0].mxu0
      %7948 = vmatprep.mubr.f32.mxu0 0.0
      %7949 = vmatmul.mubr.f32.gmra.mrb[0].mxu0 %v7782
      %v7950 = vpop.f32.mrb[0].mxu0
      %v7951 = vadd.f32 %v7627, %v7950
      %v7952 = vpop.f32.mrb[0].mxu0
      %7953 = vmatprep.mubr.f32.mxu0 0.0
      %7954 = vmatmul.mubr.f32.gmra.mrb[0].mxu0 %v7785
      %v7955 = vpop.f32.mrb[0].mxu0
      %v7956 = vadd.f32 %v7632, %v7955
      %v7957 = vpop.f32.mrb[0].mxu0
      %7958 = vmatprep.mubr.f32.mxu0 0.0
      %7959 = vmatmul.mubr.f32.gmra.mrb[0].mxu0 %v7788
      %v7960 = vpop.f32.mrb[0].mxu0
      %v7961 = vadd.f32 %v7637, %v7960
      %v7962 = vpop.f32.mrb[0].mxu0
      %7963 = vmatprep.mubr.f32.mxu0 0.0
      %7964 = vmatmul.mubr.f32.gmra.mrb[0].mxu0 %v7791
      %v7965 = vpop.f32.mrb[0].mxu0
      %v7966 = vadd.f32 %v7642, %v7965
      %v7967 = vpop.f32.mrb[0].mxu0
      %7968 = vmatprep.mubr.f32.mxu0 0.0
      %7969 = vmatmul.mubr.f32.gmra.mrb[0].mxu0 %v7794
      %v7970 = vpop.f32.mrb[0].mxu0
      %v7971 = vadd.f32 %v7647, %v7970
      %v7972 = vpop.f32.mrb[0].mxu0
      %7973 = vmatprep.mubr.f32.mxu0 0.0
      %7974 = vmatmul.mubr.f32.gmra.mrb[0].mxu0 %v7797
      %v7975 = vpop.f32.mrb[0].mxu0
      %v7976 = vadd.f32 %v7652, %v7975
      %v7977 = vpop.f32.mrb[0].mxu0
      %7978 = vmatprep.mubr.f32.mxu0 0.0
      %7979 = vmatmul.mubr.f32.gmra.mrb[0].mxu0 %v7800
      %v7980 = vpop.f32.mrb[0].mxu0
      %v7981 = vadd.f32 %v7657, %v7980
      %v7982 = vpop.f32.mrb[0].mxu0
      %7983 = vmatprep.mubr.f32.mxu0 0.0
      %7984 = vmatmul.mubr.f32.gmra.mrb[0].mxu0 %v7803
      %v7985 = vpop.f32.mrb[0].mxu0
      %v7986 = vadd.f32 %v7662, %v7985
      %v7987 = vpop.f32.mrb[0].mxu0
      %7988 = vmatprep.mubr.f32.mxu0 0.0
      %7989 = vmatmul.mubr.f32.gmra.mrb[0].mxu0 %v7806
      %v7990 = vpop.f32.mrb[0].mxu0
      %v7991 = vadd.f32 %v7667, %v7990
      %v7992 = vpop.f32.mrb[0].mxu0
      %7993 = vmatprep.mubr.f32.mxu0 0.0
      %7994 = vmatmul.mubr.f32.gmra.mrb[0].mxu0 %v7809
      %v7995 = vpop.f32.mrb[0].mxu0
      %v7996 = vadd.f32 %v7672, %v7995
      %v7997 = vpop.f32.mrb[0].mxu0
      %7998 = vmatprep.mubr.f32.mxu0 0.0
      %7999 = vmatmul.mubr.f32.gmra.mrb[0].mxu0 %v7812
      %v8000 = vpop.f32.mrb[0].mxu0
      %v8001 = vadd.f32 %v7677, %v8000
      %v8002 = vpop.f32.mrb[0].mxu0
      %8003 = vmatprep.mubr.f32.mxu0 0.0
      %8004 = vmatmul.mubr.f32.gmra.mrb[0].mxu0 %v7815
      %v8005 = vpop.f32.mrb[0].mxu0
      %v8006 = vadd.f32 %v7682, %v8005
      %v8007 = vpop.f32.mrb[0].mxu0
      %8008 = vmatprep.mubr.f32.mxu0 0.0
      %8009 = vmatmul.mubr.f32.gmra.mrb[0].mxu0 %v7818
      %v8010 = vpop.f32.mrb[0].mxu0
      %v8011 = vadd.f32 %v7687, %v8010
      %v8012 = vpop.f32.mrb[0].mxu0
      %8013 = vmatprep.mubr.f32.mxu0 0.0
      %8014 = vmatmul.mubr.f32.gmra.mrb[0].mxu0 %v7821
      %v8015 = vpop.f32.mrb[0].mxu0
      %v8016 = vadd.f32 %v7692, %v8015
      %v8017 = vpop.f32.mrb[0].mxu0
      %8018 = vmatprep.mubr.f32.mxu0 0.0
      %8019 = vmatmul.mubr.f32.gmra.mrb[0].mxu0 %v7824
      %v8020 = vpop.f32.mrb[0].mxu0
      %v8021 = vadd.f32 %v7697, %v8020
      %v8022 = vpop.f32.mrb[0].mxu0
      %8023 = vmatprep.mubr.f32.mxu0 0.0
      %8024 = vmatmul.mubr.f32.gmra.mrb[0].mxu0 %v7827
      %v8025 = vpop.f32.mrb[0].mxu0
      %v8026 = vadd.f32 %v7702, %v8025
      %v8027 = vpop.f32.mrb[0].mxu0
      %8028 = vmatprep.mubr.f32.mxu0 0.0
      %8029 = vmatmul.mubr.f32.gmra.mrb[0].mxu0 %v7830
      %v8030 = vpop.f32.mrb[0].mxu0
      %v8031 = vadd.f32 %v7707, %v8030
      %v8032 = vpop.f32.mrb[0].mxu0
      %8033 = vmatprep.mubr.f32.mxu0 0.0
      %8034 = vmatmul.mubr.f32.gmra.mrb[0].mxu0 %v7833
      %v8035 = vpop.f32.mrb[0].mxu0
      %v8036 = vadd.f32 %v7712, %v8035
      %v8037 = vpop.f32.mrb[0].mxu0
      %8038 = vmatprep.mubr.f32.mxu0 0.0
      %8039 = vmatmul.mubr.f32.gmra.mrb[0].mxu0 %v7836
      %v8040 = vpop.f32.mrb[0].mxu0
      %v8041 = vadd.f32 %v7717, %v8040
      %v8042 = vpop.f32.mrb[0].mxu0
      %8043 = vmatprep.mubr.f32.mxu0 0.0
      %8044 = vmatmul.mubr.f32.gmra.mrb[0].mxu0 %v7839
      %v8045 = vpop.f32.mrb[0].mxu0
      %v8046 = vadd.f32 %v7722, %v8045
      %v8047 = vpop.f32.mrb[0].mxu0
      %8048 = vmatprep.mubr.f32.mxu0 0.0
      %8049 = vmatmul.mubr.f32.gmra.mrb[0].mxu0 %v7842
      %v8050 = vpop.f32.mrb[0].mxu0
      %v8051 = vadd.f32 %v7727, %v8050
      %v8052 = vpop.f32.mrb[0].mxu0
      %8053 = vmatprep.mubr.f32.mxu0 0.0
      %8054 = vmatmul.mubr.f32.gmra.mrb[0].mxu0 %v7845
      %v8055 = vpop.f32.mrb[0].mxu0
      %v8056 = vadd.f32 %v7732, %v8055
      %v8057 = vpop.f32.mrb[0].mxu0
      %8058 = vmatprep.mubr.f32.mxu0 0.0
      %8059 = vmatmul.mubr.f32.gmra.mrb[0].mxu0 %v7848
      %v8060 = vpop.f32.mrb[0].mxu0
      %v8061 = vadd.f32 %v7737, %v8060
      %v8062 = vpop.f32.mrb[0].mxu0
      %8063 = vmatprep.mubr.f32.mxu0 0.0
      %8064 = vmatmul.mubr.f32.gmra.mrb[0].mxu0 %v7851
      %v8065 = vpop.f32.mrb[0].mxu0
      %v8066 = vadd.f32 %v7742, %v8065
      %v8067 = vpop.f32.mrb[0].mxu0
      %8068 = vmatprep.mubr.f32.mxu0 0.0
      %8069 = vmatmul.mubr.f32.gmra.mrb[0].mxu0 %v7854
      %v8070 = vpop.f32.mrb[0].mxu0
      %v8071 = vadd.f32 %v7747, %v8070
      %v8072 = vpop.f32.mrb[0].mxu0
      %8073 = vmatprep.mubr.f32.mxu0 0.0
      %8074 = vmatmul.mubr.f32.gmra.mrb[0].mxu0 %v7857
      %v8075 = vpop.f32.mrb[0].mxu0
      %v8076 = vadd.f32 %v7752, %v8075
      %v8077 = vpop.f32.mrb[0].mxu0
      %8078 = vmatprep.mubr.f32.mxu0 0.0
      %8079 = vmatmul.mubr.f32.gmra.mrb[0].mxu0 %v7860
      %v8080 = vpop.f32.mrb[0].mxu0
      %v8081 = vadd.f32 %v7757, %v8080
      %v8082 = vpop.f32.mrb[0].mxu0
      %8083 = vmatprep.mubr.f32.mxu0 0.0
      %8084 = vmatmul.mubr.f32.gmra.mrb[0].mxu0 %v7863
      %v8085 = vpop.f32.mrb[0].mxu0
      %v8086 = vadd.f32 %v7762, %v8085
      %v8087 = vpop.f32.mrb[0].mxu0
      %8088 = vmatprep.mubr.f32.mxu0 0.0
      %8089 = vmatmul.mubr.f32.gmra.mrb[0].mxu0 %v7866
      %v8090 = vpop.f32.mrb[0].mxu0
      %v8091 = vadd.f32 %v7767, %v8090
      %v8092 = vpop.f32.mrb[0].mxu0
      %8093 = vmatprep.mubr.f32.mxu0 0.0
      %8094 = vmatmul.mubr.f32.gmra.mrb[0].mxu0 %v7869
      %v8095 = vpop.f32.mrb[0].mxu0
      %v8096 = vadd.f32 %v7772, %v8095
      %v8097 = vpop.f32.mrb[0].mxu0
      %8098 = vdwg.mxu0
      %v8099 = vld [vmem:[%s203 + $0x12] sm:$0xff]
      %v8100 = vld [vmem:[%s203 + $0x1a] sm:$0xff]
      %v8101 = vld [vmem:[%s203 + $0x3a] sm:$0xff]
      %v8102 = vld [vmem:[%s203 + $0x42] sm:$0xff]
      %v8103 = vld [vmem:[%s203 + $0x62] sm:$0xff]
      %v8104 = vld [vmem:[%s203 + $0x6a] sm:$0xff]
      %v8105 = vld [vmem:[%s203 + $0x8a] sm:$0xff]
      %v8106 = vld [vmem:[%s203 + $0x92] sm:$0xff]
      %v8107 = vld [vmem:[%s203 + $0xb2] sm:$0xff]
      %v8108 = vld [vmem:[%s203 + $0xba] sm:$0xff]
      %v8109 = vld [vmem:[%s203 + $0xda] sm:$0xff]
      %v8110 = vld [vmem:[%s203 + $0xe2] sm:$0xff]
      %v8111 = vld [vmem:[%s203 + $0x102] sm:$0xff]
      %v8112 = vld [vmem:[%s203 + $0x10a] sm:$0xff]
      %v8113 = vld [vmem:[%s203 + $0x12a] sm:$0xff]
      %v8114 = vld [vmem:[%s203 + $0x132] sm:$0xff]
      %v8115 = vld [vmem:[%s203 + $0x152] sm:$0xff]
      %v8116 = vld [vmem:[%s203 + $0x15a] sm:$0xff]
      %v8117 = vld [vmem:[%s203 + $0x17a] sm:$0xff]
      %v8118 = vld [vmem:[%s203 + $0x182] sm:$0xff]
      %v8119 = vld [vmem:[%s203 + $0x1a2] sm:$0xff]
      %v8120 = vld [vmem:[%s203 + $0x1aa] sm:$0xff]
      %v8121 = vld [vmem:[%s203 + $0x1ca] sm:$0xff]
      %v8122 = vld [vmem:[%s203 + $0x1d2] sm:$0xff]
      %v8123 = vld [vmem:[%s203 + $0x1f2] sm:$0xff]
      %v8124 = vld [vmem:[%s203 + $0x1fa] sm:$0xff]
      %v8125 = vld [vmem:[%s203 + $0x21a] sm:$0xff]
      %v8126 = vld [vmem:[%s203 + $0x222] sm:$0xff]
      %v8127 = vld [vmem:[%s203 + $0x242] sm:$0xff]
      %v8128 = vld [vmem:[%s203 + $0x24a] sm:$0xff]
      %v8129 = vld [vmem:[%s203 + $0x26a] sm:$0xff]
      %v8130 = vld [vmem:[%s203 + $0x272] sm:$0xff]
      %s8131 = scalar_lea.vmem %s1, 80
      %v8132 = vld [vmem:[%s8131] sm:$0xf]
      %v8134 = vsel %vm280, %v8099, 0
      %v8137 = vsel %vm280, %v8100, 0
      %v8140 = vsel %vm280, %v8101, 0
      %v8143 = vsel %vm280, %v8102, 0
      %v8146 = vsel %vm280, %v8103, 0
      %v8149 = vsel %vm280, %v8104, 0
      %v8152 = vsel %vm280, %v8105, 0
      %v8155 = vsel %vm280, %v8106, 0
      %v8158 = vsel %vm280, %v8107, 0
      %v8161 = vsel %vm280, %v8108, 0
      %v8164 = vsel %vm280, %v8109, 0
      %v8167 = vsel %vm280, %v8110, 0
      %v8170 = vsel %vm280, %v8111, 0
      %v8173 = vsel %vm280, %v8112, 0
      %v8176 = vsel %vm280, %v8113, 0
      %v8179 = vsel %vm280, %v8114, 0
      %v8182 = vsel %vm280, %v8115, 0
      %v8185 = vsel %vm280, %v8116, 0
      %v8188 = vsel %vm280, %v8117, 0
      %v8191 = vsel %vm280, %v8118, 0
      %v8194 = vsel %vm280, %v8119, 0
      %v8197 = vsel %vm280, %v8120, 0
      %v8200 = vsel %vm280, %v8121, 0
      %v8203 = vsel %vm280, %v8122, 0
      %v8206 = vsel %vm280, %v8123, 0
      %v8209 = vsel %vm280, %v8124, 0
      %v8212 = vsel %vm280, %v8125, 0
      %v8215 = vsel %vm280, %v8126, 0
      %v8218 = vsel %vm280, %v8127, 0
      %v8221 = vsel %vm280, %v8128, 0
      %v8224 = vsel %vm280, %v8129, 0
      %v8227 = vsel %vm280, %v8130, 0
      %v8230 = vsel %vm377, %v8132, 0
      %8232 = vmatprep.subr.mxu0 0.0
      %8233 = vmatpush1.msra.mxu0 %v8230
      %8234 = vmatprep.subr.mxu0 0.0
      %8235 = vmatpush1.msra.mxu0 0.0
      %8236 = vmatprep.subr.mxu0 0.0
      %8237 = vmatpush1.msra.mxu0 0.0
      %8238 = vmatprep.subr.mxu0 0.0
      %8239 = vmatpush1.msra.mxu0 0.0
      %8240 = vmatprep.subr.mxu0 0.0
      %8241 = vmatpush1.msra.mxu0 0.0
      %8242 = vmatprep.subr.mxu0 0.0
      %8243 = vmatpush1.msra.mxu0 0.0
      %8244 = vmatprep.subr.mxu0 0.0
      %8245 = vmatpush1.msra.mxu0 0.0
      %8246 = vmatprep.subr.mxu0 0.0
      %8247 = vmatpush1.msra.mxu0 0.0
      %8248 = vmatprep.subr.mxu0 0.0
      %8249 = vmatpush1.msra.mxu0 0.0
      %8250 = vmatprep.subr.mxu0 0.0
      %8251 = vmatpush1.msra.mxu0 0.0
      %8252 = vmatprep.subr.mxu0 0.0
      %8253 = vmatpush1.msra.mxu0 0.0
      %8254 = vmatprep.subr.mxu0 0.0
      %8255 = vmatpush1.msra.mxu0 0.0
      %8256 = vmatprep.subr.mxu0 0.0
      %8257 = vmatpush1.msra.mxu0 0.0
      %8258 = vmatprep.subr.mxu0 0.0
      %8259 = vmatpush1.msra.mxu0 0.0
      %8260 = vmatprep.subr.mxu0 0.0
      %8261 = vmatpush1.msra.mxu0 0.0
      %8262 = vmatprep.subr.mxu0 0.0
      %8263 = vmatpush1.msra.mxu0 0.0
      %8264 = vmatprep.subr.mxu0 0.0
      %8265 = vmatpush1.msra.mxu0 0.0
      %8266 = vmatprep.subr.mxu0 0.0
      %8267 = vmatpush1.msra.mxu0 0.0
      %8268 = vmatprep.subr.mxu0 0.0
      %8269 = vmatpush1.msra.mxu0 0.0
      %8270 = vmatprep.subr.mxu0 0.0
      %8271 = vmatpush1.msra.mxu0 0.0
      %8272 = vmatprep.subr.mxu0 0.0
      %8273 = vmatpush1.msra.mxu0 0.0
      %8274 = vmatprep.subr.mxu0 0.0
      %8275 = vmatpush1.msra.mxu0 0.0
      %8276 = vmatprep.subr.mxu0 0.0
      %8277 = vmatpush1.msra.mxu0 0.0
      %8278 = vmatprep.subr.mxu0 0.0
      %8279 = vmatpush1.msra.mxu0 0.0
      %8280 = vmatprep.subr.mxu0 0.0
      %8281 = vmatpush1.msra.mxu0 0.0
      %8282 = vmatprep.subr.mxu0 0.0
      %8283 = vmatpush1.msra.mxu0 0.0
      %8284 = vmatprep.subr.mxu0 0.0
      %8285 = vmatpush1.msra.mxu0 0.0
      %8286 = vmatprep.subr.mxu0 0.0
      %8287 = vmatpush1.msra.mxu0 0.0
      %8288 = vmatprep.subr.mxu0 0.0
      %8289 = vmatpush1.msra.mxu0 0.0
      %8290 = vmatprep.subr.mxu0 0.0
      %8291 = vmatpush1.msra.mxu0 0.0
      %8292 = vmatprep.subr.mxu0 0.0
      %8293 = vmatpush1.msra.mxu0 0.0
      %8294 = vmatprep.subr.mxu0 0.0
      %8295 = vmatpush1.msra.mxu0 0.0
      %8296 = vmatprep.mubr.f32.mxu0 0.0
      %8297 = vmatmul.mubr.f32.gmra.mrb[0].mxu0 %v8134
      %v8298 = vpop.f32.mrb[0].mxu0
      %v8299 = vadd.f32 0.0, %v8298
      %v8300 = vpop.f32.mrb[0].mxu0
      %8301 = vmatprep.mubr.f32.mxu0 0.0
      %8302 = vmatmul.mubr.f32.gmra.mrb[0].mxu0 %v8137
      %v8303 = vpop.f32.mrb[0].mxu0
      %v8304 = vadd.f32 0.0, %v8303
      %v8305 = vpop.f32.mrb[0].mxu0
      %8306 = vmatprep.mubr.f32.mxu0 0.0
      %8307 = vmatmul.mubr.f32.gmra.mrb[0].mxu0 %v8140
      %v8308 = vpop.f32.mrb[0].mxu0
      %v8309 = vadd.f32 0.0, %v8308
      %v8310 = vpop.f32.mrb[0].mxu0
      %8311 = vmatprep.mubr.f32.mxu0 0.0
      %8312 = vmatmul.mubr.f32.gmra.mrb[0].mxu0 %v8143
      %v8313 = vpop.f32.mrb[0].mxu0
      %v8314 = vadd.f32 0.0, %v8313
      %v8315 = vpop.f32.mrb[0].mxu0
      %8316 = vmatprep.mubr.f32.mxu0 0.0
      %8317 = vmatmul.mubr.f32.gmra.mrb[0].mxu0 %v8146
      %v8318 = vpop.f32.mrb[0].mxu0
      %v8319 = vadd.f32 0.0, %v8318
      %v8320 = vpop.f32.mrb[0].mxu0
      %8321 = vmatprep.mubr.f32.mxu0 0.0
      %8322 = vmatmul.mubr.f32.gmra.mrb[0].mxu0 %v8149
      %v8323 = vpop.f32.mrb[0].mxu0
      %v8324 = vadd.f32 0.0, %v8323
      %v8325 = vpop.f32.mrb[0].mxu0
      %8326 = vmatprep.mubr.f32.mxu0 0.0
      %8327 = vmatmul.mubr.f32.gmra.mrb[0].mxu0 %v8152
      %v8328 = vpop.f32.mrb[0].mxu0
      %v8329 = vadd.f32 0.0, %v8328
      %v8330 = vpop.f32.mrb[0].mxu0
      %8331 = vmatprep.mubr.f32.mxu0 0.0
      %8332 = vmatmul.mubr.f32.gmra.mrb[0].mxu0 %v8155
      %v8333 = vpop.f32.mrb[0].mxu0
      %v8334 = vadd.f32 0.0, %v8333
      %v8335 = vpop.f32.mrb[0].mxu0
      %8336 = vmatprep.mubr.f32.mxu0 0.0
      %8337 = vmatmul.mubr.f32.gmra.mrb[0].mxu0 %v8158
      %v8338 = vpop.f32.mrb[0].mxu0
      %v8339 = vadd.f32 0.0, %v8338
      %v8340 = vpop.f32.mrb[0].mxu0
      %8341 = vmatprep.mubr.f32.mxu0 0.0
      %8342 = vmatmul.mubr.f32.gmra.mrb[0].mxu0 %v8161
      %v8343 = vpop.f32.mrb[0].mxu0
      %v8344 = vadd.f32 0.0, %v8343
      %v8345 = vpop.f32.mrb[0].mxu0
      %8346 = vmatprep.mubr.f32.mxu0 0.0
      %8347 = vmatmul.mubr.f32.gmra.mrb[0].mxu0 %v8164
      %v8348 = vpop.f32.mrb[0].mxu0
      %v8349 = vadd.f32 0.0, %v8348
      %v8350 = vpop.f32.mrb[0].mxu0
      %8351 = vmatprep.mubr.f32.mxu0 0.0
      %8352 = vmatmul.mubr.f32.gmra.mrb[0].mxu0 %v8167
      %v8353 = vpop.f32.mrb[0].mxu0
      %v8354 = vadd.f32 0.0, %v8353
      %v8355 = vpop.f32.mrb[0].mxu0
      %8356 = vmatprep.mubr.f32.mxu0 0.0
      %8357 = vmatmul.mubr.f32.gmra.mrb[0].mxu0 %v8170
      %v8358 = vpop.f32.mrb[0].mxu0
      %v8359 = vadd.f32 0.0, %v8358
      %v8360 = vpop.f32.mrb[0].mxu0
      %8361 = vmatprep.mubr.f32.mxu0 0.0
      %8362 = vmatmul.mubr.f32.gmra.mrb[0].mxu0 %v8173
      %v8363 = vpop.f32.mrb[0].mxu0
      %v8364 = vadd.f32 0.0, %v8363
      %v8365 = vpop.f32.mrb[0].mxu0
      %8366 = vmatprep.mubr.f32.mxu0 0.0
      %8367 = vmatmul.mubr.f32.gmra.mrb[0].mxu0 %v8176
      %v8368 = vpop.f32.mrb[0].mxu0
      %v8369 = vadd.f32 0.0, %v8368
      %v8370 = vpop.f32.mrb[0].mxu0
      %8371 = vmatprep.mubr.f32.mxu0 0.0
      %8372 = vmatmul.mubr.f32.gmra.mrb[0].mxu0 %v8179
      %v8373 = vpop.f32.mrb[0].mxu0
      %v8374 = vadd.f32 0.0, %v8373
      %v8375 = vpop.f32.mrb[0].mxu0
      %8376 = vmatprep.mubr.f32.mxu0 0.0
      %8377 = vmatmul.mubr.f32.gmra.mrb[0].mxu0 %v8182
      %v8378 = vpop.f32.mrb[0].mxu0
      %v8379 = vadd.f32 0.0, %v8378
      %v8380 = vpop.f32.mrb[0].mxu0
      %8381 = vmatprep.mubr.f32.mxu0 0.0
      %8382 = vmatmul.mubr.f32.gmra.mrb[0].mxu0 %v8185
      %v8383 = vpop.f32.mrb[0].mxu0
      %v8384 = vadd.f32 0.0, %v8383
      %v8385 = vpop.f32.mrb[0].mxu0
      %8386 = vmatprep.mubr.f32.mxu0 0.0
      %8387 = vmatmul.mubr.f32.gmra.mrb[0].mxu0 %v8188
      %v8388 = vpop.f32.mrb[0].mxu0
      %v8389 = vadd.f32 0.0, %v8388
      %v8390 = vpop.f32.mrb[0].mxu0
      %8391 = vmatprep.mubr.f32.mxu0 0.0
      %8392 = vmatmul.mubr.f32.gmra.mrb[0].mxu0 %v8191
      %v8393 = vpop.f32.mrb[0].mxu0
      %v8394 = vadd.f32 0.0, %v8393
      %v8395 = vpop.f32.mrb[0].mxu0
      %8396 = vmatprep.mubr.f32.mxu0 0.0
      %8397 = vmatmul.mubr.f32.gmra.mrb[0].mxu0 %v8194
      %v8398 = vpop.f32.mrb[0].mxu0
      %v8399 = vadd.f32 0.0, %v8398
      %v8400 = vpop.f32.mrb[0].mxu0
      %8401 = vmatprep.mubr.f32.mxu0 0.0
      %8402 = vmatmul.mubr.f32.gmra.mrb[0].mxu0 %v8197
      %v8403 = vpop.f32.mrb[0].mxu0
      %v8404 = vadd.f32 0.0, %v8403
      %v8405 = vpop.f32.mrb[0].mxu0
      %8406 = vmatprep.mubr.f32.mxu0 0.0
      %8407 = vmatmul.mubr.f32.gmra.mrb[0].mxu0 %v8200
      %v8408 = vpop.f32.mrb[0].mxu0
      %v8409 = vadd.f32 0.0, %v8408
      %v8410 = vpop.f32.mrb[0].mxu0
      %8411 = vmatprep.mubr.f32.mxu0 0.0
      %8412 = vmatmul.mubr.f32.gmra.mrb[0].mxu0 %v8203
      %v8413 = vpop.f32.mrb[0].mxu0
      %v8414 = vadd.f32 0.0, %v8413
      %v8415 = vpop.f32.mrb[0].mxu0
      %8416 = vmatprep.mubr.f32.mxu0 0.0
      %8417 = vmatmul.mubr.f32.gmra.mrb[0].mxu0 %v8206
      %v8418 = vpop.f32.mrb[0].mxu0
      %v8419 = vadd.f32 0.0, %v8418
      %v8420 = vpop.f32.mrb[0].mxu0
      %8421 = vmatprep.mubr.f32.mxu0 0.0
      %8422 = vmatmul.mubr.f32.gmra.mrb[0].mxu0 %v8209
      %v8423 = vpop.f32.mrb[0].mxu0
      %v8424 = vadd.f32 0.0, %v8423
      %v8425 = vpop.f32.mrb[0].mxu0
      %8426 = vmatprep.mubr.f32.mxu0 0.0
      %8427 = vmatmul.mubr.f32.gmra.mrb[0].mxu0 %v8212
      %v8428 = vpop.f32.mrb[0].mxu0
      %v8429 = vadd.f32 0.0, %v8428
      %v8430 = vpop.f32.mrb[0].mxu0
      %8431 = vmatprep.mubr.f32.mxu0 0.0
      %8432 = vmatmul.mubr.f32.gmra.mrb[0].mxu0 %v8215
      %v8433 = vpop.f32.mrb[0].mxu0
      %v8434 = vadd.f32 0.0, %v8433
      %v8435 = vpop.f32.mrb[0].mxu0
      %8436 = vmatprep.mubr.f32.mxu0 0.0
      %8437 = vmatmul.mubr.f32.gmra.mrb[0].mxu0 %v8218
      %v8438 = vpop.f32.mrb[0].mxu0
      %v8439 = vadd.f32 0.0, %v8438
      %v8440 = vpop.f32.mrb[0].mxu0
      %8441 = vmatprep.mubr.f32.mxu0 0.0
      %8442 = vmatmul.mubr.f32.gmra.mrb[0].mxu0 %v8221
      %v8443 = vpop.f32.mrb[0].mxu0
      %v8444 = vadd.f32 0.0, %v8443
      %v8445 = vpop.f32.mrb[0].mxu0
      %8446 = vmatprep.mubr.f32.mxu0 0.0
      %8447 = vmatmul.mubr.f32.gmra.mrb[0].mxu0 %v8224
      %v8448 = vpop.f32.mrb[0].mxu0
      %v8449 = vadd.f32 0.0, %v8448
      %v8450 = vpop.f32.mrb[0].mxu0
      %8451 = vmatprep.mubr.f32.mxu0 0.0
      %8452 = vmatmul.mubr.f32.gmra.mrb[0].mxu0 %v8227
      %v8453 = vpop.f32.mrb[0].mxu0
      %v8454 = vadd.f32 0.0, %v8453
      %v8455 = vpop.f32.mrb[0].mxu0
      %8456 = vdwg.mxu0
      %v8457 = vadd.f32 %v7941, %v8299
      %v8458 = vadd.f32 %v7946, %v8304
      %v8459 = vadd.f32 %v7951, %v8309
      %v8460 = vadd.f32 %v7956, %v8314
      %v8461 = vadd.f32 %v7961, %v8319
      %v8462 = vadd.f32 %v7966, %v8324
      %v8463 = vadd.f32 %v7971, %v8329
      %v8464 = vadd.f32 %v7976, %v8334
      %v8465 = vadd.f32 %v7981, %v8339
      %v8466 = vadd.f32 %v7986, %v8344
      %v8467 = vadd.f32 %v7991, %v8349
      %v8468 = vadd.f32 %v7996, %v8354
      %v8469 = vadd.f32 %v8001, %v8359
      %v8470 = vadd.f32 %v8006, %v8364
      %v8471 = vadd.f32 %v8011, %v8369
      %v8472 = vadd.f32 %v8016, %v8374
      %v8473 = vadd.f32 %v8021, %v8379
      %v8474 = vadd.f32 %v8026, %v8384
      %v8475 = vadd.f32 %v8031, %v8389
      %v8476 = vadd.f32 %v8036, %v8394
      %v8477 = vadd.f32 %v8041, %v8399
      %v8478 = vadd.f32 %v8046, %v8404
      %v8479 = vadd.f32 %v8051, %v8409
      %v8480 = vadd.f32 %v8056, %v8414
      %v8481 = vadd.f32 %v8061, %v8419
      %v8482 = vadd.f32 %v8066, %v8424
      %v8483 = vadd.f32 %v8071, %v8429
      %v8484 = vadd.f32 %v8076, %v8434
      %v8485 = vadd.f32 %v8081, %v8439
      %v8486 = vadd.f32 %v8086, %v8444
      %v8487 = vadd.f32 %v8091, %v8449
      %v8488 = vadd.f32 %v8096, %v8454
      %v8489 = vld [vmem:[%s1320] sm:$0xff]
      %v8490 = vld [vmem:[%s1320 + $0x8] sm:$0xff]
      %v8491 = vld [vmem:[%s1320 + $0x28] sm:$0xff]
      %v8492 = vld [vmem:[%s1320 + $0x30] sm:$0xff]
      %v8493 = vld [vmem:[%s1320 + $0x50] sm:$0xff]
      %v8494 = vld [vmem:[%s1320 + $0x58] sm:$0xff]
      %v8495 = vld [vmem:[%s1320 + $0x78] sm:$0xff]
      %v8496 = vld [vmem:[%s1320 + $0x80] sm:$0xff]
      %v8497 = vld [vmem:[%s1320 + $0xa0] sm:$0xff]
      %v8498 = vld [vmem:[%s1320 + $0xa8] sm:$0xff]
      %v8499 = vld [vmem:[%s1320 + $0xc8] sm:$0xff]
      %v8500 = vld [vmem:[%s1320 + $0xd0] sm:$0xff]
      %v8501 = vld [vmem:[%s1320 + $0xf0] sm:$0xff]
      %v8502 = vld [vmem:[%s1320 + $0xf8] sm:$0xff]
      %v8503 = vld [vmem:[%s1320 + $0x118] sm:$0xff]
      %v8504 = vld [vmem:[%s1320 + $0x120] sm:$0xff]
      %v8505 = vld [vmem:[%s1320 + $0x140] sm:$0xff]
      %v8506 = vld [vmem:[%s1320 + $0x148] sm:$0xff]
      %v8507 = vld [vmem:[%s1320 + $0x168] sm:$0xff]
      %v8508 = vld [vmem:[%s1320 + $0x170] sm:$0xff]
      %v8509 = vld [vmem:[%s1320 + $0x190] sm:$0xff]
      %v8510 = vld [vmem:[%s1320 + $0x198] sm:$0xff]
      %v8511 = vld [vmem:[%s1320 + $0x1b8] sm:$0xff]
      %v8512 = vld [vmem:[%s1320 + $0x1c0] sm:$0xff]
      %v8513 = vld [vmem:[%s1320 + $0x1e0] sm:$0xff]
      %v8514 = vld [vmem:[%s1320 + $0x1e8] sm:$0xff]
      %v8515 = vld [vmem:[%s1320 + $0x208] sm:$0xff]
      %v8516 = vld [vmem:[%s1320 + $0x210] sm:$0xff]
      %v8517 = vld [vmem:[%s1320 + $0x230] sm:$0xff]
      %v8518 = vld [vmem:[%s1320 + $0x238] sm:$0xff]
      %v8519 = vld [vmem:[%s1320 + $0x258] sm:$0xff]
      %v8520 = vld [vmem:[%s1320 + $0x260] sm:$0xff]
      %s8521 = scalar_lea.vmem %s1, 84
      %v8522 = vld [vmem:[%s8521] sm:$0xf]
      %v8524 = vsel %vm280, %v8489, 0
      %v8527 = vsel %vm280, %v8490, 0
      %v8530 = vsel %vm280, %v8491, 0
      %v8533 = vsel %vm280, %v8492, 0
      %v8536 = vsel %vm280, %v8493, 0
      %v8539 = vsel %vm280, %v8494, 0
      %v8542 = vsel %vm280, %v8495, 0
      %v8545 = vsel %vm280, %v8496, 0
      %v8548 = vsel %vm280, %v8497, 0
      %v8551 = vsel %vm280, %v8498, 0
      %v8554 = vsel %vm280, %v8499, 0
      %v8557 = vsel %vm280, %v8500, 0
      %v8560 = vsel %vm280, %v8501, 0
      %v8563 = vsel %vm280, %v8502, 0
      %v8566 = vsel %vm280, %v8503, 0
      %v8569 = vsel %vm280, %v8504, 0
      %v8572 = vsel %vm280, %v8505, 0
      %v8575 = vsel %vm280, %v8506, 0
      %v8578 = vsel %vm280, %v8507, 0
      %v8581 = vsel %vm280, %v8508, 0
      %v8584 = vsel %vm280, %v8509, 0
      %v8587 = vsel %vm280, %v8510, 0
      %v8590 = vsel %vm280, %v8511, 0
      %v8593 = vsel %vm280, %v8512, 0
      %v8596 = vsel %vm280, %v8513, 0
      %v8599 = vsel %vm280, %v8514, 0
      %v8602 = vsel %vm280, %v8515, 0
      %v8605 = vsel %vm280, %v8516, 0
      %v8608 = vsel %vm280, %v8517, 0
      %v8611 = vsel %vm280, %v8518, 0
      %v8614 = vsel %vm280, %v8519, 0
      %v8617 = vsel %vm280, %v8520, 0
      %v8620 = vsel %vm377, %v8522, 0
      %8622 = vmatprep.subr.mxu0 0.0
      %8623 = vmatpush1.msra.mxu0 %v8620
      %8624 = vmatprep.subr.mxu0 0.0
      %8625 = vmatpush1.msra.mxu0 0.0
      %8626 = vmatprep.subr.mxu0 0.0
      %8627 = vmatpush1.msra.mxu0 0.0
      %8628 = vmatprep.subr.mxu0 0.0
      %8629 = vmatpush1.msra.mxu0 0.0
      %8630 = vmatprep.subr.mxu0 0.0
      %8631 = vmatpush1.msra.mxu0 0.0
      %8632 = vmatprep.subr.mxu0 0.0
      %8633 = vmatpush1.msra.mxu0 0.0
      %8634 = vmatprep.subr.mxu0 0.0
      %8635 = vmatpush1.msra.mxu0 0.0
      %8636 = vmatprep.subr.mxu0 0.0
      %8637 = vmatpush1.msra.mxu0 0.0
      %8638 = vmatprep.subr.mxu0 0.0
      %8639 = vmatpush1.msra.mxu0 0.0
      %8640 = vmatprep.subr.mxu0 0.0
      %8641 = vmatpush1.msra.mxu0 0.0
      %8642 = vmatprep.subr.mxu0 0.0
      %8643 = vmatpush1.msra.mxu0 0.0
      %8644 = vmatprep.subr.mxu0 0.0
      %8645 = vmatpush1.msra.mxu0 0.0
      %8646 = vmatprep.subr.mxu0 0.0
      %8647 = vmatpush1.msra.mxu0 0.0
      %8648 = vmatprep.subr.mxu0 0.0
      %8649 = vmatpush1.msra.mxu0 0.0
      %8650 = vmatprep.subr.mxu0 0.0
      %8651 = vmatpush1.msra.mxu0 0.0
      %8652 = vmatprep.subr.mxu0 0.0
      %8653 = vmatpush1.msra.mxu0 0.0
      %8654 = vmatprep.subr.mxu0 0.0
      %8655 = vmatpush1.msra.mxu0 0.0
      %8656 = vmatprep.subr.mxu0 0.0
      %8657 = vmatpush1.msra.mxu0 0.0
      %8658 = vmatprep.subr.mxu0 0.0
      %8659 = vmatpush1.msra.mxu0 0.0
      %8660 = vmatprep.subr.mxu0 0.0
      %8661 = vmatpush1.msra.mxu0 0.0
      %8662 = vmatprep.subr.mxu0 0.0
      %8663 = vmatpush1.msra.mxu0 0.0
      %8664 = vmatprep.subr.mxu0 0.0
      %8665 = vmatpush1.msra.mxu0 0.0
      %8666 = vmatprep.subr.mxu0 0.0
      %8667 = vmatpush1.msra.mxu0 0.0
      %8668 = vmatprep.subr.mxu0 0.0
      %8669 = vmatpush1.msra.mxu0 0.0
      %8670 = vmatprep.subr.mxu0 0.0
      %8671 = vmatpush1.msra.mxu0 0.0
      %8672 = vmatprep.subr.mxu0 0.0
      %8673 = vmatpush1.msra.mxu0 0.0
      %8674 = vmatprep.subr.mxu0 0.0
      %8675 = vmatpush1.msra.mxu0 0.0
      %8676 = vmatprep.subr.mxu0 0.0
      %8677 = vmatpush1.msra.mxu0 0.0
      %8678 = vmatprep.subr.mxu0 0.0
      %8679 = vmatpush1.msra.mxu0 0.0
      %8680 = vmatprep.subr.mxu0 0.0
      %8681 = vmatpush1.msra.mxu0 0.0
      %8682 = vmatprep.subr.mxu0 0.0
      %8683 = vmatpush1.msra.mxu0 0.0
      %8684 = vmatprep.subr.mxu0 0.0
      %8685 = vmatpush1.msra.mxu0 0.0
      %8686 = vmatprep.mubr.f32.mxu0 0.0
      %8687 = vmatmul.mubr.f32.gmra.mrb[0].mxu0 %v8524
      %v8688 = vpop.f32.mrb[0].mxu0
      %v8689 = vadd.f32 0.0, %v8688
      %v8690 = vpop.f32.mrb[0].mxu0
      %8691 = vmatprep.mubr.f32.mxu0 0.0
      %8692 = vmatmul.mubr.f32.gmra.mrb[0].mxu0 %v8527
      %v8693 = vpop.f32.mrb[0].mxu0
      %v8694 = vadd.f32 0.0, %v8693
      %v8695 = vpop.f32.mrb[0].mxu0
      %8696 = vmatprep.mubr.f32.mxu0 0.0
      %8697 = vmatmul.mubr.f32.gmra.mrb[0].mxu0 %v8530
      %v8698 = vpop.f32.mrb[0].mxu0
      %v8699 = vadd.f32 0.0, %v8698
      %v8700 = vpop.f32.mrb[0].mxu0
      %8701 = vmatprep.mubr.f32.mxu0 0.0
      %8702 = vmatmul.mubr.f32.gmra.mrb[0].mxu0 %v8533
      %v8703 = vpop.f32.mrb[0].mxu0
      %v8704 = vadd.f32 0.0, %v8703
      %v8705 = vpop.f32.mrb[0].mxu0
      %8706 = vmatprep.mubr.f32.mxu0 0.0
      %8707 = vmatmul.mubr.f32.gmra.mrb[0].mxu0 %v8536
      %v8708 = vpop.f32.mrb[0].mxu0
      %v8709 = vadd.f32 0.0, %v8708
      %v8710 = vpop.f32.mrb[0].mxu0
      %8711 = vmatprep.mubr.f32.mxu0 0.0
      %8712 = vmatmul.mubr.f32.gmra.mrb[0].mxu0 %v8539
      %v8713 = vpop.f32.mrb[0].mxu0
      %v8714 = vadd.f32 0.0, %v8713
      %v8715 = vpop.f32.mrb[0].mxu0
      %8716 = vmatprep.mubr.f32.mxu0 0.0
      %8717 = vmatmul.mubr.f32.gmra.mrb[0].mxu0 %v8542
      %v8718 = vpop.f32.mrb[0].mxu0
      %v8719 = vadd.f32 0.0, %v8718
      %v8720 = vpop.f32.mrb[0].mxu0
      %8721 = vmatprep.mubr.f32.mxu0 0.0
      %8722 = vmatmul.mubr.f32.gmra.mrb[0].mxu0 %v8545
      %v8723 = vpop.f32.mrb[0].mxu0
      %v8724 = vadd.f32 0.0, %v8723
      %v8725 = vpop.f32.mrb[0].mxu0
      %8726 = vmatprep.mubr.f32.mxu0 0.0
      %8727 = vmatmul.mubr.f32.gmra.mrb[0].mxu0 %v8548
      %v8728 = vpop.f32.mrb[0].mxu0
      %v8729 = vadd.f32 0.0, %v8728
      %v8730 = vpop.f32.mrb[0].mxu0
      %8731 = vmatprep.mubr.f32.mxu0 0.0
      %8732 = vmatmul.mubr.f32.gmra.mrb[0].mxu0 %v8551
      %v8733 = vpop.f32.mrb[0].mxu0
      %v8734 = vadd.f32 0.0, %v8733
      %v8735 = vpop.f32.mrb[0].mxu0
      %8736 = vmatprep.mubr.f32.mxu0 0.0
      %8737 = vmatmul.mubr.f32.gmra.mrb[0].mxu0 %v8554
      %v8738 = vpop.f32.mrb[0].mxu0
      %v8739 = vadd.f32 0.0, %v8738
      %v8740 = vpop.f32.mrb[0].mxu0
      %8741 = vmatprep.mubr.f32.mxu0 0.0
      %8742 = vmatmul.mubr.f32.gmra.mrb[0].mxu0 %v8557
      %v8743 = vpop.f32.mrb[0].mxu0
      %v8744 = vadd.f32 0.0, %v8743
      %v8745 = vpop.f32.mrb[0].mxu0
      %8746 = vmatprep.mubr.f32.mxu0 0.0
      %8747 = vmatmul.mubr.f32.gmra.mrb[0].mxu0 %v8560
      %v8748 = vpop.f32.mrb[0].mxu0
      %v8749 = vadd.f32 0.0, %v8748
      %v8750 = vpop.f32.mrb[0].mxu0
      %8751 = vmatprep.mubr.f32.mxu0 0.0
      %8752 = vmatmul.mubr.f32.gmra.mrb[0].mxu0 %v8563
      %v8753 = vpop.f32.mrb[0].mxu0
      %v8754 = vadd.f32 0.0, %v8753
      %v8755 = vpop.f32.mrb[0].mxu0
      %8756 = vmatprep.mubr.f32.mxu0 0.0
      %8757 = vmatmul.mubr.f32.gmra.mrb[0].mxu0 %v8566
      %v8758 = vpop.f32.mrb[0].mxu0
      %v8759 = vadd.f32 0.0, %v8758
      %v8760 = vpop.f32.mrb[0].mxu0
      %8761 = vmatprep.mubr.f32.mxu0 0.0
      %8762 = vmatmul.mubr.f32.gmra.mrb[0].mxu0 %v8569
      %v8763 = vpop.f32.mrb[0].mxu0
      %v8764 = vadd.f32 0.0, %v8763
      %v8765 = vpop.f32.mrb[0].mxu0
      %8766 = vmatprep.mubr.f32.mxu0 0.0
      %8767 = vmatmul.mubr.f32.gmra.mrb[0].mxu0 %v8572
      %v8768 = vpop.f32.mrb[0].mxu0
      %v8769 = vadd.f32 0.0, %v8768
      %v8770 = vpop.f32.mrb[0].mxu0
      %8771 = vmatprep.mubr.f32.mxu0 0.0
      %8772 = vmatmul.mubr.f32.gmra.mrb[0].mxu0 %v8575
      %v8773 = vpop.f32.mrb[0].mxu0
      %v8774 = vadd.f32 0.0, %v8773
      %v8775 = vpop.f32.mrb[0].mxu0
      %8776 = vmatprep.mubr.f32.mxu0 0.0
      %8777 = vmatmul.mubr.f32.gmra.mrb[0].mxu0 %v8578
      %v8778 = vpop.f32.mrb[0].mxu0
      %v8779 = vadd.f32 0.0, %v8778
      %v8780 = vpop.f32.mrb[0].mxu0
      %8781 = vmatprep.mubr.f32.mxu0 0.0
      %8782 = vmatmul.mubr.f32.gmra.mrb[0].mxu0 %v8581
      %v8783 = vpop.f32.mrb[0].mxu0
      %v8784 = vadd.f32 0.0, %v8783
      %v8785 = vpop.f32.mrb[0].mxu0
      %8786 = vmatprep.mubr.f32.mxu0 0.0
      %8787 = vmatmul.mubr.f32.gmra.mrb[0].mxu0 %v8584
      %v8788 = vpop.f32.mrb[0].mxu0
      %v8789 = vadd.f32 0.0, %v8788
      %v8790 = vpop.f32.mrb[0].mxu0
      %8791 = vmatprep.mubr.f32.mxu0 0.0
      %8792 = vmatmul.mubr.f32.gmra.mrb[0].mxu0 %v8587
      %v8793 = vpop.f32.mrb[0].mxu0
      %v8794 = vadd.f32 0.0, %v8793
      %v8795 = vpop.f32.mrb[0].mxu0
      %8796 = vmatprep.mubr.f32.mxu0 0.0
      %8797 = vmatmul.mubr.f32.gmra.mrb[0].mxu0 %v8590
      %v8798 = vpop.f32.mrb[0].mxu0
      %v8799 = vadd.f32 0.0, %v8798
      %v8800 = vpop.f32.mrb[0].mxu0
      %8801 = vmatprep.mubr.f32.mxu0 0.0
      %8802 = vmatmul.mubr.f32.gmra.mrb[0].mxu0 %v8593
      %v8803 = vpop.f32.mrb[0].mxu0
      %v8804 = vadd.f32 0.0, %v8803
      %v8805 = vpop.f32.mrb[0].mxu0
      %8806 = vmatprep.mubr.f32.mxu0 0.0
      %8807 = vmatmul.mubr.f32.gmra.mrb[0].mxu0 %v8596
      %v8808 = vpop.f32.mrb[0].mxu0
      %v8809 = vadd.f32 0.0, %v8808
      %v8810 = vpop.f32.mrb[0].mxu0
      %8811 = vmatprep.mubr.f32.mxu0 0.0
      %8812 = vmatmul.mubr.f32.gmra.mrb[0].mxu0 %v8599
      %v8813 = vpop.f32.mrb[0].mxu0
      %v8814 = vadd.f32 0.0, %v8813
      %v8815 = vpop.f32.mrb[0].mxu0
      %8816 = vmatprep.mubr.f32.mxu0 0.0
      %8817 = vmatmul.mubr.f32.gmra.mrb[0].mxu0 %v8602
      %v8818 = vpop.f32.mrb[0].mxu0
      %v8819 = vadd.f32 0.0, %v8818
      %v8820 = vpop.f32.mrb[0].mxu0
      %8821 = vmatprep.mubr.f32.mxu0 0.0
      %8822 = vmatmul.mubr.f32.gmra.mrb[0].mxu0 %v8605
      %v8823 = vpop.f32.mrb[0].mxu0
      %v8824 = vadd.f32 0.0, %v8823
      %v8825 = vpop.f32.mrb[0].mxu0
      %8826 = vmatprep.mubr.f32.mxu0 0.0
      %8827 = vmatmul.mubr.f32.gmra.mrb[0].mxu0 %v8608
      %v8828 = vpop.f32.mrb[0].mxu0
      %v8829 = vadd.f32 0.0, %v8828
      %v8830 = vpop.f32.mrb[0].mxu0
      %8831 = vmatprep.mubr.f32.mxu0 0.0
      %8832 = vmatmul.mubr.f32.gmra.mrb[0].mxu0 %v8611
      %v8833 = vpop.f32.mrb[0].mxu0
      %v8834 = vadd.f32 0.0, %v8833
      %v8835 = vpop.f32.mrb[0].mxu0
      %8836 = vmatprep.mubr.f32.mxu0 0.0
      %8837 = vmatmul.mubr.f32.gmra.mrb[0].mxu0 %v8614
      %v8838 = vpop.f32.mrb[0].mxu0
      %v8839 = vadd.f32 0.0, %v8838
      %v8840 = vpop.f32.mrb[0].mxu0
      %8841 = vmatprep.mubr.f32.mxu0 0.0
      %8842 = vmatmul.mubr.f32.gmra.mrb[0].mxu0 %v8617
      %v8843 = vpop.f32.mrb[0].mxu0
      %v8844 = vadd.f32 0.0, %v8843
      %v8845 = vpop.f32.mrb[0].mxu0
      %8846 = vdwg.mxu0
      %v8847 = vadd.f32 %v8457, %v8689
      %v8848 = vadd.f32 %v8458, %v8694
      %v8849 = vadd.f32 %v8459, %v8699
      %v8850 = vadd.f32 %v8460, %v8704
      %v8851 = vadd.f32 %v8461, %v8709
      %v8852 = vadd.f32 %v8462, %v8714
      %v8853 = vadd.f32 %v8463, %v8719
      %v8854 = vadd.f32 %v8464, %v8724
      %v8855 = vadd.f32 %v8465, %v8729
      %v8856 = vadd.f32 %v8466, %v8734
      %v8857 = vadd.f32 %v8467, %v8739
      %v8858 = vadd.f32 %v8468, %v8744
      %v8859 = vadd.f32 %v8469, %v8749
      %v8860 = vadd.f32 %v8470, %v8754
      %v8861 = vadd.f32 %v8471, %v8759
      %v8862 = vadd.f32 %v8472, %v8764
      %v8863 = vadd.f32 %v8473, %v8769
      %v8864 = vadd.f32 %v8474, %v8774
      %v8865 = vadd.f32 %v8475, %v8779
      %v8866 = vadd.f32 %v8476, %v8784
      %v8867 = vadd.f32 %v8477, %v8789
      %v8868 = vadd.f32 %v8478, %v8794
      %v8869 = vadd.f32 %v8479, %v8799
      %v8870 = vadd.f32 %v8480, %v8804
      %v8871 = vadd.f32 %v8481, %v8809
      %v8872 = vadd.f32 %v8482, %v8814
      %v8873 = vadd.f32 %v8483, %v8819
      %v8874 = vadd.f32 %v8484, %v8824
      %v8875 = vadd.f32 %v8485, %v8829
      %v8876 = vadd.f32 %v8486, %v8834
      %v8877 = vadd.f32 %v8487, %v8839
      %v8878 = vadd.f32 %v8488, %v8844
      %v8879 = vld [vmem:[%s1320 + $0x9] sm:$0xff]
      %v8880 = vld [vmem:[%s1320 + $0x11] sm:$0xff]
      %v8881 = vld [vmem:[%s1320 + $0x31] sm:$0xff]
      %v8882 = vld [vmem:[%s1320 + $0x39] sm:$0xff]
      %v8883 = vld [vmem:[%s1320 + $0x59] sm:$0xff]
      %v8884 = vld [vmem:[%s1320 + $0x61] sm:$0xff]
      %v8885 = vld [vmem:[%s1320 + $0x81] sm:$0xff]
      %v8886 = vld [vmem:[%s1320 + $0x89] sm:$0xff]
      %v8887 = vld [vmem:[%s1320 + $0xa9] sm:$0xff]
      %v8888 = vld [vmem:[%s1320 + $0xb1] sm:$0xff]
      %v8889 = vld [vmem:[%s1320 + $0xd1] sm:$0xff]
      %v8890 = vld [vmem:[%s1320 + $0xd9] sm:$0xff]
      %v8891 = vld [vmem:[%s1320 + $0xf9] sm:$0xff]
      %v8892 = vld [vmem:[%s1320 + $0x101] sm:$0xff]
      %v8893 = vld [vmem:[%s1320 + $0x121] sm:$0xff]
      %v8894 = vld [vmem:[%s1320 + $0x129] sm:$0xff]
      %v8895 = vld [vmem:[%s1320 + $0x149] sm:$0xff]
      %v8896 = vld [vmem:[%s1320 + $0x151] sm:$0xff]
      %v8897 = vld [vmem:[%s1320 + $0x171] sm:$0xff]
      %v8898 = vld [vmem:[%s1320 + $0x179] sm:$0xff]
      %v8899 = vld [vmem:[%s1320 + $0x199] sm:$0xff]
      %v8900 = vld [vmem:[%s1320 + $0x1a1] sm:$0xff]
      %v8901 = vld [vmem:[%s1320 + $0x1c1] sm:$0xff]
      %v8902 = vld [vmem:[%s1320 + $0x1c9] sm:$0xff]
      %v8903 = vld [vmem:[%s1320 + $0x1e9] sm:$0xff]
      %v8904 = vld [vmem:[%s1320 + $0x1f1] sm:$0xff]
      %v8905 = vld [vmem:[%s1320 + $0x211] sm:$0xff]
      %v8906 = vld [vmem:[%s1320 + $0x219] sm:$0xff]
      %v8907 = vld [vmem:[%s1320 + $0x239] sm:$0xff]
      %v8908 = vld [vmem:[%s1320 + $0x241] sm:$0xff]
      %v8909 = vld [vmem:[%s1320 + $0x261] sm:$0xff]
      %v8910 = vld [vmem:[%s1320 + $0x269] sm:$0xff]
      %s8911 = scalar_lea.vmem %s1, 88
      %v8912 = vld [vmem:[%s8911] sm:$0xf]
      %v8914 = vsel %vm280, %v8879, 0
      %v8917 = vsel %vm280, %v8880, 0
      %v8920 = vsel %vm280, %v8881, 0
      %v8923 = vsel %vm280, %v8882, 0
      %v8926 = vsel %vm280, %v8883, 0
      %v8929 = vsel %vm280, %v8884, 0
      %v8932 = vsel %vm280, %v8885, 0
      %v8935 = vsel %vm280, %v8886, 0
      %v8938 = vsel %vm280, %v8887, 0
      %v8941 = vsel %vm280, %v8888, 0
      %v8944 = vsel %vm280, %v8889, 0
      %v8947 = vsel %vm280, %v8890, 0
      %v8950 = vsel %vm280, %v8891, 0
      %v8953 = vsel %vm280, %v8892, 0
      %v8956 = vsel %vm280, %v8893, 0
      %v8959 = vsel %vm280, %v8894, 0
      %v8962 = vsel %vm280, %v8895, 0
      %v8965 = vsel %vm280, %v8896, 0
      %v8968 = vsel %vm280, %v8897, 0
      %v8971 = vsel %vm280, %v8898, 0
      %v8974 = vsel %vm280, %v8899, 0
      %v8977 = vsel %vm280, %v8900, 0
      %v8980 = vsel %vm280, %v8901, 0
      %v8983 = vsel %vm280, %v8902, 0
      %v8986 = vsel %vm280, %v8903, 0
      %v8989 = vsel %vm280, %v8904, 0
      %v8992 = vsel %vm280, %v8905, 0
      %v8995 = vsel %vm280, %v8906, 0
      %v8998 = vsel %vm280, %v8907, 0
      %v9001 = vsel %vm280, %v8908, 0
      %v9004 = vsel %vm280, %v8909, 0
      %v9007 = vsel %vm280, %v8910, 0
      %v9010 = vsel %vm377, %v8912, 0
      %9012 = vmatprep.subr.mxu0 0.0
      %9013 = vmatpush1.msra.mxu0 %v9010
      %9014 = vmatprep.subr.mxu0 0.0
      %9015 = vmatpush1.msra.mxu0 0.0
      %9016 = vmatprep.subr.mxu0 0.0
      %9017 = vmatpush1.msra.mxu0 0.0
      %9018 = vmatprep.subr.mxu0 0.0
      %9019 = vmatpush1.msra.mxu0 0.0
      %9020 = vmatprep.subr.mxu0 0.0
      %9021 = vmatpush1.msra.mxu0 0.0
      %9022 = vmatprep.subr.mxu0 0.0
      %9023 = vmatpush1.msra.mxu0 0.0
      %9024 = vmatprep.subr.mxu0 0.0
      %9025 = vmatpush1.msra.mxu0 0.0
      %9026 = vmatprep.subr.mxu0 0.0
      %9027 = vmatpush1.msra.mxu0 0.0
      %9028 = vmatprep.subr.mxu0 0.0
      %9029 = vmatpush1.msra.mxu0 0.0
      %9030 = vmatprep.subr.mxu0 0.0
      %9031 = vmatpush1.msra.mxu0 0.0
      %9032 = vmatprep.subr.mxu0 0.0
      %9033 = vmatpush1.msra.mxu0 0.0
      %9034 = vmatprep.subr.mxu0 0.0
      %9035 = vmatpush1.msra.mxu0 0.0
      %9036 = vmatprep.subr.mxu0 0.0
      %9037 = vmatpush1.msra.mxu0 0.0
      %9038 = vmatprep.subr.mxu0 0.0
      %9039 = vmatpush1.msra.mxu0 0.0
      %9040 = vmatprep.subr.mxu0 0.0
      %9041 = vmatpush1.msra.mxu0 0.0
      %9042 = vmatprep.subr.mxu0 0.0
      %9043 = vmatpush1.msra.mxu0 0.0
      %9044 = vmatprep.subr.mxu0 0.0
      %9045 = vmatpush1.msra.mxu0 0.0
      %9046 = vmatprep.subr.mxu0 0.0
      %9047 = vmatpush1.msra.mxu0 0.0
      %9048 = vmatprep.subr.mxu0 0.0
      %9049 = vmatpush1.msra.mxu0 0.0
      %9050 = vmatprep.subr.mxu0 0.0
      %9051 = vmatpush1.msra.mxu0 0.0
      %9052 = vmatprep.subr.mxu0 0.0
      %9053 = vmatpush1.msra.mxu0 0.0
      %9054 = vmatprep.subr.mxu0 0.0
      %9055 = vmatpush1.msra.mxu0 0.0
      %9056 = vmatprep.subr.mxu0 0.0
      %9057 = vmatpush1.msra.mxu0 0.0
      %9058 = vmatprep.subr.mxu0 0.0
      %9059 = vmatpush1.msra.mxu0 0.0
      %9060 = vmatprep.subr.mxu0 0.0
      %9061 = vmatpush1.msra.mxu0 0.0
      %9062 = vmatprep.subr.mxu0 0.0
      %9063 = vmatpush1.msra.mxu0 0.0
      %9064 = vmatprep.subr.mxu0 0.0
      %9065 = vmatpush1.msra.mxu0 0.0
      %9066 = vmatprep.subr.mxu0 0.0
      %9067 = vmatpush1.msra.mxu0 0.0
      %9068 = vmatprep.subr.mxu0 0.0
      %9069 = vmatpush1.msra.mxu0 0.0
      %9070 = vmatprep.subr.mxu0 0.0
      %9071 = vmatpush1.msra.mxu0 0.0
      %9072 = vmatprep.subr.mxu0 0.0
      %9073 = vmatpush1.msra.mxu0 0.0
      %9074 = vmatprep.subr.mxu0 0.0
      %9075 = vmatpush1.msra.mxu0 0.0
      %9076 = vmatprep.mubr.f32.mxu0 0.0
      %9077 = vmatmul.mubr.f32.gmra.mrb[0].mxu0 %v8914
      %v9078 = vpop.f32.mrb[0].mxu0
      %v9079 = vadd.f32 0.0, %v9078
      %v9080 = vpop.f32.mrb[0].mxu0
      %9081 = vmatprep.mubr.f32.mxu0 0.0
      %9082 = vmatmul.mubr.f32.gmra.mrb[0].mxu0 %v8917
      %v9083 = vpop.f32.mrb[0].mxu0
      %v9084 = vadd.f32 0.0, %v9083
      %v9085 = vpop.f32.mrb[0].mxu0
      %9086 = vmatprep.mubr.f32.mxu0 0.0
      %9087 = vmatmul.mubr.f32.gmra.mrb[0].mxu0 %v8920
      %v9088 = vpop.f32.mrb[0].mxu0
      %v9089 = vadd.f32 0.0, %v9088
      %v9090 = vpop.f32.mrb[0].mxu0
      %9091 = vmatprep.mubr.f32.mxu0 0.0
      %9092 = vmatmul.mubr.f32.gmra.mrb[0].mxu0 %v8923
      %v9093 = vpop.f32.mrb[0].mxu0
      %v9094 = vadd.f32 0.0, %v9093
      %v9095 = vpop.f32.mrb[0].mxu0
      %9096 = vmatprep.mubr.f32.mxu0 0.0
      %9097 = vmatmul.mubr.f32.gmra.mrb[0].mxu0 %v8926
      %v9098 = vpop.f32.mrb[0].mxu0
      %v9099 = vadd.f32 0.0, %v9098
      %v9100 = vpop.f32.mrb[0].mxu0
      %9101 = vmatprep.mubr.f32.mxu0 0.0
      %9102 = vmatmul.mubr.f32.gmra.mrb[0].mxu0 %v8929
      %v9103 = vpop.f32.mrb[0].mxu0
      %v9104 = vadd.f32 0.0, %v9103
      %v9105 = vpop.f32.mrb[0].mxu0
      %9106 = vmatprep.mubr.f32.mxu0 0.0
      %9107 = vmatmul.mubr.f32.gmra.mrb[0].mxu0 %v8932
      %v9108 = vpop.f32.mrb[0].mxu0
      %v9109 = vadd.f32 0.0, %v9108
      %v9110 = vpop.f32.mrb[0].mxu0
      %9111 = vmatprep.mubr.f32.mxu0 0.0
      %9112 = vmatmul.mubr.f32.gmra.mrb[0].mxu0 %v8935
      %v9113 = vpop.f32.mrb[0].mxu0
      %v9114 = vadd.f32 0.0, %v9113
      %v9115 = vpop.f32.mrb[0].mxu0
      %9116 = vmatprep.mubr.f32.mxu0 0.0
      %9117 = vmatmul.mubr.f32.gmra.mrb[0].mxu0 %v8938
      %v9118 = vpop.f32.mrb[0].mxu0
      %v9119 = vadd.f32 0.0, %v9118
      %v9120 = vpop.f32.mrb[0].mxu0
      %9121 = vmatprep.mubr.f32.mxu0 0.0
      %9122 = vmatmul.mubr.f32.gmra.mrb[0].mxu0 %v8941
      %v9123 = vpop.f32.mrb[0].mxu0
      %v9124 = vadd.f32 0.0, %v9123
      %v9125 = vpop.f32.mrb[0].mxu0
      %9126 = vmatprep.mubr.f32.mxu0 0.0
      %9127 = vmatmul.mubr.f32.gmra.mrb[0].mxu0 %v8944
      %v9128 = vpop.f32.mrb[0].mxu0
      %v9129 = vadd.f32 0.0, %v9128
      %v9130 = vpop.f32.mrb[0].mxu0
      %9131 = vmatprep.mubr.f32.mxu0 0.0
      %9132 = vmatmul.mubr.f32.gmra.mrb[0].mxu0 %v8947
      %v9133 = vpop.f32.mrb[0].mxu0
      %v9134 = vadd.f32 0.0, %v9133
      %v9135 = vpop.f32.mrb[0].mxu0
      %9136 = vmatprep.mubr.f32.mxu0 0.0
      %9137 = vmatmul.mubr.f32.gmra.mrb[0].mxu0 %v8950
      %v9138 = vpop.f32.mrb[0].mxu0
      %v9139 = vadd.f32 0.0, %v9138
      %v9140 = vpop.f32.mrb[0].mxu0
      %9141 = vmatprep.mubr.f32.mxu0 0.0
      %9142 = vmatmul.mubr.f32.gmra.mrb[0].mxu0 %v8953
      %v9143 = vpop.f32.mrb[0].mxu0
      %v9144 = vadd.f32 0.0, %v9143
      %v9145 = vpop.f32.mrb[0].mxu0
      %9146 = vmatprep.mubr.f32.mxu0 0.0
      %9147 = vmatmul.mubr.f32.gmra.mrb[0].mxu0 %v8956
      %v9148 = vpop.f32.mrb[0].mxu0
      %v9149 = vadd.f32 0.0, %v9148
      %v9150 = vpop.f32.mrb[0].mxu0
      %9151 = vmatprep.mubr.f32.mxu0 0.0
      %9152 = vmatmul.mubr.f32.gmra.mrb[0].mxu0 %v8959
      %v9153 = vpop.f32.mrb[0].mxu0
      %v9154 = vadd.f32 0.0, %v9153
      %v9155 = vpop.f32.mrb[0].mxu0
      %9156 = vmatprep.mubr.f32.mxu0 0.0
      %9157 = vmatmul.mubr.f32.gmra.mrb[0].mxu0 %v8962
      %v9158 = vpop.f32.mrb[0].mxu0
      %v9159 = vadd.f32 0.0, %v9158
      %v9160 = vpop.f32.mrb[0].mxu0
      %9161 = vmatprep.mubr.f32.mxu0 0.0
      %9162 = vmatmul.mubr.f32.gmra.mrb[0].mxu0 %v8965
      %v9163 = vpop.f32.mrb[0].mxu0
      %v9164 = vadd.f32 0.0, %v9163
      %v9165 = vpop.f32.mrb[0].mxu0
      %9166 = vmatprep.mubr.f32.mxu0 0.0
      %9167 = vmatmul.mubr.f32.gmra.mrb[0].mxu0 %v8968
      %v9168 = vpop.f32.mrb[0].mxu0
      %v9169 = vadd.f32 0.0, %v9168
      %v9170 = vpop.f32.mrb[0].mxu0
      %9171 = vmatprep.mubr.f32.mxu0 0.0
      %9172 = vmatmul.mubr.f32.gmra.mrb[0].mxu0 %v8971
      %v9173 = vpop.f32.mrb[0].mxu0
      %v9174 = vadd.f32 0.0, %v9173
      %v9175 = vpop.f32.mrb[0].mxu0
      %9176 = vmatprep.mubr.f32.mxu0 0.0
      %9177 = vmatmul.mubr.f32.gmra.mrb[0].mxu0 %v8974
      %v9178 = vpop.f32.mrb[0].mxu0
      %v9179 = vadd.f32 0.0, %v9178
      %v9180 = vpop.f32.mrb[0].mxu0
      %9181 = vmatprep.mubr.f32.mxu0 0.0
      %9182 = vmatmul.mubr.f32.gmra.mrb[0].mxu0 %v8977
      %v9183 = vpop.f32.mrb[0].mxu0
      %v9184 = vadd.f32 0.0, %v9183
      %v9185 = vpop.f32.mrb[0].mxu0
      %9186 = vmatprep.mubr.f32.mxu0 0.0
      %9187 = vmatmul.mubr.f32.gmra.mrb[0].mxu0 %v8980
      %v9188 = vpop.f32.mrb[0].mxu0
      %v9189 = vadd.f32 0.0, %v9188
      %v9190 = vpop.f32.mrb[0].mxu0
      %9191 = vmatprep.mubr.f32.mxu0 0.0
      %9192 = vmatmul.mubr.f32.gmra.mrb[0].mxu0 %v8983
      %v9193 = vpop.f32.mrb[0].mxu0
      %v9194 = vadd.f32 0.0, %v9193
      %v9195 = vpop.f32.mrb[0].mxu0
      %9196 = vmatprep.mubr.f32.mxu0 0.0
      %9197 = vmatmul.mubr.f32.gmra.mrb[0].mxu0 %v8986
      %v9198 = vpop.f32.mrb[0].mxu0
      %v9199 = vadd.f32 0.0, %v9198
      %v9200 = vpop.f32.mrb[0].mxu0
      %9201 = vmatprep.mubr.f32.mxu0 0.0
      %9202 = vmatmul.mubr.f32.gmra.mrb[0].mxu0 %v8989
      %v9203 = vpop.f32.mrb[0].mxu0
      %v9204 = vadd.f32 0.0, %v9203
      %v9205 = vpop.f32.mrb[0].mxu0
      %9206 = vmatprep.mubr.f32.mxu0 0.0
      %9207 = vmatmul.mubr.f32.gmra.mrb[0].mxu0 %v8992
      %v9208 = vpop.f32.mrb[0].mxu0
      %v9209 = vadd.f32 0.0, %v9208
      %v9210 = vpop.f32.mrb[0].mxu0
      %9211 = vmatprep.mubr.f32.mxu0 0.0
      %9212 = vmatmul.mubr.f32.gmra.mrb[0].mxu0 %v8995
      %v9213 = vpop.f32.mrb[0].mxu0
      %v9214 = vadd.f32 0.0, %v9213
      %v9215 = vpop.f32.mrb[0].mxu0
      %9216 = vmatprep.mubr.f32.mxu0 0.0
      %9217 = vmatmul.mubr.f32.gmra.mrb[0].mxu0 %v8998
      %v9218 = vpop.f32.mrb[0].mxu0
      %v9219 = vadd.f32 0.0, %v9218
      %v9220 = vpop.f32.mrb[0].mxu0
      %9221 = vmatprep.mubr.f32.mxu0 0.0
      %9222 = vmatmul.mubr.f32.gmra.mrb[0].mxu0 %v9001
      %v9223 = vpop.f32.mrb[0].mxu0
      %v9224 = vadd.f32 0.0, %v9223
      %v9225 = vpop.f32.mrb[0].mxu0
      %9226 = vmatprep.mubr.f32.mxu0 0.0
      %9227 = vmatmul.mubr.f32.gmra.mrb[0].mxu0 %v9004
      %v9228 = vpop.f32.mrb[0].mxu0
      %v9229 = vadd.f32 0.0, %v9228
      %v9230 = vpop.f32.mrb[0].mxu0
      %9231 = vmatprep.mubr.f32.mxu0 0.0
      %9232 = vmatmul.mubr.f32.gmra.mrb[0].mxu0 %v9007
      %v9233 = vpop.f32.mrb[0].mxu0
      %v9234 = vadd.f32 0.0, %v9233
      %v9235 = vpop.f32.mrb[0].mxu0
      %9236 = vdwg.mxu0
      %v9237 = vadd.f32 %v8847, %v9079
      %v9238 = vadd.f32 %v8848, %v9084
      %v9239 = vadd.f32 %v8849, %v9089
      %v9240 = vadd.f32 %v8850, %v9094
      %v9241 = vadd.f32 %v8851, %v9099
      %v9242 = vadd.f32 %v8852, %v9104
      %v9243 = vadd.f32 %v8853, %v9109
      %v9244 = vadd.f32 %v8854, %v9114
      %v9245 = vadd.f32 %v8855, %v9119
      %v9246 = vadd.f32 %v8856, %v9124
      %v9247 = vadd.f32 %v8857, %v9129
      %v9248 = vadd.f32 %v8858, %v9134
      %v9249 = vadd.f32 %v8859, %v9139
      %v9250 = vadd.f32 %v8860, %v9144
      %v9251 = vadd.f32 %v8861, %v9149
      %v9252 = vadd.f32 %v8862, %v9154
      %v9253 = vadd.f32 %v8863, %v9159
      %v9254 = vadd.f32 %v8864, %v9164
      %v9255 = vadd.f32 %v8865, %v9169
      %v9256 = vadd.f32 %v8866, %v9174
      %v9257 = vadd.f32 %v8867, %v9179
      %v9258 = vadd.f32 %v8868, %v9184
      %v9259 = vadd.f32 %v8869, %v9189
      %v9260 = vadd.f32 %v8870, %v9194
      %v9261 = vadd.f32 %v8871, %v9199
      %v9262 = vadd.f32 %v8872, %v9204
      %v9263 = vadd.f32 %v8873, %v9209
      %v9264 = vadd.f32 %v8874, %v9214
      %v9265 = vadd.f32 %v8875, %v9219
      %v9266 = vadd.f32 %v8876, %v9224
      %v9267 = vadd.f32 %v8877, %v9229
      %v9268 = vadd.f32 %v8878, %v9234
      %v9269 = vld [vmem:[%s1320 + $0x12] sm:$0xff]
      %v9270 = vld [vmem:[%s1320 + $0x1a] sm:$0xff]
      %v9271 = vld [vmem:[%s1320 + $0x3a] sm:$0xff]
      %v9272 = vld [vmem:[%s1320 + $0x42] sm:$0xff]
      %v9273 = vld [vmem:[%s1320 + $0x62] sm:$0xff]
      %v9274 = vld [vmem:[%s1320 + $0x6a] sm:$0xff]
      %v9275 = vld [vmem:[%s1320 + $0x8a] sm:$0xff]
      %v9276 = vld [vmem:[%s1320 + $0x92] sm:$0xff]
      %v9277 = vld [vmem:[%s1320 + $0xb2] sm:$0xff]
      %v9278 = vld [vmem:[%s1320 + $0xba] sm:$0xff]
      %v9279 = vld [vmem:[%s1320 + $0xda] sm:$0xff]
      %v9280 = vld [vmem:[%s1320 + $0xe2] sm:$0xff]
      %v9281 = vld [vmem:[%s1320 + $0x102] sm:$0xff]
      %v9282 = vld [vmem:[%s1320 + $0x10a] sm:$0xff]
      %v9283 = vld [vmem:[%s1320 + $0x12a] sm:$0xff]
      %v9284 = vld [vmem:[%s1320 + $0x132] sm:$0xff]
      %v9285 = vld [vmem:[%s1320 + $0x152] sm:$0xff]
      %v9286 = vld [vmem:[%s1320 + $0x15a] sm:$0xff]
      %v9287 = vld [vmem:[%s1320 + $0x17a] sm:$0xff]
      %v9288 = vld [vmem:[%s1320 + $0x182] sm:$0xff]
      %v9289 = vld [vmem:[%s1320 + $0x1a2] sm:$0xff]
      %v9290 = vld [vmem:[%s1320 + $0x1aa] sm:$0xff]
      %v9291 = vld [vmem:[%s1320 + $0x1ca] sm:$0xff]
      %v9292 = vld [vmem:[%s1320 + $0x1d2] sm:$0xff]
      %v9293 = vld [vmem:[%s1320 + $0x1f2] sm:$0xff]
      %v9294 = vld [vmem:[%s1320 + $0x1fa] sm:$0xff]
      %v9295 = vld [vmem:[%s1320 + $0x21a] sm:$0xff]
      %v9296 = vld [vmem:[%s1320 + $0x222] sm:$0xff]
      %v9297 = vld [vmem:[%s1320 + $0x242] sm:$0xff]
      %v9298 = vld [vmem:[%s1320 + $0x24a] sm:$0xff]
      %v9299 = vld [vmem:[%s1320 + $0x26a] sm:$0xff]
      %v9300 = vld [vmem:[%s1320 + $0x272] sm:$0xff]
      %s9301 = scalar_lea.vmem %s1, 92
      %v9302 = vld [vmem:[%s9301] sm:$0xf]
      %v9304 = vsel %vm280, %v9269, 0
      %v9307 = vsel %vm280, %v9270, 0
      %v9310 = vsel %vm280, %v9271, 0
      %v9313 = vsel %vm280, %v9272, 0
      %v9316 = vsel %vm280, %v9273, 0
      %v9319 = vsel %vm280, %v9274, 0
      %v9322 = vsel %vm280, %v9275, 0
      %v9325 = vsel %vm280, %v9276, 0
      %v9328 = vsel %vm280, %v9277, 0
      %v9331 = vsel %vm280, %v9278, 0
      %v9334 = vsel %vm280, %v9279, 0
      %v9337 = vsel %vm280, %v9280, 0
      %v9340 = vsel %vm280, %v9281, 0
      %v9343 = vsel %vm280, %v9282, 0
      %v9346 = vsel %vm280, %v9283, 0
      %v9349 = vsel %vm280, %v9284, 0
      %v9352 = vsel %vm280, %v9285, 0
      %v9355 = vsel %vm280, %v9286, 0
      %v9358 = vsel %vm280, %v9287, 0
      %v9361 = vsel %vm280, %v9288, 0
      %v9364 = vsel %vm280, %v9289, 0
      %v9367 = vsel %vm280, %v9290, 0
      %v9370 = vsel %vm280, %v9291, 0
      %v9373 = vsel %vm280, %v9292, 0
      %v9376 = vsel %vm280, %v9293, 0
      %v9379 = vsel %vm280, %v9294, 0
      %v9382 = vsel %vm280, %v9295, 0
      %v9385 = vsel %vm280, %v9296, 0
      %v9388 = vsel %vm280, %v9297, 0
      %v9391 = vsel %vm280, %v9298, 0
      %v9394 = vsel %vm280, %v9299, 0
      %v9397 = vsel %vm280, %v9300, 0
      %v9400 = vsel %vm377, %v9302, 0
      %9402 = vmatprep.subr.mxu0 0.0
      %9403 = vmatpush1.msra.mxu0 %v9400
      %9404 = vmatprep.subr.mxu0 0.0
      %9405 = vmatpush1.msra.mxu0 0.0
      %9406 = vmatprep.subr.mxu0 0.0
      %9407 = vmatpush1.msra.mxu0 0.0
      %9408 = vmatprep.subr.mxu0 0.0
      %9409 = vmatpush1.msra.mxu0 0.0
      %9410 = vmatprep.subr.mxu0 0.0
      %9411 = vmatpush1.msra.mxu0 0.0
      %9412 = vmatprep.subr.mxu0 0.0
      %9413 = vmatpush1.msra.mxu0 0.0
      %9414 = vmatprep.subr.mxu0 0.0
      %9415 = vmatpush1.msra.mxu0 0.0
      %9416 = vmatprep.subr.mxu0 0.0
      %9417 = vmatpush1.msra.mxu0 0.0
      %9418 = vmatprep.subr.mxu0 0.0
      %9419 = vmatpush1.msra.mxu0 0.0
      %9420 = vmatprep.subr.mxu0 0.0
      %9421 = vmatpush1.msra.mxu0 0.0
      %9422 = vmatprep.subr.mxu0 0.0
      %9423 = vmatpush1.msra.mxu0 0.0
      %9424 = vmatprep.subr.mxu0 0.0
      %9425 = vmatpush1.msra.mxu0 0.0
      %9426 = vmatprep.subr.mxu0 0.0
      %9427 = vmatpush1.msra.mxu0 0.0
      %9428 = vmatprep.subr.mxu0 0.0
      %9429 = vmatpush1.msra.mxu0 0.0
      %9430 = vmatprep.subr.mxu0 0.0
      %9431 = vmatpush1.msra.mxu0 0.0
      %9432 = vmatprep.subr.mxu0 0.0
      %9433 = vmatpush1.msra.mxu0 0.0
      %9434 = vmatprep.subr.mxu0 0.0
      %9435 = vmatpush1.msra.mxu0 0.0
      %9436 = vmatprep.subr.mxu0 0.0
      %9437 = vmatpush1.msra.mxu0 0.0
      %9438 = vmatprep.subr.mxu0 0.0
      %9439 = vmatpush1.msra.mxu0 0.0
      %9440 = vmatprep.subr.mxu0 0.0
      %9441 = vmatpush1.msra.mxu0 0.0
      %9442 = vmatprep.subr.mxu0 0.0
      %9443 = vmatpush1.msra.mxu0 0.0
      %9444 = vmatprep.subr.mxu0 0.0
      %9445 = vmatpush1.msra.mxu0 0.0
      %9446 = vmatprep.subr.mxu0 0.0
      %9447 = vmatpush1.msra.mxu0 0.0
      %9448 = vmatprep.subr.mxu0 0.0
      %9449 = vmatpush1.msra.mxu0 0.0
      %9450 = vmatprep.subr.mxu0 0.0
      %9451 = vmatpush1.msra.mxu0 0.0
      %9452 = vmatprep.subr.mxu0 0.0
      %9453 = vmatpush1.msra.mxu0 0.0
      %9454 = vmatprep.subr.mxu0 0.0
      %9455 = vmatpush1.msra.mxu0 0.0
      %9456 = vmatprep.subr.mxu0 0.0
      %9457 = vmatpush1.msra.mxu0 0.0
      %9458 = vmatprep.subr.mxu0 0.0
      %9459 = vmatpush1.msra.mxu0 0.0
      %9460 = vmatprep.subr.mxu0 0.0
      %9461 = vmatpush1.msra.mxu0 0.0
      %9462 = vmatprep.subr.mxu0 0.0
      %9463 = vmatpush1.msra.mxu0 0.0
      %9464 = vmatprep.subr.mxu0 0.0
      %9465 = vmatpush1.msra.mxu0 0.0
      %9466 = vmatprep.mubr.f32.mxu0 0.0
      %9467 = vmatmul.mubr.f32.gmra.mrb[0].mxu0 %v9304
      %v9468 = vpop.f32.mrb[0].mxu0
      %v9469 = vadd.f32 0.0, %v9468
      %v9470 = vpop.f32.mrb[0].mxu0
      %9471 = vmatprep.mubr.f32.mxu0 0.0
      %9472 = vmatmul.mubr.f32.gmra.mrb[0].mxu0 %v9307
      %v9473 = vpop.f32.mrb[0].mxu0
      %v9474 = vadd.f32 0.0, %v9473
      %v9475 = vpop.f32.mrb[0].mxu0
      %9476 = vmatprep.mubr.f32.mxu0 0.0
      %9477 = vmatmul.mubr.f32.gmra.mrb[0].mxu0 %v9310
      %v9478 = vpop.f32.mrb[0].mxu0
      %v9479 = vadd.f32 0.0, %v9478
      %v9480 = vpop.f32.mrb[0].mxu0
      %9481 = vmatprep.mubr.f32.mxu0 0.0
      %9482 = vmatmul.mubr.f32.gmra.mrb[0].mxu0 %v9313
      %v9483 = vpop.f32.mrb[0].mxu0
      %v9484 = vadd.f32 0.0, %v9483
      %v9485 = vpop.f32.mrb[0].mxu0
      %9486 = vmatprep.mubr.f32.mxu0 0.0
      %9487 = vmatmul.mubr.f32.gmra.mrb[0].mxu0 %v9316
      %v9488 = vpop.f32.mrb[0].mxu0
      %v9489 = vadd.f32 0.0, %v9488
      %v9490 = vpop.f32.mrb[0].mxu0
      %9491 = vmatprep.mubr.f32.mxu0 0.0
      %9492 = vmatmul.mubr.f32.gmra.mrb[0].mxu0 %v9319
      %v9493 = vpop.f32.mrb[0].mxu0
      %v9494 = vadd.f32 0.0, %v9493
      %v9495 = vpop.f32.mrb[0].mxu0
      %9496 = vmatprep.mubr.f32.mxu0 0.0
      %9497 = vmatmul.mubr.f32.gmra.mrb[0].mxu0 %v9322
      %v9498 = vpop.f32.mrb[0].mxu0
      %v9499 = vadd.f32 0.0, %v9498
      %v9500 = vpop.f32.mrb[0].mxu0
      %9501 = vmatprep.mubr.f32.mxu0 0.0
      %9502 = vmatmul.mubr.f32.gmra.mrb[0].mxu0 %v9325
      %v9503 = vpop.f32.mrb[0].mxu0
      %v9504 = vadd.f32 0.0, %v9503
      %v9505 = vpop.f32.mrb[0].mxu0
      %9506 = vmatprep.mubr.f32.mxu0 0.0
      %9507 = vmatmul.mubr.f32.gmra.mrb[0].mxu0 %v9328
      %v9508 = vpop.f32.mrb[0].mxu0
      %v9509 = vadd.f32 0.0, %v9508
      %v9510 = vpop.f32.mrb[0].mxu0
      %9511 = vmatprep.mubr.f32.mxu0 0.0
      %9512 = vmatmul.mubr.f32.gmra.mrb[0].mxu0 %v9331
      %v9513 = vpop.f32.mrb[0].mxu0
      %v9514 = vadd.f32 0.0, %v9513
      %v9515 = vpop.f32.mrb[0].mxu0
      %9516 = vmatprep.mubr.f32.mxu0 0.0
      %9517 = vmatmul.mubr.f32.gmra.mrb[0].mxu0 %v9334
      %v9518 = vpop.f32.mrb[0].mxu0
      %v9519 = vadd.f32 0.0, %v9518
      %v9520 = vpop.f32.mrb[0].mxu0
      %9521 = vmatprep.mubr.f32.mxu0 0.0
      %9522 = vmatmul.mubr.f32.gmra.mrb[0].mxu0 %v9337
      %v9523 = vpop.f32.mrb[0].mxu0
      %v9524 = vadd.f32 0.0, %v9523
      %v9525 = vpop.f32.mrb[0].mxu0
      %9526 = vmatprep.mubr.f32.mxu0 0.0
      %9527 = vmatmul.mubr.f32.gmra.mrb[0].mxu0 %v9340
      %v9528 = vpop.f32.mrb[0].mxu0
      %v9529 = vadd.f32 0.0, %v9528
      %v9530 = vpop.f32.mrb[0].mxu0
      %9531 = vmatprep.mubr.f32.mxu0 0.0
      %9532 = vmatmul.mubr.f32.gmra.mrb[0].mxu0 %v9343
      %v9533 = vpop.f32.mrb[0].mxu0
      %v9534 = vadd.f32 0.0, %v9533
      %v9535 = vpop.f32.mrb[0].mxu0
      %9536 = vmatprep.mubr.f32.mxu0 0.0
      %9537 = vmatmul.mubr.f32.gmra.mrb[0].mxu0 %v9346
      %v9538 = vpop.f32.mrb[0].mxu0
      %v9539 = vadd.f32 0.0, %v9538
      %v9540 = vpop.f32.mrb[0].mxu0
      %9541 = vmatprep.mubr.f32.mxu0 0.0
      %9542 = vmatmul.mubr.f32.gmra.mrb[0].mxu0 %v9349
      %v9543 = vpop.f32.mrb[0].mxu0
      %v9544 = vadd.f32 0.0, %v9543
      %v9545 = vpop.f32.mrb[0].mxu0
      %9546 = vmatprep.mubr.f32.mxu0 0.0
      %9547 = vmatmul.mubr.f32.gmra.mrb[0].mxu0 %v9352
      %v9548 = vpop.f32.mrb[0].mxu0
      %v9549 = vadd.f32 0.0, %v9548
      %v9550 = vpop.f32.mrb[0].mxu0
      %9551 = vmatprep.mubr.f32.mxu0 0.0
      %9552 = vmatmul.mubr.f32.gmra.mrb[0].mxu0 %v9355
      %v9553 = vpop.f32.mrb[0].mxu0
      %v9554 = vadd.f32 0.0, %v9553
      %v9555 = vpop.f32.mrb[0].mxu0
      %9556 = vmatprep.mubr.f32.mxu0 0.0
      %9557 = vmatmul.mubr.f32.gmra.mrb[0].mxu0 %v9358
      %v9558 = vpop.f32.mrb[0].mxu0
      %v9559 = vadd.f32 0.0, %v9558
      %v9560 = vpop.f32.mrb[0].mxu0
      %9561 = vmatprep.mubr.f32.mxu0 0.0
      %9562 = vmatmul.mubr.f32.gmra.mrb[0].mxu0 %v9361
      %v9563 = vpop.f32.mrb[0].mxu0
      %v9564 = vadd.f32 0.0, %v9563
      %v9565 = vpop.f32.mrb[0].mxu0
      %9566 = vmatprep.mubr.f32.mxu0 0.0
      %9567 = vmatmul.mubr.f32.gmra.mrb[0].mxu0 %v9364
      %v9568 = vpop.f32.mrb[0].mxu0
      %v9569 = vadd.f32 0.0, %v9568
      %v9570 = vpop.f32.mrb[0].mxu0
      %9571 = vmatprep.mubr.f32.mxu0 0.0
      %9572 = vmatmul.mubr.f32.gmra.mrb[0].mxu0 %v9367
      %v9573 = vpop.f32.mrb[0].mxu0
      %v9574 = vadd.f32 0.0, %v9573
      %v9575 = vpop.f32.mrb[0].mxu0
      %9576 = vmatprep.mubr.f32.mxu0 0.0
      %9577 = vmatmul.mubr.f32.gmra.mrb[0].mxu0 %v9370
      %v9578 = vpop.f32.mrb[0].mxu0
      %v9579 = vadd.f32 0.0, %v9578
      %v9580 = vpop.f32.mrb[0].mxu0
      %9581 = vmatprep.mubr.f32.mxu0 0.0
      %9582 = vmatmul.mubr.f32.gmra.mrb[0].mxu0 %v9373
      %v9583 = vpop.f32.mrb[0].mxu0
      %v9584 = vadd.f32 0.0, %v9583
      %v9585 = vpop.f32.mrb[0].mxu0
      %9586 = vmatprep.mubr.f32.mxu0 0.0
      %9587 = vmatmul.mubr.f32.gmra.mrb[0].mxu0 %v9376
      %v9588 = vpop.f32.mrb[0].mxu0
      %v9589 = vadd.f32 0.0, %v9588
      %v9590 = vpop.f32.mrb[0].mxu0
      %9591 = vmatprep.mubr.f32.mxu0 0.0
      %9592 = vmatmul.mubr.f32.gmra.mrb[0].mxu0 %v9379
      %v9593 = vpop.f32.mrb[0].mxu0
      %v9594 = vadd.f32 0.0, %v9593
      %v9595 = vpop.f32.mrb[0].mxu0
      %9596 = vmatprep.mubr.f32.mxu0 0.0
      %9597 = vmatmul.mubr.f32.gmra.mrb[0].mxu0 %v9382
      %v9598 = vpop.f32.mrb[0].mxu0
      %v9599 = vadd.f32 0.0, %v9598
      %v9600 = vpop.f32.mrb[0].mxu0
      %9601 = vmatprep.mubr.f32.mxu0 0.0
      %9602 = vmatmul.mubr.f32.gmra.mrb[0].mxu0 %v9385
      %v9603 = vpop.f32.mrb[0].mxu0
      %v9604 = vadd.f32 0.0, %v9603
      %v9605 = vpop.f32.mrb[0].mxu0
      %9606 = vmatprep.mubr.f32.mxu0 0.0
      %9607 = vmatmul.mubr.f32.gmra.mrb[0].mxu0 %v9388
      %v9608 = vpop.f32.mrb[0].mxu0
      %v9609 = vadd.f32 0.0, %v9608
      %v9610 = vpop.f32.mrb[0].mxu0
      %9611 = vmatprep.mubr.f32.mxu0 0.0
      %9612 = vmatmul.mubr.f32.gmra.mrb[0].mxu0 %v9391
      %v9613 = vpop.f32.mrb[0].mxu0
      %v9614 = vadd.f32 0.0, %v9613
      %v9615 = vpop.f32.mrb[0].mxu0
      %9616 = vmatprep.mubr.f32.mxu0 0.0
      %9617 = vmatmul.mubr.f32.gmra.mrb[0].mxu0 %v9394
      %v9618 = vpop.f32.mrb[0].mxu0
      %v9619 = vadd.f32 0.0, %v9618
      %v9620 = vpop.f32.mrb[0].mxu0
      %9621 = vmatprep.mubr.f32.mxu0 0.0
      %9622 = vmatmul.mubr.f32.gmra.mrb[0].mxu0 %v9397
      %v9623 = vpop.f32.mrb[0].mxu0
      %v9624 = vadd.f32 0.0, %v9623
      %v9625 = vpop.f32.mrb[0].mxu0
      %9626 = vdwg.mxu0
      %v9627 = vadd.f32 %v9237, %v9469
      %v9628 = vadd.f32 %v9238, %v9474
      %v9629 = vadd.f32 %v9239, %v9479
      %v9630 = vadd.f32 %v9240, %v9484
      %v9631 = vadd.f32 %v9241, %v9489
      %v9632 = vadd.f32 %v9242, %v9494
      %v9633 = vadd.f32 %v9243, %v9499
      %v9634 = vadd.f32 %v9244, %v9504
      %v9635 = vadd.f32 %v9245, %v9509
      %v9636 = vadd.f32 %v9246, %v9514
      %v9637 = vadd.f32 %v9247, %v9519
      %v9638 = vadd.f32 %v9248, %v9524
      %v9639 = vadd.f32 %v9249, %v9529
      %v9640 = vadd.f32 %v9250, %v9534
      %v9641 = vadd.f32 %v9251, %v9539
      %v9642 = vadd.f32 %v9252, %v9544
      %v9643 = vadd.f32 %v9253, %v9549
      %v9644 = vadd.f32 %v9254, %v9554
      %v9645 = vadd.f32 %v9255, %v9559
      %v9646 = vadd.f32 %v9256, %v9564
      %v9647 = vadd.f32 %v9257, %v9569
      %v9648 = vadd.f32 %v9258, %v9574
      %v9649 = vadd.f32 %v9259, %v9579
      %v9650 = vadd.f32 %v9260, %v9584
      %v9651 = vadd.f32 %v9261, %v9589
      %v9652 = vadd.f32 %v9262, %v9594
      %v9653 = vadd.f32 %v9263, %v9599
      %v9654 = vadd.f32 %v9264, %v9604
      %v9655 = vadd.f32 %v9265, %v9609
      %v9656 = vadd.f32 %v9266, %v9614
      %v9657 = vadd.f32 %v9267, %v9619
      %v9658 = vadd.f32 %v9268, %v9624
      %s9659 = scalar_lea.vmem %s203, 720
      %v9660 = vld [vmem:[%s9659] sm:$0xff]
      %v9661 = vld [vmem:[%s9659 + $0x8] sm:$0xff]
      %v9662 = vld [vmem:[%s9659 + $0x28] sm:$0xff]
      %v9663 = vld [vmem:[%s9659 + $0x30] sm:$0xff]
      %v9664 = vld [vmem:[%s9659 + $0x50] sm:$0xff]
      %v9665 = vld [vmem:[%s9659 + $0x58] sm:$0xff]
      %v9666 = vld [vmem:[%s9659 + $0x78] sm:$0xff]
      %v9667 = vld [vmem:[%s9659 + $0x80] sm:$0xff]
      %v9668 = vld [vmem:[%s9659 + $0xa0] sm:$0xff]
      %v9669 = vld [vmem:[%s9659 + $0xa8] sm:$0xff]
      %v9670 = vld [vmem:[%s9659 + $0xc8] sm:$0xff]
      %v9671 = vld [vmem:[%s9659 + $0xd0] sm:$0xff]
      %v9672 = vld [vmem:[%s9659 + $0xf0] sm:$0xff]
      %v9673 = vld [vmem:[%s9659 + $0xf8] sm:$0xff]
      %v9674 = vld [vmem:[%s9659 + $0x118] sm:$0xff]
      %v9675 = vld [vmem:[%s9659 + $0x120] sm:$0xff]
      %v9676 = vld [vmem:[%s9659 + $0x140] sm:$0xff]
      %v9677 = vld [vmem:[%s9659 + $0x148] sm:$0xff]
      %v9678 = vld [vmem:[%s9659 + $0x168] sm:$0xff]
      %v9679 = vld [vmem:[%s9659 + $0x170] sm:$0xff]
      %v9680 = vld [vmem:[%s9659 + $0x190] sm:$0xff]
      %v9681 = vld [vmem:[%s9659 + $0x198] sm:$0xff]
      %v9682 = vld [vmem:[%s9659 + $0x1b8] sm:$0xff]
      %v9683 = vld [vmem:[%s9659 + $0x1c0] sm:$0xff]
      %v9684 = vld [vmem:[%s9659 + $0x1e0] sm:$0xff]
      %v9685 = vld [vmem:[%s9659 + $0x1e8] sm:$0xff]
      %v9686 = vld [vmem:[%s9659 + $0x208] sm:$0xff]
      %v9687 = vld [vmem:[%s9659 + $0x210] sm:$0xff]
      %v9688 = vld [vmem:[%s9659 + $0x230] sm:$0xff]
      %v9689 = vld [vmem:[%s9659 + $0x238] sm:$0xff]
      %v9690 = vld [vmem:[%s9659 + $0x258] sm:$0xff]
      %v9691 = vld [vmem:[%s9659 + $0x260] sm:$0xff]
      %s9692 = scalar_lea.vmem %s1, 96
      %v9693 = vld [vmem:[%s9692] sm:$0xf]
      %v9695 = vsel %vm280, %v9660, 0
      %v9698 = vsel %vm280, %v9661, 0
      %v9701 = vsel %vm280, %v9662, 0
      %v9704 = vsel %vm280, %v9663, 0
      %v9707 = vsel %vm280, %v9664, 0
      %v9710 = vsel %vm280, %v9665, 0
      %v9713 = vsel %vm280, %v9666, 0
      %v9716 = vsel %vm280, %v9667, 0
      %v9719 = vsel %vm280, %v9668, 0
      %v9722 = vsel %vm280, %v9669, 0
      %v9725 = vsel %vm280, %v9670, 0
      %v9728 = vsel %vm280, %v9671, 0
      %v9731 = vsel %vm280, %v9672, 0
      %v9734 = vsel %vm280, %v9673, 0
      %v9737 = vsel %vm280, %v9674, 0
      %v9740 = vsel %vm280, %v9675, 0
      %v9743 = vsel %vm280, %v9676, 0
      %v9746 = vsel %vm280, %v9677, 0
      %v9749 = vsel %vm280, %v9678, 0
      %v9752 = vsel %vm280, %v9679, 0
      %v9755 = vsel %vm280, %v9680, 0
      %v9758 = vsel %vm280, %v9681, 0
      %v9761 = vsel %vm280, %v9682, 0
      %v9764 = vsel %vm280, %v9683, 0
      %v9767 = vsel %vm280, %v9684, 0
      %v9770 = vsel %vm280, %v9685, 0
      %v9773 = vsel %vm280, %v9686, 0
      %v9776 = vsel %vm280, %v9687, 0
      %v9779 = vsel %vm280, %v9688, 0
      %v9782 = vsel %vm280, %v9689, 0
      %v9785 = vsel %vm280, %v9690, 0
      %v9788 = vsel %vm280, %v9691, 0
      %v9791 = vsel %vm377, %v9693, 0
      %9793 = vmatprep.subr.mxu0 0.0
      %9794 = vmatpush1.msra.mxu0 %v9791
      %9795 = vmatprep.subr.mxu0 0.0
      %9796 = vmatpush1.msra.mxu0 0.0
      %9797 = vmatprep.subr.mxu0 0.0
      %9798 = vmatpush1.msra.mxu0 0.0
      %9799 = vmatprep.subr.mxu0 0.0
      %9800 = vmatpush1.msra.mxu0 0.0
      %9801 = vmatprep.subr.mxu0 0.0
      %9802 = vmatpush1.msra.mxu0 0.0
      %9803 = vmatprep.subr.mxu0 0.0
      %9804 = vmatpush1.msra.mxu0 0.0
      %9805 = vmatprep.subr.mxu0 0.0
      %9806 = vmatpush1.msra.mxu0 0.0
      %9807 = vmatprep.subr.mxu0 0.0
      %9808 = vmatpush1.msra.mxu0 0.0
      %9809 = vmatprep.subr.mxu0 0.0
      %9810 = vmatpush1.msra.mxu0 0.0
      %9811 = vmatprep.subr.mxu0 0.0
      %9812 = vmatpush1.msra.mxu0 0.0
      %9813 = vmatprep.subr.mxu0 0.0
      %9814 = vmatpush1.msra.mxu0 0.0
      %9815 = vmatprep.subr.mxu0 0.0
      %9816 = vmatpush1.msra.mxu0 0.0
      %9817 = vmatprep.subr.mxu0 0.0
      %9818 = vmatpush1.msra.mxu0 0.0
      %9819 = vmatprep.subr.mxu0 0.0
      %9820 = vmatpush1.msra.mxu0 0.0
      %9821 = vmatprep.subr.mxu0 0.0
      %9822 = vmatpush1.msra.mxu0 0.0
      %9823 = vmatprep.subr.mxu0 0.0
      %9824 = vmatpush1.msra.mxu0 0.0
      %9825 = vmatprep.subr.mxu0 0.0
      %9826 = vmatpush1.msra.mxu0 0.0
      %9827 = vmatprep.subr.mxu0 0.0
      %9828 = vmatpush1.msra.mxu0 0.0
      %9829 = vmatprep.subr.mxu0 0.0
      %9830 = vmatpush1.msra.mxu0 0.0
      %9831 = vmatprep.subr.mxu0 0.0
      %9832 = vmatpush1.msra.mxu0 0.0
      %9833 = vmatprep.subr.mxu0 0.0
      %9834 = vmatpush1.msra.mxu0 0.0
      %9835 = vmatprep.subr.mxu0 0.0
      %9836 = vmatpush1.msra.mxu0 0.0
      %9837 = vmatprep.subr.mxu0 0.0
      %9838 = vmatpush1.msra.mxu0 0.0
      %9839 = vmatprep.subr.mxu0 0.0
      %9840 = vmatpush1.msra.mxu0 0.0
      %9841 = vmatprep.subr.mxu0 0.0
      %9842 = vmatpush1.msra.mxu0 0.0
      %9843 = vmatprep.subr.mxu0 0.0
      %9844 = vmatpush1.msra.mxu0 0.0
      %9845 = vmatprep.subr.mxu0 0.0
      %9846 = vmatpush1.msra.mxu0 0.0
      %9847 = vmatprep.subr.mxu0 0.0
      %9848 = vmatpush1.msra.mxu0 0.0
      %9849 = vmatprep.subr.mxu0 0.0
      %9850 = vmatpush1.msra.mxu0 0.0
      %9851 = vmatprep.subr.mxu0 0.0
      %9852 = vmatpush1.msra.mxu0 0.0
      %9853 = vmatprep.subr.mxu0 0.0
      %9854 = vmatpush1.msra.mxu0 0.0
      %9855 = vmatprep.subr.mxu0 0.0
      %9856 = vmatpush1.msra.mxu0 0.0
      %9857 = vmatprep.mubr.f32.mxu0 0.0
      %9858 = vmatmul.mubr.f32.gmra.mrb[0].mxu0 %v9695
      %v9859 = vpop.f32.mrb[0].mxu0
      %v9860 = vadd.f32 0.0, %v9859
      %v9861 = vpop.f32.mrb[0].mxu0
      %9862 = vmatprep.mubr.f32.mxu0 0.0
      %9863 = vmatmul.mubr.f32.gmra.mrb[0].mxu0 %v9698
      %v9864 = vpop.f32.mrb[0].mxu0
      %v9865 = vadd.f32 0.0, %v9864
      %v9866 = vpop.f32.mrb[0].mxu0
      %9867 = vmatprep.mubr.f32.mxu0 0.0
      %9868 = vmatmul.mubr.f32.gmra.mrb[0].mxu0 %v9701
      %v9869 = vpop.f32.mrb[0].mxu0
      %v9870 = vadd.f32 0.0, %v9869
      %v9871 = vpop.f32.mrb[0].mxu0
      %9872 = vmatprep.mubr.f32.mxu0 0.0
      %9873 = vmatmul.mubr.f32.gmra.mrb[0].mxu0 %v9704
      %v9874 = vpop.f32.mrb[0].mxu0
      %v9875 = vadd.f32 0.0, %v9874
      %v9876 = vpop.f32.mrb[0].mxu0
      %9877 = vmatprep.mubr.f32.mxu0 0.0
      %9878 = vmatmul.mubr.f32.gmra.mrb[0].mxu0 %v9707
      %v9879 = vpop.f32.mrb[0].mxu0
      %v9880 = vadd.f32 0.0, %v9879
      %v9881 = vpop.f32.mrb[0].mxu0
      %9882 = vmatprep.mubr.f32.mxu0 0.0
      %9883 = vmatmul.mubr.f32.gmra.mrb[0].mxu0 %v9710
      %v9884 = vpop.f32.mrb[0].mxu0
      %v9885 = vadd.f32 0.0, %v9884
      %v9886 = vpop.f32.mrb[0].mxu0
      %9887 = vmatprep.mubr.f32.mxu0 0.0
      %9888 = vmatmul.mubr.f32.gmra.mrb[0].mxu0 %v9713
      %v9889 = vpop.f32.mrb[0].mxu0
      %v9890 = vadd.f32 0.0, %v9889
      %v9891 = vpop.f32.mrb[0].mxu0
      %9892 = vmatprep.mubr.f32.mxu0 0.0
      %9893 = vmatmul.mubr.f32.gmra.mrb[0].mxu0 %v9716
      %v9894 = vpop.f32.mrb[0].mxu0
      %v9895 = vadd.f32 0.0, %v9894
      %v9896 = vpop.f32.mrb[0].mxu0
      %9897 = vmatprep.mubr.f32.mxu0 0.0
      %9898 = vmatmul.mubr.f32.gmra.mrb[0].mxu0 %v9719
      %v9899 = vpop.f32.mrb[0].mxu0
      %v9900 = vadd.f32 0.0, %v9899
      %v9901 = vpop.f32.mrb[0].mxu0
      %9902 = vmatprep.mubr.f32.mxu0 0.0
      %9903 = vmatmul.mubr.f32.gmra.mrb[0].mxu0 %v9722
      %v9904 = vpop.f32.mrb[0].mxu0
      %v9905 = vadd.f32 0.0, %v9904
      %v9906 = vpop.f32.mrb[0].mxu0
      %9907 = vmatprep.mubr.f32.mxu0 0.0
      %9908 = vmatmul.mubr.f32.gmra.mrb[0].mxu0 %v9725
      %v9909 = vpop.f32.mrb[0].mxu0
      %v9910 = vadd.f32 0.0, %v9909
      %v9911 = vpop.f32.mrb[0].mxu0
      %9912 = vmatprep.mubr.f32.mxu0 0.0
      %9913 = vmatmul.mubr.f32.gmra.mrb[0].mxu0 %v9728
      %v9914 = vpop.f32.mrb[0].mxu0
      %v9915 = vadd.f32 0.0, %v9914
      %v9916 = vpop.f32.mrb[0].mxu0
      %9917 = vmatprep.mubr.f32.mxu0 0.0
      %9918 = vmatmul.mubr.f32.gmra.mrb[0].mxu0 %v9731
      %v9919 = vpop.f32.mrb[0].mxu0
      %v9920 = vadd.f32 0.0, %v9919
      %v9921 = vpop.f32.mrb[0].mxu0
      %9922 = vmatprep.mubr.f32.mxu0 0.0
      %9923 = vmatmul.mubr.f32.gmra.mrb[0].mxu0 %v9734
      %v9924 = vpop.f32.mrb[0].mxu0
      %v9925 = vadd.f32 0.0, %v9924
      %v9926 = vpop.f32.mrb[0].mxu0
      %9927 = vmatprep.mubr.f32.mxu0 0.0
      %9928 = vmatmul.mubr.f32.gmra.mrb[0].mxu0 %v9737
      %v9929 = vpop.f32.mrb[0].mxu0
      %v9930 = vadd.f32 0.0, %v9929
      %v9931 = vpop.f32.mrb[0].mxu0
      %9932 = vmatprep.mubr.f32.mxu0 0.0
      %9933 = vmatmul.mubr.f32.gmra.mrb[0].mxu0 %v9740
      %v9934 = vpop.f32.mrb[0].mxu0
      %v9935 = vadd.f32 0.0, %v9934
      %v9936 = vpop.f32.mrb[0].mxu0
      %9937 = vmatprep.mubr.f32.mxu0 0.0
      %9938 = vmatmul.mubr.f32.gmra.mrb[0].mxu0 %v9743
      %v9939 = vpop.f32.mrb[0].mxu0
      %v9940 = vadd.f32 0.0, %v9939
      %v9941 = vpop.f32.mrb[0].mxu0
      %9942 = vmatprep.mubr.f32.mxu0 0.0
      %9943 = vmatmul.mubr.f32.gmra.mrb[0].mxu0 %v9746
      %v9944 = vpop.f32.mrb[0].mxu0
      %v9945 = vadd.f32 0.0, %v9944
      %v9946 = vpop.f32.mrb[0].mxu0
      %9947 = vmatprep.mubr.f32.mxu0 0.0
      %9948 = vmatmul.mubr.f32.gmra.mrb[0].mxu0 %v9749
      %v9949 = vpop.f32.mrb[0].mxu0
      %v9950 = vadd.f32 0.0, %v9949
      %v9951 = vpop.f32.mrb[0].mxu0
      %9952 = vmatprep.mubr.f32.mxu0 0.0
      %9953 = vmatmul.mubr.f32.gmra.mrb[0].mxu0 %v9752
      %v9954 = vpop.f32.mrb[0].mxu0
      %v9955 = vadd.f32 0.0, %v9954
      %v9956 = vpop.f32.mrb[0].mxu0
      %9957 = vmatprep.mubr.f32.mxu0 0.0
      %9958 = vmatmul.mubr.f32.gmra.mrb[0].mxu0 %v9755
      %v9959 = vpop.f32.mrb[0].mxu0
      %v9960 = vadd.f32 0.0, %v9959
      %v9961 = vpop.f32.mrb[0].mxu0
      %9962 = vmatprep.mubr.f32.mxu0 0.0
      %9963 = vmatmul.mubr.f32.gmra.mrb[0].mxu0 %v9758
      %v9964 = vpop.f32.mrb[0].mxu0
      %v9965 = vadd.f32 0.0, %v9964
      %v9966 = vpop.f32.mrb[0].mxu0
      %9967 = vmatprep.mubr.f32.mxu0 0.0
      %9968 = vmatmul.mubr.f32.gmra.mrb[0].mxu0 %v9761
      %v9969 = vpop.f32.mrb[0].mxu0
      %v9970 = vadd.f32 0.0, %v9969
      %v9971 = vpop.f32.mrb[0].mxu0
      %9972 = vmatprep.mubr.f32.mxu0 0.0
      %9973 = vmatmul.mubr.f32.gmra.mrb[0].mxu0 %v9764
      %v9974 = vpop.f32.mrb[0].mxu0
      %v9975 = vadd.f32 0.0, %v9974
      %v9976 = vpop.f32.mrb[0].mxu0
      %9977 = vmatprep.mubr.f32.mxu0 0.0
      %9978 = vmatmul.mubr.f32.gmra.mrb[0].mxu0 %v9767
      %v9979 = vpop.f32.mrb[0].mxu0
      %v9980 = vadd.f32 0.0, %v9979
      %v9981 = vpop.f32.mrb[0].mxu0
      %9982 = vmatprep.mubr.f32.mxu0 0.0
      %9983 = vmatmul.mubr.f32.gmra.mrb[0].mxu0 %v9770
      %v9984 = vpop.f32.mrb[0].mxu0
      %v9985 = vadd.f32 0.0, %v9984
      %v9986 = vpop.f32.mrb[0].mxu0
      %9987 = vmatprep.mubr.f32.mxu0 0.0
      %9988 = vmatmul.mubr.f32.gmra.mrb[0].mxu0 %v9773
      %v9989 = vpop.f32.mrb[0].mxu0
      %v9990 = vadd.f32 0.0, %v9989
      %v9991 = vpop.f32.mrb[0].mxu0
      %9992 = vmatprep.mubr.f32.mxu0 0.0
      %9993 = vmatmul.mubr.f32.gmra.mrb[0].mxu0 %v9776
      %v9994 = vpop.f32.mrb[0].mxu0
      %v9995 = vadd.f32 0.0, %v9994
      %v9996 = vpop.f32.mrb[0].mxu0
      %9997 = vmatprep.mubr.f32.mxu0 0.0
      %9998 = vmatmul.mubr.f32.gmra.mrb[0].mxu0 %v9779
      %v9999 = vpop.f32.mrb[0].mxu0
      %v10000 = vadd.f32 0.0, %v9999
      %v10001 = vpop.f32.mrb[0].mxu0
      %10002 = vmatprep.mubr.f32.mxu0 0.0
      %10003 = vmatmul.mubr.f32.gmra.mrb[0].mxu0 %v9782
      %v10004 = vpop.f32.mrb[0].mxu0
      %v10005 = vadd.f32 0.0, %v10004
      %v10006 = vpop.f32.mrb[0].mxu0
      %10007 = vmatprep.mubr.f32.mxu0 0.0
      %10008 = vmatmul.mubr.f32.gmra.mrb[0].mxu0 %v9785
      %v10009 = vpop.f32.mrb[0].mxu0
      %v10010 = vadd.f32 0.0, %v10009
      %v10011 = vpop.f32.mrb[0].mxu0
      %10012 = vmatprep.mubr.f32.mxu0 0.0
      %10013 = vmatmul.mubr.f32.gmra.mrb[0].mxu0 %v9788
      %v10014 = vpop.f32.mrb[0].mxu0
      %v10015 = vadd.f32 0.0, %v10014
      %v10016 = vpop.f32.mrb[0].mxu0
      %10017 = vdwg.mxu0
      %v10018 = vadd.f32 %v9627, %v9860
      %v10019 = vadd.f32 %v9628, %v9865
      %v10020 = vadd.f32 %v9629, %v9870
      %v10021 = vadd.f32 %v9630, %v9875
      %v10022 = vadd.f32 %v9631, %v9880
      %v10023 = vadd.f32 %v9632, %v9885
      %v10024 = vadd.f32 %v9633, %v9890
      %v10025 = vadd.f32 %v9634, %v9895
      %v10026 = vadd.f32 %v9635, %v9900
      %v10027 = vadd.f32 %v9636, %v9905
      %v10028 = vadd.f32 %v9637, %v9910
      %v10029 = vadd.f32 %v9638, %v9915
      %v10030 = vadd.f32 %v9639, %v9920
      %v10031 = vadd.f32 %v9640, %v9925
      %v10032 = vadd.f32 %v9641, %v9930
      %v10033 = vadd.f32 %v9642, %v9935
      %v10034 = vadd.f32 %v9643, %v9940
      %v10035 = vadd.f32 %v9644, %v9945
      %v10036 = vadd.f32 %v9645, %v9950
      %v10037 = vadd.f32 %v9646, %v9955
      %v10038 = vadd.f32 %v9647, %v9960
      %v10039 = vadd.f32 %v9648, %v9965
      %v10040 = vadd.f32 %v9649, %v9970
      %v10041 = vadd.f32 %v9650, %v9975
      %v10042 = vadd.f32 %v9651, %v9980
      %v10043 = vadd.f32 %v9652, %v9985
      %v10044 = vadd.f32 %v9653, %v9990
      %v10045 = vadd.f32 %v9654, %v9995
      %v10046 = vadd.f32 %v9655, %v10000
      %v10047 = vadd.f32 %v9656, %v10005
      %v10048 = vadd.f32 %v9657, %v10010
      %v10049 = vadd.f32 %v9658, %v10015
      %v10050 = vld [vmem:[%s9659 + $0x9] sm:$0xff]
      %v10051 = vld [vmem:[%s9659 + $0x11] sm:$0xff]
      %v10052 = vld [vmem:[%s9659 + $0x31] sm:$0xff]
      %v10053 = vld [vmem:[%s9659 + $0x39] sm:$0xff]
      %v10054 = vld [vmem:[%s9659 + $0x59] sm:$0xff]
      %v10055 = vld [vmem:[%s9659 + $0x61] sm:$0xff]
      %v10056 = vld [vmem:[%s9659 + $0x81] sm:$0xff]
      %v10057 = vld [vmem:[%s9659 + $0x89] sm:$0xff]
      %v10058 = vld [vmem:[%s9659 + $0xa9] sm:$0xff]
      %v10059 = vld [vmem:[%s9659 + $0xb1] sm:$0xff]
      %v10060 = vld [vmem:[%s9659 + $0xd1] sm:$0xff]
      %v10061 = vld [vmem:[%s9659 + $0xd9] sm:$0xff]
      %v10062 = vld [vmem:[%s9659 + $0xf9] sm:$0xff]
      %v10063 = vld [vmem:[%s9659 + $0x101] sm:$0xff]
      %v10064 = vld [vmem:[%s9659 + $0x121] sm:$0xff]
      %v10065 = vld [vmem:[%s9659 + $0x129] sm:$0xff]
      %v10066 = vld [vmem:[%s9659 + $0x149] sm:$0xff]
      %v10067 = vld [vmem:[%s9659 + $0x151] sm:$0xff]
      %v10068 = vld [vmem:[%s9659 + $0x171] sm:$0xff]
      %v10069 = vld [vmem:[%s9659 + $0x179] sm:$0xff]
      %v10070 = vld [vmem:[%s9659 + $0x199] sm:$0xff]
      %v10071 = vld [vmem:[%s9659 + $0x1a1] sm:$0xff]
      %v10072 = vld [vmem:[%s9659 + $0x1c1] sm:$0xff]
      %v10073 = vld [vmem:[%s9659 + $0x1c9] sm:$0xff]
      %v10074 = vld [vmem:[%s9659 + $0x1e9] sm:$0xff]
      %v10075 = vld [vmem:[%s9659 + $0x1f1] sm:$0xff]
      %v10076 = vld [vmem:[%s9659 + $0x211] sm:$0xff]
      %v10077 = vld [vmem:[%s9659 + $0x219] sm:$0xff]
      %v10078 = vld [vmem:[%s9659 + $0x239] sm:$0xff]
      %v10079 = vld [vmem:[%s9659 + $0x241] sm:$0xff]
      %v10080 = vld [vmem:[%s9659 + $0x261] sm:$0xff]
      %v10081 = vld [vmem:[%s9659 + $0x269] sm:$0xff]
      %s10082 = scalar_lea.vmem %s1, 100
      %v10083 = vld [vmem:[%s10082] sm:$0xf]
      %v10085 = vsel %vm280, %v10050, 0
      %v10088 = vsel %vm280, %v10051, 0
      %v10091 = vsel %vm280, %v10052, 0
      %v10094 = vsel %vm280, %v10053, 0
      %v10097 = vsel %vm280, %v10054, 0
      %v10100 = vsel %vm280, %v10055, 0
      %v10103 = vsel %vm280, %v10056, 0
      %v10106 = vsel %vm280, %v10057, 0
      %v10109 = vsel %vm280, %v10058, 0
      %v10112 = vsel %vm280, %v10059, 0
      %v10115 = vsel %vm280, %v10060, 0
      %v10118 = vsel %vm280, %v10061, 0
      %v10121 = vsel %vm280, %v10062, 0
      %v10124 = vsel %vm280, %v10063, 0
      %v10127 = vsel %vm280, %v10064, 0
      %v10130 = vsel %vm280, %v10065, 0
      %v10133 = vsel %vm280, %v10066, 0
      %v10136 = vsel %vm280, %v10067, 0
      %v10139 = vsel %vm280, %v10068, 0
      %v10142 = vsel %vm280, %v10069, 0
      %v10145 = vsel %vm280, %v10070, 0
      %v10148 = vsel %vm280, %v10071, 0
      %v10151 = vsel %vm280, %v10072, 0
      %v10154 = vsel %vm280, %v10073, 0
      %v10157 = vsel %vm280, %v10074, 0
      %v10160 = vsel %vm280, %v10075, 0
      %v10163 = vsel %vm280, %v10076, 0
      %v10166 = vsel %vm280, %v10077, 0
      %v10169 = vsel %vm280, %v10078, 0
      %v10172 = vsel %vm280, %v10079, 0
      %v10175 = vsel %vm280, %v10080, 0
      %v10178 = vsel %vm280, %v10081, 0
      %v10181 = vsel %vm377, %v10083, 0
      %10183 = vmatprep.subr.mxu0 0.0
      %10184 = vmatpush1.msra.mxu0 %v10181
      %10185 = vmatprep.subr.mxu0 0.0
      %10186 = vmatpush1.msra.mxu0 0.0
      %10187 = vmatprep.subr.mxu0 0.0
      %10188 = vmatpush1.msra.mxu0 0.0
      %10189 = vmatprep.subr.mxu0 0.0
      %10190 = vmatpush1.msra.mxu0 0.0
      %10191 = vmatprep.subr.mxu0 0.0
      %10192 = vmatpush1.msra.mxu0 0.0
      %10193 = vmatprep.subr.mxu0 0.0
      %10194 = vmatpush1.msra.mxu0 0.0
      %10195 = vmatprep.subr.mxu0 0.0
      %10196 = vmatpush1.msra.mxu0 0.0
      %10197 = vmatprep.subr.mxu0 0.0
      %10198 = vmatpush1.msra.mxu0 0.0
      %10199 = vmatprep.subr.mxu0 0.0
      %10200 = vmatpush1.msra.mxu0 0.0
      %10201 = vmatprep.subr.mxu0 0.0
      %10202 = vmatpush1.msra.mxu0 0.0
      %10203 = vmatprep.subr.mxu0 0.0
      %10204 = vmatpush1.msra.mxu0 0.0
      %10205 = vmatprep.subr.mxu0 0.0
      %10206 = vmatpush1.msra.mxu0 0.0
      %10207 = vmatprep.subr.mxu0 0.0
      %10208 = vmatpush1.msra.mxu0 0.0
      %10209 = vmatprep.subr.mxu0 0.0
      %10210 = vmatpush1.msra.mxu0 0.0
      %10211 = vmatprep.subr.mxu0 0.0
      %10212 = vmatpush1.msra.mxu0 0.0
      %10213 = vmatprep.subr.mxu0 0.0
      %10214 = vmatpush1.msra.mxu0 0.0
      %10215 = vmatprep.subr.mxu0 0.0
      %10216 = vmatpush1.msra.mxu0 0.0
      %10217 = vmatprep.subr.mxu0 0.0
      %10218 = vmatpush1.msra.mxu0 0.0
      %10219 = vmatprep.subr.mxu0 0.0
      %10220 = vmatpush1.msra.mxu0 0.0
      %10221 = vmatprep.subr.mxu0 0.0
      %10222 = vmatpush1.msra.mxu0 0.0
      %10223 = vmatprep.subr.mxu0 0.0
      %10224 = vmatpush1.msra.mxu0 0.0
      %10225 = vmatprep.subr.mxu0 0.0
      %10226 = vmatpush1.msra.mxu0 0.0
      %10227 = vmatprep.subr.mxu0 0.0
      %10228 = vmatpush1.msra.mxu0 0.0
      %10229 = vmatprep.subr.mxu0 0.0
      %10230 = vmatpush1.msra.mxu0 0.0
      %10231 = vmatprep.subr.mxu0 0.0
      %10232 = vmatpush1.msra.mxu0 0.0
      %10233 = vmatprep.subr.mxu0 0.0
      %10234 = vmatpush1.msra.mxu0 0.0
      %10235 = vmatprep.subr.mxu0 0.0
      %10236 = vmatpush1.msra.mxu0 0.0
      %10237 = vmatprep.subr.mxu0 0.0
      %10238 = vmatpush1.msra.mxu0 0.0
      %10239 = vmatprep.subr.mxu0 0.0
      %10240 = vmatpush1.msra.mxu0 0.0
      %10241 = vmatprep.subr.mxu0 0.0
      %10242 = vmatpush1.msra.mxu0 0.0
      %10243 = vmatprep.subr.mxu0 0.0
      %10244 = vmatpush1.msra.mxu0 0.0
      %10245 = vmatprep.subr.mxu0 0.0
      %10246 = vmatpush1.msra.mxu0 0.0
      %10247 = vmatprep.mubr.f32.mxu0 0.0
      %10248 = vmatmul.mubr.f32.gmra.mrb[0].mxu0 %v10085
      %v10249 = vpop.f32.mrb[0].mxu0
      %v10250 = vadd.f32 0.0, %v10249
      %v10251 = vpop.f32.mrb[0].mxu0
      %10252 = vmatprep.mubr.f32.mxu0 0.0
      %10253 = vmatmul.mubr.f32.gmra.mrb[0].mxu0 %v10088
      %v10254 = vpop.f32.mrb[0].mxu0
      %v10255 = vadd.f32 0.0, %v10254
      %v10256 = vpop.f32.mrb[0].mxu0
      %10257 = vmatprep.mubr.f32.mxu0 0.0
      %10258 = vmatmul.mubr.f32.gmra.mrb[0].mxu0 %v10091
      %v10259 = vpop.f32.mrb[0].mxu0
      %v10260 = vadd.f32 0.0, %v10259
      %v10261 = vpop.f32.mrb[0].mxu0
      %10262 = vmatprep.mubr.f32.mxu0 0.0
      %10263 = vmatmul.mubr.f32.gmra.mrb[0].mxu0 %v10094
      %v10264 = vpop.f32.mrb[0].mxu0
      %v10265 = vadd.f32 0.0, %v10264
      %v10266 = vpop.f32.mrb[0].mxu0
      %10267 = vmatprep.mubr.f32.mxu0 0.0
      %10268 = vmatmul.mubr.f32.gmra.mrb[0].mxu0 %v10097
      %v10269 = vpop.f32.mrb[0].mxu0
      %v10270 = vadd.f32 0.0, %v10269
      %v10271 = vpop.f32.mrb[0].mxu0
      %10272 = vmatprep.mubr.f32.mxu0 0.0
      %10273 = vmatmul.mubr.f32.gmra.mrb[0].mxu0 %v10100
      %v10274 = vpop.f32.mrb[0].mxu0
      %v10275 = vadd.f32 0.0, %v10274
      %v10276 = vpop.f32.mrb[0].mxu0
      %10277 = vmatprep.mubr.f32.mxu0 0.0
      %10278 = vmatmul.mubr.f32.gmra.mrb[0].mxu0 %v10103
      %v10279 = vpop.f32.mrb[0].mxu0
      %v10280 = vadd.f32 0.0, %v10279
      %v10281 = vpop.f32.mrb[0].mxu0
      %10282 = vmatprep.mubr.f32.mxu0 0.0
      %10283 = vmatmul.mubr.f32.gmra.mrb[0].mxu0 %v10106
      %v10284 = vpop.f32.mrb[0].mxu0
      %v10285 = vadd.f32 0.0, %v10284
      %v10286 = vpop.f32.mrb[0].mxu0
      %10287 = vmatprep.mubr.f32.mxu0 0.0
      %10288 = vmatmul.mubr.f32.gmra.mrb[0].mxu0 %v10109
      %v10289 = vpop.f32.mrb[0].mxu0
      %v10290 = vadd.f32 0.0, %v10289
      %v10291 = vpop.f32.mrb[0].mxu0
      %10292 = vmatprep.mubr.f32.mxu0 0.0
      %10293 = vmatmul.mubr.f32.gmra.mrb[0].mxu0 %v10112
      %v10294 = vpop.f32.mrb[0].mxu0
      %v10295 = vadd.f32 0.0, %v10294
      %v10296 = vpop.f32.mrb[0].mxu0
      %10297 = vmatprep.mubr.f32.mxu0 0.0
      %10298 = vmatmul.mubr.f32.gmra.mrb[0].mxu0 %v10115
      %v10299 = vpop.f32.mrb[0].mxu0
      %v10300 = vadd.f32 0.0, %v10299
      %v10301 = vpop.f32.mrb[0].mxu0
      %10302 = vmatprep.mubr.f32.mxu0 0.0
      %10303 = vmatmul.mubr.f32.gmra.mrb[0].mxu0 %v10118
      %v10304 = vpop.f32.mrb[0].mxu0
      %v10305 = vadd.f32 0.0, %v10304
      %v10306 = vpop.f32.mrb[0].mxu0
      %10307 = vmatprep.mubr.f32.mxu0 0.0
      %10308 = vmatmul.mubr.f32.gmra.mrb[0].mxu0 %v10121
      %v10309 = vpop.f32.mrb[0].mxu0
      %v10310 = vadd.f32 0.0, %v10309
      %v10311 = vpop.f32.mrb[0].mxu0
      %10312 = vmatprep.mubr.f32.mxu0 0.0
      %10313 = vmatmul.mubr.f32.gmra.mrb[0].mxu0 %v10124
      %v10314 = vpop.f32.mrb[0].mxu0
      %v10315 = vadd.f32 0.0, %v10314
      %v10316 = vpop.f32.mrb[0].mxu0
      %10317 = vmatprep.mubr.f32.mxu0 0.0
      %10318 = vmatmul.mubr.f32.gmra.mrb[0].mxu0 %v10127
      %v10319 = vpop.f32.mrb[0].mxu0
      %v10320 = vadd.f32 0.0, %v10319
      %v10321 = vpop.f32.mrb[0].mxu0
      %10322 = vmatprep.mubr.f32.mxu0 0.0
      %10323 = vmatmul.mubr.f32.gmra.mrb[0].mxu0 %v10130
      %v10324 = vpop.f32.mrb[0].mxu0
      %v10325 = vadd.f32 0.0, %v10324
      %v10326 = vpop.f32.mrb[0].mxu0
      %10327 = vmatprep.mubr.f32.mxu0 0.0
      %10328 = vmatmul.mubr.f32.gmra.mrb[0].mxu0 %v10133
      %v10329 = vpop.f32.mrb[0].mxu0
      %v10330 = vadd.f32 0.0, %v10329
      %v10331 = vpop.f32.mrb[0].mxu0
      %10332 = vmatprep.mubr.f32.mxu0 0.0
      %10333 = vmatmul.mubr.f32.gmra.mrb[0].mxu0 %v10136
      %v10334 = vpop.f32.mrb[0].mxu0
      %v10335 = vadd.f32 0.0, %v10334
      %v10336 = vpop.f32.mrb[0].mxu0
      %10337 = vmatprep.mubr.f32.mxu0 0.0
      %10338 = vmatmul.mubr.f32.gmra.mrb[0].mxu0 %v10139
      %v10339 = vpop.f32.mrb[0].mxu0
      %v10340 = vadd.f32 0.0, %v10339
      %v10341 = vpop.f32.mrb[0].mxu0
      %10342 = vmatprep.mubr.f32.mxu0 0.0
      %10343 = vmatmul.mubr.f32.gmra.mrb[0].mxu0 %v10142
      %v10344 = vpop.f32.mrb[0].mxu0
      %v10345 = vadd.f32 0.0, %v10344
      %v10346 = vpop.f32.mrb[0].mxu0
      %10347 = vmatprep.mubr.f32.mxu0 0.0
      %10348 = vmatmul.mubr.f32.gmra.mrb[0].mxu0 %v10145
      %v10349 = vpop.f32.mrb[0].mxu0
      %v10350 = vadd.f32 0.0, %v10349
      %v10351 = vpop.f32.mrb[0].mxu0
      %10352 = vmatprep.mubr.f32.mxu0 0.0
      %10353 = vmatmul.mubr.f32.gmra.mrb[0].mxu0 %v10148
      %v10354 = vpop.f32.mrb[0].mxu0
      %v10355 = vadd.f32 0.0, %v10354
      %v10356 = vpop.f32.mrb[0].mxu0
      %10357 = vmatprep.mubr.f32.mxu0 0.0
      %10358 = vmatmul.mubr.f32.gmra.mrb[0].mxu0 %v10151
      %v10359 = vpop.f32.mrb[0].mxu0
      %v10360 = vadd.f32 0.0, %v10359
      %v10361 = vpop.f32.mrb[0].mxu0
      %10362 = vmatprep.mubr.f32.mxu0 0.0
      %10363 = vmatmul.mubr.f32.gmra.mrb[0].mxu0 %v10154
      %v10364 = vpop.f32.mrb[0].mxu0
      %v10365 = vadd.f32 0.0, %v10364
      %v10366 = vpop.f32.mrb[0].mxu0
      %10367 = vmatprep.mubr.f32.mxu0 0.0
      %10368 = vmatmul.mubr.f32.gmra.mrb[0].mxu0 %v10157
      %v10369 = vpop.f32.mrb[0].mxu0
      %v10370 = vadd.f32 0.0, %v10369
      %v10371 = vpop.f32.mrb[0].mxu0
      %10372 = vmatprep.mubr.f32.mxu0 0.0
      %10373 = vmatmul.mubr.f32.gmra.mrb[0].mxu0 %v10160
      %v10374 = vpop.f32.mrb[0].mxu0
      %v10375 = vadd.f32 0.0, %v10374
      %v10376 = vpop.f32.mrb[0].mxu0
      %10377 = vmatprep.mubr.f32.mxu0 0.0
      %10378 = vmatmul.mubr.f32.gmra.mrb[0].mxu0 %v10163
      %v10379 = vpop.f32.mrb[0].mxu0
      %v10380 = vadd.f32 0.0, %v10379
      %v10381 = vpop.f32.mrb[0].mxu0
      %10382 = vmatprep.mubr.f32.mxu0 0.0
      %10383 = vmatmul.mubr.f32.gmra.mrb[0].mxu0 %v10166
      %v10384 = vpop.f32.mrb[0].mxu0
      %v10385 = vadd.f32 0.0, %v10384
      %v10386 = vpop.f32.mrb[0].mxu0
      %10387 = vmatprep.mubr.f32.mxu0 0.0
      %10388 = vmatmul.mubr.f32.gmra.mrb[0].mxu0 %v10169
      %v10389 = vpop.f32.mrb[0].mxu0
      %v10390 = vadd.f32 0.0, %v10389
      %v10391 = vpop.f32.mrb[0].mxu0
      %10392 = vmatprep.mubr.f32.mxu0 0.0
      %10393 = vmatmul.mubr.f32.gmra.mrb[0].mxu0 %v10172
      %v10394 = vpop.f32.mrb[0].mxu0
      %v10395 = vadd.f32 0.0, %v10394
      %v10396 = vpop.f32.mrb[0].mxu0
      %10397 = vmatprep.mubr.f32.mxu0 0.0
      %10398 = vmatmul.mubr.f32.gmra.mrb[0].mxu0 %v10175
      %v10399 = vpop.f32.mrb[0].mxu0
      %v10400 = vadd.f32 0.0, %v10399
      %v10401 = vpop.f32.mrb[0].mxu0
      %10402 = vmatprep.mubr.f32.mxu0 0.0
      %10403 = vmatmul.mubr.f32.gmra.mrb[0].mxu0 %v10178
      %v10404 = vpop.f32.mrb[0].mxu0
      %v10405 = vadd.f32 0.0, %v10404
      %v10406 = vpop.f32.mrb[0].mxu0
      %10407 = vdwg.mxu0
      %v10408 = vadd.f32 %v10018, %v10250
      %v10409 = vadd.f32 %v10019, %v10255
      %v10410 = vadd.f32 %v10020, %v10260
      %v10411 = vadd.f32 %v10021, %v10265
      %v10412 = vadd.f32 %v10022, %v10270
      %v10413 = vadd.f32 %v10023, %v10275
      %v10414 = vadd.f32 %v10024, %v10280
      %v10415 = vadd.f32 %v10025, %v10285
      %v10416 = vadd.f32 %v10026, %v10290
      %v10417 = vadd.f32 %v10027, %v10295
      %v10418 = vadd.f32 %v10028, %v10300
      %v10419 = vadd.f32 %v10029, %v10305
      %v10420 = vadd.f32 %v10030, %v10310
      %v10421 = vadd.f32 %v10031, %v10315
      %v10422 = vadd.f32 %v10032, %v10320
      %v10423 = vadd.f32 %v10033, %v10325
      %v10424 = vadd.f32 %v10034, %v10330
      %v10425 = vadd.f32 %v10035, %v10335
      %v10426 = vadd.f32 %v10036, %v10340
      %v10427 = vadd.f32 %v10037, %v10345
      %v10428 = vadd.f32 %v10038, %v10350
      %v10429 = vadd.f32 %v10039, %v10355
      %v10430 = vadd.f32 %v10040, %v10360
      %v10431 = vadd.f32 %v10041, %v10365
      %v10432 = vadd.f32 %v10042, %v10370
      %v10433 = vadd.f32 %v10043, %v10375
      %v10434 = vadd.f32 %v10044, %v10380
      %v10435 = vadd.f32 %v10045, %v10385
      %v10436 = vadd.f32 %v10046, %v10390
      %v10437 = vadd.f32 %v10047, %v10395
      %v10438 = vadd.f32 %v10048, %v10400
      %v10439 = vadd.f32 %v10049, %v10405
      %v10440 = vld [vmem:[%s9659 + $0x12] sm:$0xff]
      %v10441 = vld [vmem:[%s9659 + $0x1a] sm:$0xff]
      %v10442 = vld [vmem:[%s9659 + $0x3a] sm:$0xff]
      %v10443 = vld [vmem:[%s9659 + $0x42] sm:$0xff]
      %v10444 = vld [vmem:[%s9659 + $0x62] sm:$0xff]
      %v10445 = vld [vmem:[%s9659 + $0x6a] sm:$0xff]
      %v10446 = vld [vmem:[%s9659 + $0x8a] sm:$0xff]
      %v10447 = vld [vmem:[%s9659 + $0x92] sm:$0xff]
      %v10448 = vld [vmem:[%s9659 + $0xb2] sm:$0xff]
      %v10449 = vld [vmem:[%s9659 + $0xba] sm:$0xff]
      %v10450 = vld [vmem:[%s9659 + $0xda] sm:$0xff]
      %v10451 = vld [vmem:[%s9659 + $0xe2] sm:$0xff]
      %v10452 = vld [vmem:[%s9659 + $0x102] sm:$0xff]
      %v10453 = vld [vmem:[%s9659 + $0x10a] sm:$0xff]
      %v10454 = vld [vmem:[%s9659 + $0x12a] sm:$0xff]
      %v10455 = vld [vmem:[%s9659 + $0x132] sm:$0xff]
      %v10456 = vld [vmem:[%s9659 + $0x152] sm:$0xff]
      %v10457 = vld [vmem:[%s9659 + $0x15a] sm:$0xff]
      %v10458 = vld [vmem:[%s9659 + $0x17a] sm:$0xff]
      %v10459 = vld [vmem:[%s9659 + $0x182] sm:$0xff]
      %v10460 = vld [vmem:[%s9659 + $0x1a2] sm:$0xff]
      %v10461 = vld [vmem:[%s9659 + $0x1aa] sm:$0xff]
      %v10462 = vld [vmem:[%s9659 + $0x1ca] sm:$0xff]
      %v10463 = vld [vmem:[%s9659 + $0x1d2] sm:$0xff]
      %v10464 = vld [vmem:[%s9659 + $0x1f2] sm:$0xff]
      %v10465 = vld [vmem:[%s9659 + $0x1fa] sm:$0xff]
      %v10466 = vld [vmem:[%s9659 + $0x21a] sm:$0xff]
      %v10467 = vld [vmem:[%s9659 + $0x222] sm:$0xff]
      %v10468 = vld [vmem:[%s9659 + $0x242] sm:$0xff]
      %v10469 = vld [vmem:[%s9659 + $0x24a] sm:$0xff]
      %v10470 = vld [vmem:[%s9659 + $0x26a] sm:$0xff]
      %v10471 = vld [vmem:[%s9659 + $0x272] sm:$0xff]
      %s10472 = scalar_lea.vmem %s1, 104
      %v10473 = vld [vmem:[%s10472] sm:$0xf]
      %v10475 = vsel %vm280, %v10440, 0
      %v10478 = vsel %vm280, %v10441, 0
      %v10481 = vsel %vm280, %v10442, 0
      %v10484 = vsel %vm280, %v10443, 0
      %v10487 = vsel %vm280, %v10444, 0
      %v10490 = vsel %vm280, %v10445, 0
      %v10493 = vsel %vm280, %v10446, 0
      %v10496 = vsel %vm280, %v10447, 0
      %v10499 = vsel %vm280, %v10448, 0
      %v10502 = vsel %vm280, %v10449, 0
      %v10505 = vsel %vm280, %v10450, 0
      %v10508 = vsel %vm280, %v10451, 0
      %v10511 = vsel %vm280, %v10452, 0
      %v10514 = vsel %vm280, %v10453, 0
      %v10517 = vsel %vm280, %v10454, 0
      %v10520 = vsel %vm280, %v10455, 0
      %v10523 = vsel %vm280, %v10456, 0
      %v10526 = vsel %vm280, %v10457, 0
      %v10529 = vsel %vm280, %v10458, 0
      %v10532 = vsel %vm280, %v10459, 0
      %v10535 = vsel %vm280, %v10460, 0
      %v10538 = vsel %vm280, %v10461, 0
      %v10541 = vsel %vm280, %v10462, 0
      %v10544 = vsel %vm280, %v10463, 0
      %v10547 = vsel %vm280, %v10464, 0
      %v10550 = vsel %vm280, %v10465, 0
      %v10553 = vsel %vm280, %v10466, 0
      %v10556 = vsel %vm280, %v10467, 0
      %v10559 = vsel %vm280, %v10468, 0
      %v10562 = vsel %vm280, %v10469, 0
      %v10565 = vsel %vm280, %v10470, 0
      %v10568 = vsel %vm280, %v10471, 0
      %v10571 = vsel %vm377, %v10473, 0
      %10573 = vmatprep.subr.mxu0 0.0
      %10574 = vmatpush1.msra.mxu0 %v10571
      %10575 = vmatprep.subr.mxu0 0.0
      %10576 = vmatpush1.msra.mxu0 0.0
      %10577 = vmatprep.subr.mxu0 0.0
      %10578 = vmatpush1.msra.mxu0 0.0
      %10579 = vmatprep.subr.mxu0 0.0
      %10580 = vmatpush1.msra.mxu0 0.0
      %10581 = vmatprep.subr.mxu0 0.0
      %10582 = vmatpush1.msra.mxu0 0.0
      %10583 = vmatprep.subr.mxu0 0.0
      %10584 = vmatpush1.msra.mxu0 0.0
      %10585 = vmatprep.subr.mxu0 0.0
      %10586 = vmatpush1.msra.mxu0 0.0
      %10587 = vmatprep.subr.mxu0 0.0
      %10588 = vmatpush1.msra.mxu0 0.0
      %10589 = vmatprep.subr.mxu0 0.0
      %10590 = vmatpush1.msra.mxu0 0.0
      %10591 = vmatprep.subr.mxu0 0.0
      %10592 = vmatpush1.msra.mxu0 0.0
      %10593 = vmatprep.subr.mxu0 0.0
      %10594 = vmatpush1.msra.mxu0 0.0
      %10595 = vmatprep.subr.mxu0 0.0
      %10596 = vmatpush1.msra.mxu0 0.0
      %10597 = vmatprep.subr.mxu0 0.0
      %10598 = vmatpush1.msra.mxu0 0.0
      %10599 = vmatprep.subr.mxu0 0.0
      %10600 = vmatpush1.msra.mxu0 0.0
      %10601 = vmatprep.subr.mxu0 0.0
      %10602 = vmatpush1.msra.mxu0 0.0
      %10603 = vmatprep.subr.mxu0 0.0
      %10604 = vmatpush1.msra.mxu0 0.0
      %10605 = vmatprep.subr.mxu0 0.0
      %10606 = vmatpush1.msra.mxu0 0.0
      %10607 = vmatprep.subr.mxu0 0.0
      %10608 = vmatpush1.msra.mxu0 0.0
      %10609 = vmatprep.subr.mxu0 0.0
      %10610 = vmatpush1.msra.mxu0 0.0
      %10611 = vmatprep.subr.mxu0 0.0
      %10612 = vmatpush1.msra.mxu0 0.0
      %10613 = vmatprep.subr.mxu0 0.0
      %10614 = vmatpush1.msra.mxu0 0.0
      %10615 = vmatprep.subr.mxu0 0.0
      %10616 = vmatpush1.msra.mxu0 0.0
      %10617 = vmatprep.subr.mxu0 0.0
      %10618 = vmatpush1.msra.mxu0 0.0
      %10619 = vmatprep.subr.mxu0 0.0
      %10620 = vmatpush1.msra.mxu0 0.0
      %10621 = vmatprep.subr.mxu0 0.0
      %10622 = vmatpush1.msra.mxu0 0.0
      %10623 = vmatprep.subr.mxu0 0.0
      %10624 = vmatpush1.msra.mxu0 0.0
      %10625 = vmatprep.subr.mxu0 0.0
      %10626 = vmatpush1.msra.mxu0 0.0
      %10627 = vmatprep.subr.mxu0 0.0
      %10628 = vmatpush1.msra.mxu0 0.0
      %10629 = vmatprep.subr.mxu0 0.0
      %10630 = vmatpush1.msra.mxu0 0.0
      %10631 = vmatprep.subr.mxu0 0.0
      %10632 = vmatpush1.msra.mxu0 0.0
      %10633 = vmatprep.subr.mxu0 0.0
      %10634 = vmatpush1.msra.mxu0 0.0
      %10635 = vmatprep.subr.mxu0 0.0
      %10636 = vmatpush1.msra.mxu0 0.0
      %10637 = vmatprep.mubr.f32.mxu0 0.0
      %10638 = vmatmul.mubr.f32.gmra.mrb[0].mxu0 %v10475
      %v10639 = vpop.f32.mrb[0].mxu0
      %v10640 = vadd.f32 0.0, %v10639
      %v10641 = vpop.f32.mrb[0].mxu0
      %10642 = vmatprep.mubr.f32.mxu0 0.0
      %10643 = vmatmul.mubr.f32.gmra.mrb[0].mxu0 %v10478
      %v10644 = vpop.f32.mrb[0].mxu0
      %v10645 = vadd.f32 0.0, %v10644
      %v10646 = vpop.f32.mrb[0].mxu0
      %10647 = vmatprep.mubr.f32.mxu0 0.0
      %10648 = vmatmul.mubr.f32.gmra.mrb[0].mxu0 %v10481
      %v10649 = vpop.f32.mrb[0].mxu0
      %v10650 = vadd.f32 0.0, %v10649
      %v10651 = vpop.f32.mrb[0].mxu0
      %10652 = vmatprep.mubr.f32.mxu0 0.0
      %10653 = vmatmul.mubr.f32.gmra.mrb[0].mxu0 %v10484
      %v10654 = vpop.f32.mrb[0].mxu0
      %v10655 = vadd.f32 0.0, %v10654
      %v10656 = vpop.f32.mrb[0].mxu0
      %10657 = vmatprep.mubr.f32.mxu0 0.0
      %10658 = vmatmul.mubr.f32.gmra.mrb[0].mxu0 %v10487
      %v10659 = vpop.f32.mrb[0].mxu0
      %v10660 = vadd.f32 0.0, %v10659
      %v10661 = vpop.f32.mrb[0].mxu0
      %10662 = vmatprep.mubr.f32.mxu0 0.0
      %10663 = vmatmul.mubr.f32.gmra.mrb[0].mxu0 %v10490
      %v10664 = vpop.f32.mrb[0].mxu0
      %v10665 = vadd.f32 0.0, %v10664
      %v10666 = vpop.f32.mrb[0].mxu0
      %10667 = vmatprep.mubr.f32.mxu0 0.0
      %10668 = vmatmul.mubr.f32.gmra.mrb[0].mxu0 %v10493
      %v10669 = vpop.f32.mrb[0].mxu0
      %v10670 = vadd.f32 0.0, %v10669
      %v10671 = vpop.f32.mrb[0].mxu0
      %10672 = vmatprep.mubr.f32.mxu0 0.0
      %10673 = vmatmul.mubr.f32.gmra.mrb[0].mxu0 %v10496
      %v10674 = vpop.f32.mrb[0].mxu0
      %v10675 = vadd.f32 0.0, %v10674
      %v10676 = vpop.f32.mrb[0].mxu0
      %10677 = vmatprep.mubr.f32.mxu0 0.0
      %10678 = vmatmul.mubr.f32.gmra.mrb[0].mxu0 %v10499
      %v10679 = vpop.f32.mrb[0].mxu0
      %v10680 = vadd.f32 0.0, %v10679
      %v10681 = vpop.f32.mrb[0].mxu0
      %10682 = vmatprep.mubr.f32.mxu0 0.0
      %10683 = vmatmul.mubr.f32.gmra.mrb[0].mxu0 %v10502
      %v10684 = vpop.f32.mrb[0].mxu0
      %v10685 = vadd.f32 0.0, %v10684
      %v10686 = vpop.f32.mrb[0].mxu0
      %10687 = vmatprep.mubr.f32.mxu0 0.0
      %10688 = vmatmul.mubr.f32.gmra.mrb[0].mxu0 %v10505
      %v10689 = vpop.f32.mrb[0].mxu0
      %v10690 = vadd.f32 0.0, %v10689
      %v10691 = vpop.f32.mrb[0].mxu0
      %10692 = vmatprep.mubr.f32.mxu0 0.0
      %10693 = vmatmul.mubr.f32.gmra.mrb[0].mxu0 %v10508
      %v10694 = vpop.f32.mrb[0].mxu0
      %v10695 = vadd.f32 0.0, %v10694
      %v10696 = vpop.f32.mrb[0].mxu0
      %10697 = vmatprep.mubr.f32.mxu0 0.0
      %10698 = vmatmul.mubr.f32.gmra.mrb[0].mxu0 %v10511
      %v10699 = vpop.f32.mrb[0].mxu0
      %v10700 = vadd.f32 0.0, %v10699
      %v10701 = vpop.f32.mrb[0].mxu0
      %10702 = vmatprep.mubr.f32.mxu0 0.0
      %10703 = vmatmul.mubr.f32.gmra.mrb[0].mxu0 %v10514
      %v10704 = vpop.f32.mrb[0].mxu0
      %v10705 = vadd.f32 0.0, %v10704
      %v10706 = vpop.f32.mrb[0].mxu0
      %10707 = vmatprep.mubr.f32.mxu0 0.0
      %10708 = vmatmul.mubr.f32.gmra.mrb[0].mxu0 %v10517
      %v10709 = vpop.f32.mrb[0].mxu0
      %v10710 = vadd.f32 0.0, %v10709
      %v10711 = vpop.f32.mrb[0].mxu0
      %10712 = vmatprep.mubr.f32.mxu0 0.0
      %10713 = vmatmul.mubr.f32.gmra.mrb[0].mxu0 %v10520
      %v10714 = vpop.f32.mrb[0].mxu0
      %v10715 = vadd.f32 0.0, %v10714
      %v10716 = vpop.f32.mrb[0].mxu0
      %10717 = vmatprep.mubr.f32.mxu0 0.0
      %10718 = vmatmul.mubr.f32.gmra.mrb[0].mxu0 %v10523
      %v10719 = vpop.f32.mrb[0].mxu0
      %v10720 = vadd.f32 0.0, %v10719
      %v10721 = vpop.f32.mrb[0].mxu0
      %10722 = vmatprep.mubr.f32.mxu0 0.0
      %10723 = vmatmul.mubr.f32.gmra.mrb[0].mxu0 %v10526
      %v10724 = vpop.f32.mrb[0].mxu0
      %v10725 = vadd.f32 0.0, %v10724
      %v10726 = vpop.f32.mrb[0].mxu0
      %10727 = vmatprep.mubr.f32.mxu0 0.0
      %10728 = vmatmul.mubr.f32.gmra.mrb[0].mxu0 %v10529
      %v10729 = vpop.f32.mrb[0].mxu0
      %v10730 = vadd.f32 0.0, %v10729
      %v10731 = vpop.f32.mrb[0].mxu0
      %10732 = vmatprep.mubr.f32.mxu0 0.0
      %10733 = vmatmul.mubr.f32.gmra.mrb[0].mxu0 %v10532
      %v10734 = vpop.f32.mrb[0].mxu0
      %v10735 = vadd.f32 0.0, %v10734
      %v10736 = vpop.f32.mrb[0].mxu0
      %10737 = vmatprep.mubr.f32.mxu0 0.0
      %10738 = vmatmul.mubr.f32.gmra.mrb[0].mxu0 %v10535
      %v10739 = vpop.f32.mrb[0].mxu0
      %v10740 = vadd.f32 0.0, %v10739
      %v10741 = vpop.f32.mrb[0].mxu0
      %10742 = vmatprep.mubr.f32.mxu0 0.0
      %10743 = vmatmul.mubr.f32.gmra.mrb[0].mxu0 %v10538
      %v10744 = vpop.f32.mrb[0].mxu0
      %v10745 = vadd.f32 0.0, %v10744
      %v10746 = vpop.f32.mrb[0].mxu0
      %10747 = vmatprep.mubr.f32.mxu0 0.0
      %10748 = vmatmul.mubr.f32.gmra.mrb[0].mxu0 %v10541
      %v10749 = vpop.f32.mrb[0].mxu0
      %v10750 = vadd.f32 0.0, %v10749
      %v10751 = vpop.f32.mrb[0].mxu0
      %10752 = vmatprep.mubr.f32.mxu0 0.0
      %10753 = vmatmul.mubr.f32.gmra.mrb[0].mxu0 %v10544
      %v10754 = vpop.f32.mrb[0].mxu0
      %v10755 = vadd.f32 0.0, %v10754
      %v10756 = vpop.f32.mrb[0].mxu0
      %10757 = vmatprep.mubr.f32.mxu0 0.0
      %10758 = vmatmul.mubr.f32.gmra.mrb[0].mxu0 %v10547
      %v10759 = vpop.f32.mrb[0].mxu0
      %v10760 = vadd.f32 0.0, %v10759
      %v10761 = vpop.f32.mrb[0].mxu0
      %10762 = vmatprep.mubr.f32.mxu0 0.0
      %10763 = vmatmul.mubr.f32.gmra.mrb[0].mxu0 %v10550
      %v10764 = vpop.f32.mrb[0].mxu0
      %v10765 = vadd.f32 0.0, %v10764
      %v10766 = vpop.f32.mrb[0].mxu0
      %10767 = vmatprep.mubr.f32.mxu0 0.0
      %10768 = vmatmul.mubr.f32.gmra.mrb[0].mxu0 %v10553
      %v10769 = vpop.f32.mrb[0].mxu0
      %v10770 = vadd.f32 0.0, %v10769
      %v10771 = vpop.f32.mrb[0].mxu0
      %10772 = vmatprep.mubr.f32.mxu0 0.0
      %10773 = vmatmul.mubr.f32.gmra.mrb[0].mxu0 %v10556
      %v10774 = vpop.f32.mrb[0].mxu0
      %v10775 = vadd.f32 0.0, %v10774
      %v10776 = vpop.f32.mrb[0].mxu0
      %10777 = vmatprep.mubr.f32.mxu0 0.0
      %10778 = vmatmul.mubr.f32.gmra.mrb[0].mxu0 %v10559
      %v10779 = vpop.f32.mrb[0].mxu0
      %v10780 = vadd.f32 0.0, %v10779
      %v10781 = vpop.f32.mrb[0].mxu0
      %10782 = vmatprep.mubr.f32.mxu0 0.0
      %10783 = vmatmul.mubr.f32.gmra.mrb[0].mxu0 %v10562
      %v10784 = vpop.f32.mrb[0].mxu0
      %v10785 = vadd.f32 0.0, %v10784
      %v10786 = vpop.f32.mrb[0].mxu0
      %10787 = vmatprep.mubr.f32.mxu0 0.0
      %10788 = vmatmul.mubr.f32.gmra.mrb[0].mxu0 %v10565
      %v10789 = vpop.f32.mrb[0].mxu0
      %v10790 = vadd.f32 0.0, %v10789
      %v10791 = vpop.f32.mrb[0].mxu0
      %10792 = vmatprep.mubr.f32.mxu0 0.0
      %10793 = vmatmul.mubr.f32.gmra.mrb[0].mxu0 %v10568
      %v10794 = vpop.f32.mrb[0].mxu0
      %v10795 = vadd.f32 0.0, %v10794
      %v10796 = vpop.f32.mrb[0].mxu0
      %10797 = vdwg.mxu0
      %v10798 = vadd.f32 %v10408, %v10640
      %v10799 = vadd.f32 %v10409, %v10645
      %v10800 = vadd.f32 %v10410, %v10650
      %v10801 = vadd.f32 %v10411, %v10655
      %v10802 = vadd.f32 %v10412, %v10660
      %v10803 = vadd.f32 %v10413, %v10665
      %v10804 = vadd.f32 %v10414, %v10670
      %v10805 = vadd.f32 %v10415, %v10675
      %v10806 = vadd.f32 %v10416, %v10680
      %v10807 = vadd.f32 %v10417, %v10685
      %v10808 = vadd.f32 %v10418, %v10690
      %v10809 = vadd.f32 %v10419, %v10695
      %v10810 = vadd.f32 %v10420, %v10700
      %v10811 = vadd.f32 %v10421, %v10705
      %v10812 = vadd.f32 %v10422, %v10710
      %v10813 = vadd.f32 %v10423, %v10715
      %v10814 = vadd.f32 %v10424, %v10720
      %v10815 = vadd.f32 %v10425, %v10725
      %v10816 = vadd.f32 %v10426, %v10730
      %v10817 = vadd.f32 %v10427, %v10735
      %v10818 = vadd.f32 %v10428, %v10740
      %v10819 = vadd.f32 %v10429, %v10745
      %v10820 = vadd.f32 %v10430, %v10750
      %v10821 = vadd.f32 %v10431, %v10755
      %v10822 = vadd.f32 %v10432, %v10760
      %v10823 = vadd.f32 %v10433, %v10765
      %v10824 = vadd.f32 %v10434, %v10770
      %v10825 = vadd.f32 %v10435, %v10775
      %v10826 = vadd.f32 %v10436, %v10780
      %v10827 = vadd.f32 %v10437, %v10785
      %v10828 = vadd.f32 %v10438, %v10790
      %v10829 = vadd.f32 %v10439, %v10795
      %s10830 = scalar_lea.vmem %s2, 2
      %v10831 = vld [vmem:[%s10830] sm:$0x1]
      %v10833 = vlaneseq
      %v10834 = vshrl.u32 %v10833, 7
      %v10835 = vsub.s32 0, %v10834
      %v10836 = vrot.slane %v10831, %v10835
      %v10838 = vadd.f32 %v10798, %v10836
      %v10839 = vadd.f32 %v10799, %v10836
      %v10840 = vadd.f32 %v10800, %v10836
      %v10841 = vadd.f32 %v10801, %v10836
      %v10842 = vadd.f32 %v10802, %v10836
      %v10843 = vadd.f32 %v10803, %v10836
      %v10844 = vadd.f32 %v10804, %v10836
      %v10845 = vadd.f32 %v10805, %v10836
      %v10846 = vadd.f32 %v10806, %v10836
      %v10847 = vadd.f32 %v10807, %v10836
      %v10848 = vadd.f32 %v10808, %v10836
      %v10849 = vadd.f32 %v10809, %v10836
      %v10850 = vadd.f32 %v10810, %v10836
      %v10851 = vadd.f32 %v10811, %v10836
      %v10852 = vadd.f32 %v10812, %v10836
      %v10853 = vadd.f32 %v10813, %v10836
      %v10854 = vadd.f32 %v10814, %v10836
      %v10855 = vadd.f32 %v10815, %v10836
      %v10856 = vadd.f32 %v10816, %v10836
      %v10857 = vadd.f32 %v10817, %v10836
      %v10858 = vadd.f32 %v10818, %v10836
      %v10859 = vadd.f32 %v10819, %v10836
      %v10860 = vadd.f32 %v10820, %v10836
      %v10861 = vadd.f32 %v10821, %v10836
      %v10862 = vadd.f32 %v10822, %v10836
      %v10863 = vadd.f32 %v10823, %v10836
      %v10864 = vadd.f32 %v10824, %v10836
      %v10865 = vadd.f32 %v10825, %v10836
      %v10866 = vadd.f32 %v10826, %v10836
      %v10867 = vadd.f32 %v10827, %v10836
      %v10868 = vadd.f32 %v10828, %v10836
      %v10869 = vadd.f32 %v10829, %v10836
      %10902 = vrot.lane.b32.xlu0 %v10838, 4
      %v10903 = vpop.permute.xlu0 %10902
      %10904 = vrot.lane.b32.xlu0 %v10839, 4
      %v10905 = vpop.permute.xlu0 %10904
      %10906 = vrot.lane.b32.xlu0 %v10840, 4
      %v10907 = vpop.permute.xlu0 %10906
      %10908 = vrot.lane.b32.xlu0 %v10841, 4
      %v10909 = vpop.permute.xlu0 %10908
      %10910 = vrot.lane.b32.xlu0 %v10842, 4
      %v10911 = vpop.permute.xlu0 %10910
      %10912 = vrot.lane.b32.xlu0 %v10843, 4
      %v10913 = vpop.permute.xlu0 %10912
      %10914 = vrot.lane.b32.xlu0 %v10844, 4
      %v10915 = vpop.permute.xlu0 %10914
      %10916 = vrot.lane.b32.xlu0 %v10845, 4
      %v10917 = vpop.permute.xlu0 %10916
      %10918 = vrot.lane.b32.xlu0 %v10846, 4
      %v10919 = vpop.permute.xlu0 %10918
      %10920 = vrot.lane.b32.xlu0 %v10847, 4
      %v10921 = vpop.permute.xlu0 %10920
      %10922 = vrot.lane.b32.xlu0 %v10848, 4
      %v10923 = vpop.permute.xlu0 %10922
      %10924 = vrot.lane.b32.xlu0 %v10849, 4
      %v10925 = vpop.permute.xlu0 %10924
      %10926 = vrot.lane.b32.xlu0 %v10850, 4
      %v10927 = vpop.permute.xlu0 %10926
      %10928 = vrot.lane.b32.xlu0 %v10851, 4
      %v10929 = vpop.permute.xlu0 %10928
      %10930 = vrot.lane.b32.xlu0 %v10852, 4
      %v10931 = vpop.permute.xlu0 %10930
      %10932 = vrot.lane.b32.xlu0 %v10853, 4
      %v10933 = vpop.permute.xlu0 %10932
      %10934 = vrot.lane.b32.xlu0 %v10854, 4
      %v10935 = vpop.permute.xlu0 %10934
      %10936 = vrot.lane.b32.xlu0 %v10855, 4
      %v10937 = vpop.permute.xlu0 %10936
      %10938 = vrot.lane.b32.xlu0 %v10856, 4
      %v10939 = vpop.permute.xlu0 %10938
      %10940 = vrot.lane.b32.xlu0 %v10857, 4
      %v10941 = vpop.permute.xlu0 %10940
      %10942 = vrot.lane.b32.xlu0 %v10858, 4
      %v10943 = vpop.permute.xlu0 %10942
      %10944 = vrot.lane.b32.xlu0 %v10859, 4
      %v10945 = vpop.permute.xlu0 %10944
      %10946 = vrot.lane.b32.xlu0 %v10860, 4
      %v10947 = vpop.permute.xlu0 %10946
      %10948 = vrot.lane.b32.xlu0 %v10861, 4
      %v10949 = vpop.permute.xlu0 %10948
      %10950 = vrot.lane.b32.xlu0 %v10862, 4
      %v10951 = vpop.permute.xlu0 %10950
      %10952 = vrot.lane.b32.xlu0 %v10863, 4
      %v10953 = vpop.permute.xlu0 %10952
      %10954 = vrot.lane.b32.xlu0 %v10864, 4
      %v10955 = vpop.permute.xlu0 %10954
      %10956 = vrot.lane.b32.xlu0 %v10865, 4
      %v10957 = vpop.permute.xlu0 %10956
      %10958 = vrot.lane.b32.xlu0 %v10866, 4
      %v10959 = vpop.permute.xlu0 %10958
      %10960 = vrot.lane.b32.xlu0 %v10867, 4
      %v10961 = vpop.permute.xlu0 %10960
      %10962 = vrot.lane.b32.xlu0 %v10868, 4
      %v10963 = vpop.permute.xlu0 %10962
      %10964 = vrot.lane.b32.xlu0 %v10869, 4
      %v10965 = vpop.permute.xlu0 %10964
      %vm10998 = vcmask 48160
      %10999 = vst.msk [vmem:[%s211] sm:$0xff] %vm10998, %v10903
      %11000 = vst.msk [vmem:[%s211 + $0x8] sm:$0xff] %vm10998, %v10905
      %11001 = vst.msk [vmem:[%s211 + $0x10] sm:$0xff] %vm10998, %v10907
      %11002 = vst.msk [vmem:[%s211 + $0x18] sm:$0xff] %vm10998, %v10909
      %11003 = vst.msk [vmem:[%s211 + $0x20] sm:$0xff] %vm10998, %v10911
      %11004 = vst.msk [vmem:[%s211 + $0x28] sm:$0xff] %vm10998, %v10913
      %11005 = vst.msk [vmem:[%s211 + $0x30] sm:$0xff] %vm10998, %v10915
      %11006 = vst.msk [vmem:[%s211 + $0x38] sm:$0xff] %vm10998, %v10917
      %11007 = vst.msk [vmem:[%s211 + $0x40] sm:$0xff] %vm10998, %v10919
      %11008 = vst.msk [vmem:[%s211 + $0x48] sm:$0xff] %vm10998, %v10921
      %11009 = vst.msk [vmem:[%s211 + $0x50] sm:$0xff] %vm10998, %v10923
      %11010 = vst.msk [vmem:[%s211 + $0x58] sm:$0xff] %vm10998, %v10925
      %11011 = vst.msk [vmem:[%s211 + $0x60] sm:$0xff] %vm10998, %v10927
      %11012 = vst.msk [vmem:[%s211 + $0x68] sm:$0xff] %vm10998, %v10929
      %11013 = vst.msk [vmem:[%s211 + $0x70] sm:$0xff] %vm10998, %v10931
      %11014 = vst.msk [vmem:[%s211 + $0x78] sm:$0xff] %vm10998, %v10933
      %11015 = vst.msk [vmem:[%s211 + $0x80] sm:$0xff] %vm10998, %v10935
      %11016 = vst.msk [vmem:[%s211 + $0x88] sm:$0xff] %vm10998, %v10937
      %11017 = vst.msk [vmem:[%s211 + $0x90] sm:$0xff] %vm10998, %v10939
      %11018 = vst.msk [vmem:[%s211 + $0x98] sm:$0xff] %vm10998, %v10941
      %11019 = vst.msk [vmem:[%s211 + $0xa0] sm:$0xff] %vm10998, %v10943
      %11020 = vst.msk [vmem:[%s211 + $0xa8] sm:$0xff] %vm10998, %v10945
      %11021 = vst.msk [vmem:[%s211 + $0xb0] sm:$0xff] %vm10998, %v10947
      %11022 = vst.msk [vmem:[%s211 + $0xb8] sm:$0xff] %vm10998, %v10949
      %11023 = vst.msk [vmem:[%s211 + $0xc0] sm:$0xff] %vm10998, %v10951
      %11024 = vst.msk [vmem:[%s211 + $0xc8] sm:$0xff] %vm10998, %v10953
      %11025 = vst.msk [vmem:[%s211 + $0xd0] sm:$0xff] %vm10998, %v10955
      %11026 = vst.msk [vmem:[%s211 + $0xd8] sm:$0xff] %vm10998, %v10957
      %11027 = vst.msk [vmem:[%s211 + $0xe0] sm:$0xff] %vm10998, %v10959
      %11028 = vst.msk [vmem:[%s211 + $0xe8] sm:$0xff] %vm10998, %v10961
      %11029 = vst.msk [vmem:[%s211 + $0xf0] sm:$0xff] %vm10998, %v10963
      %11030 = vst.msk [vmem:[%s211 + $0xf8] sm:$0xff] %vm10998, %v10965
      %v11031 = vld [vmem:[%s206] sm:$0x1]
      %v11033 = vlaneseq
      %v11034 = vshrl.u32 %v11033, 7
      %v11035 = vsub.s32 0, %v11034
      %v11036 = vrot.slane %v11031, %v11035
      %11037 = vrot.lane.b32.xlu0 %v11036, 6
      %v11038 = vpop.permute.xlu0 %11037
      %vm11040 = vcmask 64560
      %11041 = vst.msk [vmem:[%s211] sm:$0xff] %vm11040, %v11038
      %11042 = vst.msk [vmem:[%s211 + $0x8] sm:$0xff] %vm11040, %v11038
      %11043 = vst.msk [vmem:[%s211 + $0x10] sm:$0xff] %vm11040, %v11038
      %11044 = vst.msk [vmem:[%s211 + $0x18] sm:$0xff] %vm11040, %v11038
      %11045 = vst.msk [vmem:[%s211 + $0x20] sm:$0xff] %vm11040, %v11038
      %11046 = vst.msk [vmem:[%s211 + $0x28] sm:$0xff] %vm11040, %v11038
      %11047 = vst.msk [vmem:[%s211 + $0x30] sm:$0xff] %vm11040, %v11038
      %11048 = vst.msk [vmem:[%s211 + $0x38] sm:$0xff] %vm11040, %v11038
      %11049 = vst.msk [vmem:[%s211 + $0x40] sm:$0xff] %vm11040, %v11038
      %11050 = vst.msk [vmem:[%s211 + $0x48] sm:$0xff] %vm11040, %v11038
      %11051 = vst.msk [vmem:[%s211 + $0x50] sm:$0xff] %vm11040, %v11038
      %11052 = vst.msk [vmem:[%s211 + $0x58] sm:$0xff] %vm11040, %v11038
      %11053 = vst.msk [vmem:[%s211 + $0x60] sm:$0xff] %vm11040, %v11038
      %11054 = vst.msk [vmem:[%s211 + $0x68] sm:$0xff] %vm11040, %v11038
      %11055 = vst.msk [vmem:[%s211 + $0x70] sm:$0xff] %vm11040, %v11038
      %11056 = vst.msk [vmem:[%s211 + $0x78] sm:$0xff] %vm11040, %v11038
      %11057 = vst.msk [vmem:[%s211 + $0x80] sm:$0xff] %vm11040, %v11038
      %11058 = vst.msk [vmem:[%s211 + $0x88] sm:$0xff] %vm11040, %v11038
      %11059 = vst.msk [vmem:[%s211 + $0x90] sm:$0xff] %vm11040, %v11038
      %11060 = vst.msk [vmem:[%s211 + $0x98] sm:$0xff] %vm11040, %v11038
      %11061 = vst.msk [vmem:[%s211 + $0xa0] sm:$0xff] %vm11040, %v11038
      %11062 = vst.msk [vmem:[%s211 + $0xa8] sm:$0xff] %vm11040, %v11038
      %11063 = vst.msk [vmem:[%s211 + $0xb0] sm:$0xff] %vm11040, %v11038
      %11064 = vst.msk [vmem:[%s211 + $0xb8] sm:$0xff] %vm11040, %v11038
      %11065 = vst.msk [vmem:[%s211 + $0xc0] sm:$0xff] %vm11040, %v11038
      %11066 = vst.msk [vmem:[%s211 + $0xc8] sm:$0xff] %vm11040, %v11038
      %11067 = vst.msk [vmem:[%s211 + $0xd0] sm:$0xff] %vm11040, %v11038
      %11068 = vst.msk [vmem:[%s211 + $0xd8] sm:$0xff] %vm11040, %v11038
      %11069 = vst.msk [vmem:[%s211 + $0xe0] sm:$0xff] %vm11040, %v11038
      %11070 = vst.msk [vmem:[%s211 + $0xe8] sm:$0xff] %vm11040, %v11038
      %11071 = vst.msk [vmem:[%s211 + $0xf0] sm:$0xff] %vm11040, %v11038
      %11072 = vst.msk [vmem:[%s211 + $0xf8] sm:$0xff] %vm11040, %v11038
      %p11073 = scmp.lt.s32.totalorder %s15, 1
      %s11074 = scalar_select %p11073, %s15, 1
      %s11075 = smul.addr %s11074, 32
      %s11076 = smul.addr %s11075, 8
      %s11077 = scalar_lea.vmem %s4, %s11076
      // Predicated region
      $region37: #{run.1} parent=35 // pred_check
        %p11078 = pneg %p127
      $region38: #{run.1} parent=35 // pred_check_branch
        %11080 = sbr.rel (%p11078) target = $region40
      $region39: #{run.1} parent=35 // pred_region
        _
      $region40: #{run.1} parent=35 // pred_fallthru
        _
    $region36: #{run.1} parent=5 // pred_fallthru
      _
    %p11081 = scmp.le.s32.totalorder 2, %s10
    // Predicated region
    $region41: #{run.1} parent=5 // pred_check
      %p11082 = pneg %p11081
    $region42: #{run.1} parent=5 // pred_check_branch
      %11084 = sbr.rel (%p11082) target = $region44
    $region43: #{run.1} parent=5 // pred_region
      %s11085 = ssub.s32 %s10, 2
      // Predicated region
      $region45: #{run.1} parent=43 // pred_check
        %p11086 = pneg %p133
      $region46: #{run.1} parent=43 // pred_check_branch
        %11088 = sbr.rel (%p11086) target = $region48
      $region47: #{run.1} parent=43 // pred_region
        %p11089 = scmp.lt.s32.totalorder %s16, 1
        %s11090 = scalar_select %p11089, %s16, 1
        %s11091 = smul.addr %s11090, 32
        %s11092 = smul.addr %s11091, 8
        %s11093 = scalar_lea.vmem %s4, %s11092
      $region48: #{run.1} parent=43 // pred_fallthru
        _
    $region44: #{run.1} parent=5 // pred_fallthru
      _
  $region6: #{run.1} parent=0 // loop_footer
    %s14 = sadd.s32 1, %s10
  $region7: #{run.1} parent=0 // loop_footer_branch
    %9 = sbr.rel target = $region3
  $region8: #{run.1} parent=0 // loop_exit
    _

</llo_original>
